<compile_context>
chip_gen: v5e
topology: v5e:2x2
jax: 0.10.0
libtpu: 0.0.40
codegen_flags: <defaults>
</compile_context>

<pallas_src>
import functools

import jax
import jax.numpy as jnp
from jax.experimental import pallas as pl
from jax.experimental.pallas import tpu as pltpu


# ----------------------------- TPU generation config -----------------------------

def _tpu_generation():
    try:
        kind = jax.devices()[0].device_kind.lower()
    except Exception:
        return "unknown"
    for g in ("v7", "v6", "v5", "v4"):
        if g in kind:
            return g
    return "unknown"


_GEN = _tpu_generation()
_IS_V7 = _GEN == "v7"
if _GEN in ("v4", "v5", "v6"):
    # 128 MiB physical VMEM: larger tiles + 64 MiB scoped limit.
    _MM_TILE_CAP = 512
    _VMEM_LIMIT = 64 * 1024 * 1024
else:
    # v7x (64 MiB physical VMEM) / unknown: conservative 256-tiles, 32 MiB.
    _MM_TILE_CAP = 256
    _VMEM_LIMIT = 32 * 1024 * 1024


# ----------------------------- helpers -----------------------------

def _round_up(x, m):
    return (x + m - 1) // m * m


def _choose_m_tiling(M, cap):
    """(tm, Mp). Prefer a full-dim or divisor tile so no padded copy of the
    (potentially large) im2col patch tensor is materialized."""
    if M <= cap:
        return M, M
    best = 0
    for t in range(cap, 7, -8):           # largest multiple-of-8 divisor <= cap
        if M % t == 0:
            best = t
            break
    if best >= 128:
        return best, M
    return cap, _round_up(M, cap)


def _choose_n_tiling(O, cap):
    if O <= cap:
        return O, O
    for t in range(cap, 127, -128):
        if O % t == 0:
            return t, O
    return cap, _round_up(O, cap)


def _choose_k_tiling(K, M):
    """(tk, Kp). Single full-K step whenever it fits (all conv layers); for the
    huge fc reductions prefer the largest multiple-of-128 divisor (no weight
    padding) and only fall back to padding K when the divisor structure is poor."""
    max_tk = 2048 if M <= 64 else 1024
    Kp128 = _round_up(K, 128)
    if Kp128 <= max_tk:
        return K, K                       # full-dim block, zero padding, 1 K step
    best = 0
    t = 128
    while t <= max_tk:
        if Kp128 % t == 0:
            best = t
        t += 128
    if best >= 512:
        return best, Kp128
    return max_tk, _round_up(K, max_tk)


# ----------------------------- fused matmul kernel -----------------------------

def _matmul_kernel(x_ref, w_ref, b_ref, o_ref, acc_ref, *, act):
    """One (tm, tn) output tile; accumulates over the K grid axis in f32 scratch."""
    @pl.when(pl.program_id(2) == 0)
    def _():
        acc_ref[...] = jnp.zeros_like(acc_ref)

    acc_ref[...] += jnp.dot(x_ref[...], w_ref[...],
                            preferred_element_type=jnp.float32)

    @pl.when(pl.program_id(2) == pl.num_programs(2) - 1)
    def _():
        y = acc_ref[...] + b_ref[...]          # epilogue in f32 (v5e has no bf16 VPU/EUP)
        if act == "relu":
            y = jnp.maximum(y, 0.0)
        elif act == "sigmoid":
            y = jax.nn.sigmoid(y)
        o_ref[...] = y.astype(o_ref.dtype)


def matmul_bias_act(x, w, b, act=None, out_dtype=jnp.float32):
    """x: (M, K), w: (K, O), b: (O,) -> (M, O).

    bf16 operands, f32 accumulate, tiled + software-pipelined BlockSpecs.
    Padding is only applied when the tile search can't avoid it, so conv-layer
    im2col tensors are consumed exactly as built (no second HBM round trip).
    """
    M, K = x.shape
    O = w.shape[1]

    tm, Mp = _choose_m_tiling(M, _MM_TILE_CAP)
    tn, Op = _choose_n_tiling(O, _MM_TILE_CAP)
    tk, Kp = _choose_k_tiling(K, M)

    xp = x.astype(jnp.bfloat16)
    if (Mp, Kp) != (M, K):
        xp = jnp.pad(xp, ((0, Mp - M), (0, Kp - K)))
    wp = w.astype(jnp.bfloat16)
    if (Kp, Op) != (K, O):
        wp = jnp.pad(wp, ((0, Kp - K), (0, Op - O)))
    bp = b.astype(jnp.float32)
    if Op != O:
        bp = jnp.pad(bp, (0, Op - O))
    bp = bp.reshape(1, Op)

    out = pl.pallas_call(
        functools.partial(_matmul_kernel, act=act),
        out_shape=jax.ShapeDtypeStruct((Mp, Op), out_dtype),
        grid=(Mp // tm, Op // tn, Kp // tk),
        in_specs=[
            pl.BlockSpec((tm, tk), lambda i, j, k: (i, k)),
            pl.BlockSpec((tk, tn), lambda i, j, k: (k, j)),
            pl.BlockSpec((1, tn), lambda i, j, k: (0, j)),
        ],
        out_specs=pl.BlockSpec((tm, tn), lambda i, j, k: (i, j)),
        scratch_shapes=[pltpu.VMEM((tm, tn), jnp.float32)],
        compiler_params=pltpu.CompilerParams(
            dimension_semantics=("parallel", "parallel", "arbitrary"),
            vmem_limit_bytes=_VMEM_LIMIT,
        ),
    )(xp, wp, bp)
    if (Mp, Op) != (M, O):
        out = out[:M, :O]
    return out


# ----------------------------- grid_sample kernel -----------------------------

def _grid_sample_kernel(ix_ref, iy_ref, img_ref, col_ref, selT_ref, o_ref, *, H):
    """Separable bilinear grid_sample (padding_mode='zeros') for one
    (batch, output-pixel-block) tile.

    ix/iy: (1, tp, 1) unnormalized sample coords (f32). img: (1, H, W*C) bf16.
    col:   (1, W*C) int32 lane->source-column index (lane // C).
    selT:  (C, W*C) one-hot reduction matrix (W groups of C lanes -> C rows).
    Out-of-range corners never match an index -> zeros padding for free.
    Output block is (1, C, tp): lane-dense stores (pixels on lanes).
    """
    ix = ix_ref[0]                       # (tp, 1) f32
    iy = iy_ref[0]                       # (tp, 1) f32
    x0f = jnp.floor(ix)
    y0f = jnp.floor(iy)
    wx1 = ix - x0f
    wx0 = 1.0 - wx1
    wy1 = iy - y0f
    wy0 = 1.0 - wy1
    x0 = x0f.astype(jnp.int32)
    y0 = y0f.astype(jnp.int32)
    tp = ix.shape[0]

    # Stage 1 (MXU, bf16 x bf16 -> f32 acc): one-hot y-corner weights blend rows.
    # TODO(synk): a scalar-prefetched real row gather (2 rows per pixel) would cut
    # this from O(P*H*W*C) to O(P*W*C) MACs; kept as a bf16 one-hot matmul for now.
    h_idx = jax.lax.broadcasted_iota(jnp.int32, (tp, H), 1)
    ry = jnp.where(h_idx == y0, wy0, 0.0) + jnp.where(h_idx == y0 + 1, wy1, 0.0)
    G = jnp.dot(ry.astype(jnp.bfloat16), img_ref[0],
                preferred_element_type=jnp.float32)            # (tp, W*C) f32

    # Stage 2 (VPU + MXU): x-corner weights on the W*C lane layout via two
    # equality compares against the precomputed column index, then reduce the
    # W groups of C lanes to C rows with a one-hot matmul -> (C, tp).
    col = col_ref[...]                                         # (1, W*C) int32
    cxe = (jnp.where(col == x0, wx0, 0.0)
           + jnp.where(col == x0 + 1, wx1, 0.0))               # (tp, W*C) f32
    res = jax.lax.dot_general(selT_ref[...], G * cxe,
                              (((1,), (1,)), ((), ())),
                              preferred_element_type=jnp.float32)  # (C, tp)
    o_ref[0] = res.astype(o_ref.dtype)


def _pick_pixel_tile(P, cap):
    t = cap
    while t >= 128:
        if P % t == 0:
            return t
        t -= 128
    return P


def grid_sample_bilinear(img_nhwc, theta):
    """Equivalent of F.grid_sample(img, F.affine_grid(theta, img.size(),
    align_corners=False), align_corners=False) on NHWC data. Returns bf16 NHWC."""
    N, H, W, C = img_nhwc.shape
    P = H * W

    # affine_grid base grid (align_corners=False): normalized pixel centers.
    xs = (2.0 * jnp.arange(W, dtype=jnp.float32) + 1.0) / W - 1.0
    ys = (2.0 * jnp.arange(H, dtype=jnp.float32) + 1.0) / H - 1.0
    gy, gx = jnp.meshgrid(ys, xs, indexing="ij")             # (H, W)
    base = jnp.stack([gx.reshape(-1), gy.reshape(-1),
                      jnp.ones((P,), jnp.float32)], axis=-1)  # (P, 3)
    coords = jnp.einsum("pk,njk->npj", base, theta)           # (N, P, 2) = (x, y)
    # un-normalize (align_corners=False): ix = ((x + 1) * W - 1) / 2  (coords stay f32)
    ix = (((coords[..., 0] + 1.0) * W - 1.0) * 0.5)[..., None].astype(jnp.float32)
    iy = (((coords[..., 1] + 1.0) * H - 1.0) * 0.5)[..., None].astype(jnp.float32)

    img_flat = img_nhwc.reshape(N, H, W * C).astype(jnp.bfloat16)
    col = (jnp.arange(W * C, dtype=jnp.int32) // C).reshape(1, W * C)
    selT = (jnp.arange(C, dtype=jnp.int32)[:, None]
            == (jnp.arange(W * C, dtype=jnp.int32)[None, :] % C)).astype(jnp.float32)

    cap = 128 if (_IS_V7 and W * C >= 1024) else 256          # smaller tile on v7x VMEM
    tp = _pick_pixel_tile(P, cap)

    out = pl.pallas_call(
        functools.partial(_grid_sample_kernel, H=H),
        out_shape=jax.ShapeDtypeStruct((N, C, P), jnp.bfloat16),
        grid=(N, P // tp),
        in_specs=[
            pl.BlockSpec((1, tp, 1), lambda n, p: (n, p, 0)),
            pl.BlockSpec((1, tp, 1), lambda n, p: (n, p, 0)),
            pl.BlockSpec((1, H, W * C), lambda n, p: (n, 0, 0)),
            pl.BlockSpec((1, W * C), lambda n, p: (0, 0)),
            pl.BlockSpec((C, W * C), lambda n, p: (0, 0)),
        ],
        out_specs=pl.BlockSpec((1, C, tp), lambda n, p: (n, 0, p)),
        compiler_params=pltpu.CompilerParams(
            dimension_semantics=("parallel", "parallel"),
            vmem_limit_bytes=_VMEM_LIMIT,
        ),
    )(ix, iy, img_flat, col, selT)
    # lane-dense (N, C, P) store -> back to NHWC for the decoder (tiny transpose).
    return jnp.transpose(out, (0, 2, 1)).reshape(N, H, W, C)


# ----------------------------- conv glue -----------------------------

def conv2d_3x3(x, w, b, *, stride=1, relu=True):
    """PyTorch nn.Conv2d(kernel=3, padding=1, stride=s) + optional ReLU, NHWC data.

    w layout: (3, 3, Cin, Cout)  (torch (Cout, Cin, 3, 3) permuted).
    Stride-2 decimation is applied *during* patch extraction, patches are built
    in bf16, and the matmul consumes them with full-dim / divisor tiles so no
    additional padded copy is materialized.
    """
    # TODO(synk): im2col patch extraction is still JAX-side layout glue (a halo-tiled
    # fully fused conv kernel would remove this HBM round trip entirely); all conv
    # MACs run inside the tiled Pallas matmul kernel.
    N, H, W, Cin = x.shape
    Cout = w.shape[-1]
    x = x.astype(jnp.bfloat16)
    xp = jnp.pad(x, ((0, 0), (1, 1), (1, 1), (0, 0)))
    cols = [xp[:, kh:kh + H:stride, kw:kw + W:stride, :]
            for kh in range(3) for kw in range(3)]
    patches = jnp.concatenate(cols, axis=-1)                 # (N, Ho, Wo, 9*Cin)
    Ho, Wo = patches.shape[1], patches.shape[2]
    y = matmul_bias_act(
        patches.reshape(N * Ho * Wo, 9 * Cin),
        w.reshape(9 * Cin, Cout), b,
        act="relu" if relu else None,
        out_dtype=jnp.bfloat16,
    )
    return y.reshape(N, Ho, Wo, Cout)


# ----------------------------- parameters -----------------------------

def _kaiming_normal(key, shape, fan_in):
    return jax.random.normal(key, shape, jnp.float32) * (2.0 / fan_in) ** 0.5


def _uniform_bias(key, shape, fan_in):
    bound = 1.0 / (fan_in ** 0.5)
    return jax.random.uniform(key, shape, jnp.float32, -bound, bound)


def _fold_flatten_into_fc(w_chw_rows, c, h, ww):
    """Permute dense-weight rows from torch CHW-flatten order to NHWC-flatten
    order, so the forward pass can flatten NHWC activations with a plain reshape
    (no HBM transpose of the feature map)."""
    fout = w_chw_rows.shape[1]
    return (w_chw_rows.reshape(c, h, ww, fout)
            .transpose(1, 2, 0, 3)
            .reshape(c * h * ww, fout))


def init_params(key, H, W, secret_size):
    keys = iter(jax.random.split(key, 64))

    def conv_param(cin, cout):
        fan_in = cin * 9
        return (_kaiming_normal(next(keys), (3, 3, cin, cout), fan_in),
                _uniform_bias(next(keys), (cout,), fan_in))

    def dense_param(fin, fout):
        return (_kaiming_normal(next(keys), (fin, fout), fin),
                _uniform_bias(next(keys), (fout,), fin))

    def out_hw(h, s):
        return h if s == 1 else (h - 1) // 2 + 1

    params = {}

    # --- SpatialTransformerNetwork.localization ---
    stn_cfg = [(3, 32, 2), (32, 64, 2), (64, 128, 2)]
    params["stn_convs"] = []
    h, ww = H, W
    for cin, cout, s in stn_cfg:
        wt, bi = conv_param(cin, cout)
        params["stn_convs"].append((wt, bi, s))
        h, ww = out_hw(h, s), out_hw(ww, s)
    stn_flat = 128 * h * ww
    w1, b1 = dense_param(stn_flat, 128)
    params["stn_fc1"] = (_fold_flatten_into_fc(w1, 128, h, ww), b1)
    # final localization linear: zero weight, identity-affine bias (as in __init__)
    params["stn_fc2"] = (jnp.zeros((128, 6), jnp.float32),
                         jnp.array([1.0, 0.0, 0.0, 0.0, 1.0, 0.0], jnp.float32))

    # --- decoder ---
    dec_cfg = [(3, 32, 2), (32, 32, 1), (32, 64, 2), (64, 64, 1),
               (64, 64, 2), (64, 128, 2), (128, 128, 2)]
    params["dec_convs"] = []
    h, ww = H, W
    for cin, cout, s in dec_cfg:
        wt, bi = conv_param(cin, cout)
        params["dec_convs"].append((wt, bi, s))
        h, ww = out_hw(h, s), out_hw(ww, s)
    w1, b1 = dense_param(128 * h * ww, 512)
    params["dec_fc1"] = (_fold_flatten_into_fc(w1, 128, h, ww), b1)
    params["dec_fc2"] = dense_param(512, secret_size)
    return params


# ----------------------------- forward pass -----------------------------

def stega_stamp_decoder(params, image_nchw):
    # layout: NCHW (PyTorch) input -> NHWC for all kernels.
    x = jnp.transpose(image_nchw.astype(jnp.float32), (0, 2, 3, 1))
    x = x - 0.5
    N = x.shape[0]

    # --- SpatialTransformerNetwork ---
    h = x
    for wt, bi, s in params["stn_convs"]:
        h = conv2d_3x3(h, wt, bi, stride=s, relu=True)
    hf = h.reshape(N, -1)                                        # flatten (CHW order folded into fc1 weights)
    hf = matmul_bias_act(hf, *params["stn_fc1"], act="relu", out_dtype=jnp.bfloat16)
    theta = matmul_bias_act(hf, *params["stn_fc2"], act=None)    # (N, 6) f32
    theta = theta.reshape(N, 2, 3)
    t = grid_sample_bilinear(x, theta)                           # transformed image (NHWC, bf16)

    # --- decoder ---
    h = t
    for wt, bi, s in params["dec_convs"]:
        h = conv2d_3x3(h, wt, bi, stride=s, relu=True)
    hf = h.reshape(N, -1)
    hf = matmul_bias_act(hf, *params["dec_fc1"], act="relu", out_dtype=jnp.bfloat16)
    out = matmul_bias_act(hf, *params["dec_fc2"], act="sigmoid")  # torch.sigmoid(decoder(...))
    return out


# ----------------------------- main -----------------------------

if __name__ == "__main__":
    N, C, H, W = 2, 3, 16, 16          # small spatial size; dense in_features derived from it
    secret_size = 100
    root = jax.random.PRNGKey(0)
    pkey, dkey = jax.random.split(root)
    params = init_params(pkey, H, W, secret_size)
    image = jax.random.uniform(dkey, (N, C, H, W), dtype=jnp.float32)

    fwd = jax.jit(lambda img: stega_stamp_decoder(params, img))
    out = fwd(image)
    jax.block_until_ready(out)

    assert out.shape == (N, secret_size), out.shape
    assert bool(jnp.all(jnp.isfinite(out)))
    assert bool(jnp.all((out >= 0.0) & (out <= 1.0)))   # sigmoid output
    print("KERNEL_OK")
</pallas_src>

<mosaic_0001>
module attributes {stable_mosaic.version = 11 : i64} {
  func.func @_matmul_kernel(%arg0: i32, %arg1: i32, %arg2: i32, %arg3: memref<128x27xbf16, #tpu.memory_space<vmem>>, %arg4: memref<27x32xbf16, #tpu.memory_space<vmem>>, %arg5: memref<1x32xf32, #tpu.memory_space<vmem>>, %arg6: memref<128x32xbf16, #tpu.memory_space<vmem>>, %arg7: memref<128x32xf32, #tpu.memory_space<vmem>>) attributes {dimension_semantics = [#tpu.dimension_semantics<parallel>, #tpu.dimension_semantics<parallel>, #tpu.dimension_semantics<arbitrary>], iteration_bounds = array<i64: 1, 1, 1>, scalar_prefetch = 0 : i64, scratch_operands = 1 : i64, tpu.core_type = #tpu.core_type<tc>, window_params = [{transform_indices = @transform_0, window_bounds = array<i64: 128, 27>}, {transform_indices = @transform_1, window_bounds = array<i64: 27, 32>}, {transform_indices = @transform_2, window_bounds = array<i64: 1, 32>}, {transform_indices = @transform_3, window_bounds = array<i64: 128, 32>}]} {
    %c0_i32 = arith.constant 0 : i32
    %0 = arith.cmpi eq, %arg2, %c0_i32 : i32
    %1 = arith.extui %0 : i1 to i32
    %c0_i32_0 = arith.constant 0 : i32
    %2 = arith.cmpi ne, %1, %c0_i32_0 : i32
    scf.if %2 {
      %cst_10 = arith.constant 0.000000e+00 : f32
      %12 = vector.broadcast %cst_10 : f32 to vector<128x32xf32>
      %c0_11 = arith.constant 0 : index
      %c0_12 = arith.constant 0 : index
      %13 = vector.load %arg7[%c0_11, %c0_12] : memref<128x32xf32, #tpu.memory_space<vmem>>, vector<128x32xf32>
      tpu.vector_store %arg7[%c0_11, %c0_12], %12 {strides = array<i32>} : memref<128x32xf32, #tpu.memory_space<vmem>>, vector<128x32xf32>,
    } else {
    }
    %c0 = arith.constant 0 : index
    %c0_1 = arith.constant 0 : index
    %3 = vector.load %arg7[%c0, %c0_1] : memref<128x32xf32, #tpu.memory_space<vmem>>, vector<128x32xf32>
    %c0_2 = arith.constant 0 : index
    %c0_3 = arith.constant 0 : index
    %4 = vector.load %arg3[%c0_2, %c0_3] : memref<128x27xbf16, #tpu.memory_space<vmem>>, vector<128x27xbf16>
    %c0_4 = arith.constant 0 : index
    %c0_5 = arith.constant 0 : index
    %5 = vector.load %arg4[%c0_4, %c0_5] : memref<27x32xbf16, #tpu.memory_space<vmem>>, vector<27x32xbf16>
    %cst = arith.constant dense<0.000000e+00> : vector<128x32xf32>
    %6 = tpu.matmul %4, %5, %cst {dimension_numbers = #tpu.dot_dimension_numbers<[1], [0], [0], [1], [0, 0, 1, 1], [], []>} : vector<128x27xbf16>, vector<27x32xbf16>, vector<128x32xf32> -> vector<128x32xf32>
    %7 = arith.addf %3, %6 : vector<128x32xf32>
    %c0_6 = arith.constant 0 : index
    %c0_7 = arith.constant 0 : index
    %8 = vector.load %arg7[%c0_6, %c0_7] : memref<128x32xf32, #tpu.memory_space<vmem>>, vector<128x32xf32>
    tpu.vector_store %arg7[%c0_6, %c0_7], %7 {strides = array<i32>} : memref<128x32xf32, #tpu.memory_space<vmem>>, vector<128x32xf32>,
    %c0_i32_8 = arith.constant 0 : i32
    %9 = arith.cmpi eq, %arg2, %c0_i32_8 : i32
    %10 = arith.extui %9 : i1 to i32
    %c0_i32_9 = arith.constant 0 : i32
    %11 = arith.cmpi ne, %10, %c0_i32_9 : i32
    scf.if %11 {
      %c0_10 = arith.constant 0 : index
      %c0_11 = arith.constant 0 : index
      %12 = vector.load %arg7[%c0_10, %c0_11] : memref<128x32xf32, #tpu.memory_space<vmem>>, vector<128x32xf32>
      %c0_12 = arith.constant 0 : index
      %c0_13 = arith.constant 0 : index
      %13 = vector.load %arg5[%c0_12, %c0_13] : memref<1x32xf32, #tpu.memory_space<vmem>>, vector<1x32xf32>
      %14 = vector.broadcast %13 : vector<1x32xf32> to vector<128x32xf32>
      %15 = arith.addf %12, %14 : vector<128x32xf32>
      %cst_14 = arith.constant 0.000000e+00 : f32
      %16 = vector.broadcast %cst_14 : f32 to vector<128x32xf32>
      %17 = arith.maximumf %15, %16 : vector<128x32xf32>
      %18 = arith.truncf %17 : vector<128x32xf32> to vector<128x32xbf16>
      %c0_15 = arith.constant 0 : index
      %c0_16 = arith.constant 0 : index
      %19 = vector.load %arg6[%c0_15, %c0_16] : memref<128x32xbf16, #tpu.memory_space<vmem>>, vector<128x32xbf16>
      tpu.vector_store %arg6[%c0_15, %c0_16], %18 {strides = array<i32>} : memref<128x32xbf16, #tpu.memory_space<vmem>>, vector<128x32xbf16>,
    } else {
    }
    return
  }
  func.func @transform_0(%arg0: i32, %arg1: i32, %arg2: i32) -> (i32, i32) {
    %c0_i32 = arith.constant 0 : i32
    return %arg0, %arg2 : i32, i32
  }
  func.func @transform_1(%arg0: i32, %arg1: i32, %arg2: i32) -> (i32, i32) {
    %c0_i32 = arith.constant 0 : i32
    return %arg2, %arg1 : i32, i32
  }
  func.func @transform_2(%arg0: i32, %arg1: i32, %arg2: i32) -> (i32, i32) {
    %c0_i32 = arith.constant 0 : i32
    %c0_i32_0 = arith.constant 0 : i32
    return %c0_i32, %arg1 : i32, i32
  }
  func.func @transform_3(%arg0: i32, %arg1: i32, %arg2: i32) -> (i32, i32) {
    %c0_i32 = arith.constant 0 : i32
    return %arg0, %arg1 : i32, i32
  }
}

module attributes {stable_mosaic.version = 11 : i64} {
  func.func @_matmul_kernel(%arg0: i32, %arg1: i32, %arg2: i32, %arg3: memref<32x288xbf16, #tpu.memory_space<vmem>>, %arg4: memref<288x64xbf16, #tpu.memory_space<vmem>>, %arg5: memref<1x64xf32, #tpu.memory_space<vmem>>, %arg6: memref<32x64xbf16, #tpu.memory_space<vmem>>, %arg7: memref<32x64xf32, #tpu.memory_space<vmem>>) attributes {dimension_semantics = [#tpu.dimension_semantics<parallel>, #tpu.dimension_semantics<parallel>, #tpu.dimension_semantics<arbitrary>], iteration_bounds = array<i64: 1, 1, 1>, scalar_prefetch = 0 : i64, scratch_operands = 1 : i64, tpu.core_type = #tpu.core_type<tc>, window_params = [{transform_indices = @transform_0, window_bounds = array<i64: 32, 288>}, {transform_indices = @transform_1, window_bounds = array<i64: 288, 64>}, {transform_indices = @transform_2, window_bounds = array<i64: 1, 64>}, {transform_indices = @transform_3, window_bounds = array<i64: 32, 64>}]} {
    %c0_i32 = arith.constant 0 : i32
    %0 = arith.cmpi eq, %arg2, %c0_i32 : i32
    %1 = arith.extui %0 : i1 to i32
    %c0_i32_0 = arith.constant 0 : i32
    %2 = arith.cmpi ne, %1, %c0_i32_0 : i32
    scf.if %2 {
      %cst_10 = arith.constant 0.000000e+00 : f32
      %12 = vector.broadcast %cst_10 : f32 to vector<32x64xf32>
      %c0_11 = arith.constant 0 : index
      %c0_12 = arith.constant 0 : index
      %13 = vector.load %arg7[%c0_11, %c0_12] : memref<32x64xf32, #tpu.memory_space<vmem>>, vector<32x64xf32>
      tpu.vector_store %arg7[%c0_11, %c0_12], %12 {strides = array<i32>} : memref<32x64xf32, #tpu.memory_space<vmem>>, vector<32x64xf32>,
    } else {
    }
    %c0 = arith.constant 0 : index
    %c0_1 = arith.constant 0 : index
    %3 = vector.load %arg7[%c0, %c0_1] : memref<32x64xf32, #tpu.memory_space<vmem>>, vector<32x64xf32>
    %c0_2 = arith.constant 0 : index
    %c0_3 = arith.constant 0 : index
    %4 = vector.load %arg3[%c0_2, %c0_3] : memref<32x288xbf16, #tpu.memory_space<vmem>>, vector<32x288xbf16>
    %c0_4 = arith.constant 0 : index
    %c0_5 = arith.constant 0 : index
    %5 = vector.load %arg4[%c0_4, %c0_5] : memref<288x64xbf16, #tpu.memory_space<vmem>>, vector<288x64xbf16>
    %cst = arith.constant dense<0.000000e+00> : vector<32x64xf32>
    %6 = tpu.matmul %4, %5, %cst {dimension_numbers = #tpu.dot_dimension_numbers<[1], [0], [0], [1], [0, 0, 1, 1], [], []>} : vector<32x288xbf16>, vector<288x64xbf16>, vector<32x64xf32> -> vector<32x64xf32>
    %7 = arith.addf %3, %6 : vector<32x64xf32>
    %c0_6 = arith.constant 0 : index
    %c0_7 = arith.constant 0 : index
    %8 = vector.load %arg7[%c0_6, %c0_7] : memref<32x64xf32, #tpu.memory_space<vmem>>, vector<32x64xf32>
    tpu.vector_store %arg7[%c0_6, %c0_7], %7 {strides = array<i32>} : memref<32x64xf32, #tpu.memory_space<vmem>>, vector<32x64xf32>,
    %c0_i32_8 = arith.constant 0 : i32
    %9 = arith.cmpi eq, %arg2, %c0_i32_8 : i32
    %10 = arith.extui %9 : i1 to i32
    %c0_i32_9 = arith.constant 0 : i32
    %11 = arith.cmpi ne, %10, %c0_i32_9 : i32
    scf.if %11 {
      %c0_10 = arith.constant 0 : index
      %c0_11 = arith.constant 0 : index
      %12 = vector.load %arg7[%c0_10, %c0_11] : memref<32x64xf32, #tpu.memory_space<vmem>>, vector<32x64xf32>
      %c0_12 = arith.constant 0 : index
      %c0_13 = arith.constant 0 : index
      %13 = vector.load %arg5[%c0_12, %c0_13] : memref<1x64xf32, #tpu.memory_space<vmem>>, vector<1x64xf32>
      %14 = vector.broadcast %13 : vector<1x64xf32> to vector<32x64xf32>
      %15 = arith.addf %12, %14 : vector<32x64xf32>
      %cst_14 = arith.constant 0.000000e+00 : f32
      %16 = vector.broadcast %cst_14 : f32 to vector<32x64xf32>
      %17 = arith.maximumf %15, %16 : vector<32x64xf32>
      %18 = arith.truncf %17 : vector<32x64xf32> to vector<32x64xbf16>
      %c0_15 = arith.constant 0 : index
      %c0_16 = arith.constant 0 : index
      %19 = vector.load %arg6[%c0_15, %c0_16] : memref<32x64xbf16, #tpu.memory_space<vmem>>, vector<32x64xbf16>
      tpu.vector_store %arg6[%c0_15, %c0_16], %18 {strides = array<i32>} : memref<32x64xbf16, #tpu.memory_space<vmem>>, vector<32x64xbf16>,
    } else {
    }
    return
  }
  func.func @transform_0(%arg0: i32, %arg1: i32, %arg2: i32) -> (i32, i32) {
    %c0_i32 = arith.constant 0 : i32
    return %arg0, %arg2 : i32, i32
  }
  func.func @transform_1(%arg0: i32, %arg1: i32, %arg2: i32) -> (i32, i32) {
    %c0_i32 = arith.constant 0 : i32
    return %arg2, %arg1 : i32, i32
  }
  func.func @transform_2(%arg0: i32, %arg1: i32, %arg2: i32) -> (i32, i32) {
    %c0_i32 = arith.constant 0 : i32
    %c0_i32_0 = arith.constant 0 : i32
    return %c0_i32, %arg1 : i32, i32
  }
  func.func @transform_3(%arg0: i32, %arg1: i32, %arg2: i32) -> (i32, i32) {
    %c0_i32 = arith.constant 0 : i32
    return %arg0, %arg1 : i32, i32
  }
}

module attributes {stable_mosaic.version = 11 : i64} {
  func.func @_matmul_kernel(%arg0: i32, %arg1: i32, %arg2: i32, %arg3: memref<2x512xbf16, #tpu.memory_space<vmem>>, %arg4: memref<512x128xbf16, #tpu.memory_space<vmem>>, %arg5: memref<1x128xf32, #tpu.memory_space<vmem>>, %arg6: memref<2x128xbf16, #tpu.memory_space<vmem>>, %arg7: memref<2x128xf32, #tpu.memory_space<vmem>>) attributes {dimension_semantics = [#tpu.dimension_semantics<parallel>, #tpu.dimension_semantics<parallel>, #tpu.dimension_semantics<arbitrary>], iteration_bounds = array<i64: 1, 1, 1>, scalar_prefetch = 0 : i64, scratch_operands = 1 : i64, tpu.core_type = #tpu.core_type<tc>, window_params = [{transform_indices = @transform_0, window_bounds = array<i64: 2, 512>}, {transform_indices = @transform_1, window_bounds = array<i64: 512, 128>}, {transform_indices = @transform_2, window_bounds = array<i64: 1, 128>}, {transform_indices = @transform_3, window_bounds = array<i64: 2, 128>}]} {
    %c0_i32 = arith.constant 0 : i32
    %0 = arith.cmpi eq, %arg2, %c0_i32 : i32
    %1 = arith.extui %0 : i1 to i32
    %c0_i32_0 = arith.constant 0 : i32
    %2 = arith.cmpi ne, %1, %c0_i32_0 : i32
    scf.if %2 {
      %cst_10 = arith.constant 0.000000e+00 : f32
      %12 = vector.broadcast %cst_10 : f32 to vector<2x128xf32>
      %c0_11 = arith.constant 0 : index
      %c0_12 = arith.constant 0 : index
      %13 = vector.load %arg7[%c0_11, %c0_12] : memref<2x128xf32, #tpu.memory_space<vmem>>, vector<2x128xf32>
      tpu.vector_store %arg7[%c0_11, %c0_12], %12 {strides = array<i32>} : memref<2x128xf32, #tpu.memory_space<vmem>>, vector<2x128xf32>,
    } else {
    }
    %c0 = arith.constant 0 : index
    %c0_1 = arith.constant 0 : index
    %3 = vector.load %arg7[%c0, %c0_1] : memref<2x128xf32, #tpu.memory_space<vmem>>, vector<2x128xf32>
    %c0_2 = arith.constant 0 : index
    %c0_3 = arith.constant 0 : index
    %4 = vector.load %arg3[%c0_2, %c0_3] : memref<2x512xbf16, #tpu.memory_space<vmem>>, vector<2x512xbf16>
    %c0_4 = arith.constant 0 : index
    %c0_5 = arith.constant 0 : index
    %5 = vector.load %arg4[%c0_4, %c0_5] : memref<512x128xbf16, #tpu.memory_space<vmem>>, vector<512x128xbf16>
    %cst = arith.constant dense<0.000000e+00> : vector<2x128xf32>
    %6 = tpu.matmul %4, %5, %cst {dimension_numbers = #tpu.dot_dimension_numbers<[1], [0], [0], [1], [0, 0, 1, 1], [], []>} : vector<2x512xbf16>, vector<512x128xbf16>, vector<2x128xf32> -> vector<2x128xf32>
    %7 = arith.addf %3, %6 : vector<2x128xf32>
    %c0_6 = arith.constant 0 : index
    %c0_7 = arith.constant 0 : index
    %8 = vector.load %arg7[%c0_6, %c0_7] : memref<2x128xf32, #tpu.memory_space<vmem>>, vector<2x128xf32>
    tpu.vector_store %arg7[%c0_6, %c0_7], %7 {strides = array<i32>} : memref<2x128xf32, #tpu.memory_space<vmem>>, vector<2x128xf32>,
    %c0_i32_8 = arith.constant 0 : i32
    %9 = arith.cmpi eq, %arg2, %c0_i32_8 : i32
    %10 = arith.extui %9 : i1 to i32
    %c0_i32_9 = arith.constant 0 : i32
    %11 = arith.cmpi ne, %10, %c0_i32_9 : i32
    scf.if %11 {
      %c0_10 = arith.constant 0 : index
      %c0_11 = arith.constant 0 : index
      %12 = vector.load %arg7[%c0_10, %c0_11] : memref<2x128xf32, #tpu.memory_space<vmem>>, vector<2x128xf32>
      %c0_12 = arith.constant 0 : index
      %c0_13 = arith.constant 0 : index
      %13 = vector.load %arg5[%c0_12, %c0_13] : memref<1x128xf32, #tpu.memory_space<vmem>>, vector<1x128xf32>
      %14 = vector.broadcast %13 : vector<1x128xf32> to vector<2x128xf32>
      %15 = arith.addf %12, %14 : vector<2x128xf32>
      %cst_14 = arith.constant 0.000000e+00 : f32
      %16 = vector.broadcast %cst_14 : f32 to vector<2x128xf32>
      %17 = arith.maximumf %15, %16 : vector<2x128xf32>
      %18 = arith.truncf %17 : vector<2x128xf32> to vector<2x128xbf16>
      %c0_15 = arith.constant 0 : index
      %c0_16 = arith.constant 0 : index
      %19 = vector.load %arg6[%c0_15, %c0_16] : memref<2x128xbf16, #tpu.memory_space<vmem>>, vector<2x128xbf16>
      tpu.vector_store %arg6[%c0_15, %c0_16], %18 {strides = array<i32>} : memref<2x128xbf16, #tpu.memory_space<vmem>>, vector<2x128xbf16>,
    } else {
    }
    return
  }
  func.func @transform_0(%arg0: i32, %arg1: i32, %arg2: i32) -> (i32, i32) {
    %c0_i32 = arith.constant 0 : i32
    return %arg0, %arg2 : i32, i32
  }
  func.func @transform_1(%arg0: i32, %arg1: i32, %arg2: i32) -> (i32, i32) {
    %c0_i32 = arith.constant 0 : i32
    return %arg2, %arg1 : i32, i32
  }
  func.func @transform_2(%arg0: i32, %arg1: i32, %arg2: i32) -> (i32, i32) {
    %c0_i32 = arith.constant 0 : i32
    %c0_i32_0 = arith.constant 0 : i32
    return %c0_i32, %arg1 : i32, i32
  }
  func.func @transform_3(%arg0: i32, %arg1: i32, %arg2: i32) -> (i32, i32) {
    %c0_i32 = arith.constant 0 : i32
    return %arg0, %arg1 : i32, i32
  }
}

module attributes {stable_mosaic.version = 11 : i64} {
  func.func @_matmul_kernel(%arg0: i32, %arg1: i32, %arg2: i32, %arg3: memref<2x128xbf16, #tpu.memory_space<vmem>>, %arg4: memref<128x6xbf16, #tpu.memory_space<vmem>>, %arg5: memref<1x6xf32, #tpu.memory_space<vmem>>, %arg6: memref<2x6xf32, #tpu.memory_space<vmem>>, %arg7: memref<2x6xf32, #tpu.memory_space<vmem>>) attributes {dimension_semantics = [#tpu.dimension_semantics<parallel>, #tpu.dimension_semantics<parallel>, #tpu.dimension_semantics<arbitrary>], iteration_bounds = array<i64: 1, 1, 1>, scalar_prefetch = 0 : i64, scratch_operands = 1 : i64, tpu.core_type = #tpu.core_type<tc>, window_params = [{transform_indices = @transform_0, window_bounds = array<i64: 2, 128>}, {transform_indices = @transform_1, window_bounds = array<i64: 128, 6>}, {transform_indices = @transform_2, window_bounds = array<i64: 1, 6>}, {transform_indices = @transform_3, window_bounds = array<i64: 2, 6>}]} {
    %c0_i32 = arith.constant 0 : i32
    %0 = arith.cmpi eq, %arg2, %c0_i32 : i32
    %1 = arith.extui %0 : i1 to i32
    %c0_i32_0 = arith.constant 0 : i32
    %2 = arith.cmpi ne, %1, %c0_i32_0 : i32
    scf.if %2 {
      %cst_10 = arith.constant 0.000000e+00 : f32
      %12 = vector.broadcast %cst_10 : f32 to vector<2x6xf32>
      %c0_11 = arith.constant 0 : index
      %c0_12 = arith.constant 0 : index
      %13 = vector.load %arg7[%c0_11, %c0_12] : memref<2x6xf32, #tpu.memory_space<vmem>>, vector<2x6xf32>
      tpu.vector_store %arg7[%c0_11, %c0_12], %12 {strides = array<i32>} : memref<2x6xf32, #tpu.memory_space<vmem>>, vector<2x6xf32>,
    } else {
    }
    %c0 = arith.constant 0 : index
    %c0_1 = arith.constant 0 : index
    %3 = vector.load %arg7[%c0, %c0_1] : memref<2x6xf32, #tpu.memory_space<vmem>>, vector<2x6xf32>
    %c0_2 = arith.constant 0 : index
    %c0_3 = arith.constant 0 : index
    %4 = vector.load %arg3[%c0_2, %c0_3] : memref<2x128xbf16, #tpu.memory_space<vmem>>, vector<2x128xbf16>
    %c0_4 = arith.constant 0 : index
    %c0_5 = arith.constant 0 : index
    %5 = vector.load %arg4[%c0_4, %c0_5] : memref<128x6xbf16, #tpu.memory_space<vmem>>, vector<128x6xbf16>
    %cst = arith.constant dense<0.000000e+00> : vector<2x6xf32>
    %6 = tpu.matmul %4, %5, %cst {dimension_numbers = #tpu.dot_dimension_numbers<[1], [0], [0], [1], [0, 0, 1, 1], [], []>} : vector<2x128xbf16>, vector<128x6xbf16>, vector<2x6xf32> -> vector<2x6xf32>
    %7 = arith.addf %3, %6 : vector<2x6xf32>
    %c0_6 = arith.constant 0 : index
    %c0_7 = arith.constant 0 : index
    %8 = vector.load %arg7[%c0_6, %c0_7] : memref<2x6xf32, #tpu.memory_space<vmem>>, vector<2x6xf32>
    tpu.vector_store %arg7[%c0_6, %c0_7], %7 {strides = array<i32>} : memref<2x6xf32, #tpu.memory_space<vmem>>, vector<2x6xf32>,
    %c0_i32_8 = arith.constant 0 : i32
    %9 = arith.cmpi eq, %arg2, %c0_i32_8 : i32
    %10 = arith.extui %9 : i1 to i32
    %c0_i32_9 = arith.constant 0 : i32
    %11 = arith.cmpi ne, %10, %c0_i32_9 : i32
    scf.if %11 {
      %c0_10 = arith.constant 0 : index
      %c0_11 = arith.constant 0 : index
      %12 = vector.load %arg7[%c0_10, %c0_11] : memref<2x6xf32, #tpu.memory_space<vmem>>, vector<2x6xf32>
      %c0_12 = arith.constant 0 : index
      %c0_13 = arith.constant 0 : index
      %13 = vector.load %arg5[%c0_12, %c0_13] : memref<1x6xf32, #tpu.memory_space<vmem>>, vector<1x6xf32>
      %14 = vector.broadcast %13 : vector<1x6xf32> to vector<2x6xf32>
      %15 = arith.addf %12, %14 : vector<2x6xf32>
      %c0_14 = arith.constant 0 : index
      %c0_15 = arith.constant 0 : index
      %16 = vector.load %arg6[%c0_14, %c0_15] : memref<2x6xf32, #tpu.memory_space<vmem>>, vector<2x6xf32>
      tpu.vector_store %arg6[%c0_14, %c0_15], %15 {strides = array<i32>} : memref<2x6xf32, #tpu.memory_space<vmem>>, vector<2x6xf32>,
    } else {
    }
    return
  }
  func.func @transform_0(%arg0: i32, %arg1: i32, %arg2: i32) -> (i32, i32) {
    %c0_i32 = arith.constant 0 : i32
    return %arg0, %arg2 : i32, i32
  }
  func.func @transform_1(%arg0: i32, %arg1: i32, %arg2: i32) -> (i32, i32) {
    %c0_i32 = arith.constant 0 : i32
    return %arg2, %arg1 : i32, i32
  }
  func.func @transform_2(%arg0: i32, %arg1: i32, %arg2: i32) -> (i32, i32) {
    %c0_i32 = arith.constant 0 : i32
    %c0_i32_0 = arith.constant 0 : i32
    return %c0_i32, %arg1 : i32, i32
  }
  func.func @transform_3(%arg0: i32, %arg1: i32, %arg2: i32) -> (i32, i32) {
    %c0_i32 = arith.constant 0 : i32
    return %arg0, %arg1 : i32, i32
  }
}

module attributes {stable_mosaic.version = 11 : i64} {
  func.func @_matmul_kernel(%arg0: i32, %arg1: i32, %arg2: i32, %arg3: memref<8x576xbf16, #tpu.memory_space<vmem>>, %arg4: memref<576x128xbf16, #tpu.memory_space<vmem>>, %arg5: memref<1x128xf32, #tpu.memory_space<vmem>>, %arg6: memref<8x128xbf16, #tpu.memory_space<vmem>>, %arg7: memref<8x128xf32, #tpu.memory_space<vmem>>) attributes {dimension_semantics = [#tpu.dimension_semantics<parallel>, #tpu.dimension_semantics<parallel>, #tpu.dimension_semantics<arbitrary>], iteration_bounds = array<i64: 1, 1, 1>, scalar_prefetch = 0 : i64, scratch_operands = 1 : i64, tpu.core_type = #tpu.core_type<tc>, window_params = [{transform_indices = @transform_0, window_bounds = array<i64: 8, 576>}, {transform_indices = @transform_1, window_bounds = array<i64: 576, 128>}, {transform_indices = @transform_2, window_bounds = array<i64: 1, 128>}, {transform_indices = @transform_3, window_bounds = array<i64: 8, 128>}]} {
    %c0_i32 = arith.constant 0 : i32
    %0 = arith.cmpi eq, %arg2, %c0_i32 : i32
    %1 = arith.extui %0 : i1 to i32
    %c0_i32_0 = arith.constant 0 : i32
    %2 = arith.cmpi ne, %1, %c0_i32_0 : i32
    scf.if %2 {
      %cst_10 = arith.constant 0.000000e+00 : f32
      %12 = vector.broadcast %cst_10 : f32 to vector<8x128xf32>
      %c0_11 = arith.constant 0 : index
      %c0_12 = arith.constant 0 : index
      %13 = vector.load %arg7[%c0_11, %c0_12] : memref<8x128xf32, #tpu.memory_space<vmem>>, vector<8x128xf32>
      tpu.vector_store %arg7[%c0_11, %c0_12], %12 {strides = array<i32>} : memref<8x128xf32, #tpu.memory_space<vmem>>, vector<8x128xf32>,
    } else {
    }
    %c0 = arith.constant 0 : index
    %c0_1 = arith.constant 0 : index
    %3 = vector.load %arg7[%c0, %c0_1] : memref<8x128xf32, #tpu.memory_space<vmem>>, vector<8x128xf32>
    %c0_2 = arith.constant 0 : index
    %c0_3 = arith.constant 0 : index
    %4 = vector.load %arg3[%c0_2, %c0_3] : memref<8x576xbf16, #tpu.memory_space<vmem>>, vector<8x576xbf16>
    %c0_4 = arith.constant 0 : index
    %c0_5 = arith.constant 0 : index
    %5 = vector.load %arg4[%c0_4, %c0_5] : memref<576x128xbf16, #tpu.memory_space<vmem>>, vector<576x128xbf16>
    %cst = arith.constant dense<0.000000e+00> : vector<8x128xf32>
    %6 = tpu.matmul %4, %5, %cst {dimension_numbers = #tpu.dot_dimension_numbers<[1], [0], [0], [1], [0, 0, 1, 1], [], []>} : vector<8x576xbf16>, vector<576x128xbf16>, vector<8x128xf32> -> vector<8x128xf32>
    %7 = arith.addf %3, %6 : vector<8x128xf32>
    %c0_6 = arith.constant 0 : index
    %c0_7 = arith.constant 0 : index
    %8 = vector.load %arg7[%c0_6, %c0_7] : memref<8x128xf32, #tpu.memory_space<vmem>>, vector<8x128xf32>
    tpu.vector_store %arg7[%c0_6, %c0_7], %7 {strides = array<i32>} : memref<8x128xf32, #tpu.memory_space<vmem>>, vector<8x128xf32>,
    %c0_i32_8 = arith.constant 0 : i32
    %9 = arith.cmpi eq, %arg2, %c0_i32_8 : i32
    %10 = arith.extui %9 : i1 to i32
    %c0_i32_9 = arith.constant 0 : i32
    %11 = arith.cmpi ne, %10, %c0_i32_9 : i32
    scf.if %11 {
      %c0_10 = arith.constant 0 : index
      %c0_11 = arith.constant 0 : index
      %12 = vector.load %arg7[%c0_10, %c0_11] : memref<8x128xf32, #tpu.memory_space<vmem>>, vector<8x128xf32>
      %c0_12 = arith.constant 0 : index
      %c0_13 = arith.constant 0 : index
      %13 = vector.load %arg5[%c0_12, %c0_13] : memref<1x128xf32, #tpu.memory_space<vmem>>, vector<1x128xf32>
      %14 = vector.broadcast %13 : vector<1x128xf32> to vector<8x128xf32>
      %15 = arith.addf %12, %14 : vector<8x128xf32>
      %cst_14 = arith.constant 0.000000e+00 : f32
      %16 = vector.broadcast %cst_14 : f32 to vector<8x128xf32>
      %17 = arith.maximumf %15, %16 : vector<8x128xf32>
      %18 = arith.truncf %17 : vector<8x128xf32> to vector<8x128xbf16>
      %c0_15 = arith.constant 0 : index
      %c0_16 = arith.constant 0 : index
      %19 = vector.load %arg6[%c0_15, %c0_16] : memref<8x128xbf16, #tpu.memory_space<vmem>>, vector<8x128xbf16>
      tpu.vector_store %arg6[%c0_15, %c0_16], %18 {strides = array<i32>} : memref<8x128xbf16, #tpu.memory_space<vmem>>, vector<8x128xbf16>,
    } else {
    }
    return
  }
  func.func @transform_0(%arg0: i32, %arg1: i32, %arg2: i32) -> (i32, i32) {
    %c0_i32 = arith.constant 0 : i32
    return %arg0, %arg2 : i32, i32
  }
  func.func @transform_1(%arg0: i32, %arg1: i32, %arg2: i32) -> (i32, i32) {
    %c0_i32 = arith.constant 0 : i32
    return %arg2, %arg1 : i32, i32
  }
  func.func @transform_2(%arg0: i32, %arg1: i32, %arg2: i32) -> (i32, i32) {
    %c0_i32 = arith.constant 0 : i32
    %c0_i32_0 = arith.constant 0 : i32
    return %c0_i32, %arg1 : i32, i32
  }
  func.func @transform_3(%arg0: i32, %arg1: i32, %arg2: i32) -> (i32, i32) {
    %c0_i32 = arith.constant 0 : i32
    return %arg0, %arg1 : i32, i32
  }
}

module attributes {stable_mosaic.version = 11 : i64} {
  func.func @_grid_sample_kernel(%arg0: i32, %arg1: i32, %arg2: memref<1x256x1xf32, #tpu.memory_space<vmem>>, %arg3: memref<1x256x1xf32, #tpu.memory_space<vmem>>, %arg4: memref<1x16x48xbf16, #tpu.memory_space<vmem>>, %arg5: memref<1x48xi32, #tpu.memory_space<vmem>>, %arg6: memref<3x48xf32, #tpu.memory_space<vmem>>, %arg7: memref<1x3x256xbf16, #tpu.memory_space<vmem>>) attributes {dimension_semantics = [#tpu.dimension_semantics<parallel>, #tpu.dimension_semantics<parallel>], iteration_bounds = array<i64: 2, 1>, scalar_prefetch = 0 : i64, scratch_operands = 0 : i64, tpu.core_type = #tpu.core_type<tc>, window_params = [{transform_indices = @transform_0, window_bounds = array<i64: 1, 256, 1>}, {transform_indices = @transform_1, window_bounds = array<i64: 1, 256, 1>}, {transform_indices = @transform_2, window_bounds = array<i64: 1, 16, 48>}, {pipeline_mode = #tpu.pipeline_mode<synchronous>, transform_indices = @transform_3, window_bounds = array<i64: 1, 48>}, {pipeline_mode = #tpu.pipeline_mode<synchronous>, transform_indices = @transform_4, window_bounds = array<i64: 3, 48>}, {transform_indices = @transform_5, window_bounds = array<i64: 1, 3, 256>}]} {
    %c0 = arith.constant 0 : index
    %c0_0 = arith.constant 0 : index
    %c0_1 = arith.constant 0 : index
    %0 = vector.load %arg2[%c0, %c0_0, %c0_1] : memref<1x256x1xf32, #tpu.memory_space<vmem>>, vector<1x256x1xf32>
    %1 = vector.shape_cast %0 : vector<1x256x1xf32> to vector<256x1xf32>
    %c0_2 = arith.constant 0 : index
    %c0_3 = arith.constant 0 : index
    %c0_4 = arith.constant 0 : index
    %2 = vector.load %arg3[%c0_2, %c0_3, %c0_4] : memref<1x256x1xf32, #tpu.memory_space<vmem>>, vector<1x256x1xf32>
    %3 = vector.shape_cast %2 : vector<1x256x1xf32> to vector<256x1xf32>
    %4 = math.floor %1 : vector<256x1xf32>
    %5 = math.floor %3 : vector<256x1xf32>
    %6 = arith.subf %1, %4 : vector<256x1xf32>
    %cst = arith.constant 1.000000e+00 : f32
    %7 = vector.broadcast %cst : f32 to vector<256x1xf32>
    %8 = arith.subf %7, %6 : vector<256x1xf32>
    %9 = arith.subf %3, %5 : vector<256x1xf32>
    %cst_5 = arith.constant 1.000000e+00 : f32
    %10 = vector.broadcast %cst_5 : f32 to vector<256x1xf32>
    %11 = arith.subf %10, %9 : vector<256x1xf32>
    %12 = arith.fptosi %4 : vector<256x1xf32> to vector<256x1xi32>
    %13 = arith.fptosi %5 : vector<256x1xf32> to vector<256x1xi32>
    %14 = tpu.iota {dimensions = array<i32: 1>} : vector<256x16xi32>
    %15 = vector.broadcast %13 : vector<256x1xi32> to vector<256x16xi32>
    %16 = arith.cmpi eq, %14, %15 : vector<256x16xi32>
    %cst_6 = arith.constant 0.000000e+00 : f32
    %17 = vector.shape_cast %11 : vector<256x1xf32> to vector<256x1xf32>
    %18 = vector.broadcast %17 : vector<256x1xf32> to vector<256x16xf32>
    %19 = vector.broadcast %cst_6 : f32 to vector<256x16xf32>
    %20 = arith.select %16, %18, %19 : vector<256x16xi1>, vector<256x16xf32>
    %c1_i32 = arith.constant 1 : i32
    %21 = vector.broadcast %c1_i32 : i32 to vector<256x1xi32>
    %22 = arith.addi %13, %21 : vector<256x1xi32>
    %23 = vector.broadcast %22 : vector<256x1xi32> to vector<256x16xi32>
    %24 = arith.cmpi eq, %14, %23 : vector<256x16xi32>
    %cst_7 = arith.constant 0.000000e+00 : f32
    %25 = vector.shape_cast %9 : vector<256x1xf32> to vector<256x1xf32>
    %26 = vector.broadcast %25 : vector<256x1xf32> to vector<256x16xf32>
    %27 = vector.broadcast %cst_7 : f32 to vector<256x16xf32>
    %28 = arith.select %24, %26, %27 : vector<256x16xi1>, vector<256x16xf32>
    %29 = arith.addf %20, %28 : vector<256x16xf32>
    %30 = arith.truncf %29 : vector<256x16xf32> to vector<256x16xbf16>
    %c0_8 = arith.constant 0 : index
    %c0_9 = arith.constant 0 : index
    %c0_10 = arith.constant 0 : index
    %31 = vector.load %arg4[%c0_8, %c0_9, %c0_10] : memref<1x16x48xbf16, #tpu.memory_space<vmem>>, vector<1x16x48xbf16>
    %32 = vector.shape_cast %31 : vector<1x16x48xbf16> to vector<16x48xbf16>
    %cst_11 = arith.constant dense<0.000000e+00> : vector<256x48xf32>
    %33 = tpu.matmul %30, %32, %cst_11 {dimension_numbers = #tpu.dot_dimension_numbers<[1], [0], [0], [1], [0, 0, 1, 1], [], []>} : vector<256x16xbf16>, vector<16x48xbf16>, vector<256x48xf32> -> vector<256x48xf32>
    %c0_12 = arith.constant 0 : index
    %c0_13 = arith.constant 0 : index
    %34 = vector.load %arg5[%c0_12, %c0_13] : memref<1x48xi32, #tpu.memory_space<vmem>>, vector<1x48xi32>
    %35 = vector.broadcast %34 : vector<1x48xi32> to vector<256x48xi32>
    %36 = vector.broadcast %12 : vector<256x1xi32> to vector<256x48xi32>
    %37 = arith.cmpi eq, %35, %36 : vector<256x48xi32>
    %cst_14 = arith.constant 0.000000e+00 : f32
    %38 = vector.shape_cast %8 : vector<256x1xf32> to vector<256x1xf32>
    %39 = vector.broadcast %38 : vector<256x1xf32> to vector<256x48xf32>
    %40 = vector.broadcast %cst_14 : f32 to vector<256x48xf32>
    %41 = arith.select %37, %39, %40 : vector<256x48xi1>, vector<256x48xf32>
    %c1_i32_15 = arith.constant 1 : i32
    %42 = vector.broadcast %c1_i32_15 : i32 to vector<256x1xi32>
    %43 = arith.addi %12, %42 : vector<256x1xi32>
    %44 = vector.broadcast %34 : vector<1x48xi32> to vector<256x48xi32>
    %45 = vector.broadcast %43 : vector<256x1xi32> to vector<256x48xi32>
    %46 = arith.cmpi eq, %44, %45 : vector<256x48xi32>
    %cst_16 = arith.constant 0.000000e+00 : f32
    %47 = vector.shape_cast %6 : vector<256x1xf32> to vector<256x1xf32>
    %48 = vector.broadcast %47 : vector<256x1xf32> to vector<256x48xf32>
    %49 = vector.broadcast %cst_16 : f32 to vector<256x48xf32>
    %50 = arith.select %46, %48, %49 : vector<256x48xi1>, vector<256x48xf32>
    %51 = arith.addf %41, %50 : vector<256x48xf32>
    %c0_17 = arith.constant 0 : index
    %c0_18 = arith.constant 0 : index
    %52 = vector.load %arg6[%c0_17, %c0_18] : memref<3x48xf32, #tpu.memory_space<vmem>>, vector<3x48xf32>
    %53 = arith.mulf %33, %51 : vector<256x48xf32>
    %cst_19 = arith.constant dense<0.000000e+00> : vector<3x256xf32>
    %54 = tpu.matmul %52, %53, %cst_19 {dimension_numbers = #tpu.dot_dimension_numbers<[1], [1], [0], [0], [0, 0, 1, 0], [], []>} : vector<3x48xf32>, vector<256x48xf32>, vector<3x256xf32> -> vector<3x256xf32>
    %55 = arith.truncf %54 : vector<3x256xf32> to vector<3x256xbf16>
    %c0_20 = arith.constant 0 : index
    %c0_21 = arith.constant 0 : index
    %c0_22 = arith.constant 0 : index
    %56 = vector.load %arg7[%c0_20, %c0_21, %c0_22] : memref<1x3x256xbf16, #tpu.memory_space<vmem>>, vector<1x3x256xbf16>
    %57 = vector.shape_cast %56 : vector<1x3x256xbf16> to vector<3x256xbf16>
    %58 = vector.shape_cast %55 : vector<3x256xbf16> to vector<1x3x256xbf16>
    tpu.vector_store %arg7[%c0_20, %c0_21, %c0_22], %58 {strides = array<i32>} : memref<1x3x256xbf16, #tpu.memory_space<vmem>>, vector<1x3x256xbf16>,
    return
  }
  func.func @transform_0(%arg0: i32, %arg1: i32) -> (i32, i32, i32) {
    %c0_i32 = arith.constant 0 : i32
    %c0_i32_0 = arith.constant 0 : i32
    return %arg0, %arg1, %c0_i32 : i32, i32, i32
  }
  func.func @transform_1(%arg0: i32, %arg1: i32) -> (i32, i32, i32) {
    %c0_i32 = arith.constant 0 : i32
    %c0_i32_0 = arith.constant 0 : i32
    return %arg0, %arg1, %c0_i32 : i32, i32, i32
  }
  func.func @transform_2(%arg0: i32, %arg1: i32) -> (i32, i32, i32) {
    %c0_i32 = arith.constant 0 : i32
    %c0_i32_0 = arith.constant 0 : i32
    %c0_i32_1 = arith.constant 0 : i32
    return %arg0, %c0_i32, %c0_i32_0 : i32, i32, i32
  }
  func.func @transform_3(%arg0: i32, %arg1: i32) -> (i32, i32) {
    %c0_i32 = arith.constant 0 : i32
    %c0_i32_0 = arith.constant 0 : i32
    %c0_i32_1 = arith.constant 0 : i32
    return %c0_i32, %c0_i32_0 : i32, i32
  }
  func.func @transform_4(%arg0: i32, %arg1: i32) -> (i32, i32) {
    %c0_i32 = arith.constant 0 : i32
    %c0_i32_0 = arith.constant 0 : i32
    %c0_i32_1 = arith.constant 0 : i32
    return %c0_i32, %c0_i32_0 : i32, i32
  }
  func.func @transform_5(%arg0: i32, %arg1: i32) -> (i32, i32, i32) {
    %c0_i32 = arith.constant 0 : i32
    %c0_i32_0 = arith.constant 0 : i32
    return %arg0, %c0_i32, %arg1 : i32, i32, i32
  }
}

module attributes {stable_mosaic.version = 11 : i64} {
  func.func @_matmul_kernel(%arg0: i32, %arg1: i32, %arg2: i32, %arg3: memref<128x288xbf16, #tpu.memory_space<vmem>>, %arg4: memref<288x32xbf16, #tpu.memory_space<vmem>>, %arg5: memref<1x32xf32, #tpu.memory_space<vmem>>, %arg6: memref<128x32xbf16, #tpu.memory_space<vmem>>, %arg7: memref<128x32xf32, #tpu.memory_space<vmem>>) attributes {dimension_semantics = [#tpu.dimension_semantics<parallel>, #tpu.dimension_semantics<parallel>, #tpu.dimension_semantics<arbitrary>], iteration_bounds = array<i64: 1, 1, 1>, scalar_prefetch = 0 : i64, scratch_operands = 1 : i64, tpu.core_type = #tpu.core_type<tc>, window_params = [{transform_indices = @transform_0, window_bounds = array<i64: 128, 288>}, {transform_indices = @transform_1, window_bounds = array<i64: 288, 32>}, {transform_indices = @transform_2, window_bounds = array<i64: 1, 32>}, {transform_indices = @transform_3, window_bounds = array<i64: 128, 32>}]} {
    %c0_i32 = arith.constant 0 : i32
    %0 = arith.cmpi eq, %arg2, %c0_i32 : i32
    %1 = arith.extui %0 : i1 to i32
    %c0_i32_0 = arith.constant 0 : i32
    %2 = arith.cmpi ne, %1, %c0_i32_0 : i32
    scf.if %2 {
      %cst_10 = arith.constant 0.000000e+00 : f32
      %12 = vector.broadcast %cst_10 : f32 to vector<128x32xf32>
      %c0_11 = arith.constant 0 : index
      %c0_12 = arith.constant 0 : index
      %13 = vector.load %arg7[%c0_11, %c0_12] : memref<128x32xf32, #tpu.memory_space<vmem>>, vector<128x32xf32>
      tpu.vector_store %arg7[%c0_11, %c0_12], %12 {strides = array<i32>} : memref<128x32xf32, #tpu.memory_space<vmem>>, vector<128x32xf32>,
    } else {
    }
    %c0 = arith.constant 0 : index
    %c0_1 = arith.constant 0 : index
    %3 = vector.load %arg7[%c0, %c0_1] : memref<128x32xf32, #tpu.memory_space<vmem>>, vector<128x32xf32>
    %c0_2 = arith.constant 0 : index
    %c0_3 = arith.constant 0 : index
    %4 = vector.load %arg3[%c0_2, %c0_3] : memref<128x288xbf16, #tpu.memory_space<vmem>>, vector<128x288xbf16>
    %c0_4 = arith.constant 0 : index
    %c0_5 = arith.constant 0 : index
    %5 = vector.load %arg4[%c0_4, %c0_5] : memref<288x32xbf16, #tpu.memory_space<vmem>>, vector<288x32xbf16>
    %cst = arith.constant dense<0.000000e+00> : vector<128x32xf32>
    %6 = tpu.matmul %4, %5, %cst {dimension_numbers = #tpu.dot_dimension_numbers<[1], [0], [0], [1], [0, 0, 1, 1], [], []>} : vector<128x288xbf16>, vector<288x32xbf16>, vector<128x32xf32> -> vector<128x32xf32>
    %7 = arith.addf %3, %6 : vector<128x32xf32>
    %c0_6 = arith.constant 0 : index
    %c0_7 = arith.constant 0 : index
    %8 = vector.load %arg7[%c0_6, %c0_7] : memref<128x32xf32, #tpu.memory_space<vmem>>, vector<128x32xf32>
    tpu.vector_store %arg7[%c0_6, %c0_7], %7 {strides = array<i32>} : memref<128x32xf32, #tpu.memory_space<vmem>>, vector<128x32xf32>,
    %c0_i32_8 = arith.constant 0 : i32
    %9 = arith.cmpi eq, %arg2, %c0_i32_8 : i32
    %10 = arith.extui %9 : i1 to i32
    %c0_i32_9 = arith.constant 0 : i32
    %11 = arith.cmpi ne, %10, %c0_i32_9 : i32
    scf.if %11 {
      %c0_10 = arith.constant 0 : index
      %c0_11 = arith.constant 0 : index
      %12 = vector.load %arg7[%c0_10, %c0_11] : memref<128x32xf32, #tpu.memory_space<vmem>>, vector<128x32xf32>
      %c0_12 = arith.constant 0 : index
      %c0_13 = arith.constant 0 : index
      %13 = vector.load %arg5[%c0_12, %c0_13] : memref<1x32xf32, #tpu.memory_space<vmem>>, vector<1x32xf32>
      %14 = vector.broadcast %13 : vector<1x32xf32> to vector<128x32xf32>
      %15 = arith.addf %12, %14 : vector<128x32xf32>
      %cst_14 = arith.constant 0.000000e+00 : f32
      %16 = vector.broadcast %cst_14 : f32 to vector<128x32xf32>
      %17 = arith.maximumf %15, %16 : vector<128x32xf32>
      %18 = arith.truncf %17 : vector<128x32xf32> to vector<128x32xbf16>
      %c0_15 = arith.constant 0 : index
      %c0_16 = arith.constant 0 : index
      %19 = vector.load %arg6[%c0_15, %c0_16] : memref<128x32xbf16, #tpu.memory_space<vmem>>, vector<128x32xbf16>
      tpu.vector_store %arg6[%c0_15, %c0_16], %18 {strides = array<i32>} : memref<128x32xbf16, #tpu.memory_space<vmem>>, vector<128x32xbf16>,
    } else {
    }
    return
  }
  func.func @transform_0(%arg0: i32, %arg1: i32, %arg2: i32) -> (i32, i32) {
    %c0_i32 = arith.constant 0 : i32
    return %arg0, %arg2 : i32, i32
  }
  func.func @transform_1(%arg0: i32, %arg1: i32, %arg2: i32) -> (i32, i32) {
    %c0_i32 = arith.constant 0 : i32
    return %arg2, %arg1 : i32, i32
  }
  func.func @transform_2(%arg0: i32, %arg1: i32, %arg2: i32) -> (i32, i32) {
    %c0_i32 = arith.constant 0 : i32
    %c0_i32_0 = arith.constant 0 : i32
    return %c0_i32, %arg1 : i32, i32
  }
  func.func @transform_3(%arg0: i32, %arg1: i32, %arg2: i32) -> (i32, i32) {
    %c0_i32 = arith.constant 0 : i32
    return %arg0, %arg1 : i32, i32
  }
}

module attributes {stable_mosaic.version = 11 : i64} {
  func.func @_matmul_kernel(%arg0: i32, %arg1: i32, %arg2: i32, %arg3: memref<32x576xbf16, #tpu.memory_space<vmem>>, %arg4: memref<576x64xbf16, #tpu.memory_space<vmem>>, %arg5: memref<1x64xf32, #tpu.memory_space<vmem>>, %arg6: memref<32x64xbf16, #tpu.memory_space<vmem>>, %arg7: memref<32x64xf32, #tpu.memory_space<vmem>>) attributes {dimension_semantics = [#tpu.dimension_semantics<parallel>, #tpu.dimension_semantics<parallel>, #tpu.dimension_semantics<arbitrary>], iteration_bounds = array<i64: 1, 1, 1>, scalar_prefetch = 0 : i64, scratch_operands = 1 : i64, tpu.core_type = #tpu.core_type<tc>, window_params = [{transform_indices = @transform_0, window_bounds = array<i64: 32, 576>}, {transform_indices = @transform_1, window_bounds = array<i64: 576, 64>}, {transform_indices = @transform_2, window_bounds = array<i64: 1, 64>}, {transform_indices = @transform_3, window_bounds = array<i64: 32, 64>}]} {
    %c0_i32 = arith.constant 0 : i32
    %0 = arith.cmpi eq, %arg2, %c0_i32 : i32
    %1 = arith.extui %0 : i1 to i32
    %c0_i32_0 = arith.constant 0 : i32
    %2 = arith.cmpi ne, %1, %c0_i32_0 : i32
    scf.if %2 {
      %cst_10 = arith.constant 0.000000e+00 : f32
      %12 = vector.broadcast %cst_10 : f32 to vector<32x64xf32>
      %c0_11 = arith.constant 0 : index
      %c0_12 = arith.constant 0 : index
      %13 = vector.load %arg7[%c0_11, %c0_12] : memref<32x64xf32, #tpu.memory_space<vmem>>, vector<32x64xf32>
      tpu.vector_store %arg7[%c0_11, %c0_12], %12 {strides = array<i32>} : memref<32x64xf32, #tpu.memory_space<vmem>>, vector<32x64xf32>,
    } else {
    }
    %c0 = arith.constant 0 : index
    %c0_1 = arith.constant 0 : index
    %3 = vector.load %arg7[%c0, %c0_1] : memref<32x64xf32, #tpu.memory_space<vmem>>, vector<32x64xf32>
    %c0_2 = arith.constant 0 : index
    %c0_3 = arith.constant 0 : index
    %4 = vector.load %arg3[%c0_2, %c0_3] : memref<32x576xbf16, #tpu.memory_space<vmem>>, vector<32x576xbf16>
    %c0_4 = arith.constant 0 : index
    %c0_5 = arith.constant 0 : index
    %5 = vector.load %arg4[%c0_4, %c0_5] : memref<576x64xbf16, #tpu.memory_space<vmem>>, vector<576x64xbf16>
    %cst = arith.constant dense<0.000000e+00> : vector<32x64xf32>
    %6 = tpu.matmul %4, %5, %cst {dimension_numbers = #tpu.dot_dimension_numbers<[1], [0], [0], [1], [0, 0, 1, 1], [], []>} : vector<32x576xbf16>, vector<576x64xbf16>, vector<32x64xf32> -> vector<32x64xf32>
    %7 = arith.addf %3, %6 : vector<32x64xf32>
    %c0_6 = arith.constant 0 : index
    %c0_7 = arith.constant 0 : index
    %8 = vector.load %arg7[%c0_6, %c0_7] : memref<32x64xf32, #tpu.memory_space<vmem>>, vector<32x64xf32>
    tpu.vector_store %arg7[%c0_6, %c0_7], %7 {strides = array<i32>} : memref<32x64xf32, #tpu.memory_space<vmem>>, vector<32x64xf32>,
    %c0_i32_8 = arith.constant 0 : i32
    %9 = arith.cmpi eq, %arg2, %c0_i32_8 : i32
    %10 = arith.extui %9 : i1 to i32
    %c0_i32_9 = arith.constant 0 : i32
    %11 = arith.cmpi ne, %10, %c0_i32_9 : i32
    scf.if %11 {
      %c0_10 = arith.constant 0 : index
      %c0_11 = arith.constant 0 : index
      %12 = vector.load %arg7[%c0_10, %c0_11] : memref<32x64xf32, #tpu.memory_space<vmem>>, vector<32x64xf32>
      %c0_12 = arith.constant 0 : index
      %c0_13 = arith.constant 0 : index
      %13 = vector.load %arg5[%c0_12, %c0_13] : memref<1x64xf32, #tpu.memory_space<vmem>>, vector<1x64xf32>
      %14 = vector.broadcast %13 : vector<1x64xf32> to vector<32x64xf32>
      %15 = arith.addf %12, %14 : vector<32x64xf32>
      %cst_14 = arith.constant 0.000000e+00 : f32
      %16 = vector.broadcast %cst_14 : f32 to vector<32x64xf32>
      %17 = arith.maximumf %15, %16 : vector<32x64xf32>
      %18 = arith.truncf %17 : vector<32x64xf32> to vector<32x64xbf16>
      %c0_15 = arith.constant 0 : index
      %c0_16 = arith.constant 0 : index
      %19 = vector.load %arg6[%c0_15, %c0_16] : memref<32x64xbf16, #tpu.memory_space<vmem>>, vector<32x64xbf16>
      tpu.vector_store %arg6[%c0_15, %c0_16], %18 {strides = array<i32>} : memref<32x64xbf16, #tpu.memory_space<vmem>>, vector<32x64xbf16>,
    } else {
    }
    return
  }
  func.func @transform_0(%arg0: i32, %arg1: i32, %arg2: i32) -> (i32, i32) {
    %c0_i32 = arith.constant 0 : i32
    return %arg0, %arg2 : i32, i32
  }
  func.func @transform_1(%arg0: i32, %arg1: i32, %arg2: i32) -> (i32, i32) {
    %c0_i32 = arith.constant 0 : i32
    return %arg2, %arg1 : i32, i32
  }
  func.func @transform_2(%arg0: i32, %arg1: i32, %arg2: i32) -> (i32, i32) {
    %c0_i32 = arith.constant 0 : i32
    %c0_i32_0 = arith.constant 0 : i32
    return %c0_i32, %arg1 : i32, i32
  }
  func.func @transform_3(%arg0: i32, %arg1: i32, %arg2: i32) -> (i32, i32) {
    %c0_i32 = arith.constant 0 : i32
    return %arg0, %arg1 : i32, i32
  }
}

module attributes {stable_mosaic.version = 11 : i64} {
  func.func @_matmul_kernel(%arg0: i32, %arg1: i32, %arg2: i32, %arg3: memref<8x576xbf16, #tpu.memory_space<vmem>>, %arg4: memref<576x64xbf16, #tpu.memory_space<vmem>>, %arg5: memref<1x64xf32, #tpu.memory_space<vmem>>, %arg6: memref<8x64xbf16, #tpu.memory_space<vmem>>, %arg7: memref<8x64xf32, #tpu.memory_space<vmem>>) attributes {dimension_semantics = [#tpu.dimension_semantics<parallel>, #tpu.dimension_semantics<parallel>, #tpu.dimension_semantics<arbitrary>], iteration_bounds = array<i64: 1, 1, 1>, scalar_prefetch = 0 : i64, scratch_operands = 1 : i64, tpu.core_type = #tpu.core_type<tc>, window_params = [{transform_indices = @transform_0, window_bounds = array<i64: 8, 576>}, {transform_indices = @transform_1, window_bounds = array<i64: 576, 64>}, {transform_indices = @transform_2, window_bounds = array<i64: 1, 64>}, {transform_indices = @transform_3, window_bounds = array<i64: 8, 64>}]} {
    %c0_i32 = arith.constant 0 : i32
    %0 = arith.cmpi eq, %arg2, %c0_i32 : i32
    %1 = arith.extui %0 : i1 to i32
    %c0_i32_0 = arith.constant 0 : i32
    %2 = arith.cmpi ne, %1, %c0_i32_0 : i32
    scf.if %2 {
      %cst_10 = arith.constant 0.000000e+00 : f32
      %12 = vector.broadcast %cst_10 : f32 to vector<8x64xf32>
      %c0_11 = arith.constant 0 : index
      %c0_12 = arith.constant 0 : index
      %13 = vector.load %arg7[%c0_11, %c0_12] : memref<8x64xf32, #tpu.memory_space<vmem>>, vector<8x64xf32>
      tpu.vector_store %arg7[%c0_11, %c0_12], %12 {strides = array<i32>} : memref<8x64xf32, #tpu.memory_space<vmem>>, vector<8x64xf32>,
    } else {
    }
    %c0 = arith.constant 0 : index
    %c0_1 = arith.constant 0 : index
    %3 = vector.load %arg7[%c0, %c0_1] : memref<8x64xf32, #tpu.memory_space<vmem>>, vector<8x64xf32>
    %c0_2 = arith.constant 0 : index
    %c0_3 = arith.constant 0 : index
    %4 = vector.load %arg3[%c0_2, %c0_3] : memref<8x576xbf16, #tpu.memory_space<vmem>>, vector<8x576xbf16>
    %c0_4 = arith.constant 0 : index
    %c0_5 = arith.constant 0 : index
    %5 = vector.load %arg4[%c0_4, %c0_5] : memref<576x64xbf16, #tpu.memory_space<vmem>>, vector<576x64xbf16>
    %cst = arith.constant dense<0.000000e+00> : vector<8x64xf32>
    %6 = tpu.matmul %4, %5, %cst {dimension_numbers = #tpu.dot_dimension_numbers<[1], [0], [0], [1], [0, 0, 1, 1], [], []>} : vector<8x576xbf16>, vector<576x64xbf16>, vector<8x64xf32> -> vector<8x64xf32>
    %7 = arith.addf %3, %6 : vector<8x64xf32>
    %c0_6 = arith.constant 0 : index
    %c0_7 = arith.constant 0 : index
    %8 = vector.load %arg7[%c0_6, %c0_7] : memref<8x64xf32, #tpu.memory_space<vmem>>, vector<8x64xf32>
    tpu.vector_store %arg7[%c0_6, %c0_7], %7 {strides = array<i32>} : memref<8x64xf32, #tpu.memory_space<vmem>>, vector<8x64xf32>,
    %c0_i32_8 = arith.constant 0 : i32
    %9 = arith.cmpi eq, %arg2, %c0_i32_8 : i32
    %10 = arith.extui %9 : i1 to i32
    %c0_i32_9 = arith.constant 0 : i32
    %11 = arith.cmpi ne, %10, %c0_i32_9 : i32
    scf.if %11 {
      %c0_10 = arith.constant 0 : index
      %c0_11 = arith.constant 0 : index
      %12 = vector.load %arg7[%c0_10, %c0_11] : memref<8x64xf32, #tpu.memory_space<vmem>>, vector<8x64xf32>
      %c0_12 = arith.constant 0 : index
      %c0_13 = arith.constant 0 : index
      %13 = vector.load %arg5[%c0_12, %c0_13] : memref<1x64xf32, #tpu.memory_space<vmem>>, vector<1x64xf32>
      %14 = vector.broadcast %13 : vector<1x64xf32> to vector<8x64xf32>
      %15 = arith.addf %12, %14 : vector<8x64xf32>
      %cst_14 = arith.constant 0.000000e+00 : f32
      %16 = vector.broadcast %cst_14 : f32 to vector<8x64xf32>
      %17 = arith.maximumf %15, %16 : vector<8x64xf32>
      %18 = arith.truncf %17 : vector<8x64xf32> to vector<8x64xbf16>
      %c0_15 = arith.constant 0 : index
      %c0_16 = arith.constant 0 : index
      %19 = vector.load %arg6[%c0_15, %c0_16] : memref<8x64xbf16, #tpu.memory_space<vmem>>, vector<8x64xbf16>
      tpu.vector_store %arg6[%c0_15, %c0_16], %18 {strides = array<i32>} : memref<8x64xbf16, #tpu.memory_space<vmem>>, vector<8x64xbf16>,
    } else {
    }
    return
  }
  func.func @transform_0(%arg0: i32, %arg1: i32, %arg2: i32) -> (i32, i32) {
    %c0_i32 = arith.constant 0 : i32
    return %arg0, %arg2 : i32, i32
  }
  func.func @transform_1(%arg0: i32, %arg1: i32, %arg2: i32) -> (i32, i32) {
    %c0_i32 = arith.constant 0 : i32
    return %arg2, %arg1 : i32, i32
  }
  func.func @transform_2(%arg0: i32, %arg1: i32, %arg2: i32) -> (i32, i32) {
    %c0_i32 = arith.constant 0 : i32
    %c0_i32_0 = arith.constant 0 : i32
    return %c0_i32, %arg1 : i32, i32
  }
  func.func @transform_3(%arg0: i32, %arg1: i32, %arg2: i32) -> (i32, i32) {
    %c0_i32 = arith.constant 0 : i32
    return %arg0, %arg1 : i32, i32
  }
}

module attributes {stable_mosaic.version = 11 : i64} {
  func.func @_matmul_kernel(%arg0: i32, %arg1: i32, %arg2: i32, %arg3: memref<2x576xbf16, #tpu.memory_space<vmem>>, %arg4: memref<576x128xbf16, #tpu.memory_space<vmem>>, %arg5: memref<1x128xf32, #tpu.memory_space<vmem>>, %arg6: memref<2x128xbf16, #tpu.memory_space<vmem>>, %arg7: memref<2x128xf32, #tpu.memory_space<vmem>>) attributes {dimension_semantics = [#tpu.dimension_semantics<parallel>, #tpu.dimension_semantics<parallel>, #tpu.dimension_semantics<arbitrary>], iteration_bounds = array<i64: 1, 1, 1>, scalar_prefetch = 0 : i64, scratch_operands = 1 : i64, tpu.core_type = #tpu.core_type<tc>, window_params = [{transform_indices = @transform_0, window_bounds = array<i64: 2, 576>}, {transform_indices = @transform_1, window_bounds = array<i64: 576, 128>}, {transform_indices = @transform_2, window_bounds = array<i64: 1, 128>}, {transform_indices = @transform_3, window_bounds = array<i64: 2, 128>}]} {
    %c0_i32 = arith.constant 0 : i32
    %0 = arith.cmpi eq, %arg2, %c0_i32 : i32
    %1 = arith.extui %0 : i1 to i32
    %c0_i32_0 = arith.constant 0 : i32
    %2 = arith.cmpi ne, %1, %c0_i32_0 : i32
    scf.if %2 {
      %cst_10 = arith.constant 0.000000e+00 : f32
      %12 = vector.broadcast %cst_10 : f32 to vector<2x128xf32>
      %c0_11 = arith.constant 0 : index
      %c0_12 = arith.constant 0 : index
      %13 = vector.load %arg7[%c0_11, %c0_12] : memref<2x128xf32, #tpu.memory_space<vmem>>, vector<2x128xf32>
      tpu.vector_store %arg7[%c0_11, %c0_12], %12 {strides = array<i32>} : memref<2x128xf32, #tpu.memory_space<vmem>>, vector<2x128xf32>,
    } else {
    }
    %c0 = arith.constant 0 : index
    %c0_1 = arith.constant 0 : index
    %3 = vector.load %arg7[%c0, %c0_1] : memref<2x128xf32, #tpu.memory_space<vmem>>, vector<2x128xf32>
    %c0_2 = arith.constant 0 : index
    %c0_3 = arith.constant 0 : index
    %4 = vector.load %arg3[%c0_2, %c0_3] : memref<2x576xbf16, #tpu.memory_space<vmem>>, vector<2x576xbf16>
    %c0_4 = arith.constant 0 : index
    %c0_5 = arith.constant 0 : index
    %5 = vector.load %arg4[%c0_4, %c0_5] : memref<576x128xbf16, #tpu.memory_space<vmem>>, vector<576x128xbf16>
    %cst = arith.constant dense<0.000000e+00> : vector<2x128xf32>
    %6 = tpu.matmul %4, %5, %cst {dimension_numbers = #tpu.dot_dimension_numbers<[1], [0], [0], [1], [0, 0, 1, 1], [], []>} : vector<2x576xbf16>, vector<576x128xbf16>, vector<2x128xf32> -> vector<2x128xf32>
    %7 = arith.addf %3, %6 : vector<2x128xf32>
    %c0_6 = arith.constant 0 : index
    %c0_7 = arith.constant 0 : index
    %8 = vector.load %arg7[%c0_6, %c0_7] : memref<2x128xf32, #tpu.memory_space<vmem>>, vector<2x128xf32>
    tpu.vector_store %arg7[%c0_6, %c0_7], %7 {strides = array<i32>} : memref<2x128xf32, #tpu.memory_space<vmem>>, vector<2x128xf32>,
    %c0_i32_8 = arith.constant 0 : i32
    %9 = arith.cmpi eq, %arg2, %c0_i32_8 : i32
    %10 = arith.extui %9 : i1 to i32
    %c0_i32_9 = arith.constant 0 : i32
    %11 = arith.cmpi ne, %10, %c0_i32_9 : i32
    scf.if %11 {
      %c0_10 = arith.constant 0 : index
      %c0_11 = arith.constant 0 : index
      %12 = vector.load %arg7[%c0_10, %c0_11] : memref<2x128xf32, #tpu.memory_space<vmem>>, vector<2x128xf32>
      %c0_12 = arith.constant 0 : index
      %c0_13 = arith.constant 0 : index
      %13 = vector.load %arg5[%c0_12, %c0_13] : memref<1x128xf32, #tpu.memory_space<vmem>>, vector<1x128xf32>
      %14 = vector.broadcast %13 : vector<1x128xf32> to vector<2x128xf32>
      %15 = arith.addf %12, %14 : vector<2x128xf32>
      %cst_14 = arith.constant 0.000000e+00 : f32
      %16 = vector.broadcast %cst_14 : f32 to vector<2x128xf32>
      %17 = arith.maximumf %15, %16 : vector<2x128xf32>
      %18 = arith.truncf %17 : vector<2x128xf32> to vector<2x128xbf16>
      %c0_15 = arith.constant 0 : index
      %c0_16 = arith.constant 0 : index
      %19 = vector.load %arg6[%c0_15, %c0_16] : memref<2x128xbf16, #tpu.memory_space<vmem>>, vector<2x128xbf16>
      tpu.vector_store %arg6[%c0_15, %c0_16], %18 {strides = array<i32>} : memref<2x128xbf16, #tpu.memory_space<vmem>>, vector<2x128xbf16>,
    } else {
    }
    return
  }
  func.func @transform_0(%arg0: i32, %arg1: i32, %arg2: i32) -> (i32, i32) {
    %c0_i32 = arith.constant 0 : i32
    return %arg0, %arg2 : i32, i32
  }
  func.func @transform_1(%arg0: i32, %arg1: i32, %arg2: i32) -> (i32, i32) {
    %c0_i32 = arith.constant 0 : i32
    return %arg2, %arg1 : i32, i32
  }
  func.func @transform_2(%arg0: i32, %arg1: i32, %arg2: i32) -> (i32, i32) {
    %c0_i32 = arith.constant 0 : i32
    %c0_i32_0 = arith.constant 0 : i32
    return %c0_i32, %arg1 : i32, i32
  }
  func.func @transform_3(%arg0: i32, %arg1: i32, %arg2: i32) -> (i32, i32) {
    %c0_i32 = arith.constant 0 : i32
    return %arg0, %arg1 : i32, i32
  }
}

module attributes {stable_mosaic.version = 11 : i64} {
  func.func @_matmul_kernel(%arg0: i32, %arg1: i32, %arg2: i32, %arg3: memref<2x1152xbf16, #tpu.memory_space<vmem>>, %arg4: memref<1152x128xbf16, #tpu.memory_space<vmem>>, %arg5: memref<1x128xf32, #tpu.memory_space<vmem>>, %arg6: memref<2x128xbf16, #tpu.memory_space<vmem>>, %arg7: memref<2x128xf32, #tpu.memory_space<vmem>>) attributes {dimension_semantics = [#tpu.dimension_semantics<parallel>, #tpu.dimension_semantics<parallel>, #tpu.dimension_semantics<arbitrary>], iteration_bounds = array<i64: 1, 1, 1>, scalar_prefetch = 0 : i64, scratch_operands = 1 : i64, tpu.core_type = #tpu.core_type<tc>, window_params = [{transform_indices = @transform_0, window_bounds = array<i64: 2, 1152>}, {transform_indices = @transform_1, window_bounds = array<i64: 1152, 128>}, {transform_indices = @transform_2, window_bounds = array<i64: 1, 128>}, {transform_indices = @transform_3, window_bounds = array<i64: 2, 128>}]} {
    %c0_i32 = arith.constant 0 : i32
    %0 = arith.cmpi eq, %arg2, %c0_i32 : i32
    %1 = arith.extui %0 : i1 to i32
    %c0_i32_0 = arith.constant 0 : i32
    %2 = arith.cmpi ne, %1, %c0_i32_0 : i32
    scf.if %2 {
      %cst_10 = arith.constant 0.000000e+00 : f32
      %12 = vector.broadcast %cst_10 : f32 to vector<2x128xf32>
      %c0_11 = arith.constant 0 : index
      %c0_12 = arith.constant 0 : index
      %13 = vector.load %arg7[%c0_11, %c0_12] : memref<2x128xf32, #tpu.memory_space<vmem>>, vector<2x128xf32>
      tpu.vector_store %arg7[%c0_11, %c0_12], %12 {strides = array<i32>} : memref<2x128xf32, #tpu.memory_space<vmem>>, vector<2x128xf32>,
    } else {
    }
    %c0 = arith.constant 0 : index
    %c0_1 = arith.constant 0 : index
    %3 = vector.load %arg7[%c0, %c0_1] : memref<2x128xf32, #tpu.memory_space<vmem>>, vector<2x128xf32>
    %c0_2 = arith.constant 0 : index
    %c0_3 = arith.constant 0 : index
    %4 = vector.load %arg3[%c0_2, %c0_3] : memref<2x1152xbf16, #tpu.memory_space<vmem>>, vector<2x1152xbf16>
    %c0_4 = arith.constant 0 : index
    %c0_5 = arith.constant 0 : index
    %5 = vector.load %arg4[%c0_4, %c0_5] : memref<1152x128xbf16, #tpu.memory_space<vmem>>, vector<1152x128xbf16>
    %cst = arith.constant dense<0.000000e+00> : vector<2x128xf32>
    %6 = tpu.matmul %4, %5, %cst {dimension_numbers = #tpu.dot_dimension_numbers<[1], [0], [0], [1], [0, 0, 1, 1], [], []>} : vector<2x1152xbf16>, vector<1152x128xbf16>, vector<2x128xf32> -> vector<2x128xf32>
    %7 = arith.addf %3, %6 : vector<2x128xf32>
    %c0_6 = arith.constant 0 : index
    %c0_7 = arith.constant 0 : index
    %8 = vector.load %arg7[%c0_6, %c0_7] : memref<2x128xf32, #tpu.memory_space<vmem>>, vector<2x128xf32>
    tpu.vector_store %arg7[%c0_6, %c0_7], %7 {strides = array<i32>} : memref<2x128xf32, #tpu.memory_space<vmem>>, vector<2x128xf32>,
    %c0_i32_8 = arith.constant 0 : i32
    %9 = arith.cmpi eq, %arg2, %c0_i32_8 : i32
    %10 = arith.extui %9 : i1 to i32
    %c0_i32_9 = arith.constant 0 : i32
    %11 = arith.cmpi ne, %10, %c0_i32_9 : i32
    scf.if %11 {
      %c0_10 = arith.constant 0 : index
      %c0_11 = arith.constant 0 : index
      %12 = vector.load %arg7[%c0_10, %c0_11] : memref<2x128xf32, #tpu.memory_space<vmem>>, vector<2x128xf32>
      %c0_12 = arith.constant 0 : index
      %c0_13 = arith.constant 0 : index
      %13 = vector.load %arg5[%c0_12, %c0_13] : memref<1x128xf32, #tpu.memory_space<vmem>>, vector<1x128xf32>
      %14 = vector.broadcast %13 : vector<1x128xf32> to vector<2x128xf32>
      %15 = arith.addf %12, %14 : vector<2x128xf32>
      %cst_14 = arith.constant 0.000000e+00 : f32
      %16 = vector.broadcast %cst_14 : f32 to vector<2x128xf32>
      %17 = arith.maximumf %15, %16 : vector<2x128xf32>
      %18 = arith.truncf %17 : vector<2x128xf32> to vector<2x128xbf16>
      %c0_15 = arith.constant 0 : index
      %c0_16 = arith.constant 0 : index
      %19 = vector.load %arg6[%c0_15, %c0_16] : memref<2x128xbf16, #tpu.memory_space<vmem>>, vector<2x128xbf16>
      tpu.vector_store %arg6[%c0_15, %c0_16], %18 {strides = array<i32>} : memref<2x128xbf16, #tpu.memory_space<vmem>>, vector<2x128xbf16>,
    } else {
    }
    return
  }
  func.func @transform_0(%arg0: i32, %arg1: i32, %arg2: i32) -> (i32, i32) {
    %c0_i32 = arith.constant 0 : i32
    return %arg0, %arg2 : i32, i32
  }
  func.func @transform_1(%arg0: i32, %arg1: i32, %arg2: i32) -> (i32, i32) {
    %c0_i32 = arith.constant 0 : i32
    return %arg2, %arg1 : i32, i32
  }
  func.func @transform_2(%arg0: i32, %arg1: i32, %arg2: i32) -> (i32, i32) {
    %c0_i32 = arith.constant 0 : i32
    %c0_i32_0 = arith.constant 0 : i32
    return %c0_i32, %arg1 : i32, i32
  }
  func.func @transform_3(%arg0: i32, %arg1: i32, %arg2: i32) -> (i32, i32) {
    %c0_i32 = arith.constant 0 : i32
    return %arg0, %arg1 : i32, i32
  }
}

module attributes {stable_mosaic.version = 11 : i64} {
  func.func @_matmul_kernel(%arg0: i32, %arg1: i32, %arg2: i32, %arg3: memref<2x128xbf16, #tpu.memory_space<vmem>>, %arg4: memref<128x256xbf16, #tpu.memory_space<vmem>>, %arg5: memref<1x256xf32, #tpu.memory_space<vmem>>, %arg6: memref<2x256xbf16, #tpu.memory_space<vmem>>, %arg7: memref<2x256xf32, #tpu.memory_space<vmem>>) attributes {dimension_semantics = [#tpu.dimension_semantics<parallel>, #tpu.dimension_semantics<parallel>, #tpu.dimension_semantics<arbitrary>], iteration_bounds = array<i64: 1, 2, 1>, scalar_prefetch = 0 : i64, scratch_operands = 1 : i64, tpu.core_type = #tpu.core_type<tc>, window_params = [{transform_indices = @transform_0, window_bounds = array<i64: 2, 128>}, {transform_indices = @transform_1, window_bounds = array<i64: 128, 256>}, {transform_indices = @transform_2, window_bounds = array<i64: 1, 256>}, {transform_indices = @transform_3, window_bounds = array<i64: 2, 256>}]} {
    %c0_i32 = arith.constant 0 : i32
    %0 = arith.cmpi eq, %arg2, %c0_i32 : i32
    %1 = arith.extui %0 : i1 to i32
    %c0_i32_0 = arith.constant 0 : i32
    %2 = arith.cmpi ne, %1, %c0_i32_0 : i32
    scf.if %2 {
      %cst_10 = arith.constant 0.000000e+00 : f32
      %12 = vector.broadcast %cst_10 : f32 to vector<2x256xf32>
      %c0_11 = arith.constant 0 : index
      %c0_12 = arith.constant 0 : index
      %13 = vector.load %arg7[%c0_11, %c0_12] : memref<2x256xf32, #tpu.memory_space<vmem>>, vector<2x256xf32>
      tpu.vector_store %arg7[%c0_11, %c0_12], %12 {strides = array<i32>} : memref<2x256xf32, #tpu.memory_space<vmem>>, vector<2x256xf32>,
    } else {
    }
    %c0 = arith.constant 0 : index
    %c0_1 = arith.constant 0 : index
    %3 = vector.load %arg7[%c0, %c0_1] : memref<2x256xf32, #tpu.memory_space<vmem>>, vector<2x256xf32>
    %c0_2 = arith.constant 0 : index
    %c0_3 = arith.constant 0 : index
    %4 = vector.load %arg3[%c0_2, %c0_3] : memref<2x128xbf16, #tpu.memory_space<vmem>>, vector<2x128xbf16>
    %c0_4 = arith.constant 0 : index
    %c0_5 = arith.constant 0 : index
    %5 = vector.load %arg4[%c0_4, %c0_5] : memref<128x256xbf16, #tpu.memory_space<vmem>>, vector<128x256xbf16>
    %cst = arith.constant dense<0.000000e+00> : vector<2x256xf32>
    %6 = tpu.matmul %4, %5, %cst {dimension_numbers = #tpu.dot_dimension_numbers<[1], [0], [0], [1], [0, 0, 1, 1], [], []>} : vector<2x128xbf16>, vector<128x256xbf16>, vector<2x256xf32> -> vector<2x256xf32>
    %7 = arith.addf %3, %6 : vector<2x256xf32>
    %c0_6 = arith.constant 0 : index
    %c0_7 = arith.constant 0 : index
    %8 = vector.load %arg7[%c0_6, %c0_7] : memref<2x256xf32, #tpu.memory_space<vmem>>, vector<2x256xf32>
    tpu.vector_store %arg7[%c0_6, %c0_7], %7 {strides = array<i32>} : memref<2x256xf32, #tpu.memory_space<vmem>>, vector<2x256xf32>,
    %c0_i32_8 = arith.constant 0 : i32
    %9 = arith.cmpi eq, %arg2, %c0_i32_8 : i32
    %10 = arith.extui %9 : i1 to i32
    %c0_i32_9 = arith.constant 0 : i32
    %11 = arith.cmpi ne, %10, %c0_i32_9 : i32
    scf.if %11 {
      %c0_10 = arith.constant 0 : index
      %c0_11 = arith.constant 0 : index
      %12 = vector.load %arg7[%c0_10, %c0_11] : memref<2x256xf32, #tpu.memory_space<vmem>>, vector<2x256xf32>
      %c0_12 = arith.constant 0 : index
      %c0_13 = arith.constant 0 : index
      %13 = vector.load %arg5[%c0_12, %c0_13] : memref<1x256xf32, #tpu.memory_space<vmem>>, vector<1x256xf32>
      %14 = vector.broadcast %13 : vector<1x256xf32> to vector<2x256xf32>
      %15 = arith.addf %12, %14 : vector<2x256xf32>
      %cst_14 = arith.constant 0.000000e+00 : f32
      %16 = vector.broadcast %cst_14 : f32 to vector<2x256xf32>
      %17 = arith.maximumf %15, %16 : vector<2x256xf32>
      %18 = arith.truncf %17 : vector<2x256xf32> to vector<2x256xbf16>
      %c0_15 = arith.constant 0 : index
      %c0_16 = arith.constant 0 : index
      %19 = vector.load %arg6[%c0_15, %c0_16] : memref<2x256xbf16, #tpu.memory_space<vmem>>, vector<2x256xbf16>
      tpu.vector_store %arg6[%c0_15, %c0_16], %18 {strides = array<i32>} : memref<2x256xbf16, #tpu.memory_space<vmem>>, vector<2x256xbf16>,
    } else {
    }
    return
  }
  func.func @transform_0(%arg0: i32, %arg1: i32, %arg2: i32) -> (i32, i32) {
    %c0_i32 = arith.constant 0 : i32
    return %arg0, %arg2 : i32, i32
  }
  func.func @transform_1(%arg0: i32, %arg1: i32, %arg2: i32) -> (i32, i32) {
    %c0_i32 = arith.constant 0 : i32
    return %arg2, %arg1 : i32, i32
  }
  func.func @transform_2(%arg0: i32, %arg1: i32, %arg2: i32) -> (i32, i32) {
    %c0_i32 = arith.constant 0 : i32
    %c0_i32_0 = arith.constant 0 : i32
    return %c0_i32, %arg1 : i32, i32
  }
  func.func @transform_3(%arg0: i32, %arg1: i32, %arg2: i32) -> (i32, i32) {
    %c0_i32 = arith.constant 0 : i32
    return %arg0, %arg1 : i32, i32
  }
}

module attributes {stable_mosaic.version = 11 : i64} {
  func.func @_matmul_kernel(%arg0: i32, %arg1: i32, %arg2: i32, %arg3: memref<2x512xbf16, #tpu.memory_space<vmem>>, %arg4: memref<512x100xbf16, #tpu.memory_space<vmem>>, %arg5: memref<1x100xf32, #tpu.memory_space<vmem>>, %arg6: memref<2x100xf32, #tpu.memory_space<vmem>>, %arg7: memref<2x100xf32, #tpu.memory_space<vmem>>) attributes {dimension_semantics = [#tpu.dimension_semantics<parallel>, #tpu.dimension_semantics<parallel>, #tpu.dimension_semantics<arbitrary>], iteration_bounds = array<i64: 1, 1, 1>, scalar_prefetch = 0 : i64, scratch_operands = 1 : i64, tpu.core_type = #tpu.core_type<tc>, window_params = [{transform_indices = @transform_0, window_bounds = array<i64: 2, 512>}, {transform_indices = @transform_1, window_bounds = array<i64: 512, 100>}, {transform_indices = @transform_2, window_bounds = array<i64: 1, 100>}, {transform_indices = @transform_3, window_bounds = array<i64: 2, 100>}]} {
    %c0_i32 = arith.constant 0 : i32
    %0 = arith.cmpi eq, %arg2, %c0_i32 : i32
    %1 = arith.extui %0 : i1 to i32
    %c0_i32_0 = arith.constant 0 : i32
    %2 = arith.cmpi ne, %1, %c0_i32_0 : i32
    scf.if %2 {
      %cst_10 = arith.constant 0.000000e+00 : f32
      %12 = vector.broadcast %cst_10 : f32 to vector<2x100xf32>
      %c0_11 = arith.constant 0 : index
      %c0_12 = arith.constant 0 : index
      %13 = vector.load %arg7[%c0_11, %c0_12] : memref<2x100xf32, #tpu.memory_space<vmem>>, vector<2x100xf32>
      tpu.vector_store %arg7[%c0_11, %c0_12], %12 {strides = array<i32>} : memref<2x100xf32, #tpu.memory_space<vmem>>, vector<2x100xf32>,
    } else {
    }
    %c0 = arith.constant 0 : index
    %c0_1 = arith.constant 0 : index
    %3 = vector.load %arg7[%c0, %c0_1] : memref<2x100xf32, #tpu.memory_space<vmem>>, vector<2x100xf32>
    %c0_2 = arith.constant 0 : index
    %c0_3 = arith.constant 0 : index
    %4 = vector.load %arg3[%c0_2, %c0_3] : memref<2x512xbf16, #tpu.memory_space<vmem>>, vector<2x512xbf16>
    %c0_4 = arith.constant 0 : index
    %c0_5 = arith.constant 0 : index
    %5 = vector.load %arg4[%c0_4, %c0_5] : memref<512x100xbf16, #tpu.memory_space<vmem>>, vector<512x100xbf16>
    %cst = arith.constant dense<0.000000e+00> : vector<2x100xf32>
    %6 = tpu.matmul %4, %5, %cst {dimension_numbers = #tpu.dot_dimension_numbers<[1], [0], [0], [1], [0, 0, 1, 1], [], []>} : vector<2x512xbf16>, vector<512x100xbf16>, vector<2x100xf32> -> vector<2x100xf32>
    %7 = arith.addf %3, %6 : vector<2x100xf32>
    %c0_6 = arith.constant 0 : index
    %c0_7 = arith.constant 0 : index
    %8 = vector.load %arg7[%c0_6, %c0_7] : memref<2x100xf32, #tpu.memory_space<vmem>>, vector<2x100xf32>
    tpu.vector_store %arg7[%c0_6, %c0_7], %7 {strides = array<i32>} : memref<2x100xf32, #tpu.memory_space<vmem>>, vector<2x100xf32>,
    %c0_i32_8 = arith.constant 0 : i32
    %9 = arith.cmpi eq, %arg2, %c0_i32_8 : i32
    %10 = arith.extui %9 : i1 to i32
    %c0_i32_9 = arith.constant 0 : i32
    %11 = arith.cmpi ne, %10, %c0_i32_9 : i32
    scf.if %11 {
      %c0_10 = arith.constant 0 : index
      %c0_11 = arith.constant 0 : index
      %12 = vector.load %arg7[%c0_10, %c0_11] : memref<2x100xf32, #tpu.memory_space<vmem>>, vector<2x100xf32>
      %c0_12 = arith.constant 0 : index
      %c0_13 = arith.constant 0 : index
      %13 = vector.load %arg5[%c0_12, %c0_13] : memref<1x100xf32, #tpu.memory_space<vmem>>, vector<1x100xf32>
      %14 = vector.broadcast %13 : vector<1x100xf32> to vector<2x100xf32>
      %15 = arith.addf %12, %14 : vector<2x100xf32>
      %16 = arith.negf %15 : vector<2x100xf32>
      %17 = math.exp %16 : vector<2x100xf32>
      %cst_14 = arith.constant 1.000000e+00 : f32
      %18 = vector.broadcast %cst_14 : f32 to vector<2x100xf32>
      %19 = arith.addf %18, %17 : vector<2x100xf32>
      %20 = arith.divf %18, %19 : vector<2x100xf32>
      %c0_15 = arith.constant 0 : index
      %c0_16 = arith.constant 0 : index
      %21 = vector.load %arg6[%c0_15, %c0_16] : memref<2x100xf32, #tpu.memory_space<vmem>>, vector<2x100xf32>
      tpu.vector_store %arg6[%c0_15, %c0_16], %20 {strides = array<i32>} : memref<2x100xf32, #tpu.memory_space<vmem>>, vector<2x100xf32>,
    } else {
    }
    return
  }
  func.func @transform_0(%arg0: i32, %arg1: i32, %arg2: i32) -> (i32, i32) {
    %c0_i32 = arith.constant 0 : i32
    return %arg0, %arg2 : i32, i32
  }
  func.func @transform_1(%arg0: i32, %arg1: i32, %arg2: i32) -> (i32, i32) {
    %c0_i32 = arith.constant 0 : i32
    return %arg2, %arg1 : i32, i32
  }
  func.func @transform_2(%arg0: i32, %arg1: i32, %arg2: i32) -> (i32, i32) {
    %c0_i32 = arith.constant 0 : i32
    %c0_i32_0 = arith.constant 0 : i32
    return %c0_i32, %arg1 : i32, i32
  }
  func.func @transform_3(%arg0: i32, %arg1: i32, %arg2: i32) -> (i32, i32) {
    %c0_i32 = arith.constant 0 : i32
    return %arg0, %arg1 : i32, i32
  }
}

</mosaic_0001>

<llo_original>
// kernel: _lambda_.15
$region0: #{_lambda_.15}
  #allocation0 [shape = 'u32[]', space=smem, size = 0x4, offset = 0x4, fixed_abs, tag = 'smem constant byte address 0x4 - core index']
  #allocation1 [shape = 'u32[72,128]{1,0:T(1,128)}', space=vmem, size = 0x9000, scoped, tag = 'internal scratch']
  #allocation2 [shape = 'f32[128,32]{1,0:T(8,128)}', space=vmem, size = 0x10000, scoped, tag = 'scratch operand']
  %s0 = inlined_call_operand.vmem [shape: bf16[128,27], index: 0, kind: input, shape index: {}]
  %s1 = inlined_call_operand.vmem [shape: bf16[27,32], index: 1, kind: input, shape index: {}]
  %s2 = inlined_call_operand.vmem [shape: f32[1,32], index: 2, kind: input, shape index: {}]
  %s3 = inlined_call_operand.vmem [shape: bf16[128,32], index: 3, kind: output, shape index: {}]
  %s4 = sld [smem:[#allocation0]]
  $region30: #{_lambda_.15} parent=0
    _
  %s6 = ssub.s32 1, %s4
  %s7 = scalar_select 0, %s6, %s4
  // Predicated region
  $region2: #{_lambda_.15} parent=0 // pred_check
    _
  $region3: #{_lambda_.15} parent=0 // pred_check_branch
    %9 = sbr.rel (0) target = $region5
  $region4: #{_lambda_.15} parent=0 // pred_region
    _
  $region5: #{_lambda_.15} parent=0 // pred_fallthru
    _
  // Predicated region
  $region6: #{_lambda_.15} parent=0 // pred_check
    _
  $region7: #{_lambda_.15} parent=0 // pred_check_branch
    %11 = sbr.rel (0) target = $region9
  $region8: #{_lambda_.15} parent=0 // pred_region
    _
  $region9: #{_lambda_.15} parent=0 // pred_fallthru
    _
  // Predicated region
  $region10: #{_lambda_.15} parent=0 // pred_check
    _
  $region11: #{_lambda_.15} parent=0 // pred_check_branch
    %13 = sbr.rel (0) target = $region13
  $region12: #{_lambda_.15} parent=0 // pred_region
    _
  $region13: #{_lambda_.15} parent=0 // pred_fallthru
    _
  %p15 = scmp.eq.s32.totalorder 0, 0
  // Predicated region
  $region14: #{_lambda_.15} parent=0 // pred_check
    %p16 = pneg %p15
  $region15: #{_lambda_.15} parent=0 // pred_check_branch
    %18 = sbr.rel (%p16) target = $region17
  $region16: #{_lambda_.15} parent=0 // pred_region
    %vm19 = vcmask 261120
    %20 = vst.msk [vmem:[#allocation2] sm:$0xff] %vm19, 0.0
    %21 = vst.msk [vmem:[#allocation2 + $0x8] sm:$0xff] %vm19, 0.0
    %22 = vst.msk [vmem:[#allocation2 + $0x10] sm:$0xff] %vm19, 0.0
    %23 = vst.msk [vmem:[#allocation2 + $0x18] sm:$0xff] %vm19, 0.0
    %24 = vst.msk [vmem:[#allocation2 + $0x20] sm:$0xff] %vm19, 0.0
    %25 = vst.msk [vmem:[#allocation2 + $0x28] sm:$0xff] %vm19, 0.0
    %26 = vst.msk [vmem:[#allocation2 + $0x30] sm:$0xff] %vm19, 0.0
    %27 = vst.msk [vmem:[#allocation2 + $0x38] sm:$0xff] %vm19, 0.0
    %28 = vst.msk [vmem:[#allocation2 + $0x40] sm:$0xff] %vm19, 0.0
    %29 = vst.msk [vmem:[#allocation2 + $0x48] sm:$0xff] %vm19, 0.0
    %30 = vst.msk [vmem:[#allocation2 + $0x50] sm:$0xff] %vm19, 0.0
    %31 = vst.msk [vmem:[#allocation2 + $0x58] sm:$0xff] %vm19, 0.0
    %32 = vst.msk [vmem:[#allocation2 + $0x60] sm:$0xff] %vm19, 0.0
    %33 = vst.msk [vmem:[#allocation2 + $0x68] sm:$0xff] %vm19, 0.0
    %34 = vst.msk [vmem:[#allocation2 + $0x70] sm:$0xff] %vm19, 0.0
    %35 = vst.msk [vmem:[#allocation2 + $0x78] sm:$0xff] %vm19, 0.0
  $region17: #{_lambda_.15} parent=0 // pred_fallthru
    _
  %v36 = vld [vmem:[#allocation2] sm:$0xff]
  %v37 = vld [vmem:[#allocation2 + $0x8] sm:$0xff]
  %v38 = vld [vmem:[#allocation2 + $0x10] sm:$0xff]
  %v39 = vld [vmem:[#allocation2 + $0x18] sm:$0xff]
  %v40 = vld [vmem:[#allocation2 + $0x20] sm:$0xff]
  %v41 = vld [vmem:[#allocation2 + $0x28] sm:$0xff]
  %v42 = vld [vmem:[#allocation2 + $0x30] sm:$0xff]
  %v43 = vld [vmem:[#allocation2 + $0x38] sm:$0xff]
  %v44 = vld [vmem:[#allocation2 + $0x40] sm:$0xff]
  %v45 = vld [vmem:[#allocation2 + $0x48] sm:$0xff]
  %v46 = vld [vmem:[#allocation2 + $0x50] sm:$0xff]
  %v47 = vld [vmem:[#allocation2 + $0x58] sm:$0xff]
  %v48 = vld [vmem:[#allocation2 + $0x60] sm:$0xff]
  %v49 = vld [vmem:[#allocation2 + $0x68] sm:$0xff]
  %v50 = vld [vmem:[#allocation2 + $0x70] sm:$0xff]
  %v51 = vld [vmem:[#allocation2 + $0x78] sm:$0xff]
  %v52 = vld [vmem:[%s0] sm:$0xf]
  %v53 = vld [vmem:[%s0 + $0x4] sm:$0xf]
  %v54 = vld [vmem:[%s0 + $0x8] sm:$0xf]
  %v55 = vld [vmem:[%s0 + $0xc] sm:$0xf]
  %v56 = vld [vmem:[%s0 + $0x10] sm:$0xf]
  %v57 = vld [vmem:[%s0 + $0x14] sm:$0xf]
  %v58 = vld [vmem:[%s0 + $0x18] sm:$0xf]
  %v59 = vld [vmem:[%s0 + $0x1c] sm:$0xf]
  %v60 = vld [vmem:[%s0 + $0x20] sm:$0xf]
  %v61 = vld [vmem:[%s0 + $0x24] sm:$0xf]
  %v62 = vld [vmem:[%s0 + $0x28] sm:$0xf]
  %v63 = vld [vmem:[%s0 + $0x2c] sm:$0xf]
  %v64 = vld [vmem:[%s0 + $0x30] sm:$0xf]
  %v65 = vld [vmem:[%s0 + $0x34] sm:$0xf]
  %v66 = vld [vmem:[%s0 + $0x38] sm:$0xf]
  %v67 = vld [vmem:[%s0 + $0x3c] sm:$0xf]
  %v68 = vld [vmem:[%s1] sm:$0xf]
  %v69 = vld [vmem:[%s1 + $0x4] sm:$0xf]
  %v70 = vld [vmem:[%s1 + $0x8] sm:$0xf]
  %v71 = vld [vmem:[%s1 + $0xc] sm:$0x3]
  %v88 = vunpack.c.l.b16 %v52
  %v89 = vunpack.c.l.b16 %v53
  %v90 = vunpack.c.l.b16 %v54
  %v91 = vunpack.c.l.b16 %v55
  %v92 = vunpack.c.l.b16 %v56
  %v93 = vunpack.c.l.b16 %v57
  %v94 = vunpack.c.l.b16 %v58
  %v95 = vunpack.c.l.b16 %v59
  %v96 = vunpack.c.l.b16 %v60
  %v97 = vunpack.c.l.b16 %v61
  %v98 = vunpack.c.l.b16 %v62
  %v99 = vunpack.c.l.b16 %v63
  %v100 = vunpack.c.l.b16 %v64
  %v101 = vunpack.c.l.b16 %v65
  %v102 = vunpack.c.l.b16 %v66
  %v103 = vunpack.c.l.b16 %v67
  %v104 = vpack.c.b16 %v89, %v88
  %v105 = vpack.c.b16 %v91, %v90
  %v106 = vpack.c.b16 %v93, %v92
  %v107 = vpack.c.b16 %v95, %v94
  %v108 = vpack.c.b16 %v97, %v96
  %v109 = vpack.c.b16 %v99, %v98
  %v110 = vpack.c.b16 %v101, %v100
  %v111 = vpack.c.b16 %v103, %v102
  %v116 = vunpack.c.l.b16 %v68
  %v117 = vunpack.c.l.b16 %v69
  %v118 = vunpack.c.l.b16 %v70
  %v119 = vunpack.c.l.b16 %v71
  %v120 = vpack.c.b16 %v117, %v116
  %v121 = vpack.c.b16 %v119, %v118
  %vm123 = vcmask 220160
  %v125 = vsel %vm123, %v104, 0
  %v128 = vsel %vm123, %v105, 0
  %v131 = vsel %vm123, %v106, 0
  %v134 = vsel %vm123, %v107, 0
  %v137 = vsel %vm123, %v108, 0
  %v140 = vsel %vm123, %v109, 0
  %v143 = vsel %vm123, %v110, 0
  %v146 = vsel %vm123, %v111, 0
  %vm148 = vcmask 1044480
  %vm149 = vcmask 1045504
  %v150 = vsel %vm148, 4294967295, 65535
  %v151 = vsel %vm149, %v150, 0
  %v153 = vand.u32 %v121, %v151
  %155 = vmatpush.bf16.msra.mxu0 0
  %156 = vmatpush.bf16.msra.mxu0 0
  %157 = vmatpush.bf16.msra.mxu0 0
  %158 = vmatpush.bf16.msra.mxu0 0
  %159 = vmatpush.bf16.msra.mxu0 0
  %160 = vmatpush.bf16.msra.mxu0 0
  %161 = vmatpush.bf16.msra.mxu0 %v153
  %162 = vmatpush.bf16.msra.mxu0 %v120
  %163 = vmatmul.bf16.gmra.mxu0 %v125
  %v164 = vpop.f32.mrf.mxu0
  %v165 = vadd.f32 0.0, %v164
  %v166 = vpop.f32.mrf.mxu0
  %v167 = vadd.f32 0.0, %v166
  %168 = vmatmul.bf16.gmra.mxu0 %v128
  %v169 = vpop.f32.mrf.mxu0
  %v170 = vadd.f32 0.0, %v169
  %v171 = vpop.f32.mrf.mxu0
  %v172 = vadd.f32 0.0, %v171
  %173 = vmatmul.bf16.gmra.mxu0 %v131
  %v174 = vpop.f32.mrf.mxu0
  %v175 = vadd.f32 0.0, %v174
  %v176 = vpop.f32.mrf.mxu0
  %v177 = vadd.f32 0.0, %v176
  %178 = vmatmul.bf16.gmra.mxu0 %v134
  %v179 = vpop.f32.mrf.mxu0
  %v180 = vadd.f32 0.0, %v179
  %v181 = vpop.f32.mrf.mxu0
  %v182 = vadd.f32 0.0, %v181
  %183 = vmatmul.bf16.gmra.mxu0 %v137
  %v184 = vpop.f32.mrf.mxu0
  %v185 = vadd.f32 0.0, %v184
  %v186 = vpop.f32.mrf.mxu0
  %v187 = vadd.f32 0.0, %v186
  %188 = vmatmul.bf16.gmra.mxu0 %v140
  %v189 = vpop.f32.mrf.mxu0
  %v190 = vadd.f32 0.0, %v189
  %v191 = vpop.f32.mrf.mxu0
  %v192 = vadd.f32 0.0, %v191
  %193 = vmatmul.bf16.gmra.mxu0 %v143
  %v194 = vpop.f32.mrf.mxu0
  %v195 = vadd.f32 0.0, %v194
  %v196 = vpop.f32.mrf.mxu0
  %v197 = vadd.f32 0.0, %v196
  %198 = vmatmul.bf16.gmra.mxu0 %v146
  %v199 = vpop.f32.mrf.mxu0
  %v200 = vadd.f32 0.0, %v199
  %v201 = vpop.f32.mrf.mxu0
  %v202 = vadd.f32 0.0, %v201
  %203 = vdwg.mxu0
  %v204 = vadd.f32 %v36, %v165
  %v205 = vadd.f32 %v37, %v167
  %v206 = vadd.f32 %v38, %v170
  %v207 = vadd.f32 %v39, %v172
  %v208 = vadd.f32 %v40, %v175
  %v209 = vadd.f32 %v41, %v177
  %v210 = vadd.f32 %v42, %v180
  %v211 = vadd.f32 %v43, %v182
  %v212 = vadd.f32 %v44, %v185
  %v213 = vadd.f32 %v45, %v187
  %v214 = vadd.f32 %v46, %v190
  %v215 = vadd.f32 %v47, %v192
  %v216 = vadd.f32 %v48, %v195
  %v217 = vadd.f32 %v49, %v197
  %v218 = vadd.f32 %v50, %v200
  %v219 = vadd.f32 %v51, %v202
  %vm220 = vcmask 261120
  %221 = vst.msk [vmem:[#allocation2] sm:$0xff] %vm220, %v204
  %222 = vst.msk [vmem:[#allocation2 + $0x8] sm:$0xff] %vm220, %v205
  %223 = vst.msk [vmem:[#allocation2 + $0x10] sm:$0xff] %vm220, %v206
  %224 = vst.msk [vmem:[#allocation2 + $0x18] sm:$0xff] %vm220, %v207
  %225 = vst.msk [vmem:[#allocation2 + $0x20] sm:$0xff] %vm220, %v208
  %226 = vst.msk [vmem:[#allocation2 + $0x28] sm:$0xff] %vm220, %v209
  %227 = vst.msk [vmem:[#allocation2 + $0x30] sm:$0xff] %vm220, %v210
  %228 = vst.msk [vmem:[#allocation2 + $0x38] sm:$0xff] %vm220, %v211
  %229 = vst.msk [vmem:[#allocation2 + $0x40] sm:$0xff] %vm220, %v212
  %230 = vst.msk [vmem:[#allocation2 + $0x48] sm:$0xff] %vm220, %v213
  %231 = vst.msk [vmem:[#allocation2 + $0x50] sm:$0xff] %vm220, %v214
  %232 = vst.msk [vmem:[#allocation2 + $0x58] sm:$0xff] %vm220, %v215
  %233 = vst.msk [vmem:[#allocation2 + $0x60] sm:$0xff] %vm220, %v216
  %234 = vst.msk [vmem:[#allocation2 + $0x68] sm:$0xff] %vm220, %v217
  %235 = vst.msk [vmem:[#allocation2 + $0x70] sm:$0xff] %vm220, %v218
  %236 = vst.msk [vmem:[#allocation2 + $0x78] sm:$0xff] %vm220, %v219
  // Predicated region
  $region18: #{_lambda_.15} parent=0 // pred_check
    %p237 = pneg %p15
  $region19: #{_lambda_.15} parent=0 // pred_check_branch
    %239 = sbr.rel (%p237) target = $region21
  $region20: #{_lambda_.15} parent=0 // pred_region
    %v240 = vld [vmem:[#allocation2] sm:$0xff]
    %v241 = vld [vmem:[#allocation2 + $0x8] sm:$0xff]
    %v242 = vld [vmem:[#allocation2 + $0x10] sm:$0xff]
    %v243 = vld [vmem:[#allocation2 + $0x18] sm:$0xff]
    %v244 = vld [vmem:[#allocation2 + $0x20] sm:$0xff]
    %v245 = vld [vmem:[#allocation2 + $0x28] sm:$0xff]
    %v246 = vld [vmem:[#allocation2 + $0x30] sm:$0xff]
    %v247 = vld [vmem:[#allocation2 + $0x38] sm:$0xff]
    %v248 = vld [vmem:[#allocation2 + $0x40] sm:$0xff]
    %v249 = vld [vmem:[#allocation2 + $0x48] sm:$0xff]
    %v250 = vld [vmem:[#allocation2 + $0x50] sm:$0xff]
    %v251 = vld [vmem:[#allocation2 + $0x58] sm:$0xff]
    %v252 = vld [vmem:[#allocation2 + $0x60] sm:$0xff]
    %v253 = vld [vmem:[#allocation2 + $0x68] sm:$0xff]
    %v254 = vld [vmem:[#allocation2 + $0x70] sm:$0xff]
    %v255 = vld [vmem:[#allocation2 + $0x78] sm:$0xff]
    %v256 = vld [vmem:[%s2] sm:$0x1]
    %v258 = vperm.slane %v256, 0
    %v260 = vadd.f32 %v240, %v258
    %v261 = vadd.f32 %v241, %v258
    %v262 = vadd.f32 %v242, %v258
    %v263 = vadd.f32 %v243, %v258
    %v264 = vadd.f32 %v244, %v258
    %v265 = vadd.f32 %v245, %v258
    %v266 = vadd.f32 %v246, %v258
    %v267 = vadd.f32 %v247, %v258
    %v268 = vadd.f32 %v248, %v258
    %v269 = vadd.f32 %v249, %v258
    %v270 = vadd.f32 %v250, %v258
    %v271 = vadd.f32 %v251, %v258
    %v272 = vadd.f32 %v252, %v258
    %v273 = vadd.f32 %v253, %v258
    %v274 = vadd.f32 %v254, %v258
    %v275 = vadd.f32 %v255, %v258
    %v276 = vmax.f32 %v260, 0.0
    %v277 = vmax.f32 %v261, 0.0
    %v278 = vmax.f32 %v262, 0.0
    %v279 = vmax.f32 %v263, 0.0
    %v280 = vmax.f32 %v264, 0.0
    %v281 = vmax.f32 %v265, 0.0
    %v282 = vmax.f32 %v266, 0.0
    %v283 = vmax.f32 %v267, 0.0
    %v284 = vmax.f32 %v268, 0.0
    %v285 = vmax.f32 %v269, 0.0
    %v286 = vmax.f32 %v270, 0.0
    %v287 = vmax.f32 %v271, 0.0
    %v288 = vmax.f32 %v272, 0.0
    %v289 = vmax.f32 %v273, 0.0
    %v290 = vmax.f32 %v274, 0.0
    %v291 = vmax.f32 %v275, 0.0
    %v292 = vpack.c.bf16 %v276, %v276
    %v293 = vpack.c.bf16 %v277, %v277
    %v294 = vpack.c.bf16 %v278, %v278
    %v295 = vpack.c.bf16 %v279, %v279
    %v296 = vpack.c.bf16 %v280, %v280
    %v297 = vpack.c.bf16 %v281, %v281
    %v298 = vpack.c.bf16 %v282, %v282
    %v299 = vpack.c.bf16 %v283, %v283
    %v300 = vpack.c.bf16 %v284, %v284
    %v301 = vpack.c.bf16 %v285, %v285
    %v302 = vpack.c.bf16 %v286, %v286
    %v303 = vpack.c.bf16 %v287, %v287
    %v304 = vpack.c.bf16 %v288, %v288
    %v305 = vpack.c.bf16 %v289, %v289
    %v306 = vpack.c.bf16 %v290, %v290
    %v307 = vpack.c.bf16 %v291, %v291
    %vm308 = vcmask 257024
    %309 = vst.msk [vmem:[%s3] sm:$0xf] %vm308, %v292
    %310 = vst.msk [vmem:[%s3 + $0x4] sm:$0xf] %vm308, %v293
    %311 = vst.msk [vmem:[%s3 + $0x8] sm:$0xf] %vm308, %v294
    %312 = vst.msk [vmem:[%s3 + $0xc] sm:$0xf] %vm308, %v295
    %313 = vst.msk [vmem:[%s3 + $0x10] sm:$0xf] %vm308, %v296
    %314 = vst.msk [vmem:[%s3 + $0x14] sm:$0xf] %vm308, %v297
    %315 = vst.msk [vmem:[%s3 + $0x18] sm:$0xf] %vm308, %v298
    %316 = vst.msk [vmem:[%s3 + $0x1c] sm:$0xf] %vm308, %v299
    %317 = vst.msk [vmem:[%s3 + $0x20] sm:$0xf] %vm308, %v300
    %318 = vst.msk [vmem:[%s3 + $0x24] sm:$0xf] %vm308, %v301
    %319 = vst.msk [vmem:[%s3 + $0x28] sm:$0xf] %vm308, %v302
    %320 = vst.msk [vmem:[%s3 + $0x2c] sm:$0xf] %vm308, %v303
    %321 = vst.msk [vmem:[%s3 + $0x30] sm:$0xf] %vm308, %v304
    %322 = vst.msk [vmem:[%s3 + $0x34] sm:$0xf] %vm308, %v305
    %323 = vst.msk [vmem:[%s3 + $0x38] sm:$0xf] %vm308, %v306
    %324 = vst.msk [vmem:[%s3 + $0x3c] sm:$0xf] %vm308, %v307
  $region21: #{_lambda_.15} parent=0 // pred_fallthru
    _
  // Predicated region
  $region22: #{_lambda_.15} parent=0 // pred_check
    _
  $region23: #{_lambda_.15} parent=0 // pred_check_branch
    %326 = sbr.rel (0) target = $region25
  $region24: #{_lambda_.15} parent=0 // pred_region
    _
  $region25: #{_lambda_.15} parent=0 // pred_fallthru
    _
  // Predicated region
  $region26: #{_lambda_.15} parent=0 // pred_check
    _
  $region27: #{_lambda_.15} parent=0 // pred_check_branch
    %328 = sbr.rel (0) target = $region29
  $region28: #{_lambda_.15} parent=0 // pred_region
    _
  $region29: #{_lambda_.15} parent=0 // pred_fallthru
    _

// kernel: _lambda_.16
$region0: #{_lambda_.16}
  #allocation0 [shape = 'u32[]', space=smem, size = 0x4, offset = 0x4, fixed_abs, tag = 'smem constant byte address 0x4 - core index']
  #allocation1 [shape = 'u32[72,128]{1,0:T(1,128)}', space=vmem, size = 0x9000, scoped, tag = 'internal scratch']
  #allocation2 [shape = 'f32[32,64]{1,0:T(8,128)}', space=vmem, size = 0x4000, scoped, tag = 'scratch operand']
  %s0 = inlined_call_operand.vmem [shape: bf16[32,288], index: 0, kind: input, shape index: {}]
  %s1 = inlined_call_operand.vmem [shape: bf16[288,64], index: 1, kind: input, shape index: {}]
  %s2 = inlined_call_operand.vmem [shape: f32[1,64], index: 2, kind: input, shape index: {}]
  %s3 = inlined_call_operand.vmem [shape: bf16[32,64], index: 3, kind: output, shape index: {}]
  %s4 = sld [smem:[#allocation0]]
  $region30: #{_lambda_.16} parent=0
    _
  %s6 = ssub.s32 1, %s4
  %s7 = scalar_select 0, %s6, %s4
  // Predicated region
  $region2: #{_lambda_.16} parent=0 // pred_check
    _
  $region3: #{_lambda_.16} parent=0 // pred_check_branch
    %9 = sbr.rel (0) target = $region5
  $region4: #{_lambda_.16} parent=0 // pred_region
    _
  $region5: #{_lambda_.16} parent=0 // pred_fallthru
    _
  // Predicated region
  $region6: #{_lambda_.16} parent=0 // pred_check
    _
  $region7: #{_lambda_.16} parent=0 // pred_check_branch
    %11 = sbr.rel (0) target = $region9
  $region8: #{_lambda_.16} parent=0 // pred_region
    _
  $region9: #{_lambda_.16} parent=0 // pred_fallthru
    _
  // Predicated region
  $region10: #{_lambda_.16} parent=0 // pred_check
    _
  $region11: #{_lambda_.16} parent=0 // pred_check_branch
    %13 = sbr.rel (0) target = $region13
  $region12: #{_lambda_.16} parent=0 // pred_region
    _
  $region13: #{_lambda_.16} parent=0 // pred_fallthru
    _
  %p15 = scmp.eq.s32.totalorder 0, 0
  // Predicated region
  $region14: #{_lambda_.16} parent=0 // pred_check
    %p16 = pneg %p15
  $region15: #{_lambda_.16} parent=0 // pred_check_branch
    %18 = sbr.rel (%p16) target = $region17
  $region16: #{_lambda_.16} parent=0 // pred_region
    %vm19 = vcmask 523264
    %20 = vst.msk [vmem:[#allocation2] sm:$0xff] %vm19, 0.0
    %21 = vst.msk [vmem:[#allocation2 + $0x8] sm:$0xff] %vm19, 0.0
    %22 = vst.msk [vmem:[#allocation2 + $0x10] sm:$0xff] %vm19, 0.0
    %23 = vst.msk [vmem:[#allocation2 + $0x18] sm:$0xff] %vm19, 0.0
  $region17: #{_lambda_.16} parent=0 // pred_fallthru
    _
  %v24 = vld [vmem:[#allocation2] sm:$0xff]
  %v25 = vld [vmem:[#allocation2 + $0x8] sm:$0xff]
  %v26 = vld [vmem:[#allocation2 + $0x10] sm:$0xff]
  %v27 = vld [vmem:[#allocation2 + $0x18] sm:$0xff]
  %v28 = vld [vmem:[%s0] sm:$0xff]
  %v29 = vld [vmem:[%s0 + $0x8] sm:$0xf]
  %v30 = vld [vmem:[%s0 + $0xc] sm:$0xff]
  %v31 = vld [vmem:[%s0 + $0x14] sm:$0xf]
  %v32 = vld [vmem:[%s0 + $0x18] sm:$0xff]
  %v33 = vld [vmem:[%s0 + $0x20] sm:$0xf]
  %v34 = vld [vmem:[%s0 + $0x24] sm:$0xff]
  %v35 = vld [vmem:[%s0 + $0x2c] sm:$0xf]
  %v36 = vld [vmem:[%s1] sm:$0xf]
  %v37 = vld [vmem:[%s1 + $0x4] sm:$0xf]
  %v38 = vld [vmem:[%s1 + $0x8] sm:$0xf]
  %v39 = vld [vmem:[%s1 + $0xc] sm:$0xf]
  %v40 = vld [vmem:[%s1 + $0x10] sm:$0xf]
  %v41 = vld [vmem:[%s1 + $0x14] sm:$0xf]
  %v42 = vld [vmem:[%s1 + $0x18] sm:$0xf]
  %v43 = vld [vmem:[%s1 + $0x1c] sm:$0xf]
  %v44 = vld [vmem:[%s1 + $0x20] sm:$0xf]
  %v45 = vld [vmem:[%s1 + $0x24] sm:$0xf]
  %v46 = vld [vmem:[%s1 + $0x28] sm:$0xf]
  %v47 = vld [vmem:[%s1 + $0x2c] sm:$0xf]
  %v48 = vld [vmem:[%s1 + $0x30] sm:$0xf]
  %v49 = vld [vmem:[%s1 + $0x34] sm:$0xf]
  %v50 = vld [vmem:[%s1 + $0x38] sm:$0xf]
  %v51 = vld [vmem:[%s1 + $0x3c] sm:$0xf]
  %v52 = vld [vmem:[%s1 + $0x40] sm:$0xf]
  %v53 = vld [vmem:[%s1 + $0x44] sm:$0xf]
  %v54 = vld [vmem:[%s1 + $0x48] sm:$0xf]
  %v55 = vld [vmem:[%s1 + $0x4c] sm:$0xf]
  %v56 = vld [vmem:[%s1 + $0x50] sm:$0xf]
  %v57 = vld [vmem:[%s1 + $0x54] sm:$0xf]
  %v58 = vld [vmem:[%s1 + $0x58] sm:$0xf]
  %v59 = vld [vmem:[%s1 + $0x5c] sm:$0xf]
  %v60 = vld [vmem:[%s1 + $0x60] sm:$0xf]
  %v61 = vld [vmem:[%s1 + $0x64] sm:$0xf]
  %v62 = vld [vmem:[%s1 + $0x68] sm:$0xf]
  %v63 = vld [vmem:[%s1 + $0x6c] sm:$0xf]
  %v64 = vld [vmem:[%s1 + $0x70] sm:$0xf]
  %v65 = vld [vmem:[%s1 + $0x74] sm:$0xf]
  %v66 = vld [vmem:[%s1 + $0x78] sm:$0xf]
  %v67 = vld [vmem:[%s1 + $0x7c] sm:$0xf]
  %v68 = vld [vmem:[%s1 + $0x80] sm:$0xf]
  %v69 = vld [vmem:[%s1 + $0x84] sm:$0xf]
  %v70 = vld [vmem:[%s1 + $0x88] sm:$0xf]
  %v71 = vld [vmem:[%s1 + $0x8c] sm:$0xf]
  %v80 = vunpack.c.l.b16 %v28
  %v81 = vunpack.c.h.b16 %v28
  %v82 = vunpack.c.l.b16 %v29
  %v83 = vunpack.c.l.b16 %v30
  %v84 = vunpack.c.h.b16 %v30
  %v85 = vunpack.c.l.b16 %v31
  %v86 = vunpack.c.l.b16 %v32
  %v87 = vunpack.c.h.b16 %v32
  %v88 = vunpack.c.l.b16 %v33
  %v89 = vunpack.c.l.b16 %v34
  %v90 = vunpack.c.h.b16 %v34
  %v91 = vunpack.c.l.b16 %v35
  %v92 = vpack.c.b16 %v83, %v80
  %v93 = vpack.c.b16 %v84, %v81
  %v94 = vpack.c.b16 %v85, %v82
  %v95 = vpack.c.b16 %v89, %v86
  %v96 = vpack.c.b16 %v90, %v87
  %v97 = vpack.c.b16 %v91, %v88
  %v138 = vunpack.c.l.b16 %v36
  %v139 = vunpack.c.l.b16 %v37
  %v140 = vunpack.c.l.b16 %v38
  %v141 = vunpack.c.l.b16 %v39
  %v142 = vunpack.c.l.b16 %v40
  %v143 = vunpack.c.l.b16 %v41
  %v144 = vunpack.c.l.b16 %v42
  %v145 = vunpack.c.l.b16 %v43
  %v146 = vunpack.c.l.b16 %v44
  %v147 = vunpack.c.l.b16 %v45
  %v148 = vunpack.c.l.b16 %v46
  %v149 = vunpack.c.l.b16 %v47
  %v150 = vunpack.c.l.b16 %v48
  %v151 = vunpack.c.l.b16 %v49
  %v152 = vunpack.c.l.b16 %v50
  %v153 = vunpack.c.l.b16 %v51
  %v154 = vunpack.c.l.b16 %v52
  %v155 = vunpack.c.l.b16 %v53
  %v156 = vunpack.c.l.b16 %v54
  %v157 = vunpack.c.l.b16 %v55
  %v158 = vunpack.c.l.b16 %v56
  %v159 = vunpack.c.l.b16 %v57
  %v160 = vunpack.c.l.b16 %v58
  %v161 = vunpack.c.l.b16 %v59
  %v162 = vunpack.c.l.b16 %v60
  %v163 = vunpack.c.l.b16 %v61
  %v164 = vunpack.c.l.b16 %v62
  %v165 = vunpack.c.l.b16 %v63
  %v166 = vunpack.c.l.b16 %v64
  %v167 = vunpack.c.l.b16 %v65
  %v168 = vunpack.c.l.b16 %v66
  %v169 = vunpack.c.l.b16 %v67
  %v170 = vunpack.c.l.b16 %v68
  %v171 = vunpack.c.l.b16 %v69
  %v172 = vunpack.c.l.b16 %v70
  %v173 = vunpack.c.l.b16 %v71
  %v174 = vpack.c.b16 %v139, %v138
  %v175 = vpack.c.b16 %v141, %v140
  %v176 = vpack.c.b16 %v143, %v142
  %v177 = vpack.c.b16 %v145, %v144
  %v178 = vpack.c.b16 %v147, %v146
  %v179 = vpack.c.b16 %v149, %v148
  %v180 = vpack.c.b16 %v151, %v150
  %v181 = vpack.c.b16 %v153, %v152
  %v182 = vpack.c.b16 %v155, %v154
  %v183 = vpack.c.b16 %v157, %v156
  %v184 = vpack.c.b16 %v159, %v158
  %v185 = vpack.c.b16 %v161, %v160
  %v186 = vpack.c.b16 %v163, %v162
  %v187 = vpack.c.b16 %v165, %v164
  %v188 = vpack.c.b16 %v167, %v166
  %v189 = vpack.c.b16 %v169, %v168
  %v190 = vpack.c.b16 %v171, %v170
  %v191 = vpack.c.b16 %v173, %v172
  %vm210 = vcmask 261120
  %v212 = vsel %vm210, %v94, 0
  %v215 = vsel %vm210, %v97, 0
  %217 = vmatpush.bf16.msra.mxu0 %v181
  %218 = vmatpush.bf16.msra.mxu0 %v180
  %219 = vmatpush.bf16.msra.mxu0 %v179
  %220 = vmatpush.bf16.msra.mxu0 %v178
  %221 = vmatpush.bf16.msra.mxu0 %v177
  %222 = vmatpush.bf16.msra.mxu0 %v176
  %223 = vmatpush.bf16.msra.mxu0 %v175
  %224 = vmatpush.bf16.msra.mxu0 %v174
  %225 = vmatmul.bf16.gmra.mxu0 %v92
  %v226 = vpop.f32.mrf.mxu0
  %v227 = vadd.f32 0.0, %v226
  %v228 = vpop.f32.mrf.mxu0
  %v229 = vadd.f32 0.0, %v228
  %230 = vmatmul.bf16.gmra.mxu0 %v95
  %v231 = vpop.f32.mrf.mxu0
  %v232 = vadd.f32 0.0, %v231
  %v233 = vpop.f32.mrf.mxu0
  %v234 = vadd.f32 0.0, %v233
  %235 = vdwg.mxu0
  %236 = vmatpush.bf16.msra.mxu0 %v189
  %237 = vmatpush.bf16.msra.mxu0 %v188
  %238 = vmatpush.bf16.msra.mxu0 %v187
  %239 = vmatpush.bf16.msra.mxu0 %v186
  %240 = vmatpush.bf16.msra.mxu0 %v185
  %241 = vmatpush.bf16.msra.mxu0 %v184
  %242 = vmatpush.bf16.msra.mxu0 %v183
  %243 = vmatpush.bf16.msra.mxu0 %v182
  %244 = vmatmul.bf16.gmra.mxu0 %v93
  %v245 = vpop.f32.mrf.mxu0
  %v246 = vadd.f32 %v227, %v245
  %v247 = vpop.f32.mrf.mxu0
  %v248 = vadd.f32 %v229, %v247
  %249 = vmatmul.bf16.gmra.mxu0 %v96
  %v250 = vpop.f32.mrf.mxu0
  %v251 = vadd.f32 %v232, %v250
  %v252 = vpop.f32.mrf.mxu0
  %v253 = vadd.f32 %v234, %v252
  %254 = vdwg.mxu0
  %255 = vmatpush.bf16.msra.mxu0 0
  %256 = vmatpush.bf16.msra.mxu0 0
  %257 = vmatpush.bf16.msra.mxu0 0
  %258 = vmatpush.bf16.msra.mxu0 0
  %259 = vmatpush.bf16.msra.mxu0 0
  %260 = vmatpush.bf16.msra.mxu0 0
  %261 = vmatpush.bf16.msra.mxu0 %v191
  %262 = vmatpush.bf16.msra.mxu0 %v190
  %263 = vmatmul.bf16.gmra.mxu0 %v212
  %v264 = vpop.f32.mrf.mxu0
  %v265 = vadd.f32 %v246, %v264
  %v266 = vpop.f32.mrf.mxu0
  %v267 = vadd.f32 %v248, %v266
  %268 = vmatmul.bf16.gmra.mxu0 %v215
  %v269 = vpop.f32.mrf.mxu0
  %v270 = vadd.f32 %v251, %v269
  %v271 = vpop.f32.mrf.mxu0
  %v272 = vadd.f32 %v253, %v271
  %273 = vdwg.mxu0
  %v274 = vadd.f32 %v24, %v265
  %v275 = vadd.f32 %v25, %v267
  %v276 = vadd.f32 %v26, %v270
  %v277 = vadd.f32 %v27, %v272
  %vm278 = vcmask 523264
  %279 = vst.msk [vmem:[#allocation2] sm:$0xff] %vm278, %v274
  %280 = vst.msk [vmem:[#allocation2 + $0x8] sm:$0xff] %vm278, %v275
  %281 = vst.msk [vmem:[#allocation2 + $0x10] sm:$0xff] %vm278, %v276
  %282 = vst.msk [vmem:[#allocation2 + $0x18] sm:$0xff] %vm278, %v277
  // Predicated region
  $region18: #{_lambda_.16} parent=0 // pred_check
    %p283 = pneg %p15
  $region19: #{_lambda_.16} parent=0 // pred_check_branch
    %285 = sbr.rel (%p283) target = $region21
  $region20: #{_lambda_.16} parent=0 // pred_region
    %v286 = vld [vmem:[#allocation2] sm:$0xff]
    %v287 = vld [vmem:[#allocation2 + $0x8] sm:$0xff]
    %v288 = vld [vmem:[#allocation2 + $0x10] sm:$0xff]
    %v289 = vld [vmem:[#allocation2 + $0x18] sm:$0xff]
    %v290 = vld [vmem:[%s2] sm:$0x1]
    %v292 = vperm.slane %v290, 0
    %v294 = vadd.f32 %v286, %v292
    %v295 = vadd.f32 %v287, %v292
    %v296 = vadd.f32 %v288, %v292
    %v297 = vadd.f32 %v289, %v292
    %v298 = vmax.f32 %v294, 0.0
    %v299 = vmax.f32 %v295, 0.0
    %v300 = vmax.f32 %v296, 0.0
    %v301 = vmax.f32 %v297, 0.0
    %v302 = vpack.c.bf16 %v298, %v298
    %v303 = vpack.c.bf16 %v299, %v299
    %v304 = vpack.c.bf16 %v300, %v300
    %v305 = vpack.c.bf16 %v301, %v301
    %vm306 = vcmask 519168
    %307 = vst.msk [vmem:[%s3] sm:$0xf] %vm306, %v302
    %308 = vst.msk [vmem:[%s3 + $0x4] sm:$0xf] %vm306, %v303
    %309 = vst.msk [vmem:[%s3 + $0x8] sm:$0xf] %vm306, %v304
    %310 = vst.msk [vmem:[%s3 + $0xc] sm:$0xf] %vm306, %v305
  $region21: #{_lambda_.16} parent=0 // pred_fallthru
    _
  // Predicated region
  $region22: #{_lambda_.16} parent=0 // pred_check
    _
  $region23: #{_lambda_.16} parent=0 // pred_check_branch
    %312 = sbr.rel (0) target = $region25
  $region24: #{_lambda_.16} parent=0 // pred_region
    _
  $region25: #{_lambda_.16} parent=0 // pred_fallthru
    _
  // Predicated region
  $region26: #{_lambda_.16} parent=0 // pred_check
    _
  $region27: #{_lambda_.16} parent=0 // pred_check_branch
    %314 = sbr.rel (0) target = $region29
  $region28: #{_lambda_.16} parent=0 // pred_region
    _
  $region29: #{_lambda_.16} parent=0 // pred_fallthru
    _

// kernel: _lambda_.19
$region0: #{_lambda_.19}
  #allocation0 [shape = 'u32[]', space=smem, size = 0x4, offset = 0x4, fixed_abs, tag = 'smem constant byte address 0x4 - core index']
  #allocation1 [shape = 'u32[72,128]{1,0:T(1,128)}', space=vmem, size = 0x9000, scoped, tag = 'internal scratch']
  #allocation2 [shape = 'f32[2,6]{1,0:T(2,128)}', space=vmem, size = 0x400, scoped, tag = 'scratch operand']
  %s0 = inlined_call_operand.vmem [shape: bf16[2,128], index: 0, kind: input, shape index: {}]
  %s1 = inlined_call_operand.vmem [shape: bf16[128,6], index: 1, kind: input, shape index: {}]
  %s2 = inlined_call_operand.vmem [shape: f32[1,6], index: 2, kind: input, shape index: {}]
  %s3 = inlined_call_operand.vmem [shape: f32[2,6], index: 3, kind: output, shape index: {}]
  %s4 = sld [smem:[#allocation0]]
  $region30: #{_lambda_.19} parent=0
    _
  %s6 = ssub.s32 1, %s4
  %s7 = scalar_select 0, %s6, %s4
  // Predicated region
  $region2: #{_lambda_.19} parent=0 // pred_check
    _
  $region3: #{_lambda_.19} parent=0 // pred_check_branch
    %9 = sbr.rel (0) target = $region5
  $region4: #{_lambda_.19} parent=0 // pred_region
    _
  $region5: #{_lambda_.19} parent=0 // pred_fallthru
    _
  // Predicated region
  $region6: #{_lambda_.19} parent=0 // pred_check
    _
  $region7: #{_lambda_.19} parent=0 // pred_check_branch
    %11 = sbr.rel (0) target = $region9
  $region8: #{_lambda_.19} parent=0 // pred_region
    _
  $region9: #{_lambda_.19} parent=0 // pred_fallthru
    _
  // Predicated region
  $region10: #{_lambda_.19} parent=0 // pred_check
    _
  $region11: #{_lambda_.19} parent=0 // pred_check_branch
    %13 = sbr.rel (0) target = $region13
  $region12: #{_lambda_.19} parent=0 // pred_region
    _
  $region13: #{_lambda_.19} parent=0 // pred_fallthru
    _
  %p14 = scmp.eq.s32.totalorder 0, 0
  // Predicated region
  $region14: #{_lambda_.19} parent=0 // pred_check
    %p15 = pneg %p14
  $region15: #{_lambda_.19} parent=0 // pred_check_branch
    %17 = sbr.rel (%p15) target = $region17
  $region16: #{_lambda_.19} parent=0 // pred_region
    %vm18 = vcmask 41984
    %19 = vst.msk [vmem:[#allocation2] sm:$0x3] %vm18, 0.0
  $region17: #{_lambda_.19} parent=0 // pred_fallthru
    _
  %v20 = vld [vmem:[#allocation2] sm:$0x3]
  %v21 = vld [vmem:[%s0] sm:$0x1]
  %v22 = vld [vmem:[%s1] sm:$0xf]
  %v23 = vld [vmem:[%s1 + $0x4] sm:$0xf]
  %v24 = vld [vmem:[%s1 + $0x8] sm:$0xf]
  %v25 = vld [vmem:[%s1 + $0xc] sm:$0xf]
  %v26 = vld [vmem:[%s1 + $0x10] sm:$0xf]
  %v27 = vld [vmem:[%s1 + $0x14] sm:$0xf]
  %v28 = vld [vmem:[%s1 + $0x18] sm:$0xf]
  %v29 = vld [vmem:[%s1 + $0x1c] sm:$0xf]
  %v30 = vld [vmem:[%s1 + $0x20] sm:$0xf]
  %v31 = vld [vmem:[%s1 + $0x24] sm:$0xf]
  %v32 = vld [vmem:[%s1 + $0x28] sm:$0xf]
  %v33 = vld [vmem:[%s1 + $0x2c] sm:$0xf]
  %v34 = vld [vmem:[%s1 + $0x30] sm:$0xf]
  %v35 = vld [vmem:[%s1 + $0x34] sm:$0xf]
  %v36 = vld [vmem:[%s1 + $0x38] sm:$0xf]
  %v37 = vld [vmem:[%s1 + $0x3c] sm:$0xf]
  %v54 = vunpack.c.l.b16 %v22
  %v55 = vunpack.c.l.b16 %v23
  %v56 = vunpack.c.l.b16 %v24
  %v57 = vunpack.c.l.b16 %v25
  %v58 = vunpack.c.l.b16 %v26
  %v59 = vunpack.c.l.b16 %v27
  %v60 = vunpack.c.l.b16 %v28
  %v61 = vunpack.c.l.b16 %v29
  %v62 = vunpack.c.l.b16 %v30
  %v63 = vunpack.c.l.b16 %v31
  %v64 = vunpack.c.l.b16 %v32
  %v65 = vunpack.c.l.b16 %v33
  %v66 = vunpack.c.l.b16 %v34
  %v67 = vunpack.c.l.b16 %v35
  %v68 = vunpack.c.l.b16 %v36
  %v69 = vunpack.c.l.b16 %v37
  %v70 = vpack.c.b16 %v55, %v54
  %v71 = vpack.c.b16 %v57, %v56
  %v72 = vpack.c.b16 %v59, %v58
  %v73 = vpack.c.b16 %v61, %v60
  %v74 = vpack.c.b16 %v63, %v62
  %v75 = vpack.c.b16 %v65, %v64
  %v76 = vpack.c.b16 %v67, %v66
  %v77 = vpack.c.b16 %v69, %v68
  %86 = vmatpush.bf16.msra.mxu0 %v77
  %87 = vmatpush.bf16.msra.mxu0 %v76
  %88 = vmatpush.bf16.msra.mxu0 %v75
  %89 = vmatpush.bf16.msra.mxu0 %v74
  %90 = vmatpush.bf16.msra.mxu0 %v73
  %91 = vmatpush.bf16.msra.mxu0 %v72
  %92 = vmatpush.bf16.msra.mxu0 %v71
  %93 = vmatpush.bf16.msra.mxu0 %v70
  %94 = vmatmul.bf16.gmra.mxu0 %v21
  %v95 = vpop.f32.mrf.mxu0
  %v96 = vadd.f32 0.0, %v95
  %v97 = vpop.f32.mrf.mxu0
  %98 = vdwg.mxu0
  %v99 = vadd.f32 %v20, %v96
  %vm100 = vcmask 41984
  %101 = vst.msk [vmem:[#allocation2] sm:$0x3] %vm100, %v99
  // Predicated region
  $region18: #{_lambda_.19} parent=0 // pred_check
    %p102 = pneg %p14
  $region19: #{_lambda_.19} parent=0 // pred_check_branch
    %104 = sbr.rel (%p102) target = $region21
  $region20: #{_lambda_.19} parent=0 // pred_region
    %v105 = vld [vmem:[#allocation2] sm:$0x3]
    %v106 = vld [vmem:[%s2] sm:$0x1]
    %v108 = vperm.slane %v106, 0
    %v110 = vadd.f32 %v105, %v108
    %111 = vst.msk [vmem:[%s3] sm:$0x3] %vm100, %v110
  $region21: #{_lambda_.19} parent=0 // pred_fallthru
    _
  // Predicated region
  $region22: #{_lambda_.19} parent=0 // pred_check
    _
  $region23: #{_lambda_.19} parent=0 // pred_check_branch
    %113 = sbr.rel (0) target = $region25
  $region24: #{_lambda_.19} parent=0 // pred_region
    _
  $region25: #{_lambda_.19} parent=0 // pred_fallthru
    _
  // Predicated region
  $region26: #{_lambda_.19} parent=0 // pred_check
    _
  $region27: #{_lambda_.19} parent=0 // pred_check_branch
    %115 = sbr.rel (0) target = $region29
  $region28: #{_lambda_.19} parent=0 // pred_region
    _
  $region29: #{_lambda_.19} parent=0 // pred_fallthru
    _

// kernel: _lambda_.18
$region0: #{_lambda_.18}
  #allocation0 [shape = 'u32[]', space=smem, size = 0x4, offset = 0x4, fixed_abs, tag = 'smem constant byte address 0x4 - core index']
  #allocation1 [shape = 'u32[72,128]{1,0:T(1,128)}', space=vmem, size = 0x9000, scoped, tag = 'internal scratch']
  #allocation2 [shape = 'f32[2,128]{1,0:T(2,128)}', space=vmem, size = 0x400, scoped, tag = 'scratch operand']
  %s0 = inlined_call_operand.vmem [shape: bf16[2,512], index: 0, kind: input, shape index: {}]
  %s1 = inlined_call_operand.vmem [shape: bf16[512,128], index: 1, kind: input, shape index: {}]
  %s2 = inlined_call_operand.vmem [shape: f32[1,128], index: 2, kind: input, shape index: {}]
  %s3 = inlined_call_operand.vmem [shape: bf16[2,128], index: 3, kind: output, shape index: {}]
  %s4 = sld [smem:[#allocation0]]
  $region30: #{_lambda_.18} parent=0
    _
  %s6 = ssub.s32 1, %s4
  %s7 = scalar_select 0, %s6, %s4
  // Predicated region
  $region2: #{_lambda_.18} parent=0 // pred_check
    _
  $region3: #{_lambda_.18} parent=0 // pred_check_branch
    %9 = sbr.rel (0) target = $region5
  $region4: #{_lambda_.18} parent=0 // pred_region
    _
  $region5: #{_lambda_.18} parent=0 // pred_fallthru
    _
  // Predicated region
  $region6: #{_lambda_.18} parent=0 // pred_check
    _
  $region7: #{_lambda_.18} parent=0 // pred_check_branch
    %11 = sbr.rel (0) target = $region9
  $region8: #{_lambda_.18} parent=0 // pred_region
    _
  $region9: #{_lambda_.18} parent=0 // pred_fallthru
    _
  // Predicated region
  $region10: #{_lambda_.18} parent=0 // pred_check
    _
  $region11: #{_lambda_.18} parent=0 // pred_check_branch
    %13 = sbr.rel (0) target = $region13
  $region12: #{_lambda_.18} parent=0 // pred_region
    _
  $region13: #{_lambda_.18} parent=0 // pred_fallthru
    _
  %p14 = scmp.eq.s32.totalorder 0, 0
  // Predicated region
  $region14: #{_lambda_.18} parent=0 // pred_check
    %p15 = pneg %p14
  $region15: #{_lambda_.18} parent=0 // pred_check_branch
    %17 = sbr.rel (%p15) target = $region17
  $region16: #{_lambda_.18} parent=0 // pred_region
    %18 = vst [vmem:[#allocation2] sm:$0x3] 0.0
  $region17: #{_lambda_.18} parent=0 // pred_fallthru
    _
  %v19 = vld [vmem:[#allocation2] sm:$0x3]
  %v20 = vld [vmem:[%s0] sm:$0xf]
  %v21 = vld [vmem:[%s1] sm:$0xf]
  %v22 = vld [vmem:[%s1 + $0x4] sm:$0xf]
  %v23 = vld [vmem:[%s1 + $0x8] sm:$0xf]
  %v24 = vld [vmem:[%s1 + $0xc] sm:$0xf]
  %v25 = vld [vmem:[%s1 + $0x10] sm:$0xf]
  %v26 = vld [vmem:[%s1 + $0x14] sm:$0xf]
  %v27 = vld [vmem:[%s1 + $0x18] sm:$0xf]
  %v28 = vld [vmem:[%s1 + $0x1c] sm:$0xf]
  %v29 = vld [vmem:[%s1 + $0x20] sm:$0xf]
  %v30 = vld [vmem:[%s1 + $0x24] sm:$0xf]
  %v31 = vld [vmem:[%s1 + $0x28] sm:$0xf]
  %v32 = vld [vmem:[%s1 + $0x2c] sm:$0xf]
  %v33 = vld [vmem:[%s1 + $0x30] sm:$0xf]
  %v34 = vld [vmem:[%s1 + $0x34] sm:$0xf]
  %v35 = vld [vmem:[%s1 + $0x38] sm:$0xf]
  %v36 = vld [vmem:[%s1 + $0x3c] sm:$0xf]
  %v37 = vld [vmem:[%s1 + $0x40] sm:$0xf]
  %v38 = vld [vmem:[%s1 + $0x44] sm:$0xf]
  %v39 = vld [vmem:[%s1 + $0x48] sm:$0xf]
  %v40 = vld [vmem:[%s1 + $0x4c] sm:$0xf]
  %v41 = vld [vmem:[%s1 + $0x50] sm:$0xf]
  %v42 = vld [vmem:[%s1 + $0x54] sm:$0xf]
  %v43 = vld [vmem:[%s1 + $0x58] sm:$0xf]
  %v44 = vld [vmem:[%s1 + $0x5c] sm:$0xf]
  %v45 = vld [vmem:[%s1 + $0x60] sm:$0xf]
  %v46 = vld [vmem:[%s1 + $0x64] sm:$0xf]
  %v47 = vld [vmem:[%s1 + $0x68] sm:$0xf]
  %v48 = vld [vmem:[%s1 + $0x6c] sm:$0xf]
  %v49 = vld [vmem:[%s1 + $0x70] sm:$0xf]
  %v50 = vld [vmem:[%s1 + $0x74] sm:$0xf]
  %v51 = vld [vmem:[%s1 + $0x78] sm:$0xf]
  %v52 = vld [vmem:[%s1 + $0x7c] sm:$0xf]
  %v53 = vld [vmem:[%s1 + $0x80] sm:$0xf]
  %v54 = vld [vmem:[%s1 + $0x84] sm:$0xf]
  %v55 = vld [vmem:[%s1 + $0x88] sm:$0xf]
  %v56 = vld [vmem:[%s1 + $0x8c] sm:$0xf]
  %v57 = vld [vmem:[%s1 + $0x90] sm:$0xf]
  %v58 = vld [vmem:[%s1 + $0x94] sm:$0xf]
  %v59 = vld [vmem:[%s1 + $0x98] sm:$0xf]
  %v60 = vld [vmem:[%s1 + $0x9c] sm:$0xf]
  %v61 = vld [vmem:[%s1 + $0xa0] sm:$0xf]
  %v62 = vld [vmem:[%s1 + $0xa4] sm:$0xf]
  %v63 = vld [vmem:[%s1 + $0xa8] sm:$0xf]
  %v64 = vld [vmem:[%s1 + $0xac] sm:$0xf]
  %v65 = vld [vmem:[%s1 + $0xb0] sm:$0xf]
  %v66 = vld [vmem:[%s1 + $0xb4] sm:$0xf]
  %v67 = vld [vmem:[%s1 + $0xb8] sm:$0xf]
  %v68 = vld [vmem:[%s1 + $0xbc] sm:$0xf]
  %v69 = vld [vmem:[%s1 + $0xc0] sm:$0xf]
  %v70 = vld [vmem:[%s1 + $0xc4] sm:$0xf]
  %v71 = vld [vmem:[%s1 + $0xc8] sm:$0xf]
  %v72 = vld [vmem:[%s1 + $0xcc] sm:$0xf]
  %v73 = vld [vmem:[%s1 + $0xd0] sm:$0xf]
  %v74 = vld [vmem:[%s1 + $0xd4] sm:$0xf]
  %v75 = vld [vmem:[%s1 + $0xd8] sm:$0xf]
  %v76 = vld [vmem:[%s1 + $0xdc] sm:$0xf]
  %v77 = vld [vmem:[%s1 + $0xe0] sm:$0xf]
  %v78 = vld [vmem:[%s1 + $0xe4] sm:$0xf]
  %v79 = vld [vmem:[%s1 + $0xe8] sm:$0xf]
  %v80 = vld [vmem:[%s1 + $0xec] sm:$0xf]
  %v81 = vld [vmem:[%s1 + $0xf0] sm:$0xf]
  %v82 = vld [vmem:[%s1 + $0xf4] sm:$0xf]
  %v83 = vld [vmem:[%s1 + $0xf8] sm:$0xf]
  %v84 = vld [vmem:[%s1 + $0xfc] sm:$0xf]
  %86 = vst [vmem:[#allocation1] ss:$9 sm:$0xff] %v20
  %v87 = vld [vmem:[#allocation1] sm:$0xff]
  %v88 = vld [vmem:[#allocation1 + $0x9] sm:$0xff]
  %v89 = vld [vmem:[#allocation1 + $0x12] sm:$0xff]
  %v90 = vld [vmem:[#allocation1 + $0x1b] sm:$0xff]
  %v159 = vunpack.c.l.b16 %v21
  %v160 = vunpack.c.l.b16 %v22
  %v161 = vunpack.c.l.b16 %v23
  %v162 = vunpack.c.l.b16 %v24
  %v163 = vunpack.c.l.b16 %v25
  %v164 = vunpack.c.l.b16 %v26
  %v165 = vunpack.c.l.b16 %v27
  %v166 = vunpack.c.l.b16 %v28
  %v167 = vunpack.c.l.b16 %v29
  %v168 = vunpack.c.l.b16 %v30
  %v169 = vunpack.c.l.b16 %v31
  %v170 = vunpack.c.l.b16 %v32
  %v171 = vunpack.c.l.b16 %v33
  %v172 = vunpack.c.l.b16 %v34
  %v173 = vunpack.c.l.b16 %v35
  %v174 = vunpack.c.l.b16 %v36
  %v175 = vunpack.c.l.b16 %v37
  %v176 = vunpack.c.l.b16 %v38
  %v177 = vunpack.c.l.b16 %v39
  %v178 = vunpack.c.l.b16 %v40
  %v179 = vunpack.c.l.b16 %v41
  %v180 = vunpack.c.l.b16 %v42
  %v181 = vunpack.c.l.b16 %v43
  %v182 = vunpack.c.l.b16 %v44
  %v183 = vunpack.c.l.b16 %v45
  %v184 = vunpack.c.l.b16 %v46
  %v185 = vunpack.c.l.b16 %v47
  %v186 = vunpack.c.l.b16 %v48
  %v187 = vunpack.c.l.b16 %v49
  %v188 = vunpack.c.l.b16 %v50
  %v189 = vunpack.c.l.b16 %v51
  %v190 = vunpack.c.l.b16 %v52
  %v191 = vunpack.c.l.b16 %v53
  %v192 = vunpack.c.l.b16 %v54
  %v193 = vunpack.c.l.b16 %v55
  %v194 = vunpack.c.l.b16 %v56
  %v195 = vunpack.c.l.b16 %v57
  %v196 = vunpack.c.l.b16 %v58
  %v197 = vunpack.c.l.b16 %v59
  %v198 = vunpack.c.l.b16 %v60
  %v199 = vunpack.c.l.b16 %v61
  %v200 = vunpack.c.l.b16 %v62
  %v201 = vunpack.c.l.b16 %v63
  %v202 = vunpack.c.l.b16 %v64
  %v203 = vunpack.c.l.b16 %v65
  %v204 = vunpack.c.l.b16 %v66
  %v205 = vunpack.c.l.b16 %v67
  %v206 = vunpack.c.l.b16 %v68
  %v207 = vunpack.c.l.b16 %v69
  %v208 = vunpack.c.l.b16 %v70
  %v209 = vunpack.c.l.b16 %v71
  %v210 = vunpack.c.l.b16 %v72
  %v211 = vunpack.c.l.b16 %v73
  %v212 = vunpack.c.l.b16 %v74
  %v213 = vunpack.c.l.b16 %v75
  %v214 = vunpack.c.l.b16 %v76
  %v215 = vunpack.c.l.b16 %v77
  %v216 = vunpack.c.l.b16 %v78
  %v217 = vunpack.c.l.b16 %v79
  %v218 = vunpack.c.l.b16 %v80
  %v219 = vunpack.c.l.b16 %v81
  %v220 = vunpack.c.l.b16 %v82
  %v221 = vunpack.c.l.b16 %v83
  %v222 = vunpack.c.l.b16 %v84
  %v223 = vpack.c.b16 %v160, %v159
  %v224 = vpack.c.b16 %v162, %v161
  %v225 = vpack.c.b16 %v164, %v163
  %v226 = vpack.c.b16 %v166, %v165
  %v227 = vpack.c.b16 %v168, %v167
  %v228 = vpack.c.b16 %v170, %v169
  %v229 = vpack.c.b16 %v172, %v171
  %v230 = vpack.c.b16 %v174, %v173
  %v231 = vpack.c.b16 %v176, %v175
  %v232 = vpack.c.b16 %v178, %v177
  %v233 = vpack.c.b16 %v180, %v179
  %v234 = vpack.c.b16 %v182, %v181
  %v235 = vpack.c.b16 %v184, %v183
  %v236 = vpack.c.b16 %v186, %v185
  %v237 = vpack.c.b16 %v188, %v187
  %v238 = vpack.c.b16 %v190, %v189
  %v239 = vpack.c.b16 %v192, %v191
  %v240 = vpack.c.b16 %v194, %v193
  %v241 = vpack.c.b16 %v196, %v195
  %v242 = vpack.c.b16 %v198, %v197
  %v243 = vpack.c.b16 %v200, %v199
  %v244 = vpack.c.b16 %v202, %v201
  %v245 = vpack.c.b16 %v204, %v203
  %v246 = vpack.c.b16 %v206, %v205
  %v247 = vpack.c.b16 %v208, %v207
  %v248 = vpack.c.b16 %v210, %v209
  %v249 = vpack.c.b16 %v212, %v211
  %v250 = vpack.c.b16 %v214, %v213
  %v251 = vpack.c.b16 %v216, %v215
  %v252 = vpack.c.b16 %v218, %v217
  %v253 = vpack.c.b16 %v220, %v219
  %v254 = vpack.c.b16 %v222, %v221
  %287 = vmatpush.bf16.msra.mxu0 %v230
  %288 = vmatpush.bf16.msra.mxu0 %v229
  %289 = vmatpush.bf16.msra.mxu0 %v228
  %290 = vmatpush.bf16.msra.mxu0 %v227
  %291 = vmatpush.bf16.msra.mxu0 %v226
  %292 = vmatpush.bf16.msra.mxu0 %v225
  %293 = vmatpush.bf16.msra.mxu0 %v224
  %294 = vmatpush.bf16.msra.mxu0 %v223
  %295 = vmatmul.bf16.gmra.mxu0 %v87
  %v296 = vpop.f32.mrf.mxu0
  %v297 = vadd.f32 0.0, %v296
  %v298 = vpop.f32.mrf.mxu0
  %299 = vdwg.mxu0
  %300 = vmatpush.bf16.msra.mxu0 %v238
  %301 = vmatpush.bf16.msra.mxu0 %v237
  %302 = vmatpush.bf16.msra.mxu0 %v236
  %303 = vmatpush.bf16.msra.mxu0 %v235
  %304 = vmatpush.bf16.msra.mxu0 %v234
  %305 = vmatpush.bf16.msra.mxu0 %v233
  %306 = vmatpush.bf16.msra.mxu0 %v232
  %307 = vmatpush.bf16.msra.mxu0 %v231
  %308 = vmatmul.bf16.gmra.mxu0 %v88
  %v309 = vpop.f32.mrf.mxu0
  %v310 = vadd.f32 %v297, %v309
  %v311 = vpop.f32.mrf.mxu0
  %312 = vdwg.mxu0
  %313 = vmatpush.bf16.msra.mxu0 %v246
  %314 = vmatpush.bf16.msra.mxu0 %v245
  %315 = vmatpush.bf16.msra.mxu0 %v244
  %316 = vmatpush.bf16.msra.mxu0 %v243
  %317 = vmatpush.bf16.msra.mxu0 %v242
  %318 = vmatpush.bf16.msra.mxu0 %v241
  %319 = vmatpush.bf16.msra.mxu0 %v240
  %320 = vmatpush.bf16.msra.mxu0 %v239
  %321 = vmatmul.bf16.gmra.mxu0 %v89
  %v322 = vpop.f32.mrf.mxu0
  %v323 = vadd.f32 %v310, %v322
  %v324 = vpop.f32.mrf.mxu0
  %325 = vdwg.mxu0
  %326 = vmatpush.bf16.msra.mxu0 %v254
  %327 = vmatpush.bf16.msra.mxu0 %v253
  %328 = vmatpush.bf16.msra.mxu0 %v252
  %329 = vmatpush.bf16.msra.mxu0 %v251
  %330 = vmatpush.bf16.msra.mxu0 %v250
  %331 = vmatpush.bf16.msra.mxu0 %v249
  %332 = vmatpush.bf16.msra.mxu0 %v248
  %333 = vmatpush.bf16.msra.mxu0 %v247
  %334 = vmatmul.bf16.gmra.mxu0 %v90
  %v335 = vpop.f32.mrf.mxu0
  %v336 = vadd.f32 %v323, %v335
  %v337 = vpop.f32.mrf.mxu0
  %338 = vdwg.mxu0
  %v339 = vadd.f32 %v19, %v336
  %340 = vst [vmem:[#allocation2] sm:$0x3] %v339
  // Predicated region
  $region18: #{_lambda_.18} parent=0 // pred_check
    %p341 = pneg %p14
  $region19: #{_lambda_.18} parent=0 // pred_check_branch
    %343 = sbr.rel (%p341) target = $region21
  $region20: #{_lambda_.18} parent=0 // pred_region
    %v344 = vld [vmem:[#allocation2] sm:$0x3]
    %v345 = vld [vmem:[%s2] sm:$0x1]
    %v347 = vperm.slane %v345, 0
    %v349 = vadd.f32 %v344, %v347
    %v350 = vmax.f32 %v349, 0.0
    %v351 = vpack.c.bf16 %v350, %v350
    %352 = vst [vmem:[%s3] sm:$0x1] %v351
  $region21: #{_lambda_.18} parent=0 // pred_fallthru
    _
  // Predicated region
  $region22: #{_lambda_.18} parent=0 // pred_check
    _
  $region23: #{_lambda_.18} parent=0 // pred_check_branch
    %354 = sbr.rel (0) target = $region25
  $region24: #{_lambda_.18} parent=0 // pred_region
    _
  $region25: #{_lambda_.18} parent=0 // pred_fallthru
    _
  // Predicated region
  $region26: #{_lambda_.18} parent=0 // pred_check
    _
  $region27: #{_lambda_.18} parent=0 // pred_check_branch
    %356 = sbr.rel (0) target = $region29
  $region28: #{_lambda_.18} parent=0 // pred_region
    _
  $region29: #{_lambda_.18} parent=0 // pred_fallthru
    _

// kernel: _lambda_.17
$region0: #{_lambda_.17}
  #allocation0 [shape = 'u32[]', space=smem, size = 0x4, offset = 0x4, fixed_abs, tag = 'smem constant byte address 0x4 - core index']
  #allocation1 [shape = 'u32[72,128]{1,0:T(1,128)}', space=vmem, size = 0x9000, scoped, tag = 'internal scratch']
  #allocation2 [shape = 'f32[8,128]{1,0:T(8,128)}', space=vmem, size = 0x1000, scoped, tag = 'scratch operand']
  %s0 = inlined_call_operand.vmem [shape: bf16[8,576], index: 0, kind: input, shape index: {}]
  %s1 = inlined_call_operand.vmem [shape: bf16[576,128], index: 1, kind: input, shape index: {}]
  %s2 = inlined_call_operand.vmem [shape: f32[1,128], index: 2, kind: input, shape index: {}]
  %s3 = inlined_call_operand.vmem [shape: bf16[8,128], index: 3, kind: output, shape index: {}]
  %s4 = sld [smem:[#allocation0]]
  $region30: #{_lambda_.17} parent=0
    _
  %s6 = ssub.s32 1, %s4
  %s7 = scalar_select 0, %s6, %s4
  // Predicated region
  $region2: #{_lambda_.17} parent=0 // pred_check
    _
  $region3: #{_lambda_.17} parent=0 // pred_check_branch
    %9 = sbr.rel (0) target = $region5
  $region4: #{_lambda_.17} parent=0 // pred_region
    _
  $region5: #{_lambda_.17} parent=0 // pred_fallthru
    _
  // Predicated region
  $region6: #{_lambda_.17} parent=0 // pred_check
    _
  $region7: #{_lambda_.17} parent=0 // pred_check_branch
    %11 = sbr.rel (0) target = $region9
  $region8: #{_lambda_.17} parent=0 // pred_region
    _
  $region9: #{_lambda_.17} parent=0 // pred_fallthru
    _
  // Predicated region
  $region10: #{_lambda_.17} parent=0 // pred_check
    _
  $region11: #{_lambda_.17} parent=0 // pred_check_branch
    %13 = sbr.rel (0) target = $region13
  $region12: #{_lambda_.17} parent=0 // pred_region
    _
  $region13: #{_lambda_.17} parent=0 // pred_fallthru
    _
  %p15 = scmp.eq.s32.totalorder 0, 0
  // Predicated region
  $region14: #{_lambda_.17} parent=0 // pred_check
    %p16 = pneg %p15
  $region15: #{_lambda_.17} parent=0 // pred_check_branch
    %18 = sbr.rel (%p16) target = $region17
  $region16: #{_lambda_.17} parent=0 // pred_region
    %19 = vst [vmem:[#allocation2] sm:$0xff] 0.0
  $region17: #{_lambda_.17} parent=0 // pred_fallthru
    _
  %v20 = vld [vmem:[#allocation2] sm:$0xff]
  %v21 = vld [vmem:[%s0] sm:$0xff]
  %v22 = vld [vmem:[%s0 + $0x8] sm:$0xff]
  %v23 = vld [vmem:[%s0 + $0x10] sm:$0xf]
  %v24 = vld [vmem:[%s1] sm:$0xf]
  %v25 = vld [vmem:[%s1 + $0x4] sm:$0xf]
  %v26 = vld [vmem:[%s1 + $0x8] sm:$0xf]
  %v27 = vld [vmem:[%s1 + $0xc] sm:$0xf]
  %v28 = vld [vmem:[%s1 + $0x10] sm:$0xf]
  %v29 = vld [vmem:[%s1 + $0x14] sm:$0xf]
  %v30 = vld [vmem:[%s1 + $0x18] sm:$0xf]
  %v31 = vld [vmem:[%s1 + $0x1c] sm:$0xf]
  %v32 = vld [vmem:[%s1 + $0x20] sm:$0xf]
  %v33 = vld [vmem:[%s1 + $0x24] sm:$0xf]
  %v34 = vld [vmem:[%s1 + $0x28] sm:$0xf]
  %v35 = vld [vmem:[%s1 + $0x2c] sm:$0xf]
  %v36 = vld [vmem:[%s1 + $0x30] sm:$0xf]
  %v37 = vld [vmem:[%s1 + $0x34] sm:$0xf]
  %v38 = vld [vmem:[%s1 + $0x38] sm:$0xf]
  %v39 = vld [vmem:[%s1 + $0x3c] sm:$0xf]
  %v40 = vld [vmem:[%s1 + $0x40] sm:$0xf]
  %v41 = vld [vmem:[%s1 + $0x44] sm:$0xf]
  %v42 = vld [vmem:[%s1 + $0x48] sm:$0xf]
  %v43 = vld [vmem:[%s1 + $0x4c] sm:$0xf]
  %v44 = vld [vmem:[%s1 + $0x50] sm:$0xf]
  %v45 = vld [vmem:[%s1 + $0x54] sm:$0xf]
  %v46 = vld [vmem:[%s1 + $0x58] sm:$0xf]
  %v47 = vld [vmem:[%s1 + $0x5c] sm:$0xf]
  %v48 = vld [vmem:[%s1 + $0x60] sm:$0xf]
  %v49 = vld [vmem:[%s1 + $0x64] sm:$0xf]
  %v50 = vld [vmem:[%s1 + $0x68] sm:$0xf]
  %v51 = vld [vmem:[%s1 + $0x6c] sm:$0xf]
  %v52 = vld [vmem:[%s1 + $0x70] sm:$0xf]
  %v53 = vld [vmem:[%s1 + $0x74] sm:$0xf]
  %v54 = vld [vmem:[%s1 + $0x78] sm:$0xf]
  %v55 = vld [vmem:[%s1 + $0x7c] sm:$0xf]
  %v56 = vld [vmem:[%s1 + $0x80] sm:$0xf]
  %v57 = vld [vmem:[%s1 + $0x84] sm:$0xf]
  %v58 = vld [vmem:[%s1 + $0x88] sm:$0xf]
  %v59 = vld [vmem:[%s1 + $0x8c] sm:$0xf]
  %v60 = vld [vmem:[%s1 + $0x90] sm:$0xf]
  %v61 = vld [vmem:[%s1 + $0x94] sm:$0xf]
  %v62 = vld [vmem:[%s1 + $0x98] sm:$0xf]
  %v63 = vld [vmem:[%s1 + $0x9c] sm:$0xf]
  %v64 = vld [vmem:[%s1 + $0xa0] sm:$0xf]
  %v65 = vld [vmem:[%s1 + $0xa4] sm:$0xf]
  %v66 = vld [vmem:[%s1 + $0xa8] sm:$0xf]
  %v67 = vld [vmem:[%s1 + $0xac] sm:$0xf]
  %v68 = vld [vmem:[%s1 + $0xb0] sm:$0xf]
  %v69 = vld [vmem:[%s1 + $0xb4] sm:$0xf]
  %v70 = vld [vmem:[%s1 + $0xb8] sm:$0xf]
  %v71 = vld [vmem:[%s1 + $0xbc] sm:$0xf]
  %v72 = vld [vmem:[%s1 + $0xc0] sm:$0xf]
  %v73 = vld [vmem:[%s1 + $0xc4] sm:$0xf]
  %v74 = vld [vmem:[%s1 + $0xc8] sm:$0xf]
  %v75 = vld [vmem:[%s1 + $0xcc] sm:$0xf]
  %v76 = vld [vmem:[%s1 + $0xd0] sm:$0xf]
  %v77 = vld [vmem:[%s1 + $0xd4] sm:$0xf]
  %v78 = vld [vmem:[%s1 + $0xd8] sm:$0xf]
  %v79 = vld [vmem:[%s1 + $0xdc] sm:$0xf]
  %v80 = vld [vmem:[%s1 + $0xe0] sm:$0xf]
  %v81 = vld [vmem:[%s1 + $0xe4] sm:$0xf]
  %v82 = vld [vmem:[%s1 + $0xe8] sm:$0xf]
  %v83 = vld [vmem:[%s1 + $0xec] sm:$0xf]
  %v84 = vld [vmem:[%s1 + $0xf0] sm:$0xf]
  %v85 = vld [vmem:[%s1 + $0xf4] sm:$0xf]
  %v86 = vld [vmem:[%s1 + $0xf8] sm:$0xf]
  %v87 = vld [vmem:[%s1 + $0xfc] sm:$0xf]
  %v88 = vld [vmem:[%s1 + $0x100] sm:$0xf]
  %v89 = vld [vmem:[%s1 + $0x104] sm:$0xf]
  %v90 = vld [vmem:[%s1 + $0x108] sm:$0xf]
  %v91 = vld [vmem:[%s1 + $0x10c] sm:$0xf]
  %v92 = vld [vmem:[%s1 + $0x110] sm:$0xf]
  %v93 = vld [vmem:[%s1 + $0x114] sm:$0xf]
  %v94 = vld [vmem:[%s1 + $0x118] sm:$0xf]
  %v95 = vld [vmem:[%s1 + $0x11c] sm:$0xf]
  %v99 = vunpack.c.l.b16 %v21
  %v100 = vunpack.c.h.b16 %v21
  %v101 = vunpack.c.l.b16 %v22
  %v102 = vunpack.c.h.b16 %v22
  %v103 = vunpack.c.l.b16 %v23
  %v104 = vpack.c.b16 %v99, %v99
  %v105 = vpack.c.b16 %v100, %v100
  %v106 = vpack.c.b16 %v101, %v101
  %v107 = vpack.c.b16 %v102, %v102
  %v108 = vpack.c.b16 %v103, %v103
  %v185 = vunpack.c.l.b16 %v24
  %v186 = vunpack.c.l.b16 %v25
  %v187 = vunpack.c.l.b16 %v26
  %v188 = vunpack.c.l.b16 %v27
  %v189 = vunpack.c.l.b16 %v28
  %v190 = vunpack.c.l.b16 %v29
  %v191 = vunpack.c.l.b16 %v30
  %v192 = vunpack.c.l.b16 %v31
  %v193 = vunpack.c.l.b16 %v32
  %v194 = vunpack.c.l.b16 %v33
  %v195 = vunpack.c.l.b16 %v34
  %v196 = vunpack.c.l.b16 %v35
  %v197 = vunpack.c.l.b16 %v36
  %v198 = vunpack.c.l.b16 %v37
  %v199 = vunpack.c.l.b16 %v38
  %v200 = vunpack.c.l.b16 %v39
  %v201 = vunpack.c.l.b16 %v40
  %v202 = vunpack.c.l.b16 %v41
  %v203 = vunpack.c.l.b16 %v42
  %v204 = vunpack.c.l.b16 %v43
  %v205 = vunpack.c.l.b16 %v44
  %v206 = vunpack.c.l.b16 %v45
  %v207 = vunpack.c.l.b16 %v46
  %v208 = vunpack.c.l.b16 %v47
  %v209 = vunpack.c.l.b16 %v48
  %v210 = vunpack.c.l.b16 %v49
  %v211 = vunpack.c.l.b16 %v50
  %v212 = vunpack.c.l.b16 %v51
  %v213 = vunpack.c.l.b16 %v52
  %v214 = vunpack.c.l.b16 %v53
  %v215 = vunpack.c.l.b16 %v54
  %v216 = vunpack.c.l.b16 %v55
  %v217 = vunpack.c.l.b16 %v56
  %v218 = vunpack.c.l.b16 %v57
  %v219 = vunpack.c.l.b16 %v58
  %v220 = vunpack.c.l.b16 %v59
  %v221 = vunpack.c.l.b16 %v60
  %v222 = vunpack.c.l.b16 %v61
  %v223 = vunpack.c.l.b16 %v62
  %v224 = vunpack.c.l.b16 %v63
  %v225 = vunpack.c.l.b16 %v64
  %v226 = vunpack.c.l.b16 %v65
  %v227 = vunpack.c.l.b16 %v66
  %v228 = vunpack.c.l.b16 %v67
  %v229 = vunpack.c.l.b16 %v68
  %v230 = vunpack.c.l.b16 %v69
  %v231 = vunpack.c.l.b16 %v70
  %v232 = vunpack.c.l.b16 %v71
  %v233 = vunpack.c.l.b16 %v72
  %v234 = vunpack.c.l.b16 %v73
  %v235 = vunpack.c.l.b16 %v74
  %v236 = vunpack.c.l.b16 %v75
  %v237 = vunpack.c.l.b16 %v76
  %v238 = vunpack.c.l.b16 %v77
  %v239 = vunpack.c.l.b16 %v78
  %v240 = vunpack.c.l.b16 %v79
  %v241 = vunpack.c.l.b16 %v80
  %v242 = vunpack.c.l.b16 %v81
  %v243 = vunpack.c.l.b16 %v82
  %v244 = vunpack.c.l.b16 %v83
  %v245 = vunpack.c.l.b16 %v84
  %v246 = vunpack.c.l.b16 %v85
  %v247 = vunpack.c.l.b16 %v86
  %v248 = vunpack.c.l.b16 %v87
  %v249 = vunpack.c.l.b16 %v88
  %v250 = vunpack.c.l.b16 %v89
  %v251 = vunpack.c.l.b16 %v90
  %v252 = vunpack.c.l.b16 %v91
  %v253 = vunpack.c.l.b16 %v92
  %v254 = vunpack.c.l.b16 %v93
  %v255 = vunpack.c.l.b16 %v94
  %v256 = vunpack.c.l.b16 %v95
  %v257 = vpack.c.b16 %v186, %v185
  %v258 = vpack.c.b16 %v188, %v187
  %v259 = vpack.c.b16 %v190, %v189
  %v260 = vpack.c.b16 %v192, %v191
  %v261 = vpack.c.b16 %v194, %v193
  %v262 = vpack.c.b16 %v196, %v195
  %v263 = vpack.c.b16 %v198, %v197
  %v264 = vpack.c.b16 %v200, %v199
  %v265 = vpack.c.b16 %v202, %v201
  %v266 = vpack.c.b16 %v204, %v203
  %v267 = vpack.c.b16 %v206, %v205
  %v268 = vpack.c.b16 %v208, %v207
  %v269 = vpack.c.b16 %v210, %v209
  %v270 = vpack.c.b16 %v212, %v211
  %v271 = vpack.c.b16 %v214, %v213
  %v272 = vpack.c.b16 %v216, %v215
  %v273 = vpack.c.b16 %v218, %v217
  %v274 = vpack.c.b16 %v220, %v219
  %v275 = vpack.c.b16 %v222, %v221
  %v276 = vpack.c.b16 %v224, %v223
  %v277 = vpack.c.b16 %v226, %v225
  %v278 = vpack.c.b16 %v228, %v227
  %v279 = vpack.c.b16 %v230, %v229
  %v280 = vpack.c.b16 %v232, %v231
  %v281 = vpack.c.b16 %v234, %v233
  %v282 = vpack.c.b16 %v236, %v235
  %v283 = vpack.c.b16 %v238, %v237
  %v284 = vpack.c.b16 %v240, %v239
  %v285 = vpack.c.b16 %v242, %v241
  %v286 = vpack.c.b16 %v244, %v243
  %v287 = vpack.c.b16 %v246, %v245
  %v288 = vpack.c.b16 %v248, %v247
  %v289 = vpack.c.b16 %v250, %v249
  %v290 = vpack.c.b16 %v252, %v251
  %v291 = vpack.c.b16 %v254, %v253
  %v292 = vpack.c.b16 %v256, %v255
  %vm329 = vcmask 523264
  %v331 = vsel %vm329, %v108, 0
  %333 = vmatpush.bf16.msra.mxu0 %v264
  %334 = vmatpush.bf16.msra.mxu0 %v263
  %335 = vmatpush.bf16.msra.mxu0 %v262
  %336 = vmatpush.bf16.msra.mxu0 %v261
  %337 = vmatpush.bf16.msra.mxu0 %v260
  %338 = vmatpush.bf16.msra.mxu0 %v259
  %339 = vmatpush.bf16.msra.mxu0 %v258
  %340 = vmatpush.bf16.msra.mxu0 %v257
  %341 = vmatmul.bf16.gmra.mxu0 %v104
  %v342 = vpop.f32.mrf.mxu0
  %v343 = vadd.f32 0.0, %v342
  %v344 = vpop.f32.mrf.mxu0
  %345 = vdwg.mxu0
  %346 = vmatpush.bf16.msra.mxu0 %v272
  %347 = vmatpush.bf16.msra.mxu0 %v271
  %348 = vmatpush.bf16.msra.mxu0 %v270
  %349 = vmatpush.bf16.msra.mxu0 %v269
  %350 = vmatpush.bf16.msra.mxu0 %v268
  %351 = vmatpush.bf16.msra.mxu0 %v267
  %352 = vmatpush.bf16.msra.mxu0 %v266
  %353 = vmatpush.bf16.msra.mxu0 %v265
  %354 = vmatmul.bf16.gmra.mxu0 %v105
  %v355 = vpop.f32.mrf.mxu0
  %v356 = vadd.f32 %v343, %v355
  %v357 = vpop.f32.mrf.mxu0
  %358 = vdwg.mxu0
  %359 = vmatpush.bf16.msra.mxu0 %v280
  %360 = vmatpush.bf16.msra.mxu0 %v279
  %361 = vmatpush.bf16.msra.mxu0 %v278
  %362 = vmatpush.bf16.msra.mxu0 %v277
  %363 = vmatpush.bf16.msra.mxu0 %v276
  %364 = vmatpush.bf16.msra.mxu0 %v275
  %365 = vmatpush.bf16.msra.mxu0 %v274
  %366 = vmatpush.bf16.msra.mxu0 %v273
  %367 = vmatmul.bf16.gmra.mxu0 %v106
  %v368 = vpop.f32.mrf.mxu0
  %v369 = vadd.f32 %v356, %v368
  %v370 = vpop.f32.mrf.mxu0
  %371 = vdwg.mxu0
  %372 = vmatpush.bf16.msra.mxu0 %v288
  %373 = vmatpush.bf16.msra.mxu0 %v287
  %374 = vmatpush.bf16.msra.mxu0 %v286
  %375 = vmatpush.bf16.msra.mxu0 %v285
  %376 = vmatpush.bf16.msra.mxu0 %v284
  %377 = vmatpush.bf16.msra.mxu0 %v283
  %378 = vmatpush.bf16.msra.mxu0 %v282
  %379 = vmatpush.bf16.msra.mxu0 %v281
  %380 = vmatmul.bf16.gmra.mxu0 %v107
  %v381 = vpop.f32.mrf.mxu0
  %v382 = vadd.f32 %v369, %v381
  %v383 = vpop.f32.mrf.mxu0
  %384 = vdwg.mxu0
  %385 = vmatpush.bf16.msra.mxu0 0
  %386 = vmatpush.bf16.msra.mxu0 0
  %387 = vmatpush.bf16.msra.mxu0 0
  %388 = vmatpush.bf16.msra.mxu0 0
  %389 = vmatpush.bf16.msra.mxu0 %v292
  %390 = vmatpush.bf16.msra.mxu0 %v291
  %391 = vmatpush.bf16.msra.mxu0 %v290
  %392 = vmatpush.bf16.msra.mxu0 %v289
  %393 = vmatmul.bf16.gmra.mxu0 %v331
  %v394 = vpop.f32.mrf.mxu0
  %v395 = vadd.f32 %v382, %v394
  %v396 = vpop.f32.mrf.mxu0
  %397 = vdwg.mxu0
  %v398 = vadd.f32 %v20, %v395
  %399 = vst [vmem:[#allocation2] sm:$0xff] %v398
  // Predicated region
  $region18: #{_lambda_.17} parent=0 // pred_check
    %p400 = pneg %p15
  $region19: #{_lambda_.17} parent=0 // pred_check_branch
    %402 = sbr.rel (%p400) target = $region21
  $region20: #{_lambda_.17} parent=0 // pred_region
    %v403 = vld [vmem:[#allocation2] sm:$0xff]
    %v404 = vld [vmem:[%s2] sm:$0x1]
    %v406 = vperm.slane %v404, 0
    %v408 = vadd.f32 %v403, %v406
    %v409 = vmax.f32 %v408, 0.0
    %v410 = vpack.c.bf16 %v409, %v409
    %411 = vst [vmem:[%s3] sm:$0xf] %v410
  $region21: #{_lambda_.17} parent=0 // pred_fallthru
    _
  // Predicated region
  $region22: #{_lambda_.17} parent=0 // pred_check
    _
  $region23: #{_lambda_.17} parent=0 // pred_check_branch
    %413 = sbr.rel (0) target = $region25
  $region24: #{_lambda_.17} parent=0 // pred_region
    _
  $region25: #{_lambda_.17} parent=0 // pred_fallthru
    _
  // Predicated region
  $region26: #{_lambda_.17} parent=0 // pred_check
    _
  $region27: #{_lambda_.17} parent=0 // pred_check_branch
    %415 = sbr.rel (0) target = $region29
  $region28: #{_lambda_.17} parent=0 // pred_region
    _
  $region29: #{_lambda_.17} parent=0 // pred_fallthru
    _

// kernel: _lambda_.20
$region0: #{_lambda_.20}
  #allocation0 [shape = 'u32[]', space=smem, size = 0x4, offset = 0x4, fixed_abs, tag = 'smem constant byte address 0x4 - core index']
  #allocation1 [shape = 'u32[72,128]{1,0:T(1,128)}', space=vmem, size = 0x9000, scoped, tag = 'internal scratch']
  %s0 = inlined_call_operand.vmem [shape: f32[2,256,1], index: 0, kind: input, shape index: {}]
  %s1 = inlined_call_operand.vmem [shape: f32[2,256,1], index: 1, kind: input, shape index: {}]
  %s2 = inlined_call_operand.vmem [shape: bf16[2,16,48], index: 2, kind: input, shape index: {}]
  %s3 = inlined_call_operand.vmem [shape: s32[1,48], index: 3, kind: input, shape index: {}]
  %s4 = inlined_call_operand.vmem [shape: f32[3,48], index: 4, kind: input, shape index: {}]
  %s5 = inlined_call_operand.vmem [shape: bf16[2,3,256], index: 5, kind: output, shape index: {}]
  %s6 = sld [smem:[#allocation0]]
  $region53: #{_lambda_.20} parent=0
    _
  %s8 = ssub.s32 1, %s6
  %s9 = scalar_select 0, %s8, %s6
  loop: start=0, step=1, limit=4
  $region2: #{_lambda_.20} parent=0 // loop_pre_header
    _
  $region3: #{_lambda_.20} parent=0 // loop_header
    %s11 = sphi 0, %s15
    %p12 = scmp.ge.s32.totalorder %s11, 4
    %s18 = sphi 0, %s30
    %s19 = sphi 0, %s26
    %s20 = sphi 0, %s18
    %s21 = sphi 0, %s19
    %s22 = sphi 0, %s20
    %s23 = sphi 0, %s21
    %s35 = sphi 0, %s37
    %s38 = sphi 0, %s35
    %s39 = sphi 0, %s38
    %s55 = sphi 0, %s39
    %s63 = sphi 0, %s65
    %s66 = sphi 0, %s63
    %s67 = sphi 0, %s66
    %s83 = sphi 0, %s67
    %s89 = sphi 0, %s91
    %s92 = sphi 0, %s89
    %s93 = sphi 0, %s92
    %s109 = sphi 0, %s93
    %s113 = sphi 0, %s113
    %s115 = sphi 0, %s113
    %s116 = sphi 0, %s115
    %s130 = sphi 0, %s116
    %s134 = sphi 0, %s134
    %s136 = sphi 0, %s134
    %s137 = sphi 0, %s136
    %s151 = sphi 0, %s137
    %s159 = sphi 0, %s161
    %s162 = sphi 0, %s159
    %s163 = sphi 0, %s162
    %s179 = sphi 0, %s163
  $region4: #{_lambda_.20} parent=0 // loop_header_branch
    %14 = sbr.rel (%p12) target = $region8
  $region5: #{_lambda_.20} parent=0 // loop_body
    %s16 = ssub.s32 %s11, 1
    %s17 = ssub.s32 %s11, 2
    %s24 = sadd.s32 1, %s19
    %p25 = scmp.ge.s32.totalorder %s24, 1
    %s26 = scalar_select %p25, 0, %s24
    %s27 = sadd.s32 1, %s18
    %s28 = scalar_select %p25, %s27, %s18
    %p29 = scmp.ge.s32.totalorder %s28, 2
    %s30 = scalar_select %p29, 0, %s28
    %s31 = ssub.s32 %s18, %s30
    %s32 = ssub.s32 %s19, %s26
    %s33 = sor.u32 %s31, %s32
    %p34 = scmp.eq.s32.totalorder %s33, 0
    %s36 = sadd.s32 %s35, 1
    %s37 = scalar_select %p34, %s35, %s36
    %p40 = pneg %p34
    %p41 = scmp.eq.s32.totalorder %s11, 1
    %p42 = por %p40, %p41
    %p43 = scmp.ne.s32.totalorder %s35, %s38
    %p44 = scmp.eq.s32.totalorder %s11, 0
    %p45 = por %p43, %p44
    %p46 = scmp.ne.s32.totalorder %s35, %s38
    %p47 = scmp.eq.s32.totalorder %s16, 1
    %p48 = por %p46, %p47
    %p49 = scmp.ne.s32.totalorder %s38, %s39
    %p50 = scmp.eq.s32.totalorder %s16, 0
    %p51 = por %p49, %p50
    %p52 = scmp.ne.s32.totalorder %s38, %s39
    %p53 = scmp.eq.s32.totalorder %s17, 1
    %p54 = por %p52, %p53
    %p56 = scmp.ne.s32.totalorder %s39, %s55
    %p57 = scmp.eq.s32.totalorder %s17, 0
    %p58 = por %p56, %p57
    %s59 = ssub.s32 %s18, %s30
    %s60 = ssub.s32 %s19, %s26
    %s61 = sor.u32 %s59, %s60
    %p62 = scmp.eq.s32.totalorder %s61, 0
    %s64 = sadd.s32 %s63, 1
    %s65 = scalar_select %p62, %s63, %s64
    %p68 = pneg %p62
    %p69 = scmp.eq.s32.totalorder %s11, 1
    %p70 = por %p68, %p69
    %p71 = scmp.ne.s32.totalorder %s63, %s66
    %p72 = scmp.eq.s32.totalorder %s11, 0
    %p73 = por %p71, %p72
    %p74 = scmp.ne.s32.totalorder %s63, %s66
    %p75 = scmp.eq.s32.totalorder %s16, 1
    %p76 = por %p74, %p75
    %p77 = scmp.ne.s32.totalorder %s66, %s67
    %p78 = scmp.eq.s32.totalorder %s16, 0
    %p79 = por %p77, %p78
    %p80 = scmp.ne.s32.totalorder %s66, %s67
    %p81 = scmp.eq.s32.totalorder %s17, 1
    %p82 = por %p80, %p81
    %p84 = scmp.ne.s32.totalorder %s67, %s83
    %p85 = scmp.eq.s32.totalorder %s17, 0
    %p86 = por %p84, %p85
    %s87 = ssub.s32 %s18, %s30
    %p88 = scmp.eq.s32.totalorder %s87, 0
    %s90 = sadd.s32 %s89, 1
    %s91 = scalar_select %p88, %s89, %s90
    %p94 = pneg %p88
    %p95 = scmp.eq.s32.totalorder %s11, 1
    %p96 = por %p94, %p95
    %p97 = scmp.ne.s32.totalorder %s89, %s92
    %p98 = scmp.eq.s32.totalorder %s11, 0
    %p99 = por %p97, %p98
    %p100 = scmp.ne.s32.totalorder %s89, %s92
    %p101 = scmp.eq.s32.totalorder %s16, 1
    %p102 = por %p100, %p101
    %p103 = scmp.ne.s32.totalorder %s92, %s93
    %p104 = scmp.eq.s32.totalorder %s16, 0
    %p105 = por %p103, %p104
    %p106 = scmp.ne.s32.totalorder %s92, %s93
    %p107 = scmp.eq.s32.totalorder %s17, 1
    %p108 = por %p106, %p107
    %p110 = scmp.ne.s32.totalorder %s93, %s109
    %p111 = scmp.eq.s32.totalorder %s17, 0
    %p112 = por %p110, %p111
    %s114 = sadd.s32 %s113, 1
    %p117 = scmp.eq.s32.totalorder %s11, 1
    %p118 = scmp.ne.s32.totalorder %s113, %s115
    %p119 = scmp.eq.s32.totalorder %s11, 0
    %p120 = por %p118, %p119
    %p121 = scmp.ne.s32.totalorder %s113, %s115
    %p122 = scmp.eq.s32.totalorder %s16, 1
    %p123 = por %p121, %p122
    %p124 = scmp.ne.s32.totalorder %s115, %s116
    %p125 = scmp.eq.s32.totalorder %s16, 0
    %p126 = por %p124, %p125
    %p127 = scmp.ne.s32.totalorder %s115, %s116
    %p128 = scmp.eq.s32.totalorder %s17, 1
    %p129 = por %p127, %p128
    %p131 = scmp.ne.s32.totalorder %s116, %s130
    %p132 = scmp.eq.s32.totalorder %s17, 0
    %p133 = por %p131, %p132
    %s135 = sadd.s32 %s134, 1
    %p138 = scmp.eq.s32.totalorder %s11, 1
    %p139 = scmp.ne.s32.totalorder %s134, %s136
    %p140 = scmp.eq.s32.totalorder %s11, 0
    %p141 = por %p139, %p140
    %p142 = scmp.ne.s32.totalorder %s134, %s136
    %p143 = scmp.eq.s32.totalorder %s16, 1
    %p144 = por %p142, %p143
    %p145 = scmp.ne.s32.totalorder %s136, %s137
    %p146 = scmp.eq.s32.totalorder %s16, 0
    %p147 = por %p145, %p146
    %p148 = scmp.ne.s32.totalorder %s136, %s137
    %p149 = scmp.eq.s32.totalorder %s17, 1
    %p150 = por %p148, %p149
    %p152 = scmp.ne.s32.totalorder %s137, %s151
    %p153 = scmp.eq.s32.totalorder %s17, 0
    %p154 = por %p152, %p153
    %s155 = ssub.s32 %s18, %s30
    %s156 = ssub.s32 %s19, %s26
    %s157 = sor.u32 %s155, %s156
    %p158 = scmp.eq.s32.totalorder %s157, 0
    %s160 = sadd.s32 %s159, 1
    %s161 = scalar_select %p158, %s159, %s160
    %p164 = pneg %p158
    %p165 = scmp.eq.s32.totalorder %s11, 1
    %p166 = por %p164, %p165
    %p167 = scmp.ne.s32.totalorder %s159, %s162
    %p168 = scmp.eq.s32.totalorder %s11, 0
    %p169 = por %p167, %p168
    %p170 = scmp.ne.s32.totalorder %s159, %s162
    %p171 = scmp.eq.s32.totalorder %s16, 1
    %p172 = por %p170, %p171
    %p173 = scmp.ne.s32.totalorder %s162, %s163
    %p174 = scmp.eq.s32.totalorder %s16, 0
    %p175 = por %p173, %p174
    %p176 = scmp.ne.s32.totalorder %s162, %s163
    %p177 = scmp.eq.s32.totalorder %s17, 1
    %p178 = por %p176, %p177
    %p180 = scmp.ne.s32.totalorder %s163, %s179
    %p181 = scmp.eq.s32.totalorder %s17, 0
    %p182 = por %p180, %p181
    %p183 = scmp.le.s32.totalorder 1, %s11
    %p184 = scmp.lt.s32.totalorder %s11, 3
    %p185 = pnand %p183, %p184
    %p186 = pneg %p185
    // Predicated region
    $region9: #{_lambda_.20} parent=5 // pred_check
      _
    $region10: #{_lambda_.20} parent=5 // pred_check_branch
      %188 = sbr.rel (%p185) target = $region12
    $region11: #{_lambda_.20} parent=5 // pred_region
      %s189 = ssub.s32 %s11, 1
      // Predicated region
      $region13: #{_lambda_.20} parent=11 // pred_check
        %p190 = pneg %p126
      $region14: #{_lambda_.20} parent=11 // pred_check_branch
        %192 = sbr.rel (%p190) target = $region16
      $region15: #{_lambda_.20} parent=11 // pred_region
        _
      $region16: #{_lambda_.20} parent=11 // pred_fallthru
        _
      // Predicated region
      $region17: #{_lambda_.20} parent=11 // pred_check
        %p193 = pneg %p147
      $region18: #{_lambda_.20} parent=11 // pred_check_branch
        %195 = sbr.rel (%p193) target = $region20
      $region19: #{_lambda_.20} parent=11 // pred_region
        _
      $region20: #{_lambda_.20} parent=11 // pred_fallthru
        _
    $region12: #{_lambda_.20} parent=5 // pred_fallthru
      _
    %p196 = scmp.lt.s32.totalorder %s11, 2
    // Predicated region
    $region21: #{_lambda_.20} parent=5 // pred_check
      %p197 = pneg %p196
    $region22: #{_lambda_.20} parent=5 // pred_check_branch
      %199 = sbr.rel (%p197) target = $region24
    $region23: #{_lambda_.20} parent=5 // pred_region
      // Predicated region
      $region25: #{_lambda_.20} parent=23 // pred_check
        %p200 = pneg %p45
      $region26: #{_lambda_.20} parent=23 // pred_check_branch
        %202 = sbr.rel (%p200) target = $region28
      $region27: #{_lambda_.20} parent=23 // pred_region
        %s203 = smul.u32 32, %s19
        %p204 = scmp.lt.s32.totalorder %s18, 1
        %s205 = scalar_select %p204, %s18, 1
        %p206 = scmp.lt.s32.totalorder %s203, 31
        %s207 = scalar_select %p206, %s203, 31
        %s208 = smul.addr %s205, 32
        %s209 = sadd.s32 %s207, %s208
        %s210 = smul.addr %s209, 8
        %s211 = scalar_lea.vmem %s0, %s210
        %s212 = smul.u32 32, %s19
      $region28: #{_lambda_.20} parent=23 // pred_fallthru
        _
      // Predicated region
      $region29: #{_lambda_.20} parent=23 // pred_check
        %p213 = pneg %p73
      $region30: #{_lambda_.20} parent=23 // pred_check_branch
        %215 = sbr.rel (%p213) target = $region32
      $region31: #{_lambda_.20} parent=23 // pred_region
        %s216 = smul.u32 32, %s19
        %p217 = scmp.lt.s32.totalorder %s18, 1
        %s218 = scalar_select %p217, %s18, 1
        %p219 = scmp.lt.s32.totalorder %s216, 31
        %s220 = scalar_select %p219, %s216, 31
        %s221 = smul.addr %s218, 32
        %s222 = sadd.s32 %s220, %s221
        %s223 = smul.addr %s222, 8
        %s224 = scalar_lea.vmem %s1, %s223
        %s225 = smul.u32 32, %s19
      $region32: #{_lambda_.20} parent=23 // pred_fallthru
        _
      // Predicated region
      $region33: #{_lambda_.20} parent=23 // pred_check
        %p226 = pneg %p99
      $region34: #{_lambda_.20} parent=23 // pred_check_branch
        %228 = sbr.rel (%p226) target = $region36
      $region35: #{_lambda_.20} parent=23 // pred_region
        %p229 = scmp.lt.s32.totalorder %s18, 1
        %s230 = scalar_select %p229, %s18, 1
        %s231 = smul.addr %s230, 2
        %s232 = smul.addr %s231, 4
        %s233 = scalar_lea.vmem %s2, %s232
      $region36: #{_lambda_.20} parent=23 // pred_fallthru
        _
    $region24: #{_lambda_.20} parent=5 // pred_fallthru
      _
    %p234 = scmp.le.s32.totalorder 1, %s11
    %p235 = scmp.lt.s32.totalorder %s11, 3
    %p236 = pnand %p234, %p235
    %p237 = pneg %p236
    // Predicated region
    $region37: #{_lambda_.20} parent=5 // pred_check
      _
    $region38: #{_lambda_.20} parent=5 // pred_check_branch
      %239 = sbr.rel (%p236) target = $region40
    $region39: #{_lambda_.20} parent=5 // pred_region
      %s240 = ssub.s32 %s11, 1
      %s241 = smul.u32 32, %s21
      %p242 = scmp.lt.s32.totalorder %s20, 1
      %s243 = scalar_select %p242, %s20, 1
      %p244 = scmp.lt.s32.totalorder %s241, 31
      %s245 = scalar_select %p244, %s241, 31
      %s246 = smul.addr %s243, 32
      %s247 = sadd.s32 %s245, %s246
      %s248 = smul.addr %s247, 8
      %s249 = scalar_lea.vmem %s0, %s248
      %p250 = pneg %p51
      %p251 = pneg %p48
      %s252 = smul.u32 32, %s21
      %p253 = scmp.lt.s32.totalorder %s20, 1
      %s254 = scalar_select %p253, %s20, 1
      %p255 = scmp.lt.s32.totalorder %s252, 31
      %s256 = scalar_select %p255, %s252, 31
      %s257 = smul.addr %s254, 32
      %s258 = sadd.s32 %s256, %s257
      %s259 = smul.addr %s258, 8
      %s260 = scalar_lea.vmem %s1, %s259
      %p261 = pneg %p79
      %p262 = pneg %p76
      %p263 = scmp.lt.s32.totalorder %s20, 1
      %s264 = scalar_select %p263, %s20, 1
      %s265 = smul.addr %s264, 2
      %s266 = smul.addr %s265, 4
      %s267 = scalar_lea.vmem %s2, %s266
      %p268 = pneg %p105
      %p269 = pneg %p102
      %p270 = pneg %p126
      %p271 = pneg %p123
      %p272 = pneg %p147
      %p273 = pneg %p144
      %p274 = pneg %p175
      %p275 = pneg %p172
      %s276 = smul.u32 2, %s21
      %p277 = scmp.lt.s32.totalorder %s20, 1
      %s278 = scalar_select %p277, %s20, 1
      %p279 = scmp.lt.s32.totalorder %s276, 1
      %s280 = scalar_select %p279, %s276, 1
      %s281 = smul.addr %s278, 2
      %s282 = sadd.s32 %s280, %s281
      %s283 = smul.addr %s282, 2
      %s284 = scalar_lea.vmem %s5, %s283
      %s285 = smul.u32 32, %s21
      %p286 = scmp.lt.s32.totalorder %s20, 1
      %s287 = scalar_select %p286, %s20, 1
      %p288 = scmp.lt.s32.totalorder %s285, 31
      %s289 = scalar_select %p288, %s285, 31
      %s290 = smul.addr %s287, 32
      %s291 = sadd.s32 %s289, %s290
      %s292 = smul.addr %s291, 8
      %s293 = scalar_lea.vmem %s0, %s292
      %s294 = smul.u32 32, %s21
      %s295 = smul.u32 32, %s21
      %p296 = scmp.lt.s32.totalorder %s20, 1
      %s297 = scalar_select %p296, %s20, 1
      %p298 = scmp.lt.s32.totalorder %s295, 31
      %s299 = scalar_select %p298, %s295, 31
      %s300 = smul.addr %s297, 32
      %s301 = sadd.s32 %s299, %s300
      %s302 = smul.addr %s301, 8
      %s303 = scalar_lea.vmem %s1, %s302
      %s304 = smul.u32 32, %s21
      %p305 = scmp.lt.s32.totalorder %s20, 1
      %s306 = scalar_select %p305, %s20, 1
      %s307 = smul.addr %s306, 2
      %s308 = smul.addr %s307, 4
      %s309 = scalar_lea.vmem %s2, %s308
      %s310 = smul.u32 2, %s21
      %p311 = scmp.lt.s32.totalorder %s20, 1
      %s312 = scalar_select %p311, %s20, 1
      %p313 = scmp.lt.s32.totalorder %s310, 1
      %s314 = scalar_select %p313, %s310, 1
      %s315 = smul.addr %s312, 2
      %s316 = sadd.s32 %s314, %s315
      %s317 = smul.addr %s316, 2
      %s318 = scalar_lea.vmem %s5, %s317
      %s319 = smul.u32 2, %s21
      %v321 = vld [vmem:[%s293] sm:$0xff]
      %v322 = vld [vmem:[%s293 + $0x8] sm:$0xff]
      %v323 = vld [vmem:[%s293 + $0x10] sm:$0xff]
      %v324 = vld [vmem:[%s293 + $0x18] sm:$0xff]
      %v325 = vld [vmem:[%s293 + $0x20] sm:$0xff]
      %v326 = vld [vmem:[%s293 + $0x28] sm:$0xff]
      %v327 = vld [vmem:[%s293 + $0x30] sm:$0xff]
      %v328 = vld [vmem:[%s293 + $0x38] sm:$0xff]
      %v329 = vld [vmem:[%s293 + $0x40] sm:$0xff]
      %v330 = vld [vmem:[%s293 + $0x48] sm:$0xff]
      %v331 = vld [vmem:[%s293 + $0x50] sm:$0xff]
      %v332 = vld [vmem:[%s293 + $0x58] sm:$0xff]
      %v333 = vld [vmem:[%s293 + $0x60] sm:$0xff]
      %v334 = vld [vmem:[%s293 + $0x68] sm:$0xff]
      %v335 = vld [vmem:[%s293 + $0x70] sm:$0xff]
      %v336 = vld [vmem:[%s293 + $0x78] sm:$0xff]
      %v337 = vld [vmem:[%s293 + $0x80] sm:$0xff]
      %v338 = vld [vmem:[%s293 + $0x88] sm:$0xff]
      %v339 = vld [vmem:[%s293 + $0x90] sm:$0xff]
      %v340 = vld [vmem:[%s293 + $0x98] sm:$0xff]
      %v341 = vld [vmem:[%s293 + $0xa0] sm:$0xff]
      %v342 = vld [vmem:[%s293 + $0xa8] sm:$0xff]
      %v343 = vld [vmem:[%s293 + $0xb0] sm:$0xff]
      %v344 = vld [vmem:[%s293 + $0xb8] sm:$0xff]
      %v345 = vld [vmem:[%s293 + $0xc0] sm:$0xff]
      %v346 = vld [vmem:[%s293 + $0xc8] sm:$0xff]
      %v347 = vld [vmem:[%s293 + $0xd0] sm:$0xff]
      %v348 = vld [vmem:[%s293 + $0xd8] sm:$0xff]
      %v349 = vld [vmem:[%s293 + $0xe0] sm:$0xff]
      %v350 = vld [vmem:[%s293 + $0xe8] sm:$0xff]
      %v351 = vld [vmem:[%s293 + $0xf0] sm:$0xff]
      %v352 = vld [vmem:[%s293 + $0xf8] sm:$0xff]
      %v353 = vld [vmem:[%s303] sm:$0xff]
      %v354 = vld [vmem:[%s303 + $0x8] sm:$0xff]
      %v355 = vld [vmem:[%s303 + $0x10] sm:$0xff]
      %v356 = vld [vmem:[%s303 + $0x18] sm:$0xff]
      %v357 = vld [vmem:[%s303 + $0x20] sm:$0xff]
      %v358 = vld [vmem:[%s303 + $0x28] sm:$0xff]
      %v359 = vld [vmem:[%s303 + $0x30] sm:$0xff]
      %v360 = vld [vmem:[%s303 + $0x38] sm:$0xff]
      %v361 = vld [vmem:[%s303 + $0x40] sm:$0xff]
      %v362 = vld [vmem:[%s303 + $0x48] sm:$0xff]
      %v363 = vld [vmem:[%s303 + $0x50] sm:$0xff]
      %v364 = vld [vmem:[%s303 + $0x58] sm:$0xff]
      %v365 = vld [vmem:[%s303 + $0x60] sm:$0xff]
      %v366 = vld [vmem:[%s303 + $0x68] sm:$0xff]
      %v367 = vld [vmem:[%s303 + $0x70] sm:$0xff]
      %v368 = vld [vmem:[%s303 + $0x78] sm:$0xff]
      %v369 = vld [vmem:[%s303 + $0x80] sm:$0xff]
      %v370 = vld [vmem:[%s303 + $0x88] sm:$0xff]
      %v371 = vld [vmem:[%s303 + $0x90] sm:$0xff]
      %v372 = vld [vmem:[%s303 + $0x98] sm:$0xff]
      %v373 = vld [vmem:[%s303 + $0xa0] sm:$0xff]
      %v374 = vld [vmem:[%s303 + $0xa8] sm:$0xff]
      %v375 = vld [vmem:[%s303 + $0xb0] sm:$0xff]
      %v376 = vld [vmem:[%s303 + $0xb8] sm:$0xff]
      %v377 = vld [vmem:[%s303 + $0xc0] sm:$0xff]
      %v378 = vld [vmem:[%s303 + $0xc8] sm:$0xff]
      %v379 = vld [vmem:[%s303 + $0xd0] sm:$0xff]
      %v380 = vld [vmem:[%s303 + $0xd8] sm:$0xff]
      %v381 = vld [vmem:[%s303 + $0xe0] sm:$0xff]
      %v382 = vld [vmem:[%s303 + $0xe8] sm:$0xff]
      %v383 = vld [vmem:[%s303 + $0xf0] sm:$0xff]
      %v384 = vld [vmem:[%s303 + $0xf8] sm:$0xff]
      %v385 = vfloor.f32 %v321
      %v386 = vfloor.f32 %v322
      %v387 = vfloor.f32 %v323
      %v388 = vfloor.f32 %v324
      %v389 = vfloor.f32 %v325
      %v390 = vfloor.f32 %v326
      %v391 = vfloor.f32 %v327
      %v392 = vfloor.f32 %v328
      %v393 = vfloor.f32 %v329
      %v394 = vfloor.f32 %v330
      %v395 = vfloor.f32 %v331
      %v396 = vfloor.f32 %v332
      %v397 = vfloor.f32 %v333
      %v398 = vfloor.f32 %v334
      %v399 = vfloor.f32 %v335
      %v400 = vfloor.f32 %v336
      %v401 = vfloor.f32 %v337
      %v402 = vfloor.f32 %v338
      %v403 = vfloor.f32 %v339
      %v404 = vfloor.f32 %v340
      %v405 = vfloor.f32 %v341
      %v406 = vfloor.f32 %v342
      %v407 = vfloor.f32 %v343
      %v408 = vfloor.f32 %v344
      %v409 = vfloor.f32 %v345
      %v410 = vfloor.f32 %v346
      %v411 = vfloor.f32 %v347
      %v412 = vfloor.f32 %v348
      %v413 = vfloor.f32 %v349
      %v414 = vfloor.f32 %v350
      %v415 = vfloor.f32 %v351
      %v416 = vfloor.f32 %v352
      %v417 = vfloor.f32 %v353
      %v418 = vfloor.f32 %v354
      %v419 = vfloor.f32 %v355
      %v420 = vfloor.f32 %v356
      %v421 = vfloor.f32 %v357
      %v422 = vfloor.f32 %v358
      %v423 = vfloor.f32 %v359
      %v424 = vfloor.f32 %v360
      %v425 = vfloor.f32 %v361
      %v426 = vfloor.f32 %v362
      %v427 = vfloor.f32 %v363
      %v428 = vfloor.f32 %v364
      %v429 = vfloor.f32 %v365
      %v430 = vfloor.f32 %v366
      %v431 = vfloor.f32 %v367
      %v432 = vfloor.f32 %v368
      %v433 = vfloor.f32 %v369
      %v434 = vfloor.f32 %v370
      %v435 = vfloor.f32 %v371
      %v436 = vfloor.f32 %v372
      %v437 = vfloor.f32 %v373
      %v438 = vfloor.f32 %v374
      %v439 = vfloor.f32 %v375
      %v440 = vfloor.f32 %v376
      %v441 = vfloor.f32 %v377
      %v442 = vfloor.f32 %v378
      %v443 = vfloor.f32 %v379
      %v444 = vfloor.f32 %v380
      %v445 = vfloor.f32 %v381
      %v446 = vfloor.f32 %v382
      %v447 = vfloor.f32 %v383
      %v448 = vfloor.f32 %v384
      %v449 = vsub.f32 %v321, %v385
      %v450 = vsub.f32 %v322, %v386
      %v451 = vsub.f32 %v323, %v387
      %v452 = vsub.f32 %v324, %v388
      %v453 = vsub.f32 %v325, %v389
      %v454 = vsub.f32 %v326, %v390
      %v455 = vsub.f32 %v327, %v391
      %v456 = vsub.f32 %v328, %v392
      %v457 = vsub.f32 %v329, %v393
      %v458 = vsub.f32 %v330, %v394
      %v459 = vsub.f32 %v331, %v395
      %v460 = vsub.f32 %v332, %v396
      %v461 = vsub.f32 %v333, %v397
      %v462 = vsub.f32 %v334, %v398
      %v463 = vsub.f32 %v335, %v399
      %v464 = vsub.f32 %v336, %v400
      %v465 = vsub.f32 %v337, %v401
      %v466 = vsub.f32 %v338, %v402
      %v467 = vsub.f32 %v339, %v403
      %v468 = vsub.f32 %v340, %v404
      %v469 = vsub.f32 %v341, %v405
      %v470 = vsub.f32 %v342, %v406
      %v471 = vsub.f32 %v343, %v407
      %v472 = vsub.f32 %v344, %v408
      %v473 = vsub.f32 %v345, %v409
      %v474 = vsub.f32 %v346, %v410
      %v475 = vsub.f32 %v347, %v411
      %v476 = vsub.f32 %v348, %v412
      %v477 = vsub.f32 %v349, %v413
      %v478 = vsub.f32 %v350, %v414
      %v479 = vsub.f32 %v351, %v415
      %v480 = vsub.f32 %v352, %v416
      %v481 = vsub.f32 1.0, %v449
      %v482 = vsub.f32 1.0, %v450
      %v483 = vsub.f32 1.0, %v451
      %v484 = vsub.f32 1.0, %v452
      %v485 = vsub.f32 1.0, %v453
      %v486 = vsub.f32 1.0, %v454
      %v487 = vsub.f32 1.0, %v455
      %v488 = vsub.f32 1.0, %v456
      %v489 = vsub.f32 1.0, %v457
      %v490 = vsub.f32 1.0, %v458
      %v491 = vsub.f32 1.0, %v459
      %v492 = vsub.f32 1.0, %v460
      %v493 = vsub.f32 1.0, %v461
      %v494 = vsub.f32 1.0, %v462
      %v495 = vsub.f32 1.0, %v463
      %v496 = vsub.f32 1.0, %v464
      %v497 = vsub.f32 1.0, %v465
      %v498 = vsub.f32 1.0, %v466
      %v499 = vsub.f32 1.0, %v467
      %v500 = vsub.f32 1.0, %v468
      %v501 = vsub.f32 1.0, %v469
      %v502 = vsub.f32 1.0, %v470
      %v503 = vsub.f32 1.0, %v471
      %v504 = vsub.f32 1.0, %v472
      %v505 = vsub.f32 1.0, %v473
      %v506 = vsub.f32 1.0, %v474
      %v507 = vsub.f32 1.0, %v475
      %v508 = vsub.f32 1.0, %v476
      %v509 = vsub.f32 1.0, %v477
      %v510 = vsub.f32 1.0, %v478
      %v511 = vsub.f32 1.0, %v479
      %v512 = vsub.f32 1.0, %v480
      %v513 = vsub.f32 %v353, %v417
      %v514 = vsub.f32 %v354, %v418
      %v515 = vsub.f32 %v355, %v419
      %v516 = vsub.f32 %v356, %v420
      %v517 = vsub.f32 %v357, %v421
      %v518 = vsub.f32 %v358, %v422
      %v519 = vsub.f32 %v359, %v423
      %v520 = vsub.f32 %v360, %v424
      %v521 = vsub.f32 %v361, %v425
      %v522 = vsub.f32 %v362, %v426
      %v523 = vsub.f32 %v363, %v427
      %v524 = vsub.f32 %v364, %v428
      %v525 = vsub.f32 %v365, %v429
      %v526 = vsub.f32 %v366, %v430
      %v527 = vsub.f32 %v367, %v431
      %v528 = vsub.f32 %v368, %v432
      %v529 = vsub.f32 %v369, %v433
      %v530 = vsub.f32 %v370, %v434
      %v531 = vsub.f32 %v371, %v435
      %v532 = vsub.f32 %v372, %v436
      %v533 = vsub.f32 %v373, %v437
      %v534 = vsub.f32 %v374, %v438
      %v535 = vsub.f32 %v375, %v439
      %v536 = vsub.f32 %v376, %v440
      %v537 = vsub.f32 %v377, %v441
      %v538 = vsub.f32 %v378, %v442
      %v539 = vsub.f32 %v379, %v443
      %v540 = vsub.f32 %v380, %v444
      %v541 = vsub.f32 %v381, %v445
      %v542 = vsub.f32 %v382, %v446
      %v543 = vsub.f32 %v383, %v447
      %v544 = vsub.f32 %v384, %v448
      %v545 = vsub.f32 1.0, %v513
      %v546 = vsub.f32 1.0, %v514
      %v547 = vsub.f32 1.0, %v515
      %v548 = vsub.f32 1.0, %v516
      %v549 = vsub.f32 1.0, %v517
      %v550 = vsub.f32 1.0, %v518
      %v551 = vsub.f32 1.0, %v519
      %v552 = vsub.f32 1.0, %v520
      %v553 = vsub.f32 1.0, %v521
      %v554 = vsub.f32 1.0, %v522
      %v555 = vsub.f32 1.0, %v523
      %v556 = vsub.f32 1.0, %v524
      %v557 = vsub.f32 1.0, %v525
      %v558 = vsub.f32 1.0, %v526
      %v559 = vsub.f32 1.0, %v527
      %v560 = vsub.f32 1.0, %v528
      %v561 = vsub.f32 1.0, %v529
      %v562 = vsub.f32 1.0, %v530
      %v563 = vsub.f32 1.0, %v531
      %v564 = vsub.f32 1.0, %v532
      %v565 = vsub.f32 1.0, %v533
      %v566 = vsub.f32 1.0, %v534
      %v567 = vsub.f32 1.0, %v535
      %v568 = vsub.f32 1.0, %v536
      %v569 = vsub.f32 1.0, %v537
      %v570 = vsub.f32 1.0, %v538
      %v571 = vsub.f32 1.0, %v539
      %v572 = vsub.f32 1.0, %v540
      %v573 = vsub.f32 1.0, %v541
      %v574 = vsub.f32 1.0, %v542
      %v575 = vsub.f32 1.0, %v543
      %v576 = vsub.f32 1.0, %v544
      %v577 = vcvt.f32.s32.to.zero.pseudo %v385
      %v578 = vcvt.f32.s32.to.zero.pseudo %v386
      %v579 = vcvt.f32.s32.to.zero.pseudo %v387
      %v580 = vcvt.f32.s32.to.zero.pseudo %v388
      %v581 = vcvt.f32.s32.to.zero.pseudo %v389
      %v582 = vcvt.f32.s32.to.zero.pseudo %v390
      %v583 = vcvt.f32.s32.to.zero.pseudo %v391
      %v584 = vcvt.f32.s32.to.zero.pseudo %v392
      %v585 = vcvt.f32.s32.to.zero.pseudo %v393
      %v586 = vcvt.f32.s32.to.zero.pseudo %v394
      %v587 = vcvt.f32.s32.to.zero.pseudo %v395
      %v588 = vcvt.f32.s32.to.zero.pseudo %v396
      %v589 = vcvt.f32.s32.to.zero.pseudo %v397
      %v590 = vcvt.f32.s32.to.zero.pseudo %v398
      %v591 = vcvt.f32.s32.to.zero.pseudo %v399
      %v592 = vcvt.f32.s32.to.zero.pseudo %v400
      %v593 = vcvt.f32.s32.to.zero.pseudo %v401
      %v594 = vcvt.f32.s32.to.zero.pseudo %v402
      %v595 = vcvt.f32.s32.to.zero.pseudo %v403
      %v596 = vcvt.f32.s32.to.zero.pseudo %v404
      %v597 = vcvt.f32.s32.to.zero.pseudo %v405
      %v598 = vcvt.f32.s32.to.zero.pseudo %v406
      %v599 = vcvt.f32.s32.to.zero.pseudo %v407
      %v600 = vcvt.f32.s32.to.zero.pseudo %v408
      %v601 = vcvt.f32.s32.to.zero.pseudo %v409
      %v602 = vcvt.f32.s32.to.zero.pseudo %v410
      %v603 = vcvt.f32.s32.to.zero.pseudo %v411
      %v604 = vcvt.f32.s32.to.zero.pseudo %v412
      %v605 = vcvt.f32.s32.to.zero.pseudo %v413
      %v606 = vcvt.f32.s32.to.zero.pseudo %v414
      %v607 = vcvt.f32.s32.to.zero.pseudo %v415
      %v608 = vcvt.f32.s32.to.zero.pseudo %v416
      %v609 = vcvt.f32.s32.to.zero.pseudo %v417
      %v610 = vcvt.f32.s32.to.zero.pseudo %v418
      %v611 = vcvt.f32.s32.to.zero.pseudo %v419
      %v612 = vcvt.f32.s32.to.zero.pseudo %v420
      %v613 = vcvt.f32.s32.to.zero.pseudo %v421
      %v614 = vcvt.f32.s32.to.zero.pseudo %v422
      %v615 = vcvt.f32.s32.to.zero.pseudo %v423
      %v616 = vcvt.f32.s32.to.zero.pseudo %v424
      %v617 = vcvt.f32.s32.to.zero.pseudo %v425
      %v618 = vcvt.f32.s32.to.zero.pseudo %v426
      %v619 = vcvt.f32.s32.to.zero.pseudo %v427
      %v620 = vcvt.f32.s32.to.zero.pseudo %v428
      %v621 = vcvt.f32.s32.to.zero.pseudo %v429
      %v622 = vcvt.f32.s32.to.zero.pseudo %v430
      %v623 = vcvt.f32.s32.to.zero.pseudo %v431
      %v624 = vcvt.f32.s32.to.zero.pseudo %v432
      %v625 = vcvt.f32.s32.to.zero.pseudo %v433
      %v626 = vcvt.f32.s32.to.zero.pseudo %v434
      %v627 = vcvt.f32.s32.to.zero.pseudo %v435
      %v628 = vcvt.f32.s32.to.zero.pseudo %v436
      %v629 = vcvt.f32.s32.to.zero.pseudo %v437
      %v630 = vcvt.f32.s32.to.zero.pseudo %v438
      %v631 = vcvt.f32.s32.to.zero.pseudo %v439
      %v632 = vcvt.f32.s32.to.zero.pseudo %v440
      %v633 = vcvt.f32.s32.to.zero.pseudo %v441
      %v634 = vcvt.f32.s32.to.zero.pseudo %v442
      %v635 = vcvt.f32.s32.to.zero.pseudo %v443
      %v636 = vcvt.f32.s32.to.zero.pseudo %v444
      %v637 = vcvt.f32.s32.to.zero.pseudo %v445
      %v638 = vcvt.f32.s32.to.zero.pseudo %v446
      %v639 = vcvt.f32.s32.to.zero.pseudo %v447
      %v640 = vcvt.f32.s32.to.zero.pseudo %v448
      %v641 = vlaneseq
      %v642 = vand.u32 %v641, 127
      %643 = vset.pattern.permute.xlu0 0
      %644 = vperm.xlu0 %643, %v609
      %v645 = vpop.permute.xlu0 %644
      %646 = vset.pattern.permute.xlu0 0
      %647 = vperm.xlu0 %646, %v610
      %v648 = vpop.permute.xlu0 %647
      %649 = vset.pattern.permute.xlu0 0
      %650 = vperm.xlu0 %649, %v611
      %v651 = vpop.permute.xlu0 %650
      %652 = vset.pattern.permute.xlu0 0
      %653 = vperm.xlu0 %652, %v612
      %v654 = vpop.permute.xlu0 %653
      %655 = vset.pattern.permute.xlu0 0
      %656 = vperm.xlu0 %655, %v613
      %v657 = vpop.permute.xlu0 %656
      %658 = vset.pattern.permute.xlu0 0
      %659 = vperm.xlu0 %658, %v614
      %v660 = vpop.permute.xlu0 %659
      %661 = vset.pattern.permute.xlu0 0
      %662 = vperm.xlu0 %661, %v615
      %v663 = vpop.permute.xlu0 %662
      %664 = vset.pattern.permute.xlu0 0
      %665 = vperm.xlu0 %664, %v616
      %v666 = vpop.permute.xlu0 %665
      %667 = vset.pattern.permute.xlu0 0
      %668 = vperm.xlu0 %667, %v617
      %v669 = vpop.permute.xlu0 %668
      %670 = vset.pattern.permute.xlu0 0
      %671 = vperm.xlu0 %670, %v618
      %v672 = vpop.permute.xlu0 %671
      %673 = vset.pattern.permute.xlu0 0
      %674 = vperm.xlu0 %673, %v619
      %v675 = vpop.permute.xlu0 %674
      %676 = vset.pattern.permute.xlu0 0
      %677 = vperm.xlu0 %676, %v620
      %v678 = vpop.permute.xlu0 %677
      %679 = vset.pattern.permute.xlu0 0
      %680 = vperm.xlu0 %679, %v621
      %v681 = vpop.permute.xlu0 %680
      %682 = vset.pattern.permute.xlu0 0
      %683 = vperm.xlu0 %682, %v622
      %v684 = vpop.permute.xlu0 %683
      %685 = vset.pattern.permute.xlu0 0
      %686 = vperm.xlu0 %685, %v623
      %v687 = vpop.permute.xlu0 %686
      %688 = vset.pattern.permute.xlu0 0
      %689 = vperm.xlu0 %688, %v624
      %v690 = vpop.permute.xlu0 %689
      %691 = vset.pattern.permute.xlu0 0
      %692 = vperm.xlu0 %691, %v625
      %v693 = vpop.permute.xlu0 %692
      %694 = vset.pattern.permute.xlu0 0
      %695 = vperm.xlu0 %694, %v626
      %v696 = vpop.permute.xlu0 %695
      %697 = vset.pattern.permute.xlu0 0
      %698 = vperm.xlu0 %697, %v627
      %v699 = vpop.permute.xlu0 %698
      %700 = vset.pattern.permute.xlu0 0
      %701 = vperm.xlu0 %700, %v628
      %v702 = vpop.permute.xlu0 %701
      %703 = vset.pattern.permute.xlu0 0
      %704 = vperm.xlu0 %703, %v629
      %v705 = vpop.permute.xlu0 %704
      %706 = vset.pattern.permute.xlu0 0
      %707 = vperm.xlu0 %706, %v630
      %v708 = vpop.permute.xlu0 %707
      %709 = vset.pattern.permute.xlu0 0
      %710 = vperm.xlu0 %709, %v631
      %v711 = vpop.permute.xlu0 %710
      %712 = vset.pattern.permute.xlu0 0
      %713 = vperm.xlu0 %712, %v632
      %v714 = vpop.permute.xlu0 %713
      %715 = vset.pattern.permute.xlu0 0
      %716 = vperm.xlu0 %715, %v633
      %v717 = vpop.permute.xlu0 %716
      %718 = vset.pattern.permute.xlu0 0
      %719 = vperm.xlu0 %718, %v634
      %v720 = vpop.permute.xlu0 %719
      %721 = vset.pattern.permute.xlu0 0
      %722 = vperm.xlu0 %721, %v635
      %v723 = vpop.permute.xlu0 %722
      %724 = vset.pattern.permute.xlu0 0
      %725 = vperm.xlu0 %724, %v636
      %v726 = vpop.permute.xlu0 %725
      %727 = vset.pattern.permute.xlu0 0
      %728 = vperm.xlu0 %727, %v637
      %v729 = vpop.permute.xlu0 %728
      %730 = vset.pattern.permute.xlu0 0
      %731 = vperm.xlu0 %730, %v638
      %v732 = vpop.permute.xlu0 %731
      %733 = vset.pattern.permute.xlu0 0
      %734 = vperm.xlu0 %733, %v639
      %v735 = vpop.permute.xlu0 %734
      %736 = vset.pattern.permute.xlu0 0
      %737 = vperm.xlu0 %736, %v640
      %v738 = vpop.permute.xlu0 %737
      %vm739 = vcmp.eq.s32.totalorder %v642, %v645
      %vm740 = vcmp.eq.s32.totalorder %v642, %v648
      %vm741 = vcmp.eq.s32.totalorder %v642, %v651
      %vm742 = vcmp.eq.s32.totalorder %v642, %v654
      %vm743 = vcmp.eq.s32.totalorder %v642, %v657
      %vm744 = vcmp.eq.s32.totalorder %v642, %v660
      %vm745 = vcmp.eq.s32.totalorder %v642, %v663
      %vm746 = vcmp.eq.s32.totalorder %v642, %v666
      %vm747 = vcmp.eq.s32.totalorder %v642, %v669
      %vm748 = vcmp.eq.s32.totalorder %v642, %v672
      %vm749 = vcmp.eq.s32.totalorder %v642, %v675
      %vm750 = vcmp.eq.s32.totalorder %v642, %v678
      %vm751 = vcmp.eq.s32.totalorder %v642, %v681
      %vm752 = vcmp.eq.s32.totalorder %v642, %v684
      %vm753 = vcmp.eq.s32.totalorder %v642, %v687
      %vm754 = vcmp.eq.s32.totalorder %v642, %v690
      %vm755 = vcmp.eq.s32.totalorder %v642, %v693
      %vm756 = vcmp.eq.s32.totalorder %v642, %v696
      %vm757 = vcmp.eq.s32.totalorder %v642, %v699
      %vm758 = vcmp.eq.s32.totalorder %v642, %v702
      %vm759 = vcmp.eq.s32.totalorder %v642, %v705
      %vm760 = vcmp.eq.s32.totalorder %v642, %v708
      %vm761 = vcmp.eq.s32.totalorder %v642, %v711
      %vm762 = vcmp.eq.s32.totalorder %v642, %v714
      %vm763 = vcmp.eq.s32.totalorder %v642, %v717
      %vm764 = vcmp.eq.s32.totalorder %v642, %v720
      %vm765 = vcmp.eq.s32.totalorder %v642, %v723
      %vm766 = vcmp.eq.s32.totalorder %v642, %v726
      %vm767 = vcmp.eq.s32.totalorder %v642, %v729
      %vm768 = vcmp.eq.s32.totalorder %v642, %v732
      %vm769 = vcmp.eq.s32.totalorder %v642, %v735
      %vm770 = vcmp.eq.s32.totalorder %v642, %v738
      %772 = vset.pattern.permute.xlu0 0
      %773 = vperm.xlu0 %772, %v545
      %v774 = vpop.permute.xlu0 %773
      %777 = vset.pattern.permute.xlu0 0
      %778 = vperm.xlu0 %777, %v546
      %v779 = vpop.permute.xlu0 %778
      %782 = vset.pattern.permute.xlu0 0
      %783 = vperm.xlu0 %782, %v547
      %v784 = vpop.permute.xlu0 %783
      %787 = vset.pattern.permute.xlu0 0
      %788 = vperm.xlu0 %787, %v548
      %v789 = vpop.permute.xlu0 %788
      %792 = vset.pattern.permute.xlu0 0
      %793 = vperm.xlu0 %792, %v549
      %v794 = vpop.permute.xlu0 %793
      %797 = vset.pattern.permute.xlu0 0
      %798 = vperm.xlu0 %797, %v550
      %v799 = vpop.permute.xlu0 %798
      %802 = vset.pattern.permute.xlu0 0
      %803 = vperm.xlu0 %802, %v551
      %v804 = vpop.permute.xlu0 %803
      %807 = vset.pattern.permute.xlu0 0
      %808 = vperm.xlu0 %807, %v552
      %v809 = vpop.permute.xlu0 %808
      %812 = vset.pattern.permute.xlu0 0
      %813 = vperm.xlu0 %812, %v553
      %v814 = vpop.permute.xlu0 %813
      %817 = vset.pattern.permute.xlu0 0
      %818 = vperm.xlu0 %817, %v554
      %v819 = vpop.permute.xlu0 %818
      %822 = vset.pattern.permute.xlu0 0
      %823 = vperm.xlu0 %822, %v555
      %v824 = vpop.permute.xlu0 %823
      %827 = vset.pattern.permute.xlu0 0
      %828 = vperm.xlu0 %827, %v556
      %v829 = vpop.permute.xlu0 %828
      %832 = vset.pattern.permute.xlu0 0
      %833 = vperm.xlu0 %832, %v557
      %v834 = vpop.permute.xlu0 %833
      %837 = vset.pattern.permute.xlu0 0
      %838 = vperm.xlu0 %837, %v558
      %v839 = vpop.permute.xlu0 %838
      %842 = vset.pattern.permute.xlu0 0
      %843 = vperm.xlu0 %842, %v559
      %v844 = vpop.permute.xlu0 %843
      %847 = vset.pattern.permute.xlu0 0
      %848 = vperm.xlu0 %847, %v560
      %v849 = vpop.permute.xlu0 %848
      %852 = vset.pattern.permute.xlu0 0
      %853 = vperm.xlu0 %852, %v561
      %v854 = vpop.permute.xlu0 %853
      %857 = vset.pattern.permute.xlu0 0
      %858 = vperm.xlu0 %857, %v562
      %v859 = vpop.permute.xlu0 %858
      %862 = vset.pattern.permute.xlu0 0
      %863 = vperm.xlu0 %862, %v563
      %v864 = vpop.permute.xlu0 %863
      %867 = vset.pattern.permute.xlu0 0
      %868 = vperm.xlu0 %867, %v564
      %v869 = vpop.permute.xlu0 %868
      %872 = vset.pattern.permute.xlu0 0
      %873 = vperm.xlu0 %872, %v565
      %v874 = vpop.permute.xlu0 %873
      %877 = vset.pattern.permute.xlu0 0
      %878 = vperm.xlu0 %877, %v566
      %v879 = vpop.permute.xlu0 %878
      %882 = vset.pattern.permute.xlu0 0
      %883 = vperm.xlu0 %882, %v567
      %v884 = vpop.permute.xlu0 %883
      %887 = vset.pattern.permute.xlu0 0
      %888 = vperm.xlu0 %887, %v568
      %v889 = vpop.permute.xlu0 %888
      %892 = vset.pattern.permute.xlu0 0
      %893 = vperm.xlu0 %892, %v569
      %v894 = vpop.permute.xlu0 %893
      %897 = vset.pattern.permute.xlu0 0
      %898 = vperm.xlu0 %897, %v570
      %v899 = vpop.permute.xlu0 %898
      %902 = vset.pattern.permute.xlu0 0
      %903 = vperm.xlu0 %902, %v571
      %v904 = vpop.permute.xlu0 %903
      %907 = vset.pattern.permute.xlu0 0
      %908 = vperm.xlu0 %907, %v572
      %v909 = vpop.permute.xlu0 %908
      %912 = vset.pattern.permute.xlu0 0
      %913 = vperm.xlu0 %912, %v573
      %v914 = vpop.permute.xlu0 %913
      %917 = vset.pattern.permute.xlu0 0
      %918 = vperm.xlu0 %917, %v574
      %v919 = vpop.permute.xlu0 %918
      %922 = vset.pattern.permute.xlu0 0
      %923 = vperm.xlu0 %922, %v575
      %v924 = vpop.permute.xlu0 %923
      %927 = vset.pattern.permute.xlu0 0
      %928 = vperm.xlu0 %927, %v576
      %v929 = vpop.permute.xlu0 %928
      %v931 = vsel %vm739, %v774, 0.0
      %v932 = vsel %vm740, %v779, 0.0
      %v933 = vsel %vm741, %v784, 0.0
      %v934 = vsel %vm742, %v789, 0.0
      %v935 = vsel %vm743, %v794, 0.0
      %v936 = vsel %vm744, %v799, 0.0
      %v937 = vsel %vm745, %v804, 0.0
      %v938 = vsel %vm746, %v809, 0.0
      %v939 = vsel %vm747, %v814, 0.0
      %v940 = vsel %vm748, %v819, 0.0
      %v941 = vsel %vm749, %v824, 0.0
      %v942 = vsel %vm750, %v829, 0.0
      %v943 = vsel %vm751, %v834, 0.0
      %v944 = vsel %vm752, %v839, 0.0
      %v945 = vsel %vm753, %v844, 0.0
      %v946 = vsel %vm754, %v849, 0.0
      %v947 = vsel %vm755, %v854, 0.0
      %v948 = vsel %vm756, %v859, 0.0
      %v949 = vsel %vm757, %v864, 0.0
      %v950 = vsel %vm758, %v869, 0.0
      %v951 = vsel %vm759, %v874, 0.0
      %v952 = vsel %vm760, %v879, 0.0
      %v953 = vsel %vm761, %v884, 0.0
      %v954 = vsel %vm762, %v889, 0.0
      %v955 = vsel %vm763, %v894, 0.0
      %v956 = vsel %vm764, %v899, 0.0
      %v957 = vsel %vm765, %v904, 0.0
      %v958 = vsel %vm766, %v909, 0.0
      %v959 = vsel %vm767, %v914, 0.0
      %v960 = vsel %vm768, %v919, 0.0
      %v961 = vsel %vm769, %v924, 0.0
      %v962 = vsel %vm770, %v929, 0.0
      %v963 = vadd.s32 %v609, 1
      %v964 = vadd.s32 %v610, 1
      %v965 = vadd.s32 %v611, 1
      %v966 = vadd.s32 %v612, 1
      %v967 = vadd.s32 %v613, 1
      %v968 = vadd.s32 %v614, 1
      %v969 = vadd.s32 %v615, 1
      %v970 = vadd.s32 %v616, 1
      %v971 = vadd.s32 %v617, 1
      %v972 = vadd.s32 %v618, 1
      %v973 = vadd.s32 %v619, 1
      %v974 = vadd.s32 %v620, 1
      %v975 = vadd.s32 %v621, 1
      %v976 = vadd.s32 %v622, 1
      %v977 = vadd.s32 %v623, 1
      %v978 = vadd.s32 %v624, 1
      %v979 = vadd.s32 %v625, 1
      %v980 = vadd.s32 %v626, 1
      %v981 = vadd.s32 %v627, 1
      %v982 = vadd.s32 %v628, 1
      %v983 = vadd.s32 %v629, 1
      %v984 = vadd.s32 %v630, 1
      %v985 = vadd.s32 %v631, 1
      %v986 = vadd.s32 %v632, 1
      %v987 = vadd.s32 %v633, 1
      %v988 = vadd.s32 %v634, 1
      %v989 = vadd.s32 %v635, 1
      %v990 = vadd.s32 %v636, 1
      %v991 = vadd.s32 %v637, 1
      %v992 = vadd.s32 %v638, 1
      %v993 = vadd.s32 %v639, 1
      %v994 = vadd.s32 %v640, 1
      %995 = vset.pattern.permute.xlu0 0
      %996 = vperm.xlu0 %995, %v963
      %v997 = vpop.permute.xlu0 %996
      %998 = vset.pattern.permute.xlu0 0
      %999 = vperm.xlu0 %998, %v964
      %v1000 = vpop.permute.xlu0 %999
      %1001 = vset.pattern.permute.xlu0 0
      %1002 = vperm.xlu0 %1001, %v965
      %v1003 = vpop.permute.xlu0 %1002
      %1004 = vset.pattern.permute.xlu0 0
      %1005 = vperm.xlu0 %1004, %v966
      %v1006 = vpop.permute.xlu0 %1005
      %1007 = vset.pattern.permute.xlu0 0
      %1008 = vperm.xlu0 %1007, %v967
      %v1009 = vpop.permute.xlu0 %1008
      %1010 = vset.pattern.permute.xlu0 0
      %1011 = vperm.xlu0 %1010, %v968
      %v1012 = vpop.permute.xlu0 %1011
      %1013 = vset.pattern.permute.xlu0 0
      %1014 = vperm.xlu0 %1013, %v969
      %v1015 = vpop.permute.xlu0 %1014
      %1016 = vset.pattern.permute.xlu0 0
      %1017 = vperm.xlu0 %1016, %v970
      %v1018 = vpop.permute.xlu0 %1017
      %1019 = vset.pattern.permute.xlu0 0
      %1020 = vperm.xlu0 %1019, %v971
      %v1021 = vpop.permute.xlu0 %1020
      %1022 = vset.pattern.permute.xlu0 0
      %1023 = vperm.xlu0 %1022, %v972
      %v1024 = vpop.permute.xlu0 %1023
      %1025 = vset.pattern.permute.xlu0 0
      %1026 = vperm.xlu0 %1025, %v973
      %v1027 = vpop.permute.xlu0 %1026
      %1028 = vset.pattern.permute.xlu0 0
      %1029 = vperm.xlu0 %1028, %v974
      %v1030 = vpop.permute.xlu0 %1029
      %1031 = vset.pattern.permute.xlu0 0
      %1032 = vperm.xlu0 %1031, %v975
      %v1033 = vpop.permute.xlu0 %1032
      %1034 = vset.pattern.permute.xlu0 0
      %1035 = vperm.xlu0 %1034, %v976
      %v1036 = vpop.permute.xlu0 %1035
      %1037 = vset.pattern.permute.xlu0 0
      %1038 = vperm.xlu0 %1037, %v977
      %v1039 = vpop.permute.xlu0 %1038
      %1040 = vset.pattern.permute.xlu0 0
      %1041 = vperm.xlu0 %1040, %v978
      %v1042 = vpop.permute.xlu0 %1041
      %1043 = vset.pattern.permute.xlu0 0
      %1044 = vperm.xlu0 %1043, %v979
      %v1045 = vpop.permute.xlu0 %1044
      %1046 = vset.pattern.permute.xlu0 0
      %1047 = vperm.xlu0 %1046, %v980
      %v1048 = vpop.permute.xlu0 %1047
      %1049 = vset.pattern.permute.xlu0 0
      %1050 = vperm.xlu0 %1049, %v981
      %v1051 = vpop.permute.xlu0 %1050
      %1052 = vset.pattern.permute.xlu0 0
      %1053 = vperm.xlu0 %1052, %v982
      %v1054 = vpop.permute.xlu0 %1053
      %1055 = vset.pattern.permute.xlu0 0
      %1056 = vperm.xlu0 %1055, %v983
      %v1057 = vpop.permute.xlu0 %1056
      %1058 = vset.pattern.permute.xlu0 0
      %1059 = vperm.xlu0 %1058, %v984
      %v1060 = vpop.permute.xlu0 %1059
      %1061 = vset.pattern.permute.xlu0 0
      %1062 = vperm.xlu0 %1061, %v985
      %v1063 = vpop.permute.xlu0 %1062
      %1064 = vset.pattern.permute.xlu0 0
      %1065 = vperm.xlu0 %1064, %v986
      %v1066 = vpop.permute.xlu0 %1065
      %1067 = vset.pattern.permute.xlu0 0
      %1068 = vperm.xlu0 %1067, %v987
      %v1069 = vpop.permute.xlu0 %1068
      %1070 = vset.pattern.permute.xlu0 0
      %1071 = vperm.xlu0 %1070, %v988
      %v1072 = vpop.permute.xlu0 %1071
      %1073 = vset.pattern.permute.xlu0 0
      %1074 = vperm.xlu0 %1073, %v989
      %v1075 = vpop.permute.xlu0 %1074
      %1076 = vset.pattern.permute.xlu0 0
      %1077 = vperm.xlu0 %1076, %v990
      %v1078 = vpop.permute.xlu0 %1077
      %1079 = vset.pattern.permute.xlu0 0
      %1080 = vperm.xlu0 %1079, %v991
      %v1081 = vpop.permute.xlu0 %1080
      %1082 = vset.pattern.permute.xlu0 0
      %1083 = vperm.xlu0 %1082, %v992
      %v1084 = vpop.permute.xlu0 %1083
      %1085 = vset.pattern.permute.xlu0 0
      %1086 = vperm.xlu0 %1085, %v993
      %v1087 = vpop.permute.xlu0 %1086
      %1088 = vset.pattern.permute.xlu0 0
      %1089 = vperm.xlu0 %1088, %v994
      %v1090 = vpop.permute.xlu0 %1089
      %vm1091 = vcmp.eq.s32.totalorder %v642, %v997
      %vm1092 = vcmp.eq.s32.totalorder %v642, %v1000
      %vm1093 = vcmp.eq.s32.totalorder %v642, %v1003
      %vm1094 = vcmp.eq.s32.totalorder %v642, %v1006
      %vm1095 = vcmp.eq.s32.totalorder %v642, %v1009
      %vm1096 = vcmp.eq.s32.totalorder %v642, %v1012
      %vm1097 = vcmp.eq.s32.totalorder %v642, %v1015
      %vm1098 = vcmp.eq.s32.totalorder %v642, %v1018
      %vm1099 = vcmp.eq.s32.totalorder %v642, %v1021
      %vm1100 = vcmp.eq.s32.totalorder %v642, %v1024
      %vm1101 = vcmp.eq.s32.totalorder %v642, %v1027
      %vm1102 = vcmp.eq.s32.totalorder %v642, %v1030
      %vm1103 = vcmp.eq.s32.totalorder %v642, %v1033
      %vm1104 = vcmp.eq.s32.totalorder %v642, %v1036
      %vm1105 = vcmp.eq.s32.totalorder %v642, %v1039
      %vm1106 = vcmp.eq.s32.totalorder %v642, %v1042
      %vm1107 = vcmp.eq.s32.totalorder %v642, %v1045
      %vm1108 = vcmp.eq.s32.totalorder %v642, %v1048
      %vm1109 = vcmp.eq.s32.totalorder %v642, %v1051
      %vm1110 = vcmp.eq.s32.totalorder %v642, %v1054
      %vm1111 = vcmp.eq.s32.totalorder %v642, %v1057
      %vm1112 = vcmp.eq.s32.totalorder %v642, %v1060
      %vm1113 = vcmp.eq.s32.totalorder %v642, %v1063
      %vm1114 = vcmp.eq.s32.totalorder %v642, %v1066
      %vm1115 = vcmp.eq.s32.totalorder %v642, %v1069
      %vm1116 = vcmp.eq.s32.totalorder %v642, %v1072
      %vm1117 = vcmp.eq.s32.totalorder %v642, %v1075
      %vm1118 = vcmp.eq.s32.totalorder %v642, %v1078
      %vm1119 = vcmp.eq.s32.totalorder %v642, %v1081
      %vm1120 = vcmp.eq.s32.totalorder %v642, %v1084
      %vm1121 = vcmp.eq.s32.totalorder %v642, %v1087
      %vm1122 = vcmp.eq.s32.totalorder %v642, %v1090
      %1124 = vset.pattern.permute.xlu0 0
      %1125 = vperm.xlu0 %1124, %v513
      %v1126 = vpop.permute.xlu0 %1125
      %1129 = vset.pattern.permute.xlu0 0
      %1130 = vperm.xlu0 %1129, %v514
      %v1131 = vpop.permute.xlu0 %1130
      %1134 = vset.pattern.permute.xlu0 0
      %1135 = vperm.xlu0 %1134, %v515
      %v1136 = vpop.permute.xlu0 %1135
      %1139 = vset.pattern.permute.xlu0 0
      %1140 = vperm.xlu0 %1139, %v516
      %v1141 = vpop.permute.xlu0 %1140
      %1144 = vset.pattern.permute.xlu0 0
      %1145 = vperm.xlu0 %1144, %v517
      %v1146 = vpop.permute.xlu0 %1145
      %1149 = vset.pattern.permute.xlu0 0
      %1150 = vperm.xlu0 %1149, %v518
      %v1151 = vpop.permute.xlu0 %1150
      %1154 = vset.pattern.permute.xlu0 0
      %1155 = vperm.xlu0 %1154, %v519
      %v1156 = vpop.permute.xlu0 %1155
      %1159 = vset.pattern.permute.xlu0 0
      %1160 = vperm.xlu0 %1159, %v520
      %v1161 = vpop.permute.xlu0 %1160
      %1164 = vset.pattern.permute.xlu0 0
      %1165 = vperm.xlu0 %1164, %v521
      %v1166 = vpop.permute.xlu0 %1165
      %1169 = vset.pattern.permute.xlu0 0
      %1170 = vperm.xlu0 %1169, %v522
      %v1171 = vpop.permute.xlu0 %1170
      %1174 = vset.pattern.permute.xlu0 0
      %1175 = vperm.xlu0 %1174, %v523
      %v1176 = vpop.permute.xlu0 %1175
      %1179 = vset.pattern.permute.xlu0 0
      %1180 = vperm.xlu0 %1179, %v524
      %v1181 = vpop.permute.xlu0 %1180
      %1184 = vset.pattern.permute.xlu0 0
      %1185 = vperm.xlu0 %1184, %v525
      %v1186 = vpop.permute.xlu0 %1185
      %1189 = vset.pattern.permute.xlu0 0
      %1190 = vperm.xlu0 %1189, %v526
      %v1191 = vpop.permute.xlu0 %1190
      %1194 = vset.pattern.permute.xlu0 0
      %1195 = vperm.xlu0 %1194, %v527
      %v1196 = vpop.permute.xlu0 %1195
      %1199 = vset.pattern.permute.xlu0 0
      %1200 = vperm.xlu0 %1199, %v528
      %v1201 = vpop.permute.xlu0 %1200
      %1204 = vset.pattern.permute.xlu0 0
      %1205 = vperm.xlu0 %1204, %v529
      %v1206 = vpop.permute.xlu0 %1205
      %1209 = vset.pattern.permute.xlu0 0
      %1210 = vperm.xlu0 %1209, %v530
      %v1211 = vpop.permute.xlu0 %1210
      %1214 = vset.pattern.permute.xlu0 0
      %1215 = vperm.xlu0 %1214, %v531
      %v1216 = vpop.permute.xlu0 %1215
      %1219 = vset.pattern.permute.xlu0 0
      %1220 = vperm.xlu0 %1219, %v532
      %v1221 = vpop.permute.xlu0 %1220
      %1224 = vset.pattern.permute.xlu0 0
      %1225 = vperm.xlu0 %1224, %v533
      %v1226 = vpop.permute.xlu0 %1225
      %1229 = vset.pattern.permute.xlu0 0
      %1230 = vperm.xlu0 %1229, %v534
      %v1231 = vpop.permute.xlu0 %1230
      %1234 = vset.pattern.permute.xlu0 0
      %1235 = vperm.xlu0 %1234, %v535
      %v1236 = vpop.permute.xlu0 %1235
      %1239 = vset.pattern.permute.xlu0 0
      %1240 = vperm.xlu0 %1239, %v536
      %v1241 = vpop.permute.xlu0 %1240
      %1244 = vset.pattern.permute.xlu0 0
      %1245 = vperm.xlu0 %1244, %v537
      %v1246 = vpop.permute.xlu0 %1245
      %1249 = vset.pattern.permute.xlu0 0
      %1250 = vperm.xlu0 %1249, %v538
      %v1251 = vpop.permute.xlu0 %1250
      %1254 = vset.pattern.permute.xlu0 0
      %1255 = vperm.xlu0 %1254, %v539
      %v1256 = vpop.permute.xlu0 %1255
      %1259 = vset.pattern.permute.xlu0 0
      %1260 = vperm.xlu0 %1259, %v540
      %v1261 = vpop.permute.xlu0 %1260
      %1264 = vset.pattern.permute.xlu0 0
      %1265 = vperm.xlu0 %1264, %v541
      %v1266 = vpop.permute.xlu0 %1265
      %1269 = vset.pattern.permute.xlu0 0
      %1270 = vperm.xlu0 %1269, %v542
      %v1271 = vpop.permute.xlu0 %1270
      %1274 = vset.pattern.permute.xlu0 0
      %1275 = vperm.xlu0 %1274, %v543
      %v1276 = vpop.permute.xlu0 %1275
      %1279 = vset.pattern.permute.xlu0 0
      %1280 = vperm.xlu0 %1279, %v544
      %v1281 = vpop.permute.xlu0 %1280
      %v1283 = vsel %vm1091, %v1126, 0.0
      %v1284 = vsel %vm1092, %v1131, 0.0
      %v1285 = vsel %vm1093, %v1136, 0.0
      %v1286 = vsel %vm1094, %v1141, 0.0
      %v1287 = vsel %vm1095, %v1146, 0.0
      %v1288 = vsel %vm1096, %v1151, 0.0
      %v1289 = vsel %vm1097, %v1156, 0.0
      %v1290 = vsel %vm1098, %v1161, 0.0
      %v1291 = vsel %vm1099, %v1166, 0.0
      %v1292 = vsel %vm1100, %v1171, 0.0
      %v1293 = vsel %vm1101, %v1176, 0.0
      %v1294 = vsel %vm1102, %v1181, 0.0
      %v1295 = vsel %vm1103, %v1186, 0.0
      %v1296 = vsel %vm1104, %v1191, 0.0
      %v1297 = vsel %vm1105, %v1196, 0.0
      %v1298 = vsel %vm1106, %v1201, 0.0
      %v1299 = vsel %vm1107, %v1206, 0.0
      %v1300 = vsel %vm1108, %v1211, 0.0
      %v1301 = vsel %vm1109, %v1216, 0.0
      %v1302 = vsel %vm1110, %v1221, 0.0
      %v1303 = vsel %vm1111, %v1226, 0.0
      %v1304 = vsel %vm1112, %v1231, 0.0
      %v1305 = vsel %vm1113, %v1236, 0.0
      %v1306 = vsel %vm1114, %v1241, 0.0
      %v1307 = vsel %vm1115, %v1246, 0.0
      %v1308 = vsel %vm1116, %v1251, 0.0
      %v1309 = vsel %vm1117, %v1256, 0.0
      %v1310 = vsel %vm1118, %v1261, 0.0
      %v1311 = vsel %vm1119, %v1266, 0.0
      %v1312 = vsel %vm1120, %v1271, 0.0
      %v1313 = vsel %vm1121, %v1276, 0.0
      %v1314 = vsel %vm1122, %v1281, 0.0
      %v1315 = vadd.f32 %v931, %v1283
      %v1316 = vadd.f32 %v932, %v1284
      %v1317 = vadd.f32 %v933, %v1285
      %v1318 = vadd.f32 %v934, %v1286
      %v1319 = vadd.f32 %v935, %v1287
      %v1320 = vadd.f32 %v936, %v1288
      %v1321 = vadd.f32 %v937, %v1289
      %v1322 = vadd.f32 %v938, %v1290
      %v1323 = vadd.f32 %v939, %v1291
      %v1324 = vadd.f32 %v940, %v1292
      %v1325 = vadd.f32 %v941, %v1293
      %v1326 = vadd.f32 %v942, %v1294
      %v1327 = vadd.f32 %v943, %v1295
      %v1328 = vadd.f32 %v944, %v1296
      %v1329 = vadd.f32 %v945, %v1297
      %v1330 = vadd.f32 %v946, %v1298
      %v1331 = vadd.f32 %v947, %v1299
      %v1332 = vadd.f32 %v948, %v1300
      %v1333 = vadd.f32 %v949, %v1301
      %v1334 = vadd.f32 %v950, %v1302
      %v1335 = vadd.f32 %v951, %v1303
      %v1336 = vadd.f32 %v952, %v1304
      %v1337 = vadd.f32 %v953, %v1305
      %v1338 = vadd.f32 %v954, %v1306
      %v1339 = vadd.f32 %v955, %v1307
      %v1340 = vadd.f32 %v956, %v1308
      %v1341 = vadd.f32 %v957, %v1309
      %v1342 = vadd.f32 %v958, %v1310
      %v1343 = vadd.f32 %v959, %v1311
      %v1344 = vadd.f32 %v960, %v1312
      %v1345 = vadd.f32 %v961, %v1313
      %v1346 = vadd.f32 %v962, %v1314
      %v1347 = vpack.c.bf16 %v1316, %v1315
      %v1348 = vpack.c.bf16 %v1318, %v1317
      %v1349 = vpack.c.bf16 %v1320, %v1319
      %v1350 = vpack.c.bf16 %v1322, %v1321
      %v1351 = vpack.c.bf16 %v1324, %v1323
      %v1352 = vpack.c.bf16 %v1326, %v1325
      %v1353 = vpack.c.bf16 %v1328, %v1327
      %v1354 = vpack.c.bf16 %v1330, %v1329
      %v1355 = vpack.c.bf16 %v1332, %v1331
      %v1356 = vpack.c.bf16 %v1334, %v1333
      %v1357 = vpack.c.bf16 %v1336, %v1335
      %v1358 = vpack.c.bf16 %v1338, %v1337
      %v1359 = vpack.c.bf16 %v1340, %v1339
      %v1360 = vpack.c.bf16 %v1342, %v1341
      %v1361 = vpack.c.bf16 %v1344, %v1343
      %v1362 = vpack.c.bf16 %v1346, %v1345
      %v1363 = vld [vmem:[%s309] sm:$0xf]
      %v1364 = vld [vmem:[%s309 + $0x4] sm:$0xf]
      %v1367 = vunpack.c.l.b16 %v1363
      %v1368 = vunpack.c.l.b16 %v1364
      %v1369 = vpack.c.b16 %v1368, %v1367
      %vm1371 = vcmask 130048
      %v1373 = vsel %vm1371, %v1347, 0
      %v1376 = vsel %vm1371, %v1348, 0
      %v1379 = vsel %vm1371, %v1349, 0
      %v1382 = vsel %vm1371, %v1350, 0
      %v1385 = vsel %vm1371, %v1351, 0
      %v1388 = vsel %vm1371, %v1352, 0
      %v1391 = vsel %vm1371, %v1353, 0
      %v1394 = vsel %vm1371, %v1354, 0
      %v1397 = vsel %vm1371, %v1355, 0
      %v1400 = vsel %vm1371, %v1356, 0
      %v1403 = vsel %vm1371, %v1357, 0
      %v1406 = vsel %vm1371, %v1358, 0
      %v1409 = vsel %vm1371, %v1359, 0
      %v1412 = vsel %vm1371, %v1360, 0
      %v1415 = vsel %vm1371, %v1361, 0
      %v1418 = vsel %vm1371, %v1362, 0
      %1420 = vmatpush.bf16.msra.mxu0 0
      %1421 = vmatpush.bf16.msra.mxu0 0
      %1422 = vmatpush.bf16.msra.mxu0 0
      %1423 = vmatpush.bf16.msra.mxu0 0
      %1424 = vmatpush.bf16.msra.mxu0 0
      %1425 = vmatpush.bf16.msra.mxu0 0
      %1426 = vmatpush.bf16.msra.mxu0 0
      %1427 = vmatpush.bf16.msra.mxu0 %v1369
      %1428 = vmatmul.bf16.gmra.mxu0 %v1373
      %v1429 = vpop.f32.mrf.mxu0
      %v1430 = vadd.f32 0.0, %v1429
      %v1431 = vpop.f32.mrf.mxu0
      %v1432 = vadd.f32 0.0, %v1431
      %1433 = vmatmul.bf16.gmra.mxu0 %v1376
      %v1434 = vpop.f32.mrf.mxu0
      %v1435 = vadd.f32 0.0, %v1434
      %v1436 = vpop.f32.mrf.mxu0
      %v1437 = vadd.f32 0.0, %v1436
      %1438 = vmatmul.bf16.gmra.mxu0 %v1379
      %v1439 = vpop.f32.mrf.mxu0
      %v1440 = vadd.f32 0.0, %v1439
      %v1441 = vpop.f32.mrf.mxu0
      %v1442 = vadd.f32 0.0, %v1441
      %1443 = vmatmul.bf16.gmra.mxu0 %v1382
      %v1444 = vpop.f32.mrf.mxu0
      %v1445 = vadd.f32 0.0, %v1444
      %v1446 = vpop.f32.mrf.mxu0
      %v1447 = vadd.f32 0.0, %v1446
      %1448 = vmatmul.bf16.gmra.mxu0 %v1385
      %v1449 = vpop.f32.mrf.mxu0
      %v1450 = vadd.f32 0.0, %v1449
      %v1451 = vpop.f32.mrf.mxu0
      %v1452 = vadd.f32 0.0, %v1451
      %1453 = vmatmul.bf16.gmra.mxu0 %v1388
      %v1454 = vpop.f32.mrf.mxu0
      %v1455 = vadd.f32 0.0, %v1454
      %v1456 = vpop.f32.mrf.mxu0
      %v1457 = vadd.f32 0.0, %v1456
      %1458 = vmatmul.bf16.gmra.mxu0 %v1391
      %v1459 = vpop.f32.mrf.mxu0
      %v1460 = vadd.f32 0.0, %v1459
      %v1461 = vpop.f32.mrf.mxu0
      %v1462 = vadd.f32 0.0, %v1461
      %1463 = vmatmul.bf16.gmra.mxu0 %v1394
      %v1464 = vpop.f32.mrf.mxu0
      %v1465 = vadd.f32 0.0, %v1464
      %v1466 = vpop.f32.mrf.mxu0
      %v1467 = vadd.f32 0.0, %v1466
      %1468 = vmatmul.bf16.gmra.mxu0 %v1397
      %v1469 = vpop.f32.mrf.mxu0
      %v1470 = vadd.f32 0.0, %v1469
      %v1471 = vpop.f32.mrf.mxu0
      %v1472 = vadd.f32 0.0, %v1471
      %1473 = vmatmul.bf16.gmra.mxu0 %v1400
      %v1474 = vpop.f32.mrf.mxu0
      %v1475 = vadd.f32 0.0, %v1474
      %v1476 = vpop.f32.mrf.mxu0
      %v1477 = vadd.f32 0.0, %v1476
      %1478 = vmatmul.bf16.gmra.mxu0 %v1403
      %v1479 = vpop.f32.mrf.mxu0
      %v1480 = vadd.f32 0.0, %v1479
      %v1481 = vpop.f32.mrf.mxu0
      %v1482 = vadd.f32 0.0, %v1481
      %1483 = vmatmul.bf16.gmra.mxu0 %v1406
      %v1484 = vpop.f32.mrf.mxu0
      %v1485 = vadd.f32 0.0, %v1484
      %v1486 = vpop.f32.mrf.mxu0
      %v1487 = vadd.f32 0.0, %v1486
      %1488 = vmatmul.bf16.gmra.mxu0 %v1409
      %v1489 = vpop.f32.mrf.mxu0
      %v1490 = vadd.f32 0.0, %v1489
      %v1491 = vpop.f32.mrf.mxu0
      %v1492 = vadd.f32 0.0, %v1491
      %1493 = vmatmul.bf16.gmra.mxu0 %v1412
      %v1494 = vpop.f32.mrf.mxu0
      %v1495 = vadd.f32 0.0, %v1494
      %v1496 = vpop.f32.mrf.mxu0
      %v1497 = vadd.f32 0.0, %v1496
      %1498 = vmatmul.bf16.gmra.mxu0 %v1415
      %v1499 = vpop.f32.mrf.mxu0
      %v1500 = vadd.f32 0.0, %v1499
      %v1501 = vpop.f32.mrf.mxu0
      %v1502 = vadd.f32 0.0, %v1501
      %1503 = vmatmul.bf16.gmra.mxu0 %v1418
      %v1504 = vpop.f32.mrf.mxu0
      %v1505 = vadd.f32 0.0, %v1504
      %v1506 = vpop.f32.mrf.mxu0
      %v1507 = vadd.f32 0.0, %v1506
      %1508 = vdwg.mxu0
      %v1509 = vld [vmem:[%s3] sm:$0x1]
      %v1510 = vperm.slane %v1509, 0
      %1511 = vset.pattern.permute.xlu0 0
      %1512 = vperm.xlu0 %1511, %v577
      %v1513 = vpop.permute.xlu0 %1512
      %1514 = vset.pattern.permute.xlu0 0
      %1515 = vperm.xlu0 %1514, %v578
      %v1516 = vpop.permute.xlu0 %1515
      %1517 = vset.pattern.permute.xlu0 0
      %1518 = vperm.xlu0 %1517, %v579
      %v1519 = vpop.permute.xlu0 %1518
      %1520 = vset.pattern.permute.xlu0 0
      %1521 = vperm.xlu0 %1520, %v580
      %v1522 = vpop.permute.xlu0 %1521
      %1523 = vset.pattern.permute.xlu0 0
      %1524 = vperm.xlu0 %1523, %v581
      %v1525 = vpop.permute.xlu0 %1524
      %1526 = vset.pattern.permute.xlu0 0
      %1527 = vperm.xlu0 %1526, %v582
      %v1528 = vpop.permute.xlu0 %1527
      %1529 = vset.pattern.permute.xlu0 0
      %1530 = vperm.xlu0 %1529, %v583
      %v1531 = vpop.permute.xlu0 %1530
      %1532 = vset.pattern.permute.xlu0 0
      %1533 = vperm.xlu0 %1532, %v584
      %v1534 = vpop.permute.xlu0 %1533
      %1535 = vset.pattern.permute.xlu0 0
      %1536 = vperm.xlu0 %1535, %v585
      %v1537 = vpop.permute.xlu0 %1536
      %1538 = vset.pattern.permute.xlu0 0
      %1539 = vperm.xlu0 %1538, %v586
      %v1540 = vpop.permute.xlu0 %1539
      %1541 = vset.pattern.permute.xlu0 0
      %1542 = vperm.xlu0 %1541, %v587
      %v1543 = vpop.permute.xlu0 %1542
      %1544 = vset.pattern.permute.xlu0 0
      %1545 = vperm.xlu0 %1544, %v588
      %v1546 = vpop.permute.xlu0 %1545
      %1547 = vset.pattern.permute.xlu0 0
      %1548 = vperm.xlu0 %1547, %v589
      %v1549 = vpop.permute.xlu0 %1548
      %1550 = vset.pattern.permute.xlu0 0
      %1551 = vperm.xlu0 %1550, %v590
      %v1552 = vpop.permute.xlu0 %1551
      %1553 = vset.pattern.permute.xlu0 0
      %1554 = vperm.xlu0 %1553, %v591
      %v1555 = vpop.permute.xlu0 %1554
      %1556 = vset.pattern.permute.xlu0 0
      %1557 = vperm.xlu0 %1556, %v592
      %v1558 = vpop.permute.xlu0 %1557
      %1559 = vset.pattern.permute.xlu0 0
      %1560 = vperm.xlu0 %1559, %v593
      %v1561 = vpop.permute.xlu0 %1560
      %1562 = vset.pattern.permute.xlu0 0
      %1563 = vperm.xlu0 %1562, %v594
      %v1564 = vpop.permute.xlu0 %1563
      %1565 = vset.pattern.permute.xlu0 0
      %1566 = vperm.xlu0 %1565, %v595
      %v1567 = vpop.permute.xlu0 %1566
      %1568 = vset.pattern.permute.xlu0 0
      %1569 = vperm.xlu0 %1568, %v596
      %v1570 = vpop.permute.xlu0 %1569
      %1571 = vset.pattern.permute.xlu0 0
      %1572 = vperm.xlu0 %1571, %v597
      %v1573 = vpop.permute.xlu0 %1572
      %1574 = vset.pattern.permute.xlu0 0
      %1575 = vperm.xlu0 %1574, %v598
      %v1576 = vpop.permute.xlu0 %1575
      %1577 = vset.pattern.permute.xlu0 0
      %1578 = vperm.xlu0 %1577, %v599
      %v1579 = vpop.permute.xlu0 %1578
      %1580 = vset.pattern.permute.xlu0 0
      %1581 = vperm.xlu0 %1580, %v600
      %v1582 = vpop.permute.xlu0 %1581
      %1583 = vset.pattern.permute.xlu0 0
      %1584 = vperm.xlu0 %1583, %v601
      %v1585 = vpop.permute.xlu0 %1584
      %1586 = vset.pattern.permute.xlu0 0
      %1587 = vperm.xlu0 %1586, %v602
      %v1588 = vpop.permute.xlu0 %1587
      %1589 = vset.pattern.permute.xlu0 0
      %1590 = vperm.xlu0 %1589, %v603
      %v1591 = vpop.permute.xlu0 %1590
      %1592 = vset.pattern.permute.xlu0 0
      %1593 = vperm.xlu0 %1592, %v604
      %v1594 = vpop.permute.xlu0 %1593
      %1595 = vset.pattern.permute.xlu0 0
      %1596 = vperm.xlu0 %1595, %v605
      %v1597 = vpop.permute.xlu0 %1596
      %1598 = vset.pattern.permute.xlu0 0
      %1599 = vperm.xlu0 %1598, %v606
      %v1600 = vpop.permute.xlu0 %1599
      %1601 = vset.pattern.permute.xlu0 0
      %1602 = vperm.xlu0 %1601, %v607
      %v1603 = vpop.permute.xlu0 %1602
      %1604 = vset.pattern.permute.xlu0 0
      %1605 = vperm.xlu0 %1604, %v608
      %v1606 = vpop.permute.xlu0 %1605
      %vm1607 = vcmp.eq.s32.totalorder %v1510, %v1513
      %vm1608 = vcmp.eq.s32.totalorder %v1510, %v1516
      %vm1609 = vcmp.eq.s32.totalorder %v1510, %v1519
      %vm1610 = vcmp.eq.s32.totalorder %v1510, %v1522
      %vm1611 = vcmp.eq.s32.totalorder %v1510, %v1525
      %vm1612 = vcmp.eq.s32.totalorder %v1510, %v1528
      %vm1613 = vcmp.eq.s32.totalorder %v1510, %v1531
      %vm1614 = vcmp.eq.s32.totalorder %v1510, %v1534
      %vm1615 = vcmp.eq.s32.totalorder %v1510, %v1537
      %vm1616 = vcmp.eq.s32.totalorder %v1510, %v1540
      %vm1617 = vcmp.eq.s32.totalorder %v1510, %v1543
      %vm1618 = vcmp.eq.s32.totalorder %v1510, %v1546
      %vm1619 = vcmp.eq.s32.totalorder %v1510, %v1549
      %vm1620 = vcmp.eq.s32.totalorder %v1510, %v1552
      %vm1621 = vcmp.eq.s32.totalorder %v1510, %v1555
      %vm1622 = vcmp.eq.s32.totalorder %v1510, %v1558
      %vm1623 = vcmp.eq.s32.totalorder %v1510, %v1561
      %vm1624 = vcmp.eq.s32.totalorder %v1510, %v1564
      %vm1625 = vcmp.eq.s32.totalorder %v1510, %v1567
      %vm1626 = vcmp.eq.s32.totalorder %v1510, %v1570
      %vm1627 = vcmp.eq.s32.totalorder %v1510, %v1573
      %vm1628 = vcmp.eq.s32.totalorder %v1510, %v1576
      %vm1629 = vcmp.eq.s32.totalorder %v1510, %v1579
      %vm1630 = vcmp.eq.s32.totalorder %v1510, %v1582
      %vm1631 = vcmp.eq.s32.totalorder %v1510, %v1585
      %vm1632 = vcmp.eq.s32.totalorder %v1510, %v1588
      %vm1633 = vcmp.eq.s32.totalorder %v1510, %v1591
      %vm1634 = vcmp.eq.s32.totalorder %v1510, %v1594
      %vm1635 = vcmp.eq.s32.totalorder %v1510, %v1597
      %vm1636 = vcmp.eq.s32.totalorder %v1510, %v1600
      %vm1637 = vcmp.eq.s32.totalorder %v1510, %v1603
      %vm1638 = vcmp.eq.s32.totalorder %v1510, %v1606
      %1640 = vset.pattern.permute.xlu0 0
      %1641 = vperm.xlu0 %1640, %v481
      %v1642 = vpop.permute.xlu0 %1641
      %1645 = vset.pattern.permute.xlu0 0
      %1646 = vperm.xlu0 %1645, %v482
      %v1647 = vpop.permute.xlu0 %1646
      %1650 = vset.pattern.permute.xlu0 0
      %1651 = vperm.xlu0 %1650, %v483
      %v1652 = vpop.permute.xlu0 %1651
      %1655 = vset.pattern.permute.xlu0 0
      %1656 = vperm.xlu0 %1655, %v484
      %v1657 = vpop.permute.xlu0 %1656
      %1660 = vset.pattern.permute.xlu0 0
      %1661 = vperm.xlu0 %1660, %v485
      %v1662 = vpop.permute.xlu0 %1661
      %1665 = vset.pattern.permute.xlu0 0
      %1666 = vperm.xlu0 %1665, %v486
      %v1667 = vpop.permute.xlu0 %1666
      %1670 = vset.pattern.permute.xlu0 0
      %1671 = vperm.xlu0 %1670, %v487
      %v1672 = vpop.permute.xlu0 %1671
      %1675 = vset.pattern.permute.xlu0 0
      %1676 = vperm.xlu0 %1675, %v488
      %v1677 = vpop.permute.xlu0 %1676
      %1680 = vset.pattern.permute.xlu0 0
      %1681 = vperm.xlu0 %1680, %v489
      %v1682 = vpop.permute.xlu0 %1681
      %1685 = vset.pattern.permute.xlu0 0
      %1686 = vperm.xlu0 %1685, %v490
      %v1687 = vpop.permute.xlu0 %1686
      %1690 = vset.pattern.permute.xlu0 0
      %1691 = vperm.xlu0 %1690, %v491
      %v1692 = vpop.permute.xlu0 %1691
      %1695 = vset.pattern.permute.xlu0 0
      %1696 = vperm.xlu0 %1695, %v492
      %v1697 = vpop.permute.xlu0 %1696
      %1700 = vset.pattern.permute.xlu0 0
      %1701 = vperm.xlu0 %1700, %v493
      %v1702 = vpop.permute.xlu0 %1701
      %1705 = vset.pattern.permute.xlu0 0
      %1706 = vperm.xlu0 %1705, %v494
      %v1707 = vpop.permute.xlu0 %1706
      %1710 = vset.pattern.permute.xlu0 0
      %1711 = vperm.xlu0 %1710, %v495
      %v1712 = vpop.permute.xlu0 %1711
      %1715 = vset.pattern.permute.xlu0 0
      %1716 = vperm.xlu0 %1715, %v496
      %v1717 = vpop.permute.xlu0 %1716
      %1720 = vset.pattern.permute.xlu0 0
      %1721 = vperm.xlu0 %1720, %v497
      %v1722 = vpop.permute.xlu0 %1721
      %1725 = vset.pattern.permute.xlu0 0
      %1726 = vperm.xlu0 %1725, %v498
      %v1727 = vpop.permute.xlu0 %1726
      %1730 = vset.pattern.permute.xlu0 0
      %1731 = vperm.xlu0 %1730, %v499
      %v1732 = vpop.permute.xlu0 %1731
      %1735 = vset.pattern.permute.xlu0 0
      %1736 = vperm.xlu0 %1735, %v500
      %v1737 = vpop.permute.xlu0 %1736
      %1740 = vset.pattern.permute.xlu0 0
      %1741 = vperm.xlu0 %1740, %v501
      %v1742 = vpop.permute.xlu0 %1741
      %1745 = vset.pattern.permute.xlu0 0
      %1746 = vperm.xlu0 %1745, %v502
      %v1747 = vpop.permute.xlu0 %1746
      %1750 = vset.pattern.permute.xlu0 0
      %1751 = vperm.xlu0 %1750, %v503
      %v1752 = vpop.permute.xlu0 %1751
      %1755 = vset.pattern.permute.xlu0 0
      %1756 = vperm.xlu0 %1755, %v504
      %v1757 = vpop.permute.xlu0 %1756
      %1760 = vset.pattern.permute.xlu0 0
      %1761 = vperm.xlu0 %1760, %v505
      %v1762 = vpop.permute.xlu0 %1761
      %1765 = vset.pattern.permute.xlu0 0
      %1766 = vperm.xlu0 %1765, %v506
      %v1767 = vpop.permute.xlu0 %1766
      %1770 = vset.pattern.permute.xlu0 0
      %1771 = vperm.xlu0 %1770, %v507
      %v1772 = vpop.permute.xlu0 %1771
      %1775 = vset.pattern.permute.xlu0 0
      %1776 = vperm.xlu0 %1775, %v508
      %v1777 = vpop.permute.xlu0 %1776
      %1780 = vset.pattern.permute.xlu0 0
      %1781 = vperm.xlu0 %1780, %v509
      %v1782 = vpop.permute.xlu0 %1781
      %1785 = vset.pattern.permute.xlu0 0
      %1786 = vperm.xlu0 %1785, %v510
      %v1787 = vpop.permute.xlu0 %1786
      %1790 = vset.pattern.permute.xlu0 0
      %1791 = vperm.xlu0 %1790, %v511
      %v1792 = vpop.permute.xlu0 %1791
      %1795 = vset.pattern.permute.xlu0 0
      %1796 = vperm.xlu0 %1795, %v512
      %v1797 = vpop.permute.xlu0 %1796
      %v1799 = vsel %vm1607, %v1642, 0.0
      %v1800 = vsel %vm1608, %v1647, 0.0
      %v1801 = vsel %vm1609, %v1652, 0.0
      %v1802 = vsel %vm1610, %v1657, 0.0
      %v1803 = vsel %vm1611, %v1662, 0.0
      %v1804 = vsel %vm1612, %v1667, 0.0
      %v1805 = vsel %vm1613, %v1672, 0.0
      %v1806 = vsel %vm1614, %v1677, 0.0
      %v1807 = vsel %vm1615, %v1682, 0.0
      %v1808 = vsel %vm1616, %v1687, 0.0
      %v1809 = vsel %vm1617, %v1692, 0.0
      %v1810 = vsel %vm1618, %v1697, 0.0
      %v1811 = vsel %vm1619, %v1702, 0.0
      %v1812 = vsel %vm1620, %v1707, 0.0
      %v1813 = vsel %vm1621, %v1712, 0.0
      %v1814 = vsel %vm1622, %v1717, 0.0
      %v1815 = vsel %vm1623, %v1722, 0.0
      %v1816 = vsel %vm1624, %v1727, 0.0
      %v1817 = vsel %vm1625, %v1732, 0.0
      %v1818 = vsel %vm1626, %v1737, 0.0
      %v1819 = vsel %vm1627, %v1742, 0.0
      %v1820 = vsel %vm1628, %v1747, 0.0
      %v1821 = vsel %vm1629, %v1752, 0.0
      %v1822 = vsel %vm1630, %v1757, 0.0
      %v1823 = vsel %vm1631, %v1762, 0.0
      %v1824 = vsel %vm1632, %v1767, 0.0
      %v1825 = vsel %vm1633, %v1772, 0.0
      %v1826 = vsel %vm1634, %v1777, 0.0
      %v1827 = vsel %vm1635, %v1782, 0.0
      %v1828 = vsel %vm1636, %v1787, 0.0
      %v1829 = vsel %vm1637, %v1792, 0.0
      %v1830 = vsel %vm1638, %v1797, 0.0
      %v1831 = vadd.s32 %v577, 1
      %v1832 = vadd.s32 %v578, 1
      %v1833 = vadd.s32 %v579, 1
      %v1834 = vadd.s32 %v580, 1
      %v1835 = vadd.s32 %v581, 1
      %v1836 = vadd.s32 %v582, 1
      %v1837 = vadd.s32 %v583, 1
      %v1838 = vadd.s32 %v584, 1
      %v1839 = vadd.s32 %v585, 1
      %v1840 = vadd.s32 %v586, 1
      %v1841 = vadd.s32 %v587, 1
      %v1842 = vadd.s32 %v588, 1
      %v1843 = vadd.s32 %v589, 1
      %v1844 = vadd.s32 %v590, 1
      %v1845 = vadd.s32 %v591, 1
      %v1846 = vadd.s32 %v592, 1
      %v1847 = vadd.s32 %v593, 1
      %v1848 = vadd.s32 %v594, 1
      %v1849 = vadd.s32 %v595, 1
      %v1850 = vadd.s32 %v596, 1
      %v1851 = vadd.s32 %v597, 1
      %v1852 = vadd.s32 %v598, 1
      %v1853 = vadd.s32 %v599, 1
      %v1854 = vadd.s32 %v600, 1
      %v1855 = vadd.s32 %v601, 1
      %v1856 = vadd.s32 %v602, 1
      %v1857 = vadd.s32 %v603, 1
      %v1858 = vadd.s32 %v604, 1
      %v1859 = vadd.s32 %v605, 1
      %v1860 = vadd.s32 %v606, 1
      %v1861 = vadd.s32 %v607, 1
      %v1862 = vadd.s32 %v608, 1
      %1863 = vset.pattern.permute.xlu0 0
      %1864 = vperm.xlu0 %1863, %v1831
      %v1865 = vpop.permute.xlu0 %1864
      %1866 = vset.pattern.permute.xlu0 0
      %1867 = vperm.xlu0 %1866, %v1832
      %v1868 = vpop.permute.xlu0 %1867
      %1869 = vset.pattern.permute.xlu0 0
      %1870 = vperm.xlu0 %1869, %v1833
      %v1871 = vpop.permute.xlu0 %1870
      %1872 = vset.pattern.permute.xlu0 0
      %1873 = vperm.xlu0 %1872, %v1834
      %v1874 = vpop.permute.xlu0 %1873
      %1875 = vset.pattern.permute.xlu0 0
      %1876 = vperm.xlu0 %1875, %v1835
      %v1877 = vpop.permute.xlu0 %1876
      %1878 = vset.pattern.permute.xlu0 0
      %1879 = vperm.xlu0 %1878, %v1836
      %v1880 = vpop.permute.xlu0 %1879
      %1881 = vset.pattern.permute.xlu0 0
      %1882 = vperm.xlu0 %1881, %v1837
      %v1883 = vpop.permute.xlu0 %1882
      %1884 = vset.pattern.permute.xlu0 0
      %1885 = vperm.xlu0 %1884, %v1838
      %v1886 = vpop.permute.xlu0 %1885
      %1887 = vset.pattern.permute.xlu0 0
      %1888 = vperm.xlu0 %1887, %v1839
      %v1889 = vpop.permute.xlu0 %1888
      %1890 = vset.pattern.permute.xlu0 0
      %1891 = vperm.xlu0 %1890, %v1840
      %v1892 = vpop.permute.xlu0 %1891
      %1893 = vset.pattern.permute.xlu0 0
      %1894 = vperm.xlu0 %1893, %v1841
      %v1895 = vpop.permute.xlu0 %1894
      %1896 = vset.pattern.permute.xlu0 0
      %1897 = vperm.xlu0 %1896, %v1842
      %v1898 = vpop.permute.xlu0 %1897
      %1899 = vset.pattern.permute.xlu0 0
      %1900 = vperm.xlu0 %1899, %v1843
      %v1901 = vpop.permute.xlu0 %1900
      %1902 = vset.pattern.permute.xlu0 0
      %1903 = vperm.xlu0 %1902, %v1844
      %v1904 = vpop.permute.xlu0 %1903
      %1905 = vset.pattern.permute.xlu0 0
      %1906 = vperm.xlu0 %1905, %v1845
      %v1907 = vpop.permute.xlu0 %1906
      %1908 = vset.pattern.permute.xlu0 0
      %1909 = vperm.xlu0 %1908, %v1846
      %v1910 = vpop.permute.xlu0 %1909
      %1911 = vset.pattern.permute.xlu0 0
      %1912 = vperm.xlu0 %1911, %v1847
      %v1913 = vpop.permute.xlu0 %1912
      %1914 = vset.pattern.permute.xlu0 0
      %1915 = vperm.xlu0 %1914, %v1848
      %v1916 = vpop.permute.xlu0 %1915
      %1917 = vset.pattern.permute.xlu0 0
      %1918 = vperm.xlu0 %1917, %v1849
      %v1919 = vpop.permute.xlu0 %1918
      %1920 = vset.pattern.permute.xlu0 0
      %1921 = vperm.xlu0 %1920, %v1850
      %v1922 = vpop.permute.xlu0 %1921
      %1923 = vset.pattern.permute.xlu0 0
      %1924 = vperm.xlu0 %1923, %v1851
      %v1925 = vpop.permute.xlu0 %1924
      %1926 = vset.pattern.permute.xlu0 0
      %1927 = vperm.xlu0 %1926, %v1852
      %v1928 = vpop.permute.xlu0 %1927
      %1929 = vset.pattern.permute.xlu0 0
      %1930 = vperm.xlu0 %1929, %v1853
      %v1931 = vpop.permute.xlu0 %1930
      %1932 = vset.pattern.permute.xlu0 0
      %1933 = vperm.xlu0 %1932, %v1854
      %v1934 = vpop.permute.xlu0 %1933
      %1935 = vset.pattern.permute.xlu0 0
      %1936 = vperm.xlu0 %1935, %v1855
      %v1937 = vpop.permute.xlu0 %1936
      %1938 = vset.pattern.permute.xlu0 0
      %1939 = vperm.xlu0 %1938, %v1856
      %v1940 = vpop.permute.xlu0 %1939
      %1941 = vset.pattern.permute.xlu0 0
      %1942 = vperm.xlu0 %1941, %v1857
      %v1943 = vpop.permute.xlu0 %1942
      %1944 = vset.pattern.permute.xlu0 0
      %1945 = vperm.xlu0 %1944, %v1858
      %v1946 = vpop.permute.xlu0 %1945
      %1947 = vset.pattern.permute.xlu0 0
      %1948 = vperm.xlu0 %1947, %v1859
      %v1949 = vpop.permute.xlu0 %1948
      %1950 = vset.pattern.permute.xlu0 0
      %1951 = vperm.xlu0 %1950, %v1860
      %v1952 = vpop.permute.xlu0 %1951
      %1953 = vset.pattern.permute.xlu0 0
      %1954 = vperm.xlu0 %1953, %v1861
      %v1955 = vpop.permute.xlu0 %1954
      %1956 = vset.pattern.permute.xlu0 0
      %1957 = vperm.xlu0 %1956, %v1862
      %v1958 = vpop.permute.xlu0 %1957
      %vm1959 = vcmp.eq.s32.totalorder %v1510, %v1865
      %vm1960 = vcmp.eq.s32.totalorder %v1510, %v1868
      %vm1961 = vcmp.eq.s32.totalorder %v1510, %v1871
      %vm1962 = vcmp.eq.s32.totalorder %v1510, %v1874
      %vm1963 = vcmp.eq.s32.totalorder %v1510, %v1877
      %vm1964 = vcmp.eq.s32.totalorder %v1510, %v1880
      %vm1965 = vcmp.eq.s32.totalorder %v1510, %v1883
      %vm1966 = vcmp.eq.s32.totalorder %v1510, %v1886
      %vm1967 = vcmp.eq.s32.totalorder %v1510, %v1889
      %vm1968 = vcmp.eq.s32.totalorder %v1510, %v1892
      %vm1969 = vcmp.eq.s32.totalorder %v1510, %v1895
      %vm1970 = vcmp.eq.s32.totalorder %v1510, %v1898
      %vm1971 = vcmp.eq.s32.totalorder %v1510, %v1901
      %vm1972 = vcmp.eq.s32.totalorder %v1510, %v1904
      %vm1973 = vcmp.eq.s32.totalorder %v1510, %v1907
      %vm1974 = vcmp.eq.s32.totalorder %v1510, %v1910
      %vm1975 = vcmp.eq.s32.totalorder %v1510, %v1913
      %vm1976 = vcmp.eq.s32.totalorder %v1510, %v1916
      %vm1977 = vcmp.eq.s32.totalorder %v1510, %v1919
      %vm1978 = vcmp.eq.s32.totalorder %v1510, %v1922
      %vm1979 = vcmp.eq.s32.totalorder %v1510, %v1925
      %vm1980 = vcmp.eq.s32.totalorder %v1510, %v1928
      %vm1981 = vcmp.eq.s32.totalorder %v1510, %v1931
      %vm1982 = vcmp.eq.s32.totalorder %v1510, %v1934
      %vm1983 = vcmp.eq.s32.totalorder %v1510, %v1937
      %vm1984 = vcmp.eq.s32.totalorder %v1510, %v1940
      %vm1985 = vcmp.eq.s32.totalorder %v1510, %v1943
      %vm1986 = vcmp.eq.s32.totalorder %v1510, %v1946
      %vm1987 = vcmp.eq.s32.totalorder %v1510, %v1949
      %vm1988 = vcmp.eq.s32.totalorder %v1510, %v1952
      %vm1989 = vcmp.eq.s32.totalorder %v1510, %v1955
      %vm1990 = vcmp.eq.s32.totalorder %v1510, %v1958
      %1992 = vset.pattern.permute.xlu0 0
      %1993 = vperm.xlu0 %1992, %v449
      %v1994 = vpop.permute.xlu0 %1993
      %1997 = vset.pattern.permute.xlu0 0
      %1998 = vperm.xlu0 %1997, %v450
      %v1999 = vpop.permute.xlu0 %1998
      %2002 = vset.pattern.permute.xlu0 0
      %2003 = vperm.xlu0 %2002, %v451
      %v2004 = vpop.permute.xlu0 %2003
      %2007 = vset.pattern.permute.xlu0 0
      %2008 = vperm.xlu0 %2007, %v452
      %v2009 = vpop.permute.xlu0 %2008
      %2012 = vset.pattern.permute.xlu0 0
      %2013 = vperm.xlu0 %2012, %v453
      %v2014 = vpop.permute.xlu0 %2013
      %2017 = vset.pattern.permute.xlu0 0
      %2018 = vperm.xlu0 %2017, %v454
      %v2019 = vpop.permute.xlu0 %2018
      %2022 = vset.pattern.permute.xlu0 0
      %2023 = vperm.xlu0 %2022, %v455
      %v2024 = vpop.permute.xlu0 %2023
      %2027 = vset.pattern.permute.xlu0 0
      %2028 = vperm.xlu0 %2027, %v456
      %v2029 = vpop.permute.xlu0 %2028
      %2032 = vset.pattern.permute.xlu0 0
      %2033 = vperm.xlu0 %2032, %v457
      %v2034 = vpop.permute.xlu0 %2033
      %2037 = vset.pattern.permute.xlu0 0
      %2038 = vperm.xlu0 %2037, %v458
      %v2039 = vpop.permute.xlu0 %2038
      %2042 = vset.pattern.permute.xlu0 0
      %2043 = vperm.xlu0 %2042, %v459
      %v2044 = vpop.permute.xlu0 %2043
      %2047 = vset.pattern.permute.xlu0 0
      %2048 = vperm.xlu0 %2047, %v460
      %v2049 = vpop.permute.xlu0 %2048
      %2052 = vset.pattern.permute.xlu0 0
      %2053 = vperm.xlu0 %2052, %v461
      %v2054 = vpop.permute.xlu0 %2053
      %2057 = vset.pattern.permute.xlu0 0
      %2058 = vperm.xlu0 %2057, %v462
      %v2059 = vpop.permute.xlu0 %2058
      %2062 = vset.pattern.permute.xlu0 0
      %2063 = vperm.xlu0 %2062, %v463
      %v2064 = vpop.permute.xlu0 %2063
      %2067 = vset.pattern.permute.xlu0 0
      %2068 = vperm.xlu0 %2067, %v464
      %v2069 = vpop.permute.xlu0 %2068
      %2072 = vset.pattern.permute.xlu0 0
      %2073 = vperm.xlu0 %2072, %v465
      %v2074 = vpop.permute.xlu0 %2073
      %2077 = vset.pattern.permute.xlu0 0
      %2078 = vperm.xlu0 %2077, %v466
      %v2079 = vpop.permute.xlu0 %2078
      %2082 = vset.pattern.permute.xlu0 0
      %2083 = vperm.xlu0 %2082, %v467
      %v2084 = vpop.permute.xlu0 %2083
      %2087 = vset.pattern.permute.xlu0 0
      %2088 = vperm.xlu0 %2087, %v468
      %v2089 = vpop.permute.xlu0 %2088
      %2092 = vset.pattern.permute.xlu0 0
      %2093 = vperm.xlu0 %2092, %v469
      %v2094 = vpop.permute.xlu0 %2093
      %2097 = vset.pattern.permute.xlu0 0
      %2098 = vperm.xlu0 %2097, %v470
      %v2099 = vpop.permute.xlu0 %2098
      %2102 = vset.pattern.permute.xlu0 0
      %2103 = vperm.xlu0 %2102, %v471
      %v2104 = vpop.permute.xlu0 %2103
      %2107 = vset.pattern.permute.xlu0 0
      %2108 = vperm.xlu0 %2107, %v472
      %v2109 = vpop.permute.xlu0 %2108
      %2112 = vset.pattern.permute.xlu0 0
      %2113 = vperm.xlu0 %2112, %v473
      %v2114 = vpop.permute.xlu0 %2113
      %2117 = vset.pattern.permute.xlu0 0
      %2118 = vperm.xlu0 %2117, %v474
      %v2119 = vpop.permute.xlu0 %2118
      %2122 = vset.pattern.permute.xlu0 0
      %2123 = vperm.xlu0 %2122, %v475
      %v2124 = vpop.permute.xlu0 %2123
      %2127 = vset.pattern.permute.xlu0 0
      %2128 = vperm.xlu0 %2127, %v476
      %v2129 = vpop.permute.xlu0 %2128
      %2132 = vset.pattern.permute.xlu0 0
      %2133 = vperm.xlu0 %2132, %v477
      %v2134 = vpop.permute.xlu0 %2133
      %2137 = vset.pattern.permute.xlu0 0
      %2138 = vperm.xlu0 %2137, %v478
      %v2139 = vpop.permute.xlu0 %2138
      %2142 = vset.pattern.permute.xlu0 0
      %2143 = vperm.xlu0 %2142, %v479
      %v2144 = vpop.permute.xlu0 %2143
      %2147 = vset.pattern.permute.xlu0 0
      %2148 = vperm.xlu0 %2147, %v480
      %v2149 = vpop.permute.xlu0 %2148
      %v2151 = vsel %vm1959, %v1994, 0.0
      %v2152 = vsel %vm1960, %v1999, 0.0
      %v2153 = vsel %vm1961, %v2004, 0.0
      %v2154 = vsel %vm1962, %v2009, 0.0
      %v2155 = vsel %vm1963, %v2014, 0.0
      %v2156 = vsel %vm1964, %v2019, 0.0
      %v2157 = vsel %vm1965, %v2024, 0.0
      %v2158 = vsel %vm1966, %v2029, 0.0
      %v2159 = vsel %vm1967, %v2034, 0.0
      %v2160 = vsel %vm1968, %v2039, 0.0
      %v2161 = vsel %vm1969, %v2044, 0.0
      %v2162 = vsel %vm1970, %v2049, 0.0
      %v2163 = vsel %vm1971, %v2054, 0.0
      %v2164 = vsel %vm1972, %v2059, 0.0
      %v2165 = vsel %vm1973, %v2064, 0.0
      %v2166 = vsel %vm1974, %v2069, 0.0
      %v2167 = vsel %vm1975, %v2074, 0.0
      %v2168 = vsel %vm1976, %v2079, 0.0
      %v2169 = vsel %vm1977, %v2084, 0.0
      %v2170 = vsel %vm1978, %v2089, 0.0
      %v2171 = vsel %vm1979, %v2094, 0.0
      %v2172 = vsel %vm1980, %v2099, 0.0
      %v2173 = vsel %vm1981, %v2104, 0.0
      %v2174 = vsel %vm1982, %v2109, 0.0
      %v2175 = vsel %vm1983, %v2114, 0.0
      %v2176 = vsel %vm1984, %v2119, 0.0
      %v2177 = vsel %vm1985, %v2124, 0.0
      %v2178 = vsel %vm1986, %v2129, 0.0
      %v2179 = vsel %vm1987, %v2134, 0.0
      %v2180 = vsel %vm1988, %v2139, 0.0
      %v2181 = vsel %vm1989, %v2144, 0.0
      %v2182 = vsel %vm1990, %v2149, 0.0
      %v2183 = vadd.f32 %v1799, %v2151
      %v2184 = vadd.f32 %v1800, %v2152
      %v2185 = vadd.f32 %v1801, %v2153
      %v2186 = vadd.f32 %v1802, %v2154
      %v2187 = vadd.f32 %v1803, %v2155
      %v2188 = vadd.f32 %v1804, %v2156
      %v2189 = vadd.f32 %v1805, %v2157
      %v2190 = vadd.f32 %v1806, %v2158
      %v2191 = vadd.f32 %v1807, %v2159
      %v2192 = vadd.f32 %v1808, %v2160
      %v2193 = vadd.f32 %v1809, %v2161
      %v2194 = vadd.f32 %v1810, %v2162
      %v2195 = vadd.f32 %v1811, %v2163
      %v2196 = vadd.f32 %v1812, %v2164
      %v2197 = vadd.f32 %v1813, %v2165
      %v2198 = vadd.f32 %v1814, %v2166
      %v2199 = vadd.f32 %v1815, %v2167
      %v2200 = vadd.f32 %v1816, %v2168
      %v2201 = vadd.f32 %v1817, %v2169
      %v2202 = vadd.f32 %v1818, %v2170
      %v2203 = vadd.f32 %v1819, %v2171
      %v2204 = vadd.f32 %v1820, %v2172
      %v2205 = vadd.f32 %v1821, %v2173
      %v2206 = vadd.f32 %v1822, %v2174
      %v2207 = vadd.f32 %v1823, %v2175
      %v2208 = vadd.f32 %v1824, %v2176
      %v2209 = vadd.f32 %v1825, %v2177
      %v2210 = vadd.f32 %v1826, %v2178
      %v2211 = vadd.f32 %v1827, %v2179
      %v2212 = vadd.f32 %v1828, %v2180
      %v2213 = vadd.f32 %v1829, %v2181
      %v2214 = vadd.f32 %v1830, %v2182
      %v2215 = vld [vmem:[%s4] sm:$0x7]
      %v2216 = vmul.f32 %v1430, %v2183
      %v2217 = vmul.f32 %v1432, %v2184
      %v2218 = vmul.f32 %v1435, %v2185
      %v2219 = vmul.f32 %v1437, %v2186
      %v2220 = vmul.f32 %v1440, %v2187
      %v2221 = vmul.f32 %v1442, %v2188
      %v2222 = vmul.f32 %v1445, %v2189
      %v2223 = vmul.f32 %v1447, %v2190
      %v2224 = vmul.f32 %v1450, %v2191
      %v2225 = vmul.f32 %v1452, %v2192
      %v2226 = vmul.f32 %v1455, %v2193
      %v2227 = vmul.f32 %v1457, %v2194
      %v2228 = vmul.f32 %v1460, %v2195
      %v2229 = vmul.f32 %v1462, %v2196
      %v2230 = vmul.f32 %v1465, %v2197
      %v2231 = vmul.f32 %v1467, %v2198
      %v2232 = vmul.f32 %v1470, %v2199
      %v2233 = vmul.f32 %v1472, %v2200
      %v2234 = vmul.f32 %v1475, %v2201
      %v2235 = vmul.f32 %v1477, %v2202
      %v2236 = vmul.f32 %v1480, %v2203
      %v2237 = vmul.f32 %v1482, %v2204
      %v2238 = vmul.f32 %v1485, %v2205
      %v2239 = vmul.f32 %v1487, %v2206
      %v2240 = vmul.f32 %v1490, %v2207
      %v2241 = vmul.f32 %v1492, %v2208
      %v2242 = vmul.f32 %v1495, %v2209
      %v2243 = vmul.f32 %v1497, %v2210
      %v2244 = vmul.f32 %v1500, %v2211
      %v2245 = vmul.f32 %v1502, %v2212
      %v2246 = vmul.f32 %v1505, %v2213
      %v2247 = vmul.f32 %v1507, %v2214
      %vm2248 = vcmask 392192
      %v2250 = vsel %vm2248, %v2215, 0
      %v2253 = vsel %vm2248, %v2216, 0
      %v2256 = vsel %vm2248, %v2217, 0
      %v2259 = vsel %vm2248, %v2218, 0
      %v2262 = vsel %vm2248, %v2219, 0
      %v2265 = vsel %vm2248, %v2220, 0
      %v2268 = vsel %vm2248, %v2221, 0
      %v2271 = vsel %vm2248, %v2222, 0
      %v2274 = vsel %vm2248, %v2223, 0
      %v2277 = vsel %vm2248, %v2224, 0
      %v2280 = vsel %vm2248, %v2225, 0
      %v2283 = vsel %vm2248, %v2226, 0
      %v2286 = vsel %vm2248, %v2227, 0
      %v2289 = vsel %vm2248, %v2228, 0
      %v2292 = vsel %vm2248, %v2229, 0
      %v2295 = vsel %vm2248, %v2230, 0
      %v2298 = vsel %vm2248, %v2231, 0
      %v2301 = vsel %vm2248, %v2232, 0
      %v2304 = vsel %vm2248, %v2233, 0
      %v2307 = vsel %vm2248, %v2234, 0
      %v2310 = vsel %vm2248, %v2235, 0
      %v2313 = vsel %vm2248, %v2236, 0
      %v2316 = vsel %vm2248, %v2237, 0
      %v2319 = vsel %vm2248, %v2238, 0
      %v2322 = vsel %vm2248, %v2239, 0
      %v2325 = vsel %vm2248, %v2240, 0
      %v2328 = vsel %vm2248, %v2241, 0
      %v2331 = vsel %vm2248, %v2242, 0
      %v2334 = vsel %vm2248, %v2243, 0
      %v2337 = vsel %vm2248, %v2244, 0
      %v2340 = vsel %vm2248, %v2245, 0
      %v2343 = vsel %vm2248, %v2246, 0
      %v2346 = vsel %vm2248, %v2247, 0
      %2348 = vmatpush.xpose.msra.mxu0 %v2298
      %2349 = vmatpush.xpose.msra.mxu0 %v2295
      %2350 = vmatpush.xpose.msra.mxu0 %v2292
      %2351 = vmatpush.xpose.msra.mxu0 %v2289
      %2352 = vmatpush.xpose.msra.mxu0 %v2286
      %2353 = vmatpush.xpose.msra.mxu0 %v2283
      %2354 = vmatpush.xpose.msra.mxu0 %v2280
      %2355 = vmatpush.xpose.msra.mxu0 %v2277
      %2356 = vmatpush.xpose.msra.mxu0 %v2274
      %2357 = vmatpush.xpose.msra.mxu0 %v2271
      %2358 = vmatpush.xpose.msra.mxu0 %v2268
      %2359 = vmatpush.xpose.msra.mxu0 %v2265
      %2360 = vmatpush.xpose.msra.mxu0 %v2262
      %2361 = vmatpush.xpose.msra.mxu0 %v2259
      %2362 = vmatpush.xpose.msra.mxu0 %v2256
      %2363 = vmatpush.xpose.msra.mxu0 %v2253
      %2364 = vmatmul.f32.gmra.mxu0 %v2250
      %v2365 = vpop.f32.mrf.mxu0
      %v2366 = vadd.f32 0.0, %v2365
      %2367 = vdwg.mxu0
      %2368 = vmatpush.xpose.msra.mxu0 %v2346
      %2369 = vmatpush.xpose.msra.mxu0 %v2343
      %2370 = vmatpush.xpose.msra.mxu0 %v2340
      %2371 = vmatpush.xpose.msra.mxu0 %v2337
      %2372 = vmatpush.xpose.msra.mxu0 %v2334
      %2373 = vmatpush.xpose.msra.mxu0 %v2331
      %2374 = vmatpush.xpose.msra.mxu0 %v2328
      %2375 = vmatpush.xpose.msra.mxu0 %v2325
      %2376 = vmatpush.xpose.msra.mxu0 %v2322
      %2377 = vmatpush.xpose.msra.mxu0 %v2319
      %2378 = vmatpush.xpose.msra.mxu0 %v2316
      %2379 = vmatpush.xpose.msra.mxu0 %v2313
      %2380 = vmatpush.xpose.msra.mxu0 %v2310
      %2381 = vmatpush.xpose.msra.mxu0 %v2307
      %2382 = vmatpush.xpose.msra.mxu0 %v2304
      %2383 = vmatpush.xpose.msra.mxu0 %v2301
      %2384 = vmatmul.f32.gmra.mxu0 %v2250
      %v2385 = vpop.f32.mrf.mxu0
      %v2386 = vadd.f32 0.0, %v2385
      %2387 = vdwg.mxu0
      %v2388 = vpack.c.bf16 %v2386, %v2366
      %v2390 = vrot.slane %v2388, 2
      %vm2391 = vcmask 1041408
      %v2394 = vsel %vm2391, %v2388, %v2390
      %vm2396 = vcmask 1041408
      %vm2397 = vsmask.f32 1280
      %vm2398 = vmand %vm2396, %vm2397
      %vm2399 = vcmask 1043458
      %vm2400 = vsmask.f32 3328
      %vm2401 = vmand %vm2399, %vm2400
      %vm2402 = vmor %vm2401, %vm2398
      %v2403 = vld [vmem:[%s318] sm:$0xf]
      %v2404 = vsel %vm2402, %v2394, %v2403
      %2405 = vst [vmem:[%s318] sm:$0xf] %v2404
      %s2406 = smul.u32 2, %s21
      %p2407 = scmp.lt.s32.totalorder %s20, 1
      %s2408 = scalar_select %p2407, %s20, 1
      %p2409 = scmp.lt.s32.totalorder %s2406, 1
      %s2410 = scalar_select %p2409, %s2406, 1
      %s2411 = smul.addr %s2408, 2
      %s2412 = sadd.s32 %s2410, %s2411
      %s2413 = smul.addr %s2412, 2
      %s2414 = scalar_lea.vmem %s5, %s2413
      // Predicated region
      $region41: #{_lambda_.20} parent=39 // pred_check
        %p2415 = pneg %p172
      $region42: #{_lambda_.20} parent=39 // pred_check_branch
        %2417 = sbr.rel (%p2415) target = $region44
      $region43: #{_lambda_.20} parent=39 // pred_region
        %s2418 = smul.u32 2, %s21
      $region44: #{_lambda_.20} parent=39 // pred_fallthru
        _
    $region40: #{_lambda_.20} parent=5 // pred_fallthru
      _
    %p2419 = scmp.le.s32.totalorder 2, %s11
    // Predicated region
    $region45: #{_lambda_.20} parent=5 // pred_check
      %p2420 = pneg %p2419
    $region46: #{_lambda_.20} parent=5 // pred_check_branch
      %2422 = sbr.rel (%p2420) target = $region48
    $region47: #{_lambda_.20} parent=5 // pred_region
      %s2423 = ssub.s32 %s11, 2
      // Predicated region
      $region49: #{_lambda_.20} parent=47 // pred_check
        %p2424 = pneg %p178
      $region50: #{_lambda_.20} parent=47 // pred_check_branch
        %2426 = sbr.rel (%p2424) target = $region52
      $region51: #{_lambda_.20} parent=47 // pred_region
        %s2427 = smul.u32 2, %s23
        %p2428 = scmp.lt.s32.totalorder %s22, 1
        %s2429 = scalar_select %p2428, %s22, 1
        %p2430 = scmp.lt.s32.totalorder %s2427, 1
        %s2431 = scalar_select %p2430, %s2427, 1
        %s2432 = smul.addr %s2429, 2
        %s2433 = sadd.s32 %s2431, %s2432
        %s2434 = smul.addr %s2433, 2
        %s2435 = scalar_lea.vmem %s5, %s2434
      $region52: #{_lambda_.20} parent=47 // pred_fallthru
        _
    $region48: #{_lambda_.20} parent=5 // pred_fallthru
      _
  $region6: #{_lambda_.20} parent=0 // loop_footer
    %s15 = sadd.s32 1, %s11
  $region7: #{_lambda_.20} parent=0 // loop_footer_branch
    %10 = sbr.rel target = $region3
  $region8: #{_lambda_.20} parent=0 // loop_exit
    _

// kernel: _lambda_.22
$region0: #{_lambda_.22}
  #allocation0 [shape = 'u32[]', space=smem, size = 0x4, offset = 0x4, fixed_abs, tag = 'smem constant byte address 0x4 - core index']
  #allocation1 [shape = 'u32[72,128]{1,0:T(1,128)}', space=vmem, size = 0x9000, scoped, tag = 'internal scratch']
  #allocation2 [shape = 'f32[128,32]{1,0:T(8,128)}', space=vmem, size = 0x10000, scoped, tag = 'scratch operand']
  %s0 = inlined_call_operand.vmem [shape: bf16[128,288], index: 0, kind: input, shape index: {}]
  %s1 = inlined_call_operand.vmem [shape: bf16[288,32], index: 1, kind: input, shape index: {}]
  %s2 = inlined_call_operand.vmem [shape: f32[1,32], index: 2, kind: input, shape index: {}]
  %s3 = inlined_call_operand.vmem [shape: bf16[128,32], index: 3, kind: output, shape index: {}]
  %s4 = sld [smem:[#allocation0]]
  $region30: #{_lambda_.22} parent=0
    _
  %s6 = ssub.s32 1, %s4
  %s7 = scalar_select 0, %s6, %s4
  // Predicated region
  $region2: #{_lambda_.22} parent=0 // pred_check
    _
  $region3: #{_lambda_.22} parent=0 // pred_check_branch
    %9 = sbr.rel (0) target = $region5
  $region4: #{_lambda_.22} parent=0 // pred_region
    _
  $region5: #{_lambda_.22} parent=0 // pred_fallthru
    _
  // Predicated region
  $region6: #{_lambda_.22} parent=0 // pred_check
    _
  $region7: #{_lambda_.22} parent=0 // pred_check_branch
    %11 = sbr.rel (0) target = $region9
  $region8: #{_lambda_.22} parent=0 // pred_region
    _
  $region9: #{_lambda_.22} parent=0 // pred_fallthru
    _
  // Predicated region
  $region10: #{_lambda_.22} parent=0 // pred_check
    _
  $region11: #{_lambda_.22} parent=0 // pred_check_branch
    %13 = sbr.rel (0) target = $region13
  $region12: #{_lambda_.22} parent=0 // pred_region
    _
  $region13: #{_lambda_.22} parent=0 // pred_fallthru
    _
  %p15 = scmp.eq.s32.totalorder 0, 0
  // Predicated region
  $region14: #{_lambda_.22} parent=0 // pred_check
    %p16 = pneg %p15
  $region15: #{_lambda_.22} parent=0 // pred_check_branch
    %18 = sbr.rel (%p16) target = $region17
  $region16: #{_lambda_.22} parent=0 // pred_region
    %vm19 = vcmask 261120
    %20 = vst.msk [vmem:[#allocation2] sm:$0xff] %vm19, 0.0
    %21 = vst.msk [vmem:[#allocation2 + $0x8] sm:$0xff] %vm19, 0.0
    %22 = vst.msk [vmem:[#allocation2 + $0x10] sm:$0xff] %vm19, 0.0
    %23 = vst.msk [vmem:[#allocation2 + $0x18] sm:$0xff] %vm19, 0.0
    %24 = vst.msk [vmem:[#allocation2 + $0x20] sm:$0xff] %vm19, 0.0
    %25 = vst.msk [vmem:[#allocation2 + $0x28] sm:$0xff] %vm19, 0.0
    %26 = vst.msk [vmem:[#allocation2 + $0x30] sm:$0xff] %vm19, 0.0
    %27 = vst.msk [vmem:[#allocation2 + $0x38] sm:$0xff] %vm19, 0.0
    %28 = vst.msk [vmem:[#allocation2 + $0x40] sm:$0xff] %vm19, 0.0
    %29 = vst.msk [vmem:[#allocation2 + $0x48] sm:$0xff] %vm19, 0.0
    %30 = vst.msk [vmem:[#allocation2 + $0x50] sm:$0xff] %vm19, 0.0
    %31 = vst.msk [vmem:[#allocation2 + $0x58] sm:$0xff] %vm19, 0.0
    %32 = vst.msk [vmem:[#allocation2 + $0x60] sm:$0xff] %vm19, 0.0
    %33 = vst.msk [vmem:[#allocation2 + $0x68] sm:$0xff] %vm19, 0.0
    %34 = vst.msk [vmem:[#allocation2 + $0x70] sm:$0xff] %vm19, 0.0
    %35 = vst.msk [vmem:[#allocation2 + $0x78] sm:$0xff] %vm19, 0.0
  $region17: #{_lambda_.22} parent=0 // pred_fallthru
    _
  %v36 = vld [vmem:[#allocation2] sm:$0xff]
  %v37 = vld [vmem:[#allocation2 + $0x8] sm:$0xff]
  %v38 = vld [vmem:[#allocation2 + $0x10] sm:$0xff]
  %v39 = vld [vmem:[#allocation2 + $0x18] sm:$0xff]
  %v40 = vld [vmem:[#allocation2 + $0x20] sm:$0xff]
  %v41 = vld [vmem:[#allocation2 + $0x28] sm:$0xff]
  %v42 = vld [vmem:[#allocation2 + $0x30] sm:$0xff]
  %v43 = vld [vmem:[#allocation2 + $0x38] sm:$0xff]
  %v44 = vld [vmem:[#allocation2 + $0x40] sm:$0xff]
  %v45 = vld [vmem:[#allocation2 + $0x48] sm:$0xff]
  %v46 = vld [vmem:[#allocation2 + $0x50] sm:$0xff]
  %v47 = vld [vmem:[#allocation2 + $0x58] sm:$0xff]
  %v48 = vld [vmem:[#allocation2 + $0x60] sm:$0xff]
  %v49 = vld [vmem:[#allocation2 + $0x68] sm:$0xff]
  %v50 = vld [vmem:[#allocation2 + $0x70] sm:$0xff]
  %v51 = vld [vmem:[#allocation2 + $0x78] sm:$0xff]
  %v52 = vld [vmem:[%s0] sm:$0xff]
  %v53 = vld [vmem:[%s0 + $0x8] sm:$0xf]
  %v54 = vld [vmem:[%s0 + $0xc] sm:$0xff]
  %v55 = vld [vmem:[%s0 + $0x14] sm:$0xf]
  %v56 = vld [vmem:[%s0 + $0x18] sm:$0xff]
  %v57 = vld [vmem:[%s0 + $0x20] sm:$0xf]
  %v58 = vld [vmem:[%s0 + $0x24] sm:$0xff]
  %v59 = vld [vmem:[%s0 + $0x2c] sm:$0xf]
  %v60 = vld [vmem:[%s0 + $0x30] sm:$0xff]
  %v61 = vld [vmem:[%s0 + $0x38] sm:$0xf]
  %v62 = vld [vmem:[%s0 + $0x3c] sm:$0xff]
  %v63 = vld [vmem:[%s0 + $0x44] sm:$0xf]
  %v64 = vld [vmem:[%s0 + $0x48] sm:$0xff]
  %v65 = vld [vmem:[%s0 + $0x50] sm:$0xf]
  %v66 = vld [vmem:[%s0 + $0x54] sm:$0xff]
  %v67 = vld [vmem:[%s0 + $0x5c] sm:$0xf]
  %v68 = vld [vmem:[%s0 + $0x60] sm:$0xff]
  %v69 = vld [vmem:[%s0 + $0x68] sm:$0xf]
  %v70 = vld [vmem:[%s0 + $0x6c] sm:$0xff]
  %v71 = vld [vmem:[%s0 + $0x74] sm:$0xf]
  %v72 = vld [vmem:[%s0 + $0x78] sm:$0xff]
  %v73 = vld [vmem:[%s0 + $0x80] sm:$0xf]
  %v74 = vld [vmem:[%s0 + $0x84] sm:$0xff]
  %v75 = vld [vmem:[%s0 + $0x8c] sm:$0xf]
  %v76 = vld [vmem:[%s0 + $0x90] sm:$0xff]
  %v77 = vld [vmem:[%s0 + $0x98] sm:$0xf]
  %v78 = vld [vmem:[%s0 + $0x9c] sm:$0xff]
  %v79 = vld [vmem:[%s0 + $0xa4] sm:$0xf]
  %v80 = vld [vmem:[%s0 + $0xa8] sm:$0xff]
  %v81 = vld [vmem:[%s0 + $0xb0] sm:$0xf]
  %v82 = vld [vmem:[%s0 + $0xb4] sm:$0xff]
  %v83 = vld [vmem:[%s0 + $0xbc] sm:$0xf]
  %v84 = vld [vmem:[%s1] sm:$0xf]
  %v85 = vld [vmem:[%s1 + $0x4] sm:$0xf]
  %v86 = vld [vmem:[%s1 + $0x8] sm:$0xf]
  %v87 = vld [vmem:[%s1 + $0xc] sm:$0xf]
  %v88 = vld [vmem:[%s1 + $0x10] sm:$0xf]
  %v89 = vld [vmem:[%s1 + $0x14] sm:$0xf]
  %v90 = vld [vmem:[%s1 + $0x18] sm:$0xf]
  %v91 = vld [vmem:[%s1 + $0x1c] sm:$0xf]
  %v92 = vld [vmem:[%s1 + $0x20] sm:$0xf]
  %v93 = vld [vmem:[%s1 + $0x24] sm:$0xf]
  %v94 = vld [vmem:[%s1 + $0x28] sm:$0xf]
  %v95 = vld [vmem:[%s1 + $0x2c] sm:$0xf]
  %v96 = vld [vmem:[%s1 + $0x30] sm:$0xf]
  %v97 = vld [vmem:[%s1 + $0x34] sm:$0xf]
  %v98 = vld [vmem:[%s1 + $0x38] sm:$0xf]
  %v99 = vld [vmem:[%s1 + $0x3c] sm:$0xf]
  %v100 = vld [vmem:[%s1 + $0x40] sm:$0xf]
  %v101 = vld [vmem:[%s1 + $0x44] sm:$0xf]
  %v102 = vld [vmem:[%s1 + $0x48] sm:$0xf]
  %v103 = vld [vmem:[%s1 + $0x4c] sm:$0xf]
  %v104 = vld [vmem:[%s1 + $0x50] sm:$0xf]
  %v105 = vld [vmem:[%s1 + $0x54] sm:$0xf]
  %v106 = vld [vmem:[%s1 + $0x58] sm:$0xf]
  %v107 = vld [vmem:[%s1 + $0x5c] sm:$0xf]
  %v108 = vld [vmem:[%s1 + $0x60] sm:$0xf]
  %v109 = vld [vmem:[%s1 + $0x64] sm:$0xf]
  %v110 = vld [vmem:[%s1 + $0x68] sm:$0xf]
  %v111 = vld [vmem:[%s1 + $0x6c] sm:$0xf]
  %v112 = vld [vmem:[%s1 + $0x70] sm:$0xf]
  %v113 = vld [vmem:[%s1 + $0x74] sm:$0xf]
  %v114 = vld [vmem:[%s1 + $0x78] sm:$0xf]
  %v115 = vld [vmem:[%s1 + $0x7c] sm:$0xf]
  %v116 = vld [vmem:[%s1 + $0x80] sm:$0xf]
  %v117 = vld [vmem:[%s1 + $0x84] sm:$0xf]
  %v118 = vld [vmem:[%s1 + $0x88] sm:$0xf]
  %v119 = vld [vmem:[%s1 + $0x8c] sm:$0xf]
  %v152 = vunpack.c.l.b16 %v52
  %v153 = vunpack.c.h.b16 %v52
  %v154 = vunpack.c.l.b16 %v53
  %v155 = vunpack.c.l.b16 %v54
  %v156 = vunpack.c.h.b16 %v54
  %v157 = vunpack.c.l.b16 %v55
  %v158 = vunpack.c.l.b16 %v56
  %v159 = vunpack.c.h.b16 %v56
  %v160 = vunpack.c.l.b16 %v57
  %v161 = vunpack.c.l.b16 %v58
  %v162 = vunpack.c.h.b16 %v58
  %v163 = vunpack.c.l.b16 %v59
  %v164 = vunpack.c.l.b16 %v60
  %v165 = vunpack.c.h.b16 %v60
  %v166 = vunpack.c.l.b16 %v61
  %v167 = vunpack.c.l.b16 %v62
  %v168 = vunpack.c.h.b16 %v62
  %v169 = vunpack.c.l.b16 %v63
  %v170 = vunpack.c.l.b16 %v64
  %v171 = vunpack.c.h.b16 %v64
  %v172 = vunpack.c.l.b16 %v65
  %v173 = vunpack.c.l.b16 %v66
  %v174 = vunpack.c.h.b16 %v66
  %v175 = vunpack.c.l.b16 %v67
  %v176 = vunpack.c.l.b16 %v68
  %v177 = vunpack.c.h.b16 %v68
  %v178 = vunpack.c.l.b16 %v69
  %v179 = vunpack.c.l.b16 %v70
  %v180 = vunpack.c.h.b16 %v70
  %v181 = vunpack.c.l.b16 %v71
  %v182 = vunpack.c.l.b16 %v72
  %v183 = vunpack.c.h.b16 %v72
  %v184 = vunpack.c.l.b16 %v73
  %v185 = vunpack.c.l.b16 %v74
  %v186 = vunpack.c.h.b16 %v74
  %v187 = vunpack.c.l.b16 %v75
  %v188 = vunpack.c.l.b16 %v76
  %v189 = vunpack.c.h.b16 %v76
  %v190 = vunpack.c.l.b16 %v77
  %v191 = vunpack.c.l.b16 %v78
  %v192 = vunpack.c.h.b16 %v78
  %v193 = vunpack.c.l.b16 %v79
  %v194 = vunpack.c.l.b16 %v80
  %v195 = vunpack.c.h.b16 %v80
  %v196 = vunpack.c.l.b16 %v81
  %v197 = vunpack.c.l.b16 %v82
  %v198 = vunpack.c.h.b16 %v82
  %v199 = vunpack.c.l.b16 %v83
  %v200 = vpack.c.b16 %v155, %v152
  %v201 = vpack.c.b16 %v156, %v153
  %v202 = vpack.c.b16 %v157, %v154
  %v203 = vpack.c.b16 %v161, %v158
  %v204 = vpack.c.b16 %v162, %v159
  %v205 = vpack.c.b16 %v163, %v160
  %v206 = vpack.c.b16 %v167, %v164
  %v207 = vpack.c.b16 %v168, %v165
  %v208 = vpack.c.b16 %v169, %v166
  %v209 = vpack.c.b16 %v173, %v170
  %v210 = vpack.c.b16 %v174, %v171
  %v211 = vpack.c.b16 %v175, %v172
  %v212 = vpack.c.b16 %v179, %v176
  %v213 = vpack.c.b16 %v180, %v177
  %v214 = vpack.c.b16 %v181, %v178
  %v215 = vpack.c.b16 %v185, %v182
  %v216 = vpack.c.b16 %v186, %v183
  %v217 = vpack.c.b16 %v187, %v184
  %v218 = vpack.c.b16 %v191, %v188
  %v219 = vpack.c.b16 %v192, %v189
  %v220 = vpack.c.b16 %v193, %v190
  %v221 = vpack.c.b16 %v197, %v194
  %v222 = vpack.c.b16 %v198, %v195
  %v223 = vpack.c.b16 %v199, %v196
  %v276 = vunpack.c.l.b16 %v84
  %v277 = vunpack.c.l.b16 %v85
  %v278 = vunpack.c.l.b16 %v86
  %v279 = vunpack.c.l.b16 %v87
  %v280 = vunpack.c.l.b16 %v88
  %v281 = vunpack.c.l.b16 %v89
  %v282 = vunpack.c.l.b16 %v90
  %v283 = vunpack.c.l.b16 %v91
  %v284 = vunpack.c.l.b16 %v92
  %v285 = vunpack.c.l.b16 %v93
  %v286 = vunpack.c.l.b16 %v94
  %v287 = vunpack.c.l.b16 %v95
  %v288 = vunpack.c.l.b16 %v96
  %v289 = vunpack.c.l.b16 %v97
  %v290 = vunpack.c.l.b16 %v98
  %v291 = vunpack.c.l.b16 %v99
  %v292 = vunpack.c.l.b16 %v100
  %v293 = vunpack.c.l.b16 %v101
  %v294 = vunpack.c.l.b16 %v102
  %v295 = vunpack.c.l.b16 %v103
  %v296 = vunpack.c.l.b16 %v104
  %v297 = vunpack.c.l.b16 %v105
  %v298 = vunpack.c.l.b16 %v106
  %v299 = vunpack.c.l.b16 %v107
  %v300 = vunpack.c.l.b16 %v108
  %v301 = vunpack.c.l.b16 %v109
  %v302 = vunpack.c.l.b16 %v110
  %v303 = vunpack.c.l.b16 %v111
  %v304 = vunpack.c.l.b16 %v112
  %v305 = vunpack.c.l.b16 %v113
  %v306 = vunpack.c.l.b16 %v114
  %v307 = vunpack.c.l.b16 %v115
  %v308 = vunpack.c.l.b16 %v116
  %v309 = vunpack.c.l.b16 %v117
  %v310 = vunpack.c.l.b16 %v118
  %v311 = vunpack.c.l.b16 %v119
  %v312 = vpack.c.b16 %v277, %v276
  %v313 = vpack.c.b16 %v279, %v278
  %v314 = vpack.c.b16 %v281, %v280
  %v315 = vpack.c.b16 %v283, %v282
  %v316 = vpack.c.b16 %v285, %v284
  %v317 = vpack.c.b16 %v287, %v286
  %v318 = vpack.c.b16 %v289, %v288
  %v319 = vpack.c.b16 %v291, %v290
  %v320 = vpack.c.b16 %v293, %v292
  %v321 = vpack.c.b16 %v295, %v294
  %v322 = vpack.c.b16 %v297, %v296
  %v323 = vpack.c.b16 %v299, %v298
  %v324 = vpack.c.b16 %v301, %v300
  %v325 = vpack.c.b16 %v303, %v302
  %v326 = vpack.c.b16 %v305, %v304
  %v327 = vpack.c.b16 %v307, %v306
  %v328 = vpack.c.b16 %v309, %v308
  %v329 = vpack.c.b16 %v311, %v310
  %vm348 = vcmask 261120
  %v350 = vsel %vm348, %v202, 0
  %v353 = vsel %vm348, %v205, 0
  %v356 = vsel %vm348, %v208, 0
  %v359 = vsel %vm348, %v211, 0
  %v362 = vsel %vm348, %v214, 0
  %v365 = vsel %vm348, %v217, 0
  %v368 = vsel %vm348, %v220, 0
  %v371 = vsel %vm348, %v223, 0
  %373 = vmatpush.bf16.msra.mxu0 %v319
  %374 = vmatpush.bf16.msra.mxu0 %v318
  %375 = vmatpush.bf16.msra.mxu0 %v317
  %376 = vmatpush.bf16.msra.mxu0 %v316
  %377 = vmatpush.bf16.msra.mxu0 %v315
  %378 = vmatpush.bf16.msra.mxu0 %v314
  %379 = vmatpush.bf16.msra.mxu0 %v313
  %380 = vmatpush.bf16.msra.mxu0 %v312
  %381 = vmatmul.bf16.gmra.mxu0 %v200
  %v382 = vpop.f32.mrf.mxu0
  %v383 = vadd.f32 0.0, %v382
  %v384 = vpop.f32.mrf.mxu0
  %v385 = vadd.f32 0.0, %v384
  %386 = vmatmul.bf16.gmra.mxu0 %v203
  %v387 = vpop.f32.mrf.mxu0
  %v388 = vadd.f32 0.0, %v387
  %v389 = vpop.f32.mrf.mxu0
  %v390 = vadd.f32 0.0, %v389
  %391 = vmatmul.bf16.gmra.mxu0 %v206
  %v392 = vpop.f32.mrf.mxu0
  %v393 = vadd.f32 0.0, %v392
  %v394 = vpop.f32.mrf.mxu0
  %v395 = vadd.f32 0.0, %v394
  %396 = vmatmul.bf16.gmra.mxu0 %v209
  %v397 = vpop.f32.mrf.mxu0
  %v398 = vadd.f32 0.0, %v397
  %v399 = vpop.f32.mrf.mxu0
  %v400 = vadd.f32 0.0, %v399
  %401 = vmatmul.bf16.gmra.mxu0 %v212
  %v402 = vpop.f32.mrf.mxu0
  %v403 = vadd.f32 0.0, %v402
  %v404 = vpop.f32.mrf.mxu0
  %v405 = vadd.f32 0.0, %v404
  %406 = vmatmul.bf16.gmra.mxu0 %v215
  %v407 = vpop.f32.mrf.mxu0
  %v408 = vadd.f32 0.0, %v407
  %v409 = vpop.f32.mrf.mxu0
  %v410 = vadd.f32 0.0, %v409
  %411 = vmatmul.bf16.gmra.mxu0 %v218
  %v412 = vpop.f32.mrf.mxu0
  %v413 = vadd.f32 0.0, %v412
  %v414 = vpop.f32.mrf.mxu0
  %v415 = vadd.f32 0.0, %v414
  %416 = vmatmul.bf16.gmra.mxu0 %v221
  %v417 = vpop.f32.mrf.mxu0
  %v418 = vadd.f32 0.0, %v417
  %v419 = vpop.f32.mrf.mxu0
  %v420 = vadd.f32 0.0, %v419
  %421 = vdwg.mxu0
  %422 = vmatpush.bf16.msra.mxu0 %v327
  %423 = vmatpush.bf16.msra.mxu0 %v326
  %424 = vmatpush.bf16.msra.mxu0 %v325
  %425 = vmatpush.bf16.msra.mxu0 %v324
  %426 = vmatpush.bf16.msra.mxu0 %v323
  %427 = vmatpush.bf16.msra.mxu0 %v322
  %428 = vmatpush.bf16.msra.mxu0 %v321
  %429 = vmatpush.bf16.msra.mxu0 %v320
  %430 = vmatmul.bf16.gmra.mxu0 %v201
  %v431 = vpop.f32.mrf.mxu0
  %v432 = vadd.f32 %v383, %v431
  %v433 = vpop.f32.mrf.mxu0
  %v434 = vadd.f32 %v385, %v433
  %435 = vmatmul.bf16.gmra.mxu0 %v204
  %v436 = vpop.f32.mrf.mxu0
  %v437 = vadd.f32 %v388, %v436
  %v438 = vpop.f32.mrf.mxu0
  %v439 = vadd.f32 %v390, %v438
  %440 = vmatmul.bf16.gmra.mxu0 %v207
  %v441 = vpop.f32.mrf.mxu0
  %v442 = vadd.f32 %v393, %v441
  %v443 = vpop.f32.mrf.mxu0
  %v444 = vadd.f32 %v395, %v443
  %445 = vmatmul.bf16.gmra.mxu0 %v210
  %v446 = vpop.f32.mrf.mxu0
  %v447 = vadd.f32 %v398, %v446
  %v448 = vpop.f32.mrf.mxu0
  %v449 = vadd.f32 %v400, %v448
  %450 = vmatmul.bf16.gmra.mxu0 %v213
  %v451 = vpop.f32.mrf.mxu0
  %v452 = vadd.f32 %v403, %v451
  %v453 = vpop.f32.mrf.mxu0
  %v454 = vadd.f32 %v405, %v453
  %455 = vmatmul.bf16.gmra.mxu0 %v216
  %v456 = vpop.f32.mrf.mxu0
  %v457 = vadd.f32 %v408, %v456
  %v458 = vpop.f32.mrf.mxu0
  %v459 = vadd.f32 %v410, %v458
  %460 = vmatmul.bf16.gmra.mxu0 %v219
  %v461 = vpop.f32.mrf.mxu0
  %v462 = vadd.f32 %v413, %v461
  %v463 = vpop.f32.mrf.mxu0
  %v464 = vadd.f32 %v415, %v463
  %465 = vmatmul.bf16.gmra.mxu0 %v222
  %v466 = vpop.f32.mrf.mxu0
  %v467 = vadd.f32 %v418, %v466
  %v468 = vpop.f32.mrf.mxu0
  %v469 = vadd.f32 %v420, %v468
  %470 = vdwg.mxu0
  %471 = vmatpush.bf16.msra.mxu0 0
  %472 = vmatpush.bf16.msra.mxu0 0
  %473 = vmatpush.bf16.msra.mxu0 0
  %474 = vmatpush.bf16.msra.mxu0 0
  %475 = vmatpush.bf16.msra.mxu0 0
  %476 = vmatpush.bf16.msra.mxu0 0
  %477 = vmatpush.bf16.msra.mxu0 %v329
  %478 = vmatpush.bf16.msra.mxu0 %v328
  %479 = vmatmul.bf16.gmra.mxu0 %v350
  %v480 = vpop.f32.mrf.mxu0
  %v481 = vadd.f32 %v432, %v480
  %v482 = vpop.f32.mrf.mxu0
  %v483 = vadd.f32 %v434, %v482
  %484 = vmatmul.bf16.gmra.mxu0 %v353
  %v485 = vpop.f32.mrf.mxu0
  %v486 = vadd.f32 %v437, %v485
  %v487 = vpop.f32.mrf.mxu0
  %v488 = vadd.f32 %v439, %v487
  %489 = vmatmul.bf16.gmra.mxu0 %v356
  %v490 = vpop.f32.mrf.mxu0
  %v491 = vadd.f32 %v442, %v490
  %v492 = vpop.f32.mrf.mxu0
  %v493 = vadd.f32 %v444, %v492
  %494 = vmatmul.bf16.gmra.mxu0 %v359
  %v495 = vpop.f32.mrf.mxu0
  %v496 = vadd.f32 %v447, %v495
  %v497 = vpop.f32.mrf.mxu0
  %v498 = vadd.f32 %v449, %v497
  %499 = vmatmul.bf16.gmra.mxu0 %v362
  %v500 = vpop.f32.mrf.mxu0
  %v501 = vadd.f32 %v452, %v500
  %v502 = vpop.f32.mrf.mxu0
  %v503 = vadd.f32 %v454, %v502
  %504 = vmatmul.bf16.gmra.mxu0 %v365
  %v505 = vpop.f32.mrf.mxu0
  %v506 = vadd.f32 %v457, %v505
  %v507 = vpop.f32.mrf.mxu0
  %v508 = vadd.f32 %v459, %v507
  %509 = vmatmul.bf16.gmra.mxu0 %v368
  %v510 = vpop.f32.mrf.mxu0
  %v511 = vadd.f32 %v462, %v510
  %v512 = vpop.f32.mrf.mxu0
  %v513 = vadd.f32 %v464, %v512
  %514 = vmatmul.bf16.gmra.mxu0 %v371
  %v515 = vpop.f32.mrf.mxu0
  %v516 = vadd.f32 %v467, %v515
  %v517 = vpop.f32.mrf.mxu0
  %v518 = vadd.f32 %v469, %v517
  %519 = vdwg.mxu0
  %v520 = vadd.f32 %v36, %v481
  %v521 = vadd.f32 %v37, %v483
  %v522 = vadd.f32 %v38, %v486
  %v523 = vadd.f32 %v39, %v488
  %v524 = vadd.f32 %v40, %v491
  %v525 = vadd.f32 %v41, %v493
  %v526 = vadd.f32 %v42, %v496
  %v527 = vadd.f32 %v43, %v498
  %v528 = vadd.f32 %v44, %v501
  %v529 = vadd.f32 %v45, %v503
  %v530 = vadd.f32 %v46, %v506
  %v531 = vadd.f32 %v47, %v508
  %v532 = vadd.f32 %v48, %v511
  %v533 = vadd.f32 %v49, %v513
  %v534 = vadd.f32 %v50, %v516
  %v535 = vadd.f32 %v51, %v518
  %536 = vst.msk [vmem:[#allocation2] sm:$0xff] %vm348, %v520
  %537 = vst.msk [vmem:[#allocation2 + $0x8] sm:$0xff] %vm348, %v521
  %538 = vst.msk [vmem:[#allocation2 + $0x10] sm:$0xff] %vm348, %v522
  %539 = vst.msk [vmem:[#allocation2 + $0x18] sm:$0xff] %vm348, %v523
  %540 = vst.msk [vmem:[#allocation2 + $0x20] sm:$0xff] %vm348, %v524
  %541 = vst.msk [vmem:[#allocation2 + $0x28] sm:$0xff] %vm348, %v525
  %542 = vst.msk [vmem:[#allocation2 + $0x30] sm:$0xff] %vm348, %v526
  %543 = vst.msk [vmem:[#allocation2 + $0x38] sm:$0xff] %vm348, %v527
  %544 = vst.msk [vmem:[#allocation2 + $0x40] sm:$0xff] %vm348, %v528
  %545 = vst.msk [vmem:[#allocation2 + $0x48] sm:$0xff] %vm348, %v529
  %546 = vst.msk [vmem:[#allocation2 + $0x50] sm:$0xff] %vm348, %v530
  %547 = vst.msk [vmem:[#allocation2 + $0x58] sm:$0xff] %vm348, %v531
  %548 = vst.msk [vmem:[#allocation2 + $0x60] sm:$0xff] %vm348, %v532
  %549 = vst.msk [vmem:[#allocation2 + $0x68] sm:$0xff] %vm348, %v533
  %550 = vst.msk [vmem:[#allocation2 + $0x70] sm:$0xff] %vm348, %v534
  %551 = vst.msk [vmem:[#allocation2 + $0x78] sm:$0xff] %vm348, %v535
  // Predicated region
  $region18: #{_lambda_.22} parent=0 // pred_check
    %p552 = pneg %p15
  $region19: #{_lambda_.22} parent=0 // pred_check_branch
    %554 = sbr.rel (%p552) target = $region21
  $region20: #{_lambda_.22} parent=0 // pred_region
    %v555 = vld [vmem:[#allocation2] sm:$0xff]
    %v556 = vld [vmem:[#allocation2 + $0x8] sm:$0xff]
    %v557 = vld [vmem:[#allocation2 + $0x10] sm:$0xff]
    %v558 = vld [vmem:[#allocation2 + $0x18] sm:$0xff]
    %v559 = vld [vmem:[#allocation2 + $0x20] sm:$0xff]
    %v560 = vld [vmem:[#allocation2 + $0x28] sm:$0xff]
    %v561 = vld [vmem:[#allocation2 + $0x30] sm:$0xff]
    %v562 = vld [vmem:[#allocation2 + $0x38] sm:$0xff]
    %v563 = vld [vmem:[#allocation2 + $0x40] sm:$0xff]
    %v564 = vld [vmem:[#allocation2 + $0x48] sm:$0xff]
    %v565 = vld [vmem:[#allocation2 + $0x50] sm:$0xff]
    %v566 = vld [vmem:[#allocation2 + $0x58] sm:$0xff]
    %v567 = vld [vmem:[#allocation2 + $0x60] sm:$0xff]
    %v568 = vld [vmem:[#allocation2 + $0x68] sm:$0xff]
    %v569 = vld [vmem:[#allocation2 + $0x70] sm:$0xff]
    %v570 = vld [vmem:[#allocation2 + $0x78] sm:$0xff]
    %v571 = vld [vmem:[%s2] sm:$0x1]
    %v573 = vperm.slane %v571, 0
    %v575 = vadd.f32 %v555, %v573
    %v576 = vadd.f32 %v556, %v573
    %v577 = vadd.f32 %v557, %v573
    %v578 = vadd.f32 %v558, %v573
    %v579 = vadd.f32 %v559, %v573
    %v580 = vadd.f32 %v560, %v573
    %v581 = vadd.f32 %v561, %v573
    %v582 = vadd.f32 %v562, %v573
    %v583 = vadd.f32 %v563, %v573
    %v584 = vadd.f32 %v564, %v573
    %v585 = vadd.f32 %v565, %v573
    %v586 = vadd.f32 %v566, %v573
    %v587 = vadd.f32 %v567, %v573
    %v588 = vadd.f32 %v568, %v573
    %v589 = vadd.f32 %v569, %v573
    %v590 = vadd.f32 %v570, %v573
    %v591 = vmax.f32 %v575, 0.0
    %v592 = vmax.f32 %v576, 0.0
    %v593 = vmax.f32 %v577, 0.0
    %v594 = vmax.f32 %v578, 0.0
    %v595 = vmax.f32 %v579, 0.0
    %v596 = vmax.f32 %v580, 0.0
    %v597 = vmax.f32 %v581, 0.0
    %v598 = vmax.f32 %v582, 0.0
    %v599 = vmax.f32 %v583, 0.0
    %v600 = vmax.f32 %v584, 0.0
    %v601 = vmax.f32 %v585, 0.0
    %v602 = vmax.f32 %v586, 0.0
    %v603 = vmax.f32 %v587, 0.0
    %v604 = vmax.f32 %v588, 0.0
    %v605 = vmax.f32 %v589, 0.0
    %v606 = vmax.f32 %v590, 0.0
    %v607 = vpack.c.bf16 %v591, %v591
    %v608 = vpack.c.bf16 %v592, %v592
    %v609 = vpack.c.bf16 %v593, %v593
    %v610 = vpack.c.bf16 %v594, %v594
    %v611 = vpack.c.bf16 %v595, %v595
    %v612 = vpack.c.bf16 %v596, %v596
    %v613 = vpack.c.bf16 %v597, %v597
    %v614 = vpack.c.bf16 %v598, %v598
    %v615 = vpack.c.bf16 %v599, %v599
    %v616 = vpack.c.bf16 %v600, %v600
    %v617 = vpack.c.bf16 %v601, %v601
    %v618 = vpack.c.bf16 %v602, %v602
    %v619 = vpack.c.bf16 %v603, %v603
    %v620 = vpack.c.bf16 %v604, %v604
    %v621 = vpack.c.bf16 %v605, %v605
    %v622 = vpack.c.bf16 %v606, %v606
    %vm623 = vcmask 257024
    %624 = vst.msk [vmem:[%s3] sm:$0xf] %vm623, %v607
    %625 = vst.msk [vmem:[%s3 + $0x4] sm:$0xf] %vm623, %v608
    %626 = vst.msk [vmem:[%s3 + $0x8] sm:$0xf] %vm623, %v609
    %627 = vst.msk [vmem:[%s3 + $0xc] sm:$0xf] %vm623, %v610
    %628 = vst.msk [vmem:[%s3 + $0x10] sm:$0xf] %vm623, %v611
    %629 = vst.msk [vmem:[%s3 + $0x14] sm:$0xf] %vm623, %v612
    %630 = vst.msk [vmem:[%s3 + $0x18] sm:$0xf] %vm623, %v613
    %631 = vst.msk [vmem:[%s3 + $0x1c] sm:$0xf] %vm623, %v614
    %632 = vst.msk [vmem:[%s3 + $0x20] sm:$0xf] %vm623, %v615
    %633 = vst.msk [vmem:[%s3 + $0x24] sm:$0xf] %vm623, %v616
    %634 = vst.msk [vmem:[%s3 + $0x28] sm:$0xf] %vm623, %v617
    %635 = vst.msk [vmem:[%s3 + $0x2c] sm:$0xf] %vm623, %v618
    %636 = vst.msk [vmem:[%s3 + $0x30] sm:$0xf] %vm623, %v619
    %637 = vst.msk [vmem:[%s3 + $0x34] sm:$0xf] %vm623, %v620
    %638 = vst.msk [vmem:[%s3 + $0x38] sm:$0xf] %vm623, %v621
    %639 = vst.msk [vmem:[%s3 + $0x3c] sm:$0xf] %vm623, %v622
  $region21: #{_lambda_.22} parent=0 // pred_fallthru
    _
  // Predicated region
  $region22: #{_lambda_.22} parent=0 // pred_check
    _
  $region23: #{_lambda_.22} parent=0 // pred_check_branch
    %641 = sbr.rel (0) target = $region25
  $region24: #{_lambda_.22} parent=0 // pred_region
    _
  $region25: #{_lambda_.22} parent=0 // pred_fallthru
    _
  // Predicated region
  $region26: #{_lambda_.22} parent=0 // pred_check
    _
  $region27: #{_lambda_.22} parent=0 // pred_check_branch
    %643 = sbr.rel (0) target = $region29
  $region28: #{_lambda_.22} parent=0 // pred_region
    _
  $region29: #{_lambda_.22} parent=0 // pred_fallthru
    _

// kernel: _lambda_.24
$region0: #{_lambda_.24}
  #allocation0 [shape = 'u32[]', space=smem, size = 0x4, offset = 0x4, fixed_abs, tag = 'smem constant byte address 0x4 - core index']
  #allocation1 [shape = 'u32[72,128]{1,0:T(1,128)}', space=vmem, size = 0x9000, scoped, tag = 'internal scratch']
  #allocation2 [shape = 'f32[32,64]{1,0:T(8,128)}', space=vmem, size = 0x4000, scoped, tag = 'scratch operand']
  %s0 = inlined_call_operand.vmem [shape: bf16[32,576], index: 0, kind: input, shape index: {}]
  %s1 = inlined_call_operand.vmem [shape: bf16[576,64], index: 1, kind: input, shape index: {}]
  %s2 = inlined_call_operand.vmem [shape: f32[1,64], index: 2, kind: input, shape index: {}]
  %s3 = inlined_call_operand.vmem [shape: bf16[32,64], index: 3, kind: output, shape index: {}]
  %s4 = sld [smem:[#allocation0]]
  $region30: #{_lambda_.24} parent=0
    _
  %s6 = ssub.s32 1, %s4
  %s7 = scalar_select 0, %s6, %s4
  // Predicated region
  $region2: #{_lambda_.24} parent=0 // pred_check
    _
  $region3: #{_lambda_.24} parent=0 // pred_check_branch
    %9 = sbr.rel (0) target = $region5
  $region4: #{_lambda_.24} parent=0 // pred_region
    _
  $region5: #{_lambda_.24} parent=0 // pred_fallthru
    _
  // Predicated region
  $region6: #{_lambda_.24} parent=0 // pred_check
    _
  $region7: #{_lambda_.24} parent=0 // pred_check_branch
    %11 = sbr.rel (0) target = $region9
  $region8: #{_lambda_.24} parent=0 // pred_region
    _
  $region9: #{_lambda_.24} parent=0 // pred_fallthru
    _
  // Predicated region
  $region10: #{_lambda_.24} parent=0 // pred_check
    _
  $region11: #{_lambda_.24} parent=0 // pred_check_branch
    %13 = sbr.rel (0) target = $region13
  $region12: #{_lambda_.24} parent=0 // pred_region
    _
  $region13: #{_lambda_.24} parent=0 // pred_fallthru
    _
  %p15 = scmp.eq.s32.totalorder 0, 0
  // Predicated region
  $region14: #{_lambda_.24} parent=0 // pred_check
    %p16 = pneg %p15
  $region15: #{_lambda_.24} parent=0 // pred_check_branch
    %18 = sbr.rel (%p16) target = $region17
  $region16: #{_lambda_.24} parent=0 // pred_region
    %vm19 = vcmask 523264
    %20 = vst.msk [vmem:[#allocation2] sm:$0xff] %vm19, 0.0
    %21 = vst.msk [vmem:[#allocation2 + $0x8] sm:$0xff] %vm19, 0.0
    %22 = vst.msk [vmem:[#allocation2 + $0x10] sm:$0xff] %vm19, 0.0
    %23 = vst.msk [vmem:[#allocation2 + $0x18] sm:$0xff] %vm19, 0.0
  $region17: #{_lambda_.24} parent=0 // pred_fallthru
    _
  %v24 = vld [vmem:[#allocation2] sm:$0xff]
  %v25 = vld [vmem:[#allocation2 + $0x8] sm:$0xff]
  %v26 = vld [vmem:[#allocation2 + $0x10] sm:$0xff]
  %v27 = vld [vmem:[#allocation2 + $0x18] sm:$0xff]
  %v28 = vld [vmem:[%s0] sm:$0xff]
  %v29 = vld [vmem:[%s0 + $0x8] sm:$0xff]
  %v30 = vld [vmem:[%s0 + $0x10] sm:$0xf]
  %v31 = vld [vmem:[%s0 + $0x14] sm:$0xff]
  %v32 = vld [vmem:[%s0 + $0x1c] sm:$0xff]
  %v33 = vld [vmem:[%s0 + $0x24] sm:$0xf]
  %v34 = vld [vmem:[%s0 + $0x28] sm:$0xff]
  %v35 = vld [vmem:[%s0 + $0x30] sm:$0xff]
  %v36 = vld [vmem:[%s0 + $0x38] sm:$0xf]
  %v37 = vld [vmem:[%s0 + $0x3c] sm:$0xff]
  %v38 = vld [vmem:[%s0 + $0x44] sm:$0xff]
  %v39 = vld [vmem:[%s0 + $0x4c] sm:$0xf]
  %v40 = vld [vmem:[%s1] sm:$0xf]
  %v41 = vld [vmem:[%s1 + $0x4] sm:$0xf]
  %v42 = vld [vmem:[%s1 + $0x8] sm:$0xf]
  %v43 = vld [vmem:[%s1 + $0xc] sm:$0xf]
  %v44 = vld [vmem:[%s1 + $0x10] sm:$0xf]
  %v45 = vld [vmem:[%s1 + $0x14] sm:$0xf]
  %v46 = vld [vmem:[%s1 + $0x18] sm:$0xf]
  %v47 = vld [vmem:[%s1 + $0x1c] sm:$0xf]
  %v48 = vld [vmem:[%s1 + $0x20] sm:$0xf]
  %v49 = vld [vmem:[%s1 + $0x24] sm:$0xf]
  %v50 = vld [vmem:[%s1 + $0x28] sm:$0xf]
  %v51 = vld [vmem:[%s1 + $0x2c] sm:$0xf]
  %v52 = vld [vmem:[%s1 + $0x30] sm:$0xf]
  %v53 = vld [vmem:[%s1 + $0x34] sm:$0xf]
  %v54 = vld [vmem:[%s1 + $0x38] sm:$0xf]
  %v55 = vld [vmem:[%s1 + $0x3c] sm:$0xf]
  %v56 = vld [vmem:[%s1 + $0x40] sm:$0xf]
  %v57 = vld [vmem:[%s1 + $0x44] sm:$0xf]
  %v58 = vld [vmem:[%s1 + $0x48] sm:$0xf]
  %v59 = vld [vmem:[%s1 + $0x4c] sm:$0xf]
  %v60 = vld [vmem:[%s1 + $0x50] sm:$0xf]
  %v61 = vld [vmem:[%s1 + $0x54] sm:$0xf]
  %v62 = vld [vmem:[%s1 + $0x58] sm:$0xf]
  %v63 = vld [vmem:[%s1 + $0x5c] sm:$0xf]
  %v64 = vld [vmem:[%s1 + $0x60] sm:$0xf]
  %v65 = vld [vmem:[%s1 + $0x64] sm:$0xf]
  %v66 = vld [vmem:[%s1 + $0x68] sm:$0xf]
  %v67 = vld [vmem:[%s1 + $0x6c] sm:$0xf]
  %v68 = vld [vmem:[%s1 + $0x70] sm:$0xf]
  %v69 = vld [vmem:[%s1 + $0x74] sm:$0xf]
  %v70 = vld [vmem:[%s1 + $0x78] sm:$0xf]
  %v71 = vld [vmem:[%s1 + $0x7c] sm:$0xf]
  %v72 = vld [vmem:[%s1 + $0x80] sm:$0xf]
  %v73 = vld [vmem:[%s1 + $0x84] sm:$0xf]
  %v74 = vld [vmem:[%s1 + $0x88] sm:$0xf]
  %v75 = vld [vmem:[%s1 + $0x8c] sm:$0xf]
  %v76 = vld [vmem:[%s1 + $0x90] sm:$0xf]
  %v77 = vld [vmem:[%s1 + $0x94] sm:$0xf]
  %v78 = vld [vmem:[%s1 + $0x98] sm:$0xf]
  %v79 = vld [vmem:[%s1 + $0x9c] sm:$0xf]
  %v80 = vld [vmem:[%s1 + $0xa0] sm:$0xf]
  %v81 = vld [vmem:[%s1 + $0xa4] sm:$0xf]
  %v82 = vld [vmem:[%s1 + $0xa8] sm:$0xf]
  %v83 = vld [vmem:[%s1 + $0xac] sm:$0xf]
  %v84 = vld [vmem:[%s1 + $0xb0] sm:$0xf]
  %v85 = vld [vmem:[%s1 + $0xb4] sm:$0xf]
  %v86 = vld [vmem:[%s1 + $0xb8] sm:$0xf]
  %v87 = vld [vmem:[%s1 + $0xbc] sm:$0xf]
  %v88 = vld [vmem:[%s1 + $0xc0] sm:$0xf]
  %v89 = vld [vmem:[%s1 + $0xc4] sm:$0xf]
  %v90 = vld [vmem:[%s1 + $0xc8] sm:$0xf]
  %v91 = vld [vmem:[%s1 + $0xcc] sm:$0xf]
  %v92 = vld [vmem:[%s1 + $0xd0] sm:$0xf]
  %v93 = vld [vmem:[%s1 + $0xd4] sm:$0xf]
  %v94 = vld [vmem:[%s1 + $0xd8] sm:$0xf]
  %v95 = vld [vmem:[%s1 + $0xdc] sm:$0xf]
  %v96 = vld [vmem:[%s1 + $0xe0] sm:$0xf]
  %v97 = vld [vmem:[%s1 + $0xe4] sm:$0xf]
  %v98 = vld [vmem:[%s1 + $0xe8] sm:$0xf]
  %v99 = vld [vmem:[%s1 + $0xec] sm:$0xf]
  %v100 = vld [vmem:[%s1 + $0xf0] sm:$0xf]
  %v101 = vld [vmem:[%s1 + $0xf4] sm:$0xf]
  %v102 = vld [vmem:[%s1 + $0xf8] sm:$0xf]
  %v103 = vld [vmem:[%s1 + $0xfc] sm:$0xf]
  %v104 = vld [vmem:[%s1 + $0x100] sm:$0xf]
  %v105 = vld [vmem:[%s1 + $0x104] sm:$0xf]
  %v106 = vld [vmem:[%s1 + $0x108] sm:$0xf]
  %v107 = vld [vmem:[%s1 + $0x10c] sm:$0xf]
  %v108 = vld [vmem:[%s1 + $0x110] sm:$0xf]
  %v109 = vld [vmem:[%s1 + $0x114] sm:$0xf]
  %v110 = vld [vmem:[%s1 + $0x118] sm:$0xf]
  %v111 = vld [vmem:[%s1 + $0x11c] sm:$0xf]
  %v124 = vunpack.c.l.b16 %v28
  %v125 = vunpack.c.h.b16 %v28
  %v126 = vunpack.c.l.b16 %v29
  %v127 = vunpack.c.h.b16 %v29
  %v128 = vunpack.c.l.b16 %v30
  %v129 = vunpack.c.l.b16 %v31
  %v130 = vunpack.c.h.b16 %v31
  %v131 = vunpack.c.l.b16 %v32
  %v132 = vunpack.c.h.b16 %v32
  %v133 = vunpack.c.l.b16 %v33
  %v134 = vunpack.c.l.b16 %v34
  %v135 = vunpack.c.h.b16 %v34
  %v136 = vunpack.c.l.b16 %v35
  %v137 = vunpack.c.h.b16 %v35
  %v138 = vunpack.c.l.b16 %v36
  %v139 = vunpack.c.l.b16 %v37
  %v140 = vunpack.c.h.b16 %v37
  %v141 = vunpack.c.l.b16 %v38
  %v142 = vunpack.c.h.b16 %v38
  %v143 = vunpack.c.l.b16 %v39
  %v144 = vpack.c.b16 %v129, %v124
  %v145 = vpack.c.b16 %v130, %v125
  %v146 = vpack.c.b16 %v131, %v126
  %v147 = vpack.c.b16 %v132, %v127
  %v148 = vpack.c.b16 %v133, %v128
  %v149 = vpack.c.b16 %v139, %v134
  %v150 = vpack.c.b16 %v140, %v135
  %v151 = vpack.c.b16 %v141, %v136
  %v152 = vpack.c.b16 %v142, %v137
  %v153 = vpack.c.b16 %v143, %v138
  %v234 = vunpack.c.l.b16 %v40
  %v235 = vunpack.c.l.b16 %v41
  %v236 = vunpack.c.l.b16 %v42
  %v237 = vunpack.c.l.b16 %v43
  %v238 = vunpack.c.l.b16 %v44
  %v239 = vunpack.c.l.b16 %v45
  %v240 = vunpack.c.l.b16 %v46
  %v241 = vunpack.c.l.b16 %v47
  %v242 = vunpack.c.l.b16 %v48
  %v243 = vunpack.c.l.b16 %v49
  %v244 = vunpack.c.l.b16 %v50
  %v245 = vunpack.c.l.b16 %v51
  %v246 = vunpack.c.l.b16 %v52
  %v247 = vunpack.c.l.b16 %v53
  %v248 = vunpack.c.l.b16 %v54
  %v249 = vunpack.c.l.b16 %v55
  %v250 = vunpack.c.l.b16 %v56
  %v251 = vunpack.c.l.b16 %v57
  %v252 = vunpack.c.l.b16 %v58
  %v253 = vunpack.c.l.b16 %v59
  %v254 = vunpack.c.l.b16 %v60
  %v255 = vunpack.c.l.b16 %v61
  %v256 = vunpack.c.l.b16 %v62
  %v257 = vunpack.c.l.b16 %v63
  %v258 = vunpack.c.l.b16 %v64
  %v259 = vunpack.c.l.b16 %v65
  %v260 = vunpack.c.l.b16 %v66
  %v261 = vunpack.c.l.b16 %v67
  %v262 = vunpack.c.l.b16 %v68
  %v263 = vunpack.c.l.b16 %v69
  %v264 = vunpack.c.l.b16 %v70
  %v265 = vunpack.c.l.b16 %v71
  %v266 = vunpack.c.l.b16 %v72
  %v267 = vunpack.c.l.b16 %v73
  %v268 = vunpack.c.l.b16 %v74
  %v269 = vunpack.c.l.b16 %v75
  %v270 = vunpack.c.l.b16 %v76
  %v271 = vunpack.c.l.b16 %v77
  %v272 = vunpack.c.l.b16 %v78
  %v273 = vunpack.c.l.b16 %v79
  %v274 = vunpack.c.l.b16 %v80
  %v275 = vunpack.c.l.b16 %v81
  %v276 = vunpack.c.l.b16 %v82
  %v277 = vunpack.c.l.b16 %v83
  %v278 = vunpack.c.l.b16 %v84
  %v279 = vunpack.c.l.b16 %v85
  %v280 = vunpack.c.l.b16 %v86
  %v281 = vunpack.c.l.b16 %v87
  %v282 = vunpack.c.l.b16 %v88
  %v283 = vunpack.c.l.b16 %v89
  %v284 = vunpack.c.l.b16 %v90
  %v285 = vunpack.c.l.b16 %v91
  %v286 = vunpack.c.l.b16 %v92
  %v287 = vunpack.c.l.b16 %v93
  %v288 = vunpack.c.l.b16 %v94
  %v289 = vunpack.c.l.b16 %v95
  %v290 = vunpack.c.l.b16 %v96
  %v291 = vunpack.c.l.b16 %v97
  %v292 = vunpack.c.l.b16 %v98
  %v293 = vunpack.c.l.b16 %v99
  %v294 = vunpack.c.l.b16 %v100
  %v295 = vunpack.c.l.b16 %v101
  %v296 = vunpack.c.l.b16 %v102
  %v297 = vunpack.c.l.b16 %v103
  %v298 = vunpack.c.l.b16 %v104
  %v299 = vunpack.c.l.b16 %v105
  %v300 = vunpack.c.l.b16 %v106
  %v301 = vunpack.c.l.b16 %v107
  %v302 = vunpack.c.l.b16 %v108
  %v303 = vunpack.c.l.b16 %v109
  %v304 = vunpack.c.l.b16 %v110
  %v305 = vunpack.c.l.b16 %v111
  %v306 = vpack.c.b16 %v235, %v234
  %v307 = vpack.c.b16 %v237, %v236
  %v308 = vpack.c.b16 %v239, %v238
  %v309 = vpack.c.b16 %v241, %v240
  %v310 = vpack.c.b16 %v243, %v242
  %v311 = vpack.c.b16 %v245, %v244
  %v312 = vpack.c.b16 %v247, %v246
  %v313 = vpack.c.b16 %v249, %v248
  %v314 = vpack.c.b16 %v251, %v250
  %v315 = vpack.c.b16 %v253, %v252
  %v316 = vpack.c.b16 %v255, %v254
  %v317 = vpack.c.b16 %v257, %v256
  %v318 = vpack.c.b16 %v259, %v258
  %v319 = vpack.c.b16 %v261, %v260
  %v320 = vpack.c.b16 %v263, %v262
  %v321 = vpack.c.b16 %v265, %v264
  %v322 = vpack.c.b16 %v267, %v266
  %v323 = vpack.c.b16 %v269, %v268
  %v324 = vpack.c.b16 %v271, %v270
  %v325 = vpack.c.b16 %v273, %v272
  %v326 = vpack.c.b16 %v275, %v274
  %v327 = vpack.c.b16 %v277, %v276
  %v328 = vpack.c.b16 %v279, %v278
  %v329 = vpack.c.b16 %v281, %v280
  %v330 = vpack.c.b16 %v283, %v282
  %v331 = vpack.c.b16 %v285, %v284
  %v332 = vpack.c.b16 %v287, %v286
  %v333 = vpack.c.b16 %v289, %v288
  %v334 = vpack.c.b16 %v291, %v290
  %v335 = vpack.c.b16 %v293, %v292
  %v336 = vpack.c.b16 %v295, %v294
  %v337 = vpack.c.b16 %v297, %v296
  %v338 = vpack.c.b16 %v299, %v298
  %v339 = vpack.c.b16 %v301, %v300
  %v340 = vpack.c.b16 %v303, %v302
  %v341 = vpack.c.b16 %v305, %v304
  %vm378 = vcmask 523264
  %v380 = vsel %vm378, %v148, 0
  %v383 = vsel %vm378, %v153, 0
  %385 = vmatpush.bf16.msra.mxu0 %v313
  %386 = vmatpush.bf16.msra.mxu0 %v312
  %387 = vmatpush.bf16.msra.mxu0 %v311
  %388 = vmatpush.bf16.msra.mxu0 %v310
  %389 = vmatpush.bf16.msra.mxu0 %v309
  %390 = vmatpush.bf16.msra.mxu0 %v308
  %391 = vmatpush.bf16.msra.mxu0 %v307
  %392 = vmatpush.bf16.msra.mxu0 %v306
  %393 = vmatmul.bf16.gmra.mxu0 %v144
  %v394 = vpop.f32.mrf.mxu0
  %v395 = vadd.f32 0.0, %v394
  %v396 = vpop.f32.mrf.mxu0
  %v397 = vadd.f32 0.0, %v396
  %398 = vmatmul.bf16.gmra.mxu0 %v149
  %v399 = vpop.f32.mrf.mxu0
  %v400 = vadd.f32 0.0, %v399
  %v401 = vpop.f32.mrf.mxu0
  %v402 = vadd.f32 0.0, %v401
  %403 = vdwg.mxu0
  %404 = vmatpush.bf16.msra.mxu0 %v321
  %405 = vmatpush.bf16.msra.mxu0 %v320
  %406 = vmatpush.bf16.msra.mxu0 %v319
  %407 = vmatpush.bf16.msra.mxu0 %v318
  %408 = vmatpush.bf16.msra.mxu0 %v317
  %409 = vmatpush.bf16.msra.mxu0 %v316
  %410 = vmatpush.bf16.msra.mxu0 %v315
  %411 = vmatpush.bf16.msra.mxu0 %v314
  %412 = vmatmul.bf16.gmra.mxu0 %v145
  %v413 = vpop.f32.mrf.mxu0
  %v414 = vadd.f32 %v395, %v413
  %v415 = vpop.f32.mrf.mxu0
  %v416 = vadd.f32 %v397, %v415
  %417 = vmatmul.bf16.gmra.mxu0 %v150
  %v418 = vpop.f32.mrf.mxu0
  %v419 = vadd.f32 %v400, %v418
  %v420 = vpop.f32.mrf.mxu0
  %v421 = vadd.f32 %v402, %v420
  %422 = vdwg.mxu0
  %423 = vmatpush.bf16.msra.mxu0 %v329
  %424 = vmatpush.bf16.msra.mxu0 %v328
  %425 = vmatpush.bf16.msra.mxu0 %v327
  %426 = vmatpush.bf16.msra.mxu0 %v326
  %427 = vmatpush.bf16.msra.mxu0 %v325
  %428 = vmatpush.bf16.msra.mxu0 %v324
  %429 = vmatpush.bf16.msra.mxu0 %v323
  %430 = vmatpush.bf16.msra.mxu0 %v322
  %431 = vmatmul.bf16.gmra.mxu0 %v146
  %v432 = vpop.f32.mrf.mxu0
  %v433 = vadd.f32 %v414, %v432
  %v434 = vpop.f32.mrf.mxu0
  %v435 = vadd.f32 %v416, %v434
  %436 = vmatmul.bf16.gmra.mxu0 %v151
  %v437 = vpop.f32.mrf.mxu0
  %v438 = vadd.f32 %v419, %v437
  %v439 = vpop.f32.mrf.mxu0
  %v440 = vadd.f32 %v421, %v439
  %441 = vdwg.mxu0
  %442 = vmatpush.bf16.msra.mxu0 %v337
  %443 = vmatpush.bf16.msra.mxu0 %v336
  %444 = vmatpush.bf16.msra.mxu0 %v335
  %445 = vmatpush.bf16.msra.mxu0 %v334
  %446 = vmatpush.bf16.msra.mxu0 %v333
  %447 = vmatpush.bf16.msra.mxu0 %v332
  %448 = vmatpush.bf16.msra.mxu0 %v331
  %449 = vmatpush.bf16.msra.mxu0 %v330
  %450 = vmatmul.bf16.gmra.mxu0 %v147
  %v451 = vpop.f32.mrf.mxu0
  %v452 = vadd.f32 %v433, %v451
  %v453 = vpop.f32.mrf.mxu0
  %v454 = vadd.f32 %v435, %v453
  %455 = vmatmul.bf16.gmra.mxu0 %v152
  %v456 = vpop.f32.mrf.mxu0
  %v457 = vadd.f32 %v438, %v456
  %v458 = vpop.f32.mrf.mxu0
  %v459 = vadd.f32 %v440, %v458
  %460 = vdwg.mxu0
  %461 = vmatpush.bf16.msra.mxu0 0
  %462 = vmatpush.bf16.msra.mxu0 0
  %463 = vmatpush.bf16.msra.mxu0 0
  %464 = vmatpush.bf16.msra.mxu0 0
  %465 = vmatpush.bf16.msra.mxu0 %v341
  %466 = vmatpush.bf16.msra.mxu0 %v340
  %467 = vmatpush.bf16.msra.mxu0 %v339
  %468 = vmatpush.bf16.msra.mxu0 %v338
  %469 = vmatmul.bf16.gmra.mxu0 %v380
  %v470 = vpop.f32.mrf.mxu0
  %v471 = vadd.f32 %v452, %v470
  %v472 = vpop.f32.mrf.mxu0
  %v473 = vadd.f32 %v454, %v472
  %474 = vmatmul.bf16.gmra.mxu0 %v383
  %v475 = vpop.f32.mrf.mxu0
  %v476 = vadd.f32 %v457, %v475
  %v477 = vpop.f32.mrf.mxu0
  %v478 = vadd.f32 %v459, %v477
  %479 = vdwg.mxu0
  %v480 = vadd.f32 %v24, %v471
  %v481 = vadd.f32 %v25, %v473
  %v482 = vadd.f32 %v26, %v476
  %v483 = vadd.f32 %v27, %v478
  %484 = vst.msk [vmem:[#allocation2] sm:$0xff] %vm378, %v480
  %485 = vst.msk [vmem:[#allocation2 + $0x8] sm:$0xff] %vm378, %v481
  %486 = vst.msk [vmem:[#allocation2 + $0x10] sm:$0xff] %vm378, %v482
  %487 = vst.msk [vmem:[#allocation2 + $0x18] sm:$0xff] %vm378, %v483
  // Predicated region
  $region18: #{_lambda_.24} parent=0 // pred_check
    %p488 = pneg %p15
  $region19: #{_lambda_.24} parent=0 // pred_check_branch
    %490 = sbr.rel (%p488) target = $region21
  $region20: #{_lambda_.24} parent=0 // pred_region
    %v491 = vld [vmem:[#allocation2] sm:$0xff]
    %v492 = vld [vmem:[#allocation2 + $0x8] sm:$0xff]
    %v493 = vld [vmem:[#allocation2 + $0x10] sm:$0xff]
    %v494 = vld [vmem:[#allocation2 + $0x18] sm:$0xff]
    %v495 = vld [vmem:[%s2] sm:$0x1]
    %v497 = vperm.slane %v495, 0
    %v499 = vadd.f32 %v491, %v497
    %v500 = vadd.f32 %v492, %v497
    %v501 = vadd.f32 %v493, %v497
    %v502 = vadd.f32 %v494, %v497
    %v503 = vmax.f32 %v499, 0.0
    %v504 = vmax.f32 %v500, 0.0
    %v505 = vmax.f32 %v501, 0.0
    %v506 = vmax.f32 %v502, 0.0
    %v507 = vpack.c.bf16 %v503, %v503
    %v508 = vpack.c.bf16 %v504, %v504
    %v509 = vpack.c.bf16 %v505, %v505
    %v510 = vpack.c.bf16 %v506, %v506
    %vm511 = vcmask 519168
    %512 = vst.msk [vmem:[%s3] sm:$0xf] %vm511, %v507
    %513 = vst.msk [vmem:[%s3 + $0x4] sm:$0xf] %vm511, %v508
    %514 = vst.msk [vmem:[%s3 + $0x8] sm:$0xf] %vm511, %v509
    %515 = vst.msk [vmem:[%s3 + $0xc] sm:$0xf] %vm511, %v510
  $region21: #{_lambda_.24} parent=0 // pred_fallthru
    _
  // Predicated region
  $region22: #{_lambda_.24} parent=0 // pred_check
    _
  $region23: #{_lambda_.24} parent=0 // pred_check_branch
    %517 = sbr.rel (0) target = $region25
  $region24: #{_lambda_.24} parent=0 // pred_region
    _
  $region25: #{_lambda_.24} parent=0 // pred_fallthru
    _
  // Predicated region
  $region26: #{_lambda_.24} parent=0 // pred_check
    _
  $region27: #{_lambda_.24} parent=0 // pred_check_branch
    %519 = sbr.rel (0) target = $region29
  $region28: #{_lambda_.24} parent=0 // pred_region
    _
  $region29: #{_lambda_.24} parent=0 // pred_fallthru
    _

// kernel: _lambda_.25
$region0: #{_lambda_.25}
  #allocation0 [shape = 'u32[]', space=smem, size = 0x4, offset = 0x4, fixed_abs, tag = 'smem constant byte address 0x4 - core index']
  #allocation1 [shape = 'u32[72,128]{1,0:T(1,128)}', space=vmem, size = 0x9000, scoped, tag = 'internal scratch']
  #allocation2 [shape = 'f32[8,64]{1,0:T(8,128)}', space=vmem, size = 0x1000, scoped, tag = 'scratch operand']
  %s0 = inlined_call_operand.vmem [shape: bf16[8,576], index: 0, kind: input, shape index: {}]
  %s1 = inlined_call_operand.vmem [shape: bf16[576,64], index: 1, kind: input, shape index: {}]
  %s2 = inlined_call_operand.vmem [shape: f32[1,64], index: 2, kind: input, shape index: {}]
  %s3 = inlined_call_operand.vmem [shape: bf16[8,64], index: 3, kind: output, shape index: {}]
  %s4 = sld [smem:[#allocation0]]
  $region30: #{_lambda_.25} parent=0
    _
  %s6 = ssub.s32 1, %s4
  %s7 = scalar_select 0, %s6, %s4
  // Predicated region
  $region2: #{_lambda_.25} parent=0 // pred_check
    _
  $region3: #{_lambda_.25} parent=0 // pred_check_branch
    %9 = sbr.rel (0) target = $region5
  $region4: #{_lambda_.25} parent=0 // pred_region
    _
  $region5: #{_lambda_.25} parent=0 // pred_fallthru
    _
  // Predicated region
  $region6: #{_lambda_.25} parent=0 // pred_check
    _
  $region7: #{_lambda_.25} parent=0 // pred_check_branch
    %11 = sbr.rel (0) target = $region9
  $region8: #{_lambda_.25} parent=0 // pred_region
    _
  $region9: #{_lambda_.25} parent=0 // pred_fallthru
    _
  // Predicated region
  $region10: #{_lambda_.25} parent=0 // pred_check
    _
  $region11: #{_lambda_.25} parent=0 // pred_check_branch
    %13 = sbr.rel (0) target = $region13
  $region12: #{_lambda_.25} parent=0 // pred_region
    _
  $region13: #{_lambda_.25} parent=0 // pred_fallthru
    _
  %p15 = scmp.eq.s32.totalorder 0, 0
  // Predicated region
  $region14: #{_lambda_.25} parent=0 // pred_check
    %p16 = pneg %p15
  $region15: #{_lambda_.25} parent=0 // pred_check_branch
    %18 = sbr.rel (%p16) target = $region17
  $region16: #{_lambda_.25} parent=0 // pred_region
    %vm19 = vcmask 523264
    %20 = vst.msk [vmem:[#allocation2] sm:$0xff] %vm19, 0.0
  $region17: #{_lambda_.25} parent=0 // pred_fallthru
    _
  %v21 = vld [vmem:[#allocation2] sm:$0xff]
  %v22 = vld [vmem:[%s0] sm:$0xff]
  %v23 = vld [vmem:[%s0 + $0x8] sm:$0xff]
  %v24 = vld [vmem:[%s0 + $0x10] sm:$0xf]
  %v25 = vld [vmem:[%s1] sm:$0xf]
  %v26 = vld [vmem:[%s1 + $0x4] sm:$0xf]
  %v27 = vld [vmem:[%s1 + $0x8] sm:$0xf]
  %v28 = vld [vmem:[%s1 + $0xc] sm:$0xf]
  %v29 = vld [vmem:[%s1 + $0x10] sm:$0xf]
  %v30 = vld [vmem:[%s1 + $0x14] sm:$0xf]
  %v31 = vld [vmem:[%s1 + $0x18] sm:$0xf]
  %v32 = vld [vmem:[%s1 + $0x1c] sm:$0xf]
  %v33 = vld [vmem:[%s1 + $0x20] sm:$0xf]
  %v34 = vld [vmem:[%s1 + $0x24] sm:$0xf]
  %v35 = vld [vmem:[%s1 + $0x28] sm:$0xf]
  %v36 = vld [vmem:[%s1 + $0x2c] sm:$0xf]
  %v37 = vld [vmem:[%s1 + $0x30] sm:$0xf]
  %v38 = vld [vmem:[%s1 + $0x34] sm:$0xf]
  %v39 = vld [vmem:[%s1 + $0x38] sm:$0xf]
  %v40 = vld [vmem:[%s1 + $0x3c] sm:$0xf]
  %v41 = vld [vmem:[%s1 + $0x40] sm:$0xf]
  %v42 = vld [vmem:[%s1 + $0x44] sm:$0xf]
  %v43 = vld [vmem:[%s1 + $0x48] sm:$0xf]
  %v44 = vld [vmem:[%s1 + $0x4c] sm:$0xf]
  %v45 = vld [vmem:[%s1 + $0x50] sm:$0xf]
  %v46 = vld [vmem:[%s1 + $0x54] sm:$0xf]
  %v47 = vld [vmem:[%s1 + $0x58] sm:$0xf]
  %v48 = vld [vmem:[%s1 + $0x5c] sm:$0xf]
  %v49 = vld [vmem:[%s1 + $0x60] sm:$0xf]
  %v50 = vld [vmem:[%s1 + $0x64] sm:$0xf]
  %v51 = vld [vmem:[%s1 + $0x68] sm:$0xf]
  %v52 = vld [vmem:[%s1 + $0x6c] sm:$0xf]
  %v53 = vld [vmem:[%s1 + $0x70] sm:$0xf]
  %v54 = vld [vmem:[%s1 + $0x74] sm:$0xf]
  %v55 = vld [vmem:[%s1 + $0x78] sm:$0xf]
  %v56 = vld [vmem:[%s1 + $0x7c] sm:$0xf]
  %v57 = vld [vmem:[%s1 + $0x80] sm:$0xf]
  %v58 = vld [vmem:[%s1 + $0x84] sm:$0xf]
  %v59 = vld [vmem:[%s1 + $0x88] sm:$0xf]
  %v60 = vld [vmem:[%s1 + $0x8c] sm:$0xf]
  %v61 = vld [vmem:[%s1 + $0x90] sm:$0xf]
  %v62 = vld [vmem:[%s1 + $0x94] sm:$0xf]
  %v63 = vld [vmem:[%s1 + $0x98] sm:$0xf]
  %v64 = vld [vmem:[%s1 + $0x9c] sm:$0xf]
  %v65 = vld [vmem:[%s1 + $0xa0] sm:$0xf]
  %v66 = vld [vmem:[%s1 + $0xa4] sm:$0xf]
  %v67 = vld [vmem:[%s1 + $0xa8] sm:$0xf]
  %v68 = vld [vmem:[%s1 + $0xac] sm:$0xf]
  %v69 = vld [vmem:[%s1 + $0xb0] sm:$0xf]
  %v70 = vld [vmem:[%s1 + $0xb4] sm:$0xf]
  %v71 = vld [vmem:[%s1 + $0xb8] sm:$0xf]
  %v72 = vld [vmem:[%s1 + $0xbc] sm:$0xf]
  %v73 = vld [vmem:[%s1 + $0xc0] sm:$0xf]
  %v74 = vld [vmem:[%s1 + $0xc4] sm:$0xf]
  %v75 = vld [vmem:[%s1 + $0xc8] sm:$0xf]
  %v76 = vld [vmem:[%s1 + $0xcc] sm:$0xf]
  %v77 = vld [vmem:[%s1 + $0xd0] sm:$0xf]
  %v78 = vld [vmem:[%s1 + $0xd4] sm:$0xf]
  %v79 = vld [vmem:[%s1 + $0xd8] sm:$0xf]
  %v80 = vld [vmem:[%s1 + $0xdc] sm:$0xf]
  %v81 = vld [vmem:[%s1 + $0xe0] sm:$0xf]
  %v82 = vld [vmem:[%s1 + $0xe4] sm:$0xf]
  %v83 = vld [vmem:[%s1 + $0xe8] sm:$0xf]
  %v84 = vld [vmem:[%s1 + $0xec] sm:$0xf]
  %v85 = vld [vmem:[%s1 + $0xf0] sm:$0xf]
  %v86 = vld [vmem:[%s1 + $0xf4] sm:$0xf]
  %v87 = vld [vmem:[%s1 + $0xf8] sm:$0xf]
  %v88 = vld [vmem:[%s1 + $0xfc] sm:$0xf]
  %v89 = vld [vmem:[%s1 + $0x100] sm:$0xf]
  %v90 = vld [vmem:[%s1 + $0x104] sm:$0xf]
  %v91 = vld [vmem:[%s1 + $0x108] sm:$0xf]
  %v92 = vld [vmem:[%s1 + $0x10c] sm:$0xf]
  %v93 = vld [vmem:[%s1 + $0x110] sm:$0xf]
  %v94 = vld [vmem:[%s1 + $0x114] sm:$0xf]
  %v95 = vld [vmem:[%s1 + $0x118] sm:$0xf]
  %v96 = vld [vmem:[%s1 + $0x11c] sm:$0xf]
  %v100 = vunpack.c.l.b16 %v22
  %v101 = vunpack.c.h.b16 %v22
  %v102 = vunpack.c.l.b16 %v23
  %v103 = vunpack.c.h.b16 %v23
  %v104 = vunpack.c.l.b16 %v24
  %v105 = vpack.c.b16 %v100, %v100
  %v106 = vpack.c.b16 %v101, %v101
  %v107 = vpack.c.b16 %v102, %v102
  %v108 = vpack.c.b16 %v103, %v103
  %v109 = vpack.c.b16 %v104, %v104
  %v186 = vunpack.c.l.b16 %v25
  %v187 = vunpack.c.l.b16 %v26
  %v188 = vunpack.c.l.b16 %v27
  %v189 = vunpack.c.l.b16 %v28
  %v190 = vunpack.c.l.b16 %v29
  %v191 = vunpack.c.l.b16 %v30
  %v192 = vunpack.c.l.b16 %v31
  %v193 = vunpack.c.l.b16 %v32
  %v194 = vunpack.c.l.b16 %v33
  %v195 = vunpack.c.l.b16 %v34
  %v196 = vunpack.c.l.b16 %v35
  %v197 = vunpack.c.l.b16 %v36
  %v198 = vunpack.c.l.b16 %v37
  %v199 = vunpack.c.l.b16 %v38
  %v200 = vunpack.c.l.b16 %v39
  %v201 = vunpack.c.l.b16 %v40
  %v202 = vunpack.c.l.b16 %v41
  %v203 = vunpack.c.l.b16 %v42
  %v204 = vunpack.c.l.b16 %v43
  %v205 = vunpack.c.l.b16 %v44
  %v206 = vunpack.c.l.b16 %v45
  %v207 = vunpack.c.l.b16 %v46
  %v208 = vunpack.c.l.b16 %v47
  %v209 = vunpack.c.l.b16 %v48
  %v210 = vunpack.c.l.b16 %v49
  %v211 = vunpack.c.l.b16 %v50
  %v212 = vunpack.c.l.b16 %v51
  %v213 = vunpack.c.l.b16 %v52
  %v214 = vunpack.c.l.b16 %v53
  %v215 = vunpack.c.l.b16 %v54
  %v216 = vunpack.c.l.b16 %v55
  %v217 = vunpack.c.l.b16 %v56
  %v218 = vunpack.c.l.b16 %v57
  %v219 = vunpack.c.l.b16 %v58
  %v220 = vunpack.c.l.b16 %v59
  %v221 = vunpack.c.l.b16 %v60
  %v222 = vunpack.c.l.b16 %v61
  %v223 = vunpack.c.l.b16 %v62
  %v224 = vunpack.c.l.b16 %v63
  %v225 = vunpack.c.l.b16 %v64
  %v226 = vunpack.c.l.b16 %v65
  %v227 = vunpack.c.l.b16 %v66
  %v228 = vunpack.c.l.b16 %v67
  %v229 = vunpack.c.l.b16 %v68
  %v230 = vunpack.c.l.b16 %v69
  %v231 = vunpack.c.l.b16 %v70
  %v232 = vunpack.c.l.b16 %v71
  %v233 = vunpack.c.l.b16 %v72
  %v234 = vunpack.c.l.b16 %v73
  %v235 = vunpack.c.l.b16 %v74
  %v236 = vunpack.c.l.b16 %v75
  %v237 = vunpack.c.l.b16 %v76
  %v238 = vunpack.c.l.b16 %v77
  %v239 = vunpack.c.l.b16 %v78
  %v240 = vunpack.c.l.b16 %v79
  %v241 = vunpack.c.l.b16 %v80
  %v242 = vunpack.c.l.b16 %v81
  %v243 = vunpack.c.l.b16 %v82
  %v244 = vunpack.c.l.b16 %v83
  %v245 = vunpack.c.l.b16 %v84
  %v246 = vunpack.c.l.b16 %v85
  %v247 = vunpack.c.l.b16 %v86
  %v248 = vunpack.c.l.b16 %v87
  %v249 = vunpack.c.l.b16 %v88
  %v250 = vunpack.c.l.b16 %v89
  %v251 = vunpack.c.l.b16 %v90
  %v252 = vunpack.c.l.b16 %v91
  %v253 = vunpack.c.l.b16 %v92
  %v254 = vunpack.c.l.b16 %v93
  %v255 = vunpack.c.l.b16 %v94
  %v256 = vunpack.c.l.b16 %v95
  %v257 = vunpack.c.l.b16 %v96
  %v258 = vpack.c.b16 %v187, %v186
  %v259 = vpack.c.b16 %v189, %v188
  %v260 = vpack.c.b16 %v191, %v190
  %v261 = vpack.c.b16 %v193, %v192
  %v262 = vpack.c.b16 %v195, %v194
  %v263 = vpack.c.b16 %v197, %v196
  %v264 = vpack.c.b16 %v199, %v198
  %v265 = vpack.c.b16 %v201, %v200
  %v266 = vpack.c.b16 %v203, %v202
  %v267 = vpack.c.b16 %v205, %v204
  %v268 = vpack.c.b16 %v207, %v206
  %v269 = vpack.c.b16 %v209, %v208
  %v270 = vpack.c.b16 %v211, %v210
  %v271 = vpack.c.b16 %v213, %v212
  %v272 = vpack.c.b16 %v215, %v214
  %v273 = vpack.c.b16 %v217, %v216
  %v274 = vpack.c.b16 %v219, %v218
  %v275 = vpack.c.b16 %v221, %v220
  %v276 = vpack.c.b16 %v223, %v222
  %v277 = vpack.c.b16 %v225, %v224
  %v278 = vpack.c.b16 %v227, %v226
  %v279 = vpack.c.b16 %v229, %v228
  %v280 = vpack.c.b16 %v231, %v230
  %v281 = vpack.c.b16 %v233, %v232
  %v282 = vpack.c.b16 %v235, %v234
  %v283 = vpack.c.b16 %v237, %v236
  %v284 = vpack.c.b16 %v239, %v238
  %v285 = vpack.c.b16 %v241, %v240
  %v286 = vpack.c.b16 %v243, %v242
  %v287 = vpack.c.b16 %v245, %v244
  %v288 = vpack.c.b16 %v247, %v246
  %v289 = vpack.c.b16 %v249, %v248
  %v290 = vpack.c.b16 %v251, %v250
  %v291 = vpack.c.b16 %v253, %v252
  %v292 = vpack.c.b16 %v255, %v254
  %v293 = vpack.c.b16 %v257, %v256
  %vm330 = vcmask 523264
  %v332 = vsel %vm330, %v109, 0
  %334 = vmatpush.bf16.msra.mxu0 %v265
  %335 = vmatpush.bf16.msra.mxu0 %v264
  %336 = vmatpush.bf16.msra.mxu0 %v263
  %337 = vmatpush.bf16.msra.mxu0 %v262
  %338 = vmatpush.bf16.msra.mxu0 %v261
  %339 = vmatpush.bf16.msra.mxu0 %v260
  %340 = vmatpush.bf16.msra.mxu0 %v259
  %341 = vmatpush.bf16.msra.mxu0 %v258
  %342 = vmatmul.bf16.gmra.mxu0 %v105
  %v343 = vpop.f32.mrf.mxu0
  %v344 = vadd.f32 0.0, %v343
  %v345 = vpop.f32.mrf.mxu0
  %346 = vdwg.mxu0
  %347 = vmatpush.bf16.msra.mxu0 %v273
  %348 = vmatpush.bf16.msra.mxu0 %v272
  %349 = vmatpush.bf16.msra.mxu0 %v271
  %350 = vmatpush.bf16.msra.mxu0 %v270
  %351 = vmatpush.bf16.msra.mxu0 %v269
  %352 = vmatpush.bf16.msra.mxu0 %v268
  %353 = vmatpush.bf16.msra.mxu0 %v267
  %354 = vmatpush.bf16.msra.mxu0 %v266
  %355 = vmatmul.bf16.gmra.mxu0 %v106
  %v356 = vpop.f32.mrf.mxu0
  %v357 = vadd.f32 %v344, %v356
  %v358 = vpop.f32.mrf.mxu0
  %359 = vdwg.mxu0
  %360 = vmatpush.bf16.msra.mxu0 %v281
  %361 = vmatpush.bf16.msra.mxu0 %v280
  %362 = vmatpush.bf16.msra.mxu0 %v279
  %363 = vmatpush.bf16.msra.mxu0 %v278
  %364 = vmatpush.bf16.msra.mxu0 %v277
  %365 = vmatpush.bf16.msra.mxu0 %v276
  %366 = vmatpush.bf16.msra.mxu0 %v275
  %367 = vmatpush.bf16.msra.mxu0 %v274
  %368 = vmatmul.bf16.gmra.mxu0 %v107
  %v369 = vpop.f32.mrf.mxu0
  %v370 = vadd.f32 %v357, %v369
  %v371 = vpop.f32.mrf.mxu0
  %372 = vdwg.mxu0
  %373 = vmatpush.bf16.msra.mxu0 %v289
  %374 = vmatpush.bf16.msra.mxu0 %v288
  %375 = vmatpush.bf16.msra.mxu0 %v287
  %376 = vmatpush.bf16.msra.mxu0 %v286
  %377 = vmatpush.bf16.msra.mxu0 %v285
  %378 = vmatpush.bf16.msra.mxu0 %v284
  %379 = vmatpush.bf16.msra.mxu0 %v283
  %380 = vmatpush.bf16.msra.mxu0 %v282
  %381 = vmatmul.bf16.gmra.mxu0 %v108
  %v382 = vpop.f32.mrf.mxu0
  %v383 = vadd.f32 %v370, %v382
  %v384 = vpop.f32.mrf.mxu0
  %385 = vdwg.mxu0
  %386 = vmatpush.bf16.msra.mxu0 0
  %387 = vmatpush.bf16.msra.mxu0 0
  %388 = vmatpush.bf16.msra.mxu0 0
  %389 = vmatpush.bf16.msra.mxu0 0
  %390 = vmatpush.bf16.msra.mxu0 %v293
  %391 = vmatpush.bf16.msra.mxu0 %v292
  %392 = vmatpush.bf16.msra.mxu0 %v291
  %393 = vmatpush.bf16.msra.mxu0 %v290
  %394 = vmatmul.bf16.gmra.mxu0 %v332
  %v395 = vpop.f32.mrf.mxu0
  %v396 = vadd.f32 %v383, %v395
  %v397 = vpop.f32.mrf.mxu0
  %398 = vdwg.mxu0
  %v399 = vadd.f32 %v21, %v396
  %400 = vst.msk [vmem:[#allocation2] sm:$0xff] %vm330, %v399
  // Predicated region
  $region18: #{_lambda_.25} parent=0 // pred_check
    %p401 = pneg %p15
  $region19: #{_lambda_.25} parent=0 // pred_check_branch
    %403 = sbr.rel (%p401) target = $region21
  $region20: #{_lambda_.25} parent=0 // pred_region
    %v404 = vld [vmem:[#allocation2] sm:$0xff]
    %v405 = vld [vmem:[%s2] sm:$0x1]
    %v407 = vperm.slane %v405, 0
    %v409 = vadd.f32 %v404, %v407
    %v410 = vmax.f32 %v409, 0.0
    %v411 = vpack.c.bf16 %v410, %v410
    %vm412 = vcmask 519168
    %413 = vst.msk [vmem:[%s3] sm:$0xf] %vm412, %v411
  $region21: #{_lambda_.25} parent=0 // pred_fallthru
    _
  // Predicated region
  $region22: #{_lambda_.25} parent=0 // pred_check
    _
  $region23: #{_lambda_.25} parent=0 // pred_check_branch
    %415 = sbr.rel (0) target = $region25
  $region24: #{_lambda_.25} parent=0 // pred_region
    _
  $region25: #{_lambda_.25} parent=0 // pred_fallthru
    _
  // Predicated region
  $region26: #{_lambda_.25} parent=0 // pred_check
    _
  $region27: #{_lambda_.25} parent=0 // pred_check_branch
    %417 = sbr.rel (0) target = $region29
  $region28: #{_lambda_.25} parent=0 // pred_region
    _
  $region29: #{_lambda_.25} parent=0 // pred_fallthru
    _

// kernel: _lambda_.26
$region0: #{_lambda_.26}
  #allocation0 [shape = 'u32[]', space=smem, size = 0x4, offset = 0x4, fixed_abs, tag = 'smem constant byte address 0x4 - core index']
  #allocation1 [shape = 'u32[72,128]{1,0:T(1,128)}', space=vmem, size = 0x9000, scoped, tag = 'internal scratch']
  #allocation2 [shape = 'f32[2,128]{1,0:T(2,128)}', space=vmem, size = 0x400, scoped, tag = 'scratch operand']
  %s0 = inlined_call_operand.vmem [shape: bf16[2,576], index: 0, kind: input, shape index: {}]
  %s1 = inlined_call_operand.vmem [shape: bf16[576,128], index: 1, kind: input, shape index: {}]
  %s2 = inlined_call_operand.vmem [shape: f32[1,128], index: 2, kind: input, shape index: {}]
  %s3 = inlined_call_operand.vmem [shape: bf16[2,128], index: 3, kind: output, shape index: {}]
  %s4 = sld [smem:[#allocation0]]
  $region30: #{_lambda_.26} parent=0
    _
  %s6 = ssub.s32 1, %s4
  %s7 = scalar_select 0, %s6, %s4
  // Predicated region
  $region2: #{_lambda_.26} parent=0 // pred_check
    _
  $region3: #{_lambda_.26} parent=0 // pred_check_branch
    %9 = sbr.rel (0) target = $region5
  $region4: #{_lambda_.26} parent=0 // pred_region
    _
  $region5: #{_lambda_.26} parent=0 // pred_fallthru
    _
  // Predicated region
  $region6: #{_lambda_.26} parent=0 // pred_check
    _
  $region7: #{_lambda_.26} parent=0 // pred_check_branch
    %11 = sbr.rel (0) target = $region9
  $region8: #{_lambda_.26} parent=0 // pred_region
    _
  $region9: #{_lambda_.26} parent=0 // pred_fallthru
    _
  // Predicated region
  $region10: #{_lambda_.26} parent=0 // pred_check
    _
  $region11: #{_lambda_.26} parent=0 // pred_check_branch
    %13 = sbr.rel (0) target = $region13
  $region12: #{_lambda_.26} parent=0 // pred_region
    _
  $region13: #{_lambda_.26} parent=0 // pred_fallthru
    _
  %p15 = scmp.eq.s32.totalorder 0, 0
  // Predicated region
  $region14: #{_lambda_.26} parent=0 // pred_check
    %p16 = pneg %p15
  $region15: #{_lambda_.26} parent=0 // pred_check_branch
    %18 = sbr.rel (%p16) target = $region17
  $region16: #{_lambda_.26} parent=0 // pred_region
    %19 = vst [vmem:[#allocation2] sm:$0x3] 0.0
  $region17: #{_lambda_.26} parent=0 // pred_fallthru
    _
  %v20 = vld [vmem:[#allocation2] sm:$0x3]
  %v21 = vld [vmem:[%s0] sm:$0x1f]
  %v22 = vld [vmem:[%s1] sm:$0xf]
  %v23 = vld [vmem:[%s1 + $0x4] sm:$0xf]
  %v24 = vld [vmem:[%s1 + $0x8] sm:$0xf]
  %v25 = vld [vmem:[%s1 + $0xc] sm:$0xf]
  %v26 = vld [vmem:[%s1 + $0x10] sm:$0xf]
  %v27 = vld [vmem:[%s1 + $0x14] sm:$0xf]
  %v28 = vld [vmem:[%s1 + $0x18] sm:$0xf]
  %v29 = vld [vmem:[%s1 + $0x1c] sm:$0xf]
  %v30 = vld [vmem:[%s1 + $0x20] sm:$0xf]
  %v31 = vld [vmem:[%s1 + $0x24] sm:$0xf]
  %v32 = vld [vmem:[%s1 + $0x28] sm:$0xf]
  %v33 = vld [vmem:[%s1 + $0x2c] sm:$0xf]
  %v34 = vld [vmem:[%s1 + $0x30] sm:$0xf]
  %v35 = vld [vmem:[%s1 + $0x34] sm:$0xf]
  %v36 = vld [vmem:[%s1 + $0x38] sm:$0xf]
  %v37 = vld [vmem:[%s1 + $0x3c] sm:$0xf]
  %v38 = vld [vmem:[%s1 + $0x40] sm:$0xf]
  %v39 = vld [vmem:[%s1 + $0x44] sm:$0xf]
  %v40 = vld [vmem:[%s1 + $0x48] sm:$0xf]
  %v41 = vld [vmem:[%s1 + $0x4c] sm:$0xf]
  %v42 = vld [vmem:[%s1 + $0x50] sm:$0xf]
  %v43 = vld [vmem:[%s1 + $0x54] sm:$0xf]
  %v44 = vld [vmem:[%s1 + $0x58] sm:$0xf]
  %v45 = vld [vmem:[%s1 + $0x5c] sm:$0xf]
  %v46 = vld [vmem:[%s1 + $0x60] sm:$0xf]
  %v47 = vld [vmem:[%s1 + $0x64] sm:$0xf]
  %v48 = vld [vmem:[%s1 + $0x68] sm:$0xf]
  %v49 = vld [vmem:[%s1 + $0x6c] sm:$0xf]
  %v50 = vld [vmem:[%s1 + $0x70] sm:$0xf]
  %v51 = vld [vmem:[%s1 + $0x74] sm:$0xf]
  %v52 = vld [vmem:[%s1 + $0x78] sm:$0xf]
  %v53 = vld [vmem:[%s1 + $0x7c] sm:$0xf]
  %v54 = vld [vmem:[%s1 + $0x80] sm:$0xf]
  %v55 = vld [vmem:[%s1 + $0x84] sm:$0xf]
  %v56 = vld [vmem:[%s1 + $0x88] sm:$0xf]
  %v57 = vld [vmem:[%s1 + $0x8c] sm:$0xf]
  %v58 = vld [vmem:[%s1 + $0x90] sm:$0xf]
  %v59 = vld [vmem:[%s1 + $0x94] sm:$0xf]
  %v60 = vld [vmem:[%s1 + $0x98] sm:$0xf]
  %v61 = vld [vmem:[%s1 + $0x9c] sm:$0xf]
  %v62 = vld [vmem:[%s1 + $0xa0] sm:$0xf]
  %v63 = vld [vmem:[%s1 + $0xa4] sm:$0xf]
  %v64 = vld [vmem:[%s1 + $0xa8] sm:$0xf]
  %v65 = vld [vmem:[%s1 + $0xac] sm:$0xf]
  %v66 = vld [vmem:[%s1 + $0xb0] sm:$0xf]
  %v67 = vld [vmem:[%s1 + $0xb4] sm:$0xf]
  %v68 = vld [vmem:[%s1 + $0xb8] sm:$0xf]
  %v69 = vld [vmem:[%s1 + $0xbc] sm:$0xf]
  %v70 = vld [vmem:[%s1 + $0xc0] sm:$0xf]
  %v71 = vld [vmem:[%s1 + $0xc4] sm:$0xf]
  %v72 = vld [vmem:[%s1 + $0xc8] sm:$0xf]
  %v73 = vld [vmem:[%s1 + $0xcc] sm:$0xf]
  %v74 = vld [vmem:[%s1 + $0xd0] sm:$0xf]
  %v75 = vld [vmem:[%s1 + $0xd4] sm:$0xf]
  %v76 = vld [vmem:[%s1 + $0xd8] sm:$0xf]
  %v77 = vld [vmem:[%s1 + $0xdc] sm:$0xf]
  %v78 = vld [vmem:[%s1 + $0xe0] sm:$0xf]
  %v79 = vld [vmem:[%s1 + $0xe4] sm:$0xf]
  %v80 = vld [vmem:[%s1 + $0xe8] sm:$0xf]
  %v81 = vld [vmem:[%s1 + $0xec] sm:$0xf]
  %v82 = vld [vmem:[%s1 + $0xf0] sm:$0xf]
  %v83 = vld [vmem:[%s1 + $0xf4] sm:$0xf]
  %v84 = vld [vmem:[%s1 + $0xf8] sm:$0xf]
  %v85 = vld [vmem:[%s1 + $0xfc] sm:$0xf]
  %v86 = vld [vmem:[%s1 + $0x100] sm:$0xf]
  %v87 = vld [vmem:[%s1 + $0x104] sm:$0xf]
  %v88 = vld [vmem:[%s1 + $0x108] sm:$0xf]
  %v89 = vld [vmem:[%s1 + $0x10c] sm:$0xf]
  %v90 = vld [vmem:[%s1 + $0x110] sm:$0xf]
  %v91 = vld [vmem:[%s1 + $0x114] sm:$0xf]
  %v92 = vld [vmem:[%s1 + $0x118] sm:$0xf]
  %v93 = vld [vmem:[%s1 + $0x11c] sm:$0xf]
  %95 = vst [vmem:[#allocation1] ss:$9 sm:$0xff] %v21
  %v96 = vld [vmem:[#allocation1] sm:$0xff]
  %v97 = vld [vmem:[#allocation1 + $0x9] sm:$0xff]
  %v98 = vld [vmem:[#allocation1 + $0x12] sm:$0xff]
  %v99 = vld [vmem:[#allocation1 + $0x1b] sm:$0xff]
  %v100 = vld [vmem:[#allocation1 + $0x24] sm:$0xff]
  %v177 = vunpack.c.l.b16 %v22
  %v178 = vunpack.c.l.b16 %v23
  %v179 = vunpack.c.l.b16 %v24
  %v180 = vunpack.c.l.b16 %v25
  %v181 = vunpack.c.l.b16 %v26
  %v182 = vunpack.c.l.b16 %v27
  %v183 = vunpack.c.l.b16 %v28
  %v184 = vunpack.c.l.b16 %v29
  %v185 = vunpack.c.l.b16 %v30
  %v186 = vunpack.c.l.b16 %v31
  %v187 = vunpack.c.l.b16 %v32
  %v188 = vunpack.c.l.b16 %v33
  %v189 = vunpack.c.l.b16 %v34
  %v190 = vunpack.c.l.b16 %v35
  %v191 = vunpack.c.l.b16 %v36
  %v192 = vunpack.c.l.b16 %v37
  %v193 = vunpack.c.l.b16 %v38
  %v194 = vunpack.c.l.b16 %v39
  %v195 = vunpack.c.l.b16 %v40
  %v196 = vunpack.c.l.b16 %v41
  %v197 = vunpack.c.l.b16 %v42
  %v198 = vunpack.c.l.b16 %v43
  %v199 = vunpack.c.l.b16 %v44
  %v200 = vunpack.c.l.b16 %v45
  %v201 = vunpack.c.l.b16 %v46
  %v202 = vunpack.c.l.b16 %v47
  %v203 = vunpack.c.l.b16 %v48
  %v204 = vunpack.c.l.b16 %v49
  %v205 = vunpack.c.l.b16 %v50
  %v206 = vunpack.c.l.b16 %v51
  %v207 = vunpack.c.l.b16 %v52
  %v208 = vunpack.c.l.b16 %v53
  %v209 = vunpack.c.l.b16 %v54
  %v210 = vunpack.c.l.b16 %v55
  %v211 = vunpack.c.l.b16 %v56
  %v212 = vunpack.c.l.b16 %v57
  %v213 = vunpack.c.l.b16 %v58
  %v214 = vunpack.c.l.b16 %v59
  %v215 = vunpack.c.l.b16 %v60
  %v216 = vunpack.c.l.b16 %v61
  %v217 = vunpack.c.l.b16 %v62
  %v218 = vunpack.c.l.b16 %v63
  %v219 = vunpack.c.l.b16 %v64
  %v220 = vunpack.c.l.b16 %v65
  %v221 = vunpack.c.l.b16 %v66
  %v222 = vunpack.c.l.b16 %v67
  %v223 = vunpack.c.l.b16 %v68
  %v224 = vunpack.c.l.b16 %v69
  %v225 = vunpack.c.l.b16 %v70
  %v226 = vunpack.c.l.b16 %v71
  %v227 = vunpack.c.l.b16 %v72
  %v228 = vunpack.c.l.b16 %v73
  %v229 = vunpack.c.l.b16 %v74
  %v230 = vunpack.c.l.b16 %v75
  %v231 = vunpack.c.l.b16 %v76
  %v232 = vunpack.c.l.b16 %v77
  %v233 = vunpack.c.l.b16 %v78
  %v234 = vunpack.c.l.b16 %v79
  %v235 = vunpack.c.l.b16 %v80
  %v236 = vunpack.c.l.b16 %v81
  %v237 = vunpack.c.l.b16 %v82
  %v238 = vunpack.c.l.b16 %v83
  %v239 = vunpack.c.l.b16 %v84
  %v240 = vunpack.c.l.b16 %v85
  %v241 = vunpack.c.l.b16 %v86
  %v242 = vunpack.c.l.b16 %v87
  %v243 = vunpack.c.l.b16 %v88
  %v244 = vunpack.c.l.b16 %v89
  %v245 = vunpack.c.l.b16 %v90
  %v246 = vunpack.c.l.b16 %v91
  %v247 = vunpack.c.l.b16 %v92
  %v248 = vunpack.c.l.b16 %v93
  %v249 = vpack.c.b16 %v178, %v177
  %v250 = vpack.c.b16 %v180, %v179
  %v251 = vpack.c.b16 %v182, %v181
  %v252 = vpack.c.b16 %v184, %v183
  %v253 = vpack.c.b16 %v186, %v185
  %v254 = vpack.c.b16 %v188, %v187
  %v255 = vpack.c.b16 %v190, %v189
  %v256 = vpack.c.b16 %v192, %v191
  %v257 = vpack.c.b16 %v194, %v193
  %v258 = vpack.c.b16 %v196, %v195
  %v259 = vpack.c.b16 %v198, %v197
  %v260 = vpack.c.b16 %v200, %v199
  %v261 = vpack.c.b16 %v202, %v201
  %v262 = vpack.c.b16 %v204, %v203
  %v263 = vpack.c.b16 %v206, %v205
  %v264 = vpack.c.b16 %v208, %v207
  %v265 = vpack.c.b16 %v210, %v209
  %v266 = vpack.c.b16 %v212, %v211
  %v267 = vpack.c.b16 %v214, %v213
  %v268 = vpack.c.b16 %v216, %v215
  %v269 = vpack.c.b16 %v218, %v217
  %v270 = vpack.c.b16 %v220, %v219
  %v271 = vpack.c.b16 %v222, %v221
  %v272 = vpack.c.b16 %v224, %v223
  %v273 = vpack.c.b16 %v226, %v225
  %v274 = vpack.c.b16 %v228, %v227
  %v275 = vpack.c.b16 %v230, %v229
  %v276 = vpack.c.b16 %v232, %v231
  %v277 = vpack.c.b16 %v234, %v233
  %v278 = vpack.c.b16 %v236, %v235
  %v279 = vpack.c.b16 %v238, %v237
  %v280 = vpack.c.b16 %v240, %v239
  %v281 = vpack.c.b16 %v242, %v241
  %v282 = vpack.c.b16 %v244, %v243
  %v283 = vpack.c.b16 %v246, %v245
  %v284 = vpack.c.b16 %v248, %v247
  %vm321 = vcmask 523264
  %v322 = vsel %vm321, %v100, 0
  %324 = vmatpush.bf16.msra.mxu0 %v256
  %325 = vmatpush.bf16.msra.mxu0 %v255
  %326 = vmatpush.bf16.msra.mxu0 %v254
  %327 = vmatpush.bf16.msra.mxu0 %v253
  %328 = vmatpush.bf16.msra.mxu0 %v252
  %329 = vmatpush.bf16.msra.mxu0 %v251
  %330 = vmatpush.bf16.msra.mxu0 %v250
  %331 = vmatpush.bf16.msra.mxu0 %v249
  %332 = vmatmul.bf16.gmra.mxu0 %v96
  %v333 = vpop.f32.mrf.mxu0
  %v334 = vadd.f32 0.0, %v333
  %v335 = vpop.f32.mrf.mxu0
  %336 = vdwg.mxu0
  %337 = vmatpush.bf16.msra.mxu0 %v264
  %338 = vmatpush.bf16.msra.mxu0 %v263
  %339 = vmatpush.bf16.msra.mxu0 %v262
  %340 = vmatpush.bf16.msra.mxu0 %v261
  %341 = vmatpush.bf16.msra.mxu0 %v260
  %342 = vmatpush.bf16.msra.mxu0 %v259
  %343 = vmatpush.bf16.msra.mxu0 %v258
  %344 = vmatpush.bf16.msra.mxu0 %v257
  %345 = vmatmul.bf16.gmra.mxu0 %v97
  %v346 = vpop.f32.mrf.mxu0
  %v347 = vadd.f32 %v334, %v346
  %v348 = vpop.f32.mrf.mxu0
  %349 = vdwg.mxu0
  %350 = vmatpush.bf16.msra.mxu0 %v272
  %351 = vmatpush.bf16.msra.mxu0 %v271
  %352 = vmatpush.bf16.msra.mxu0 %v270
  %353 = vmatpush.bf16.msra.mxu0 %v269
  %354 = vmatpush.bf16.msra.mxu0 %v268
  %355 = vmatpush.bf16.msra.mxu0 %v267
  %356 = vmatpush.bf16.msra.mxu0 %v266
  %357 = vmatpush.bf16.msra.mxu0 %v265
  %358 = vmatmul.bf16.gmra.mxu0 %v98
  %v359 = vpop.f32.mrf.mxu0
  %v360 = vadd.f32 %v347, %v359
  %v361 = vpop.f32.mrf.mxu0
  %362 = vdwg.mxu0
  %363 = vmatpush.bf16.msra.mxu0 %v280
  %364 = vmatpush.bf16.msra.mxu0 %v279
  %365 = vmatpush.bf16.msra.mxu0 %v278
  %366 = vmatpush.bf16.msra.mxu0 %v277
  %367 = vmatpush.bf16.msra.mxu0 %v276
  %368 = vmatpush.bf16.msra.mxu0 %v275
  %369 = vmatpush.bf16.msra.mxu0 %v274
  %370 = vmatpush.bf16.msra.mxu0 %v273
  %371 = vmatmul.bf16.gmra.mxu0 %v99
  %v372 = vpop.f32.mrf.mxu0
  %v373 = vadd.f32 %v360, %v372
  %v374 = vpop.f32.mrf.mxu0
  %375 = vdwg.mxu0
  %376 = vmatpush.bf16.msra.mxu0 0
  %377 = vmatpush.bf16.msra.mxu0 0
  %378 = vmatpush.bf16.msra.mxu0 0
  %379 = vmatpush.bf16.msra.mxu0 0
  %380 = vmatpush.bf16.msra.mxu0 %v284
  %381 = vmatpush.bf16.msra.mxu0 %v283
  %382 = vmatpush.bf16.msra.mxu0 %v282
  %383 = vmatpush.bf16.msra.mxu0 %v281
  %384 = vmatmul.bf16.gmra.mxu0 %v322
  %v385 = vpop.f32.mrf.mxu0
  %v386 = vadd.f32 %v373, %v385
  %v387 = vpop.f32.mrf.mxu0
  %388 = vdwg.mxu0
  %v389 = vadd.f32 %v20, %v386
  %390 = vst [vmem:[#allocation2] sm:$0x3] %v389
  // Predicated region
  $region18: #{_lambda_.26} parent=0 // pred_check
    %p391 = pneg %p15
  $region19: #{_lambda_.26} parent=0 // pred_check_branch
    %393 = sbr.rel (%p391) target = $region21
  $region20: #{_lambda_.26} parent=0 // pred_region
    %v394 = vld [vmem:[#allocation2] sm:$0x3]
    %v395 = vld [vmem:[%s2] sm:$0x1]
    %v397 = vperm.slane %v395, 0
    %v399 = vadd.f32 %v394, %v397
    %v400 = vmax.f32 %v399, 0.0
    %v401 = vpack.c.bf16 %v400, %v400
    %402 = vst [vmem:[%s3] sm:$0x1] %v401
  $region21: #{_lambda_.26} parent=0 // pred_fallthru
    _
  // Predicated region
  $region22: #{_lambda_.26} parent=0 // pred_check
    _
  $region23: #{_lambda_.26} parent=0 // pred_check_branch
    %404 = sbr.rel (0) target = $region25
  $region24: #{_lambda_.26} parent=0 // pred_region
    _
  $region25: #{_lambda_.26} parent=0 // pred_fallthru
    _
  // Predicated region
  $region26: #{_lambda_.26} parent=0 // pred_check
    _
  $region27: #{_lambda_.26} parent=0 // pred_check_branch
    %406 = sbr.rel (0) target = $region29
  $region28: #{_lambda_.26} parent=0 // pred_region
    _
  $region29: #{_lambda_.26} parent=0 // pred_fallthru
    _

// kernel: _lambda_.28
$region0: #{_lambda_.28}
  #allocation0 [shape = 'u32[]', space=smem, size = 0x4, offset = 0x4, fixed_abs, tag = 'smem constant byte address 0x4 - core index']
  #allocation1 [shape = 'u32[72,128]{1,0:T(1,128)}', space=vmem, size = 0x9000, scoped, tag = 'internal scratch']
  #allocation2 [shape = 'f32[2,256]{1,0:T(2,128)}', space=vmem, size = 0x800, scoped, tag = 'scratch operand']
  %s0 = inlined_call_operand.vmem [shape: bf16[2,128], index: 0, kind: input, shape index: {}]
  %s1 = inlined_call_operand.vmem [shape: bf16[128,512], index: 1, kind: input, shape index: {}]
  %s2 = inlined_call_operand.vmem [shape: f32[1,512], index: 2, kind: input, shape index: {}]
  %s3 = inlined_call_operand.vmem [shape: bf16[2,512], index: 3, kind: output, shape index: {}]
  %s4 = sld [smem:[#allocation0]]
  $region91: #{_lambda_.28} parent=0
    _
  %s6 = ssub.s32 1, %s4
  %s7 = scalar_select 0, %s6, %s4
  $region1: #{_lambda_.28} parent=0
    #allocation3 [shape = 'u8[131072]{0}', space=vmem, size = 0x20000, scoped, tag = 'input window, operand 1']
    loop: start=0, step=1, limit=4
    $region2: #{_lambda_.28} parent=1 // loop_pre_header
      _
    $region3: #{_lambda_.28} parent=1 // loop_header
      %s9 = sphi 0, %s13
      %p10 = scmp.ge.s32.totalorder %s9, 4
      %s16 = sphi 0, %s35
      %s17 = sphi 0, %s31
      %s18 = sphi 0, %s27
      %s19 = sphi 0, %s16
      %s20 = sphi 0, %s17
      %s21 = sphi 0, %s18
      %s22 = sphi 0, %s19
      %s23 = sphi 0, %s20
      %s24 = sphi 0, %s21
      %s40 = sphi 0, %s42
      %s43 = sphi 0, %s40
      %s44 = sphi 0, %s43
      %s60 = sphi 0, %s44
      %s68 = sphi 0, %s70
      %s71 = sphi 0, %s68
      %s72 = sphi 0, %s71
      %s88 = sphi 0, %s72
      %s94 = sphi 0, %s96
      %s97 = sphi 0, %s94
      %s98 = sphi 0, %s97
      %s114 = sphi 0, %s98
      %s122 = sphi 0, %s124
      %s125 = sphi 0, %s122
      %s126 = sphi 0, %s125
      %s142 = sphi 0, %s126
    $region4: #{_lambda_.28} parent=1 // loop_header_branch
      %12 = sbr.rel (%p10) target = $region8
    $region5: #{_lambda_.28} parent=1 // loop_body
      %s14 = ssub.s32 %s9, 1
      %s15 = ssub.s32 %s9, 2
      %s25 = sadd.s32 1, %s18
      %p26 = scmp.ge.s32.totalorder %s25, 1
      %s27 = scalar_select %p26, 0, %s25
      %s28 = sadd.s32 1, %s17
      %s29 = scalar_select %p26, %s28, %s17
      %p30 = scmp.ge.s32.totalorder %s29, 2
      %s31 = scalar_select %p30, 0, %s29
      %s32 = sadd.s32 1, %s16
      %s33 = scalar_select %p30, %s32, %s16
      %p34 = scmp.ge.s32.totalorder %s33, 1
      %s35 = scalar_select %p34, 0, %s33
      %s36 = ssub.s32 %s16, %s35
      %s37 = ssub.s32 %s18, %s27
      %s38 = sor.u32 %s36, %s37
      %p39 = scmp.eq.s32.totalorder %s38, 0
      %s41 = sadd.s32 %s40, 1
      %s42 = scalar_select %p39, %s40, %s41
      %p45 = pneg %p39
      %p46 = scmp.eq.s32.totalorder %s9, 1
      %p47 = por %p45, %p46
      %p48 = scmp.ne.s32.totalorder %s40, %s43
      %p49 = scmp.eq.s32.totalorder %s9, 0
      %p50 = por %p48, %p49
      %p51 = scmp.ne.s32.totalorder %s40, %s43
      %p52 = scmp.eq.s32.totalorder %s14, 1
      %p53 = por %p51, %p52
      %p54 = scmp.ne.s32.totalorder %s43, %s44
      %p55 = scmp.eq.s32.totalorder %s14, 0
      %p56 = por %p54, %p55
      %p57 = scmp.ne.s32.totalorder %s43, %s44
      %p58 = scmp.eq.s32.totalorder %s15, 1
      %p59 = por %p57, %p58
      %p61 = scmp.ne.s32.totalorder %s44, %s60
      %p62 = scmp.eq.s32.totalorder %s15, 0
      %p63 = por %p61, %p62
      %s64 = ssub.s32 %s18, %s27
      %s65 = ssub.s32 %s17, %s31
      %s66 = sor.u32 %s64, %s65
      %p67 = scmp.eq.s32.totalorder %s66, 0
      %s69 = sadd.s32 %s68, 1
      %s70 = scalar_select %p67, %s68, %s69
      %p73 = pneg %p67
      %p74 = scmp.eq.s32.totalorder %s9, 1
      %p75 = por %p73, %p74
      %p76 = scmp.ne.s32.totalorder %s68, %s71
      %p77 = scmp.eq.s32.totalorder %s9, 0
      %p78 = por %p76, %p77
      %p79 = scmp.ne.s32.totalorder %s68, %s71
      %p80 = scmp.eq.s32.totalorder %s14, 1
      %p81 = por %p79, %p80
      %p82 = scmp.ne.s32.totalorder %s71, %s72
      %p83 = scmp.eq.s32.totalorder %s14, 0
      %p84 = por %p82, %p83
      %p85 = scmp.ne.s32.totalorder %s71, %s72
      %p86 = scmp.eq.s32.totalorder %s15, 1
      %p87 = por %p85, %p86
      %p89 = scmp.ne.s32.totalorder %s72, %s88
      %p90 = scmp.eq.s32.totalorder %s15, 0
      %p91 = por %p89, %p90
      %s92 = ssub.s32 %s17, %s31
      %p93 = scmp.eq.s32.totalorder %s92, 0
      %s95 = sadd.s32 %s94, 1
      %s96 = scalar_select %p93, %s94, %s95
      %p99 = pneg %p93
      %p100 = scmp.eq.s32.totalorder %s9, 1
      %p101 = por %p99, %p100
      %p102 = scmp.ne.s32.totalorder %s94, %s97
      %p103 = scmp.eq.s32.totalorder %s9, 0
      %p104 = por %p102, %p103
      %p105 = scmp.ne.s32.totalorder %s94, %s97
      %p106 = scmp.eq.s32.totalorder %s14, 1
      %p107 = por %p105, %p106
      %p108 = scmp.ne.s32.totalorder %s97, %s98
      %p109 = scmp.eq.s32.totalorder %s14, 0
      %p110 = por %p108, %p109
      %p111 = scmp.ne.s32.totalorder %s97, %s98
      %p112 = scmp.eq.s32.totalorder %s15, 1
      %p113 = por %p111, %p112
      %p115 = scmp.ne.s32.totalorder %s98, %s114
      %p116 = scmp.eq.s32.totalorder %s15, 0
      %p117 = por %p115, %p116
      %s118 = ssub.s32 %s16, %s35
      %s119 = ssub.s32 %s17, %s31
      %s120 = sor.u32 %s118, %s119
      %p121 = scmp.eq.s32.totalorder %s120, 0
      %s123 = sadd.s32 %s122, 1
      %s124 = scalar_select %p121, %s122, %s123
      %p127 = pneg %p121
      %p128 = scmp.eq.s32.totalorder %s9, 1
      %p129 = por %p127, %p128
      %p130 = scmp.ne.s32.totalorder %s122, %s125
      %p131 = scmp.eq.s32.totalorder %s9, 0
      %p132 = por %p130, %p131
      %p133 = scmp.ne.s32.totalorder %s122, %s125
      %p134 = scmp.eq.s32.totalorder %s14, 1
      %p135 = por %p133, %p134
      %p136 = scmp.ne.s32.totalorder %s125, %s126
      %p137 = scmp.eq.s32.totalorder %s14, 0
      %p138 = por %p136, %p137
      %p139 = scmp.ne.s32.totalorder %s125, %s126
      %p140 = scmp.eq.s32.totalorder %s15, 1
      %p141 = por %p139, %p140
      %p143 = scmp.ne.s32.totalorder %s126, %s142
      %p144 = scmp.eq.s32.totalorder %s15, 0
      %p145 = por %p143, %p144
      %p146 = scmp.le.s32.totalorder 1, %s9
      %p147 = scmp.lt.s32.totalorder %s9, 3
      %p148 = pnand %p146, %p147
      %p149 = pneg %p148
      // Predicated region
      $region9: #{_lambda_.28} parent=5 // pred_check
        _
      $region10: #{_lambda_.28} parent=5 // pred_check_branch
        %151 = sbr.rel (%p148) target = $region12
      $region11: #{_lambda_.28} parent=5 // pred_region
        %s152 = ssub.s32 %s9, 1
        // Predicated region
        $region13: #{_lambda_.28} parent=11 // pred_check
          %p153 = pneg %p56
        $region14: #{_lambda_.28} parent=11 // pred_check_branch
          %155 = sbr.rel (%p153) target = $region16
        $region15: #{_lambda_.28} parent=11 // pred_region
          %p156 = scmp.lt.s32.totalorder %s19, 0
          %s157 = scalar_select %p156, %s19, 0
          %p158 = scmp.lt.s32.totalorder %s21, 0
          %s159 = scalar_select %p158, %s21, 0
          %s160 = sadd.s32 %s159, %s157
          %s161 = scalar_lea.vmem %s0, %s160
        $region16: #{_lambda_.28} parent=11 // pred_fallthru
          _
      $region12: #{_lambda_.28} parent=5 // pred_fallthru
        _
      %p162 = scmp.lt.s32.totalorder %s9, 2
      // Predicated region
      $region17: #{_lambda_.28} parent=5 // pred_check
        %p163 = pneg %p162
      $region18: #{_lambda_.28} parent=5 // pred_check_branch
        %165 = sbr.rel (%p163) target = $region20
      $region19: #{_lambda_.28} parent=5 // pred_region
        // Predicated region
        $region21: #{_lambda_.28} parent=19 // pred_check
          %p166 = pneg %p78
        $region22: #{_lambda_.28} parent=19 // pred_check_branch
          %168 = sbr.rel (%p166) target = $region24
        $region23: #{_lambda_.28} parent=19 // pred_region
          %s169 = sand.u32 %s68, 1
          %s170 = sand.u32 %s68, 1
          %s171 = smul.addr %s170, 128
          %s172 = scalar_lea.vmem [#allocation3], %s171
          %s173 = smul.u32 16, %s18
          %s174 = smul.u32 2, %s17
          %s175 = smul.addr %s173, 4
          %s176 = sadd.s32 %s174, %s175
          %s177 = smul.addr %s176, 4
          %s178 = scalar_lea.vmem %s1, %s177
          // Predicated region
          $region25: #{_lambda_.28} parent=23 // pred_check
            _
          $region26: #{_lambda_.28} parent=23 // pred_check_branch
            %180 = sbr.rel (0) target = $region28
          $region27: #{_lambda_.28} parent=23 // pred_region
            // Predicated region
            $region29: #{_lambda_.28} parent=27 // pred_check
              _
            $region30: #{_lambda_.28} parent=27 // pred_check_branch
              %182 = sbr.rel (0) target = $region32
            $region31: #{_lambda_.28} parent=27 // pred_region
              // Predicated region
              $region44: #{_lambda_.28} parent=31 // pred_check
                _
              $region45: #{_lambda_.28} parent=31 // pred_check_branch
                %228 = sbr.rel (0) target = $region47
              $region46: #{_lambda_.28} parent=31 // pred_region
                loop: start=0, step=1, limit=1
                $region48: #{_lambda_.28} parent=46 // loop_pre_header
                  _
                $region49: #{_lambda_.28} parent=46 // loop_header
                  %s230 = sphi 0, %s234
                  %p231 = scmp.ge.s32.totalorder %s230, 1
                  %s235 = sphi %s178, %s178
                  %s236 = sphi %s172, %s172
                $region50: #{_lambda_.28} parent=46 // loop_header_branch
                  %233 = sbr.rel (%p231) target = $region54
                $region51: #{_lambda_.28} parent=46 // loop_body
                  %v237 = vld [vmem:[%s235] sm:$0xff]
                  %238 = vst [vmem:[%s236] sm:$0xff] %v237
                  %v239 = vld [vmem:[%s235 + $0x10] sm:$0xff]
                  %240 = vst [vmem:[%s236 + $0x8] sm:$0xff] %v239
                  %v241 = vld [vmem:[%s235 + $0x20] sm:$0xff]
                  %242 = vst [vmem:[%s236 + $0x10] sm:$0xff] %v241
                  %v243 = vld [vmem:[%s235 + $0x30] sm:$0xff]
                  %244 = vst [vmem:[%s236 + $0x18] sm:$0xff] %v243
                  %v245 = vld [vmem:[%s235 + $0x40] sm:$0xff]
                  %246 = vst [vmem:[%s236 + $0x20] sm:$0xff] %v245
                  %v247 = vld [vmem:[%s235 + $0x50] sm:$0xff]
                  %248 = vst [vmem:[%s236 + $0x28] sm:$0xff] %v247
                  %v249 = vld [vmem:[%s235 + $0x60] sm:$0xff]
                  %250 = vst [vmem:[%s236 + $0x30] sm:$0xff] %v249
                  %v251 = vld [vmem:[%s235 + $0x70] sm:$0xff]
                  %252 = vst [vmem:[%s236 + $0x38] sm:$0xff] %v251
                  %v253 = vld [vmem:[%s235 + $0x80] sm:$0xff]
                  %254 = vst [vmem:[%s236 + $0x40] sm:$0xff] %v253
                  %v255 = vld [vmem:[%s235 + $0x90] sm:$0xff]
                  %256 = vst [vmem:[%s236 + $0x48] sm:$0xff] %v255
                  %v257 = vld [vmem:[%s235 + $0xa0] sm:$0xff]
                  %258 = vst [vmem:[%s236 + $0x50] sm:$0xff] %v257
                  %v259 = vld [vmem:[%s235 + $0xb0] sm:$0xff]
                  %260 = vst [vmem:[%s236 + $0x58] sm:$0xff] %v259
                  %v261 = vld [vmem:[%s235 + $0xc0] sm:$0xff]
                  %262 = vst [vmem:[%s236 + $0x60] sm:$0xff] %v261
                  %v263 = vld [vmem:[%s235 + $0xd0] sm:$0xff]
                  %264 = vst [vmem:[%s236 + $0x68] sm:$0xff] %v263
                  %v265 = vld [vmem:[%s235 + $0xe0] sm:$0xff]
                  %266 = vst [vmem:[%s236 + $0x70] sm:$0xff] %v265
                  %v267 = vld [vmem:[%s235 + $0xf0] sm:$0xff]
                  %268 = vst [vmem:[%s236 + $0x78] sm:$0xff] %v267
                $region52: #{_lambda_.28} parent=46 // loop_footer
                  %s234 = sadd.s32 1, %s230
                $region53: #{_lambda_.28} parent=46 // loop_footer_branch
                  %229 = sbr.rel target = $region49
                $region54: #{_lambda_.28} parent=46 // loop_exit
                  _
              $region47: #{_lambda_.28} parent=31 // pred_fallthru
                _
              // Predicated region
              $region55: #{_lambda_.28} parent=31 // pred_check
                _
              $region56: #{_lambda_.28} parent=31 // pred_check_branch
                %270 = sbr.rel target = $region58
              $region57: #{_lambda_.28} parent=31 // pred_region
                _
              $region58: #{_lambda_.28} parent=31 // pred_fallthru
                _
            $region32: #{_lambda_.28} parent=27 // pred_fallthru
              _
            // Predicated region
            $region33: #{_lambda_.28} parent=27 // pred_check
              _
            $region34: #{_lambda_.28} parent=27 // pred_check_branch
              %184 = sbr.rel target = $region36
            $region35: #{_lambda_.28} parent=27 // pred_region
              %s186 = ssub.s32 256, 1
              loop: start=0, step=1, limit=1
              $region37: #{_lambda_.28} parent=35 // loop_pre_header
                _
              $region38: #{_lambda_.28} parent=35 // loop_header
                %s188 = sphi 0, %s192
                %p189 = scmp.ge.s32.totalorder %s188, 1
                %s193 = sphi %s178, %s178
                %s194 = sphi %s172, %s172
              $region39: #{_lambda_.28} parent=35 // loop_header_branch
                %191 = sbr.rel (%p189) target = $region43
              $region40: #{_lambda_.28} parent=35 // loop_body
                %v195 = vld [vmem:[%s193] sm:%s186]
                %196 = vst [vmem:[%s194] sm:%s186] %v195
                %v197 = vld [vmem:[%s193 + $0x10] sm:%s186]
                %198 = vst [vmem:[%s194 + $0x8] sm:%s186] %v197
                %v199 = vld [vmem:[%s193 + $0x20] sm:%s186]
                %200 = vst [vmem:[%s194 + $0x10] sm:%s186] %v199
                %v201 = vld [vmem:[%s193 + $0x30] sm:%s186]
                %202 = vst [vmem:[%s194 + $0x18] sm:%s186] %v201
                %v203 = vld [vmem:[%s193 + $0x40] sm:%s186]
                %204 = vst [vmem:[%s194 + $0x20] sm:%s186] %v203
                %v205 = vld [vmem:[%s193 + $0x50] sm:%s186]
                %206 = vst [vmem:[%s194 + $0x28] sm:%s186] %v205
                %v207 = vld [vmem:[%s193 + $0x60] sm:%s186]
                %208 = vst [vmem:[%s194 + $0x30] sm:%s186] %v207
                %v209 = vld [vmem:[%s193 + $0x70] sm:%s186]
                %210 = vst [vmem:[%s194 + $0x38] sm:%s186] %v209
                %v211 = vld [vmem:[%s193 + $0x80] sm:%s186]
                %212 = vst [vmem:[%s194 + $0x40] sm:%s186] %v211
                %v213 = vld [vmem:[%s193 + $0x90] sm:%s186]
                %214 = vst [vmem:[%s194 + $0x48] sm:%s186] %v213
                %v215 = vld [vmem:[%s193 + $0xa0] sm:%s186]
                %216 = vst [vmem:[%s194 + $0x50] sm:%s186] %v215
                %v217 = vld [vmem:[%s193 + $0xb0] sm:%s186]
                %218 = vst [vmem:[%s194 + $0x58] sm:%s186] %v217
                %v219 = vld [vmem:[%s193 + $0xc0] sm:%s186]
                %220 = vst [vmem:[%s194 + $0x60] sm:%s186] %v219
                %v221 = vld [vmem:[%s193 + $0xd0] sm:%s186]
                %222 = vst [vmem:[%s194 + $0x68] sm:%s186] %v221
                %v223 = vld [vmem:[%s193 + $0xe0] sm:%s186]
                %224 = vst [vmem:[%s194 + $0x70] sm:%s186] %v223
                %v225 = vld [vmem:[%s193 + $0xf0] sm:%s186]
                %226 = vst [vmem:[%s194 + $0x78] sm:%s186] %v225
              $region41: #{_lambda_.28} parent=35 // loop_footer
                %s192 = sadd.s32 1, %s188
              $region42: #{_lambda_.28} parent=35 // loop_footer_branch
                %187 = sbr.rel target = $region38
              $region43: #{_lambda_.28} parent=35 // loop_exit
                _
            $region36: #{_lambda_.28} parent=27 // pred_fallthru
              _
          $region28: #{_lambda_.28} parent=23 // pred_fallthru
            _
          %271 = vnop
        $region24: #{_lambda_.28} parent=19 // pred_fallthru
          _
        // Predicated region
        $region59: #{_lambda_.28} parent=19 // pred_check
          %p272 = pneg %p104
        $region60: #{_lambda_.28} parent=19 // pred_check_branch
          %274 = sbr.rel (%p272) target = $region62
        $region61: #{_lambda_.28} parent=19 // pred_region
          %s275 = smul.u32 2, %s17
          %p276 = scmp.lt.s32.totalorder %s275, 3
          %s277 = scalar_select %p276, %s275, 3
          %s278 = scalar_lea.vmem %s2, %s277
          %s279 = smul.u32 2, %s17
        $region62: #{_lambda_.28} parent=19 // pred_fallthru
          _
      $region20: #{_lambda_.28} parent=5 // pred_fallthru
        _
      %p280 = scmp.le.s32.totalorder 1, %s9
      %p281 = scmp.lt.s32.totalorder %s9, 3
      %p282 = pnand %p280, %p281
      %p283 = pneg %p282
      // Predicated region
      $region63: #{_lambda_.28} parent=5 // pred_check
        _
      $region64: #{_lambda_.28} parent=5 // pred_check_branch
        %285 = sbr.rel (%p282) target = $region66
      $region65: #{_lambda_.28} parent=5 // pred_region
        %s286 = ssub.s32 %s9, 1
        %s287 = sand.u32 %s71, 1
        %s288 = sand.u32 %s71, 1
        %s289 = smul.addr %s288, 128
        %s290 = scalar_lea.vmem [#allocation3], %s289
        // Predicated region
        $region67: #{_lambda_.28} parent=65 // pred_check
          %p291 = pneg %p84
        $region68: #{_lambda_.28} parent=65 // pred_check_branch
          %293 = sbr.rel (%p291) target = $region70
        $region69: #{_lambda_.28} parent=65 // pred_region
          _
        $region70: #{_lambda_.28} parent=65 // pred_fallthru
          _
        %p294 = scmp.lt.s32.totalorder %s19, 0
        %s295 = scalar_select %p294, %s19, 0
        %p296 = scmp.lt.s32.totalorder %s21, 0
        %s297 = scalar_select %p296, %s21, 0
        %s298 = sadd.s32 %s297, %s295
        %s299 = scalar_lea.vmem %s0, %s298
        %p300 = pneg %p56
        %p301 = pneg %p53
        %s302 = sand.u32 %s71, 1
        %s303 = sand.u32 %s71, 1
        %s304 = smul.addr %s303, 128
        %s305 = scalar_lea.vmem [#allocation3], %s304
        %p306 = pneg %p84
        %p307 = pneg %p81
        %s308 = smul.u32 2, %s20
        %p309 = scmp.lt.s32.totalorder %s308, 3
        %s310 = scalar_select %p309, %s308, 3
        %s311 = scalar_lea.vmem %s2, %s310
        %p312 = pneg %p110
        %p313 = pneg %p107
        %p314 = pneg %p138
        %p315 = pneg %p135
        %s316 = smul.u32 2, %s20
        %p317 = scmp.lt.s32.totalorder %s19, 0
        %s318 = scalar_select %p317, %s19, 0
        %p319 = scmp.lt.s32.totalorder %s316, 3
        %s320 = scalar_select %p319, %s316, 3
        %s321 = smul.addr %s318, 4
        %s322 = sadd.s32 %s320, %s321
        %s323 = scalar_lea.vmem %s3, %s322
        %p324 = scmp.lt.s32.totalorder %s19, 0
        %s325 = scalar_select %p324, %s19, 0
        %p326 = scmp.lt.s32.totalorder %s21, 0
        %s327 = scalar_select %p326, %s21, 0
        %s328 = sadd.s32 %s327, %s325
        %s329 = scalar_lea.vmem %s0, %s328
        %s330 = smul.u32 16, %s21
        %s331 = smul.u32 2, %s20
        %s332 = smul.u32 2, %s20
        %p333 = scmp.lt.s32.totalorder %s332, 3
        %s334 = scalar_select %p333, %s332, 3
        %s335 = scalar_lea.vmem %s2, %s334
        %s336 = smul.u32 2, %s20
        %s337 = smul.u32 2, %s20
        %p338 = scmp.lt.s32.totalorder %s19, 0
        %s339 = scalar_select %p338, %s19, 0
        %p340 = scmp.lt.s32.totalorder %s337, 3
        %s341 = scalar_select %p340, %s337, 3
        %s342 = smul.addr %s339, 4
        %s343 = sadd.s32 %s341, %s342
        %s344 = scalar_lea.vmem %s3, %s343
        %s345 = smul.u32 2, %s20
        %p346 = scmp.eq.s32.totalorder %s21, 0
        // Predicated region
        $region71: #{_lambda_.28} parent=65 // pred_check
          %p347 = pneg %p346
        $region72: #{_lambda_.28} parent=65 // pred_check_branch
          %349 = sbr.rel (%p347) target = $region74
        $region73: #{_lambda_.28} parent=65 // pred_region
          %350 = vst [vmem:[#allocation2] sm:$0xf] 0.0
        $region74: #{_lambda_.28} parent=65 // pred_fallthru
          _
        %v351 = vld [vmem:[#allocation2] sm:$0xf]
        %v352 = vld [vmem:[%s329] sm:$0x1]
        %v353 = vld [vmem:[%s290] sm:$0xff]
        %v354 = vld [vmem:[%s290 + $0x8] sm:$0xff]
        %v355 = vld [vmem:[%s290 + $0x10] sm:$0xff]
        %v356 = vld [vmem:[%s290 + $0x18] sm:$0xff]
        %v357 = vld [vmem:[%s290 + $0x20] sm:$0xff]
        %v358 = vld [vmem:[%s290 + $0x28] sm:$0xff]
        %v359 = vld [vmem:[%s290 + $0x30] sm:$0xff]
        %v360 = vld [vmem:[%s290 + $0x38] sm:$0xff]
        %v361 = vld [vmem:[%s290 + $0x40] sm:$0xff]
        %v362 = vld [vmem:[%s290 + $0x48] sm:$0xff]
        %v363 = vld [vmem:[%s290 + $0x50] sm:$0xff]
        %v364 = vld [vmem:[%s290 + $0x58] sm:$0xff]
        %v365 = vld [vmem:[%s290 + $0x60] sm:$0xff]
        %v366 = vld [vmem:[%s290 + $0x68] sm:$0xff]
        %v367 = vld [vmem:[%s290 + $0x70] sm:$0xff]
        %v368 = vld [vmem:[%s290 + $0x78] sm:$0xff]
        %v385 = vunpack.c.l.b16 %v353
        %v386 = vunpack.c.h.b16 %v353
        %v387 = vunpack.c.l.b16 %v354
        %v388 = vunpack.c.h.b16 %v354
        %v389 = vunpack.c.l.b16 %v355
        %v390 = vunpack.c.h.b16 %v355
        %v391 = vunpack.c.l.b16 %v356
        %v392 = vunpack.c.h.b16 %v356
        %v393 = vunpack.c.l.b16 %v357
        %v394 = vunpack.c.h.b16 %v357
        %v395 = vunpack.c.l.b16 %v358
        %v396 = vunpack.c.h.b16 %v358
        %v397 = vunpack.c.l.b16 %v359
        %v398 = vunpack.c.h.b16 %v359
        %v399 = vunpack.c.l.b16 %v360
        %v400 = vunpack.c.h.b16 %v360
        %v401 = vunpack.c.l.b16 %v361
        %v402 = vunpack.c.h.b16 %v361
        %v403 = vunpack.c.l.b16 %v362
        %v404 = vunpack.c.h.b16 %v362
        %v405 = vunpack.c.l.b16 %v363
        %v406 = vunpack.c.h.b16 %v363
        %v407 = vunpack.c.l.b16 %v364
        %v408 = vunpack.c.h.b16 %v364
        %v409 = vunpack.c.l.b16 %v365
        %v410 = vunpack.c.h.b16 %v365
        %v411 = vunpack.c.l.b16 %v366
        %v412 = vunpack.c.h.b16 %v366
        %v413 = vunpack.c.l.b16 %v367
        %v414 = vunpack.c.h.b16 %v367
        %v415 = vunpack.c.l.b16 %v368
        %v416 = vunpack.c.h.b16 %v368
        %v417 = vpack.c.b16 %v387, %v385
        %v418 = vpack.c.b16 %v388, %v386
        %v419 = vpack.c.b16 %v391, %v389
        %v420 = vpack.c.b16 %v392, %v390
        %v421 = vpack.c.b16 %v395, %v393
        %v422 = vpack.c.b16 %v396, %v394
        %v423 = vpack.c.b16 %v399, %v397
        %v424 = vpack.c.b16 %v400, %v398
        %v425 = vpack.c.b16 %v403, %v401
        %v426 = vpack.c.b16 %v404, %v402
        %v427 = vpack.c.b16 %v407, %v405
        %v428 = vpack.c.b16 %v408, %v406
        %v429 = vpack.c.b16 %v411, %v409
        %v430 = vpack.c.b16 %v412, %v410
        %v431 = vpack.c.b16 %v415, %v413
        %v432 = vpack.c.b16 %v416, %v414
        %449 = vmatpush.bf16.msra.mxu0 %v431
        %450 = vmatpush.bf16.msra.mxu0 %v429
        %451 = vmatpush.bf16.msra.mxu0 %v427
        %452 = vmatpush.bf16.msra.mxu0 %v425
        %453 = vmatpush.bf16.msra.mxu0 %v423
        %454 = vmatpush.bf16.msra.mxu0 %v421
        %455 = vmatpush.bf16.msra.mxu0 %v419
        %456 = vmatpush.bf16.msra.mxu0 %v417
        %457 = vmatmul.bf16.gmra.mxu0 %v352
        %v458 = vpop.f32.mrf.mxu0
        %v459 = vadd.f32 0.0, %v458
        %v460 = vpop.f32.mrf.mxu0
        %461 = vdwg.mxu0
        %462 = vmatpush.bf16.msra.mxu0 %v432
        %463 = vmatpush.bf16.msra.mxu0 %v430
        %464 = vmatpush.bf16.msra.mxu0 %v428
        %465 = vmatpush.bf16.msra.mxu0 %v426
        %466 = vmatpush.bf16.msra.mxu0 %v424
        %467 = vmatpush.bf16.msra.mxu0 %v422
        %468 = vmatpush.bf16.msra.mxu0 %v420
        %469 = vmatpush.bf16.msra.mxu0 %v418
        %470 = vmatmul.bf16.gmra.mxu0 %v352
        %v471 = vpop.f32.mrf.mxu0
        %v472 = vadd.f32 0.0, %v471
        %v473 = vpop.f32.mrf.mxu0
        %474 = vdwg.mxu0
        %v477 = vrot.slane %v472, 6
        %vm478 = vcmask 1041408
        %v479 = vsel %vm478, %v459, %v477
        %v481 = vadd.f32 %v351, %v479
        %482 = vst [vmem:[#allocation2] sm:$0xf] %v481
        // Predicated region
        $region75: #{_lambda_.28} parent=65 // pred_check
          %p483 = pneg %p346
        $region76: #{_lambda_.28} parent=65 // pred_check_branch
          %485 = sbr.rel (%p483) target = $region78
        $region77: #{_lambda_.28} parent=65 // pred_region
          %v486 = vld [vmem:[#allocation2] sm:$0xf]
          %v487 = vld [vmem:[%s335] sm:$0x3]
          %v489 = vperm.slane %v487, 0
          %v490 = vperm.slane %v487, 1
          %v491 = vrot.slane %v490, 6
          %v492 = vsel %vm478, %v489, %v491
          %v494 = vadd.f32 %v486, %v492
          %v495 = vmax.f32 %v494, 0.0
          %497 = vst [vmem:[#allocation1] ss:$4 sm:$0xff] %v495
          %v498 = vld.sshfl [vmem:[#allocation1] sm:$0xff pattern:$0x73625140]
          %v499 = vld.sshfl [vmem:[#allocation1 + $0x8] sm:$0xff pattern:$0x73625140]
          %v502 = vpack.c.bf16 %v499, %v498
          %v504 = vrot.slane %v502, 3
          %vm505 = vcmask 1040384
          %v508 = vsel %vm505, %v502, %v504
          %510 = vst [vmem:[%s344] sm:$0x3] %v508
        $region78: #{_lambda_.28} parent=65 // pred_fallthru
          _
        %s511 = smul.u32 2, %s20
        %p512 = scmp.lt.s32.totalorder %s19, 0
        %s513 = scalar_select %p512, %s19, 0
        %p514 = scmp.lt.s32.totalorder %s511, 3
        %s515 = scalar_select %p514, %s511, 3
        %s516 = smul.addr %s513, 4
        %s517 = sadd.s32 %s515, %s516
        %s518 = scalar_lea.vmem %s3, %s517
        // Predicated region
        $region79: #{_lambda_.28} parent=65 // pred_check
          %p519 = pneg %p135
        $region80: #{_lambda_.28} parent=65 // pred_check_branch
          %521 = sbr.rel (%p519) target = $region82
        $region81: #{_lambda_.28} parent=65 // pred_region
          %s522 = smul.u32 2, %s20
        $region82: #{_lambda_.28} parent=65 // pred_fallthru
          _
      $region66: #{_lambda_.28} parent=5 // pred_fallthru
        _
      %p523 = scmp.le.s32.totalorder 2, %s9
      // Predicated region
      $region83: #{_lambda_.28} parent=5 // pred_check
        %p524 = pneg %p523
      $region84: #{_lambda_.28} parent=5 // pred_check_branch
        %526 = sbr.rel (%p524) target = $region86
      $region85: #{_lambda_.28} parent=5 // pred_region
        %s527 = ssub.s32 %s9, 2
        // Predicated region
        $region87: #{_lambda_.28} parent=85 // pred_check
          %p528 = pneg %p141
        $region88: #{_lambda_.28} parent=85 // pred_check_branch
          %530 = sbr.rel (%p528) target = $region90
        $region89: #{_lambda_.28} parent=85 // pred_region
          %s531 = smul.u32 2, %s23
          %p532 = scmp.lt.s32.totalorder %s22, 0
          %s533 = scalar_select %p532, %s22, 0
          %p534 = scmp.lt.s32.totalorder %s531, 3
          %s535 = scalar_select %p534, %s531, 3
          %s536 = smul.addr %s533, 4
          %s537 = sadd.s32 %s535, %s536
          %s538 = scalar_lea.vmem %s3, %s537
        $region90: #{_lambda_.28} parent=85 // pred_fallthru
          _
      $region86: #{_lambda_.28} parent=5 // pred_fallthru
        _
    $region6: #{_lambda_.28} parent=1 // loop_footer
      %s13 = sadd.s32 1, %s9
    $region7: #{_lambda_.28} parent=1 // loop_footer_branch
      %8 = sbr.rel target = $region3
    $region8: #{_lambda_.28} parent=1 // loop_exit
      _

// kernel: _lambda_.27
$region0: #{_lambda_.27}
  #allocation0 [shape = 'u32[]', space=smem, size = 0x4, offset = 0x4, fixed_abs, tag = 'smem constant byte address 0x4 - core index']
  #allocation1 [shape = 'u32[72,128]{1,0:T(1,128)}', space=vmem, size = 0x9000, scoped, tag = 'internal scratch']
  #allocation2 [shape = 'f32[2,128]{1,0:T(2,128)}', space=vmem, size = 0x400, scoped, tag = 'scratch operand']
  %s0 = inlined_call_operand.vmem [shape: bf16[2,1152], index: 0, kind: input, shape index: {}]
  %s1 = inlined_call_operand.vmem [shape: bf16[1152,128], index: 1, kind: input, shape index: {}]
  %s2 = inlined_call_operand.vmem [shape: f32[1,128], index: 2, kind: input, shape index: {}]
  %s3 = inlined_call_operand.vmem [shape: bf16[2,128], index: 3, kind: output, shape index: {}]
  %s4 = sld [smem:[#allocation0]]
  $region30: #{_lambda_.27} parent=0
    _
  %s6 = ssub.s32 1, %s4
  %s7 = scalar_select 0, %s6, %s4
  // Predicated region
  $region2: #{_lambda_.27} parent=0 // pred_check
    _
  $region3: #{_lambda_.27} parent=0 // pred_check_branch
    %9 = sbr.rel (0) target = $region5
  $region4: #{_lambda_.27} parent=0 // pred_region
    _
  $region5: #{_lambda_.27} parent=0 // pred_fallthru
    _
  // Predicated region
  $region6: #{_lambda_.27} parent=0 // pred_check
    _
  $region7: #{_lambda_.27} parent=0 // pred_check_branch
    %11 = sbr.rel (0) target = $region9
  $region8: #{_lambda_.27} parent=0 // pred_region
    _
  $region9: #{_lambda_.27} parent=0 // pred_fallthru
    _
  // Predicated region
  $region10: #{_lambda_.27} parent=0 // pred_check
    _
  $region11: #{_lambda_.27} parent=0 // pred_check_branch
    %13 = sbr.rel (0) target = $region13
  $region12: #{_lambda_.27} parent=0 // pred_region
    _
  $region13: #{_lambda_.27} parent=0 // pred_fallthru
    _
  %p14 = scmp.eq.s32.totalorder 0, 0
  // Predicated region
  $region14: #{_lambda_.27} parent=0 // pred_check
    %p15 = pneg %p14
  $region15: #{_lambda_.27} parent=0 // pred_check_branch
    %17 = sbr.rel (%p15) target = $region17
  $region16: #{_lambda_.27} parent=0 // pred_region
    %18 = vst [vmem:[#allocation2] sm:$0x3] 0.0
  $region17: #{_lambda_.27} parent=0 // pred_fallthru
    _
  %v19 = vld [vmem:[#allocation2] sm:$0x3]
  %v20 = vld [vmem:[%s0] sm:$0xff]
  %v21 = vld [vmem:[%s0 + $0x8] sm:$0x1]
  %v22 = vld [vmem:[%s1] sm:$0xf]
  %v23 = vld [vmem:[%s1 + $0x4] sm:$0xf]
  %v24 = vld [vmem:[%s1 + $0x8] sm:$0xf]
  %v25 = vld [vmem:[%s1 + $0xc] sm:$0xf]
  %v26 = vld [vmem:[%s1 + $0x10] sm:$0xf]
  %v27 = vld [vmem:[%s1 + $0x14] sm:$0xf]
  %v28 = vld [vmem:[%s1 + $0x18] sm:$0xf]
  %v29 = vld [vmem:[%s1 + $0x1c] sm:$0xf]
  %v30 = vld [vmem:[%s1 + $0x20] sm:$0xf]
  %v31 = vld [vmem:[%s1 + $0x24] sm:$0xf]
  %v32 = vld [vmem:[%s1 + $0x28] sm:$0xf]
  %v33 = vld [vmem:[%s1 + $0x2c] sm:$0xf]
  %v34 = vld [vmem:[%s1 + $0x30] sm:$0xf]
  %v35 = vld [vmem:[%s1 + $0x34] sm:$0xf]
  %v36 = vld [vmem:[%s1 + $0x38] sm:$0xf]
  %v37 = vld [vmem:[%s1 + $0x3c] sm:$0xf]
  %v38 = vld [vmem:[%s1 + $0x40] sm:$0xf]
  %v39 = vld [vmem:[%s1 + $0x44] sm:$0xf]
  %v40 = vld [vmem:[%s1 + $0x48] sm:$0xf]
  %v41 = vld [vmem:[%s1 + $0x4c] sm:$0xf]
  %v42 = vld [vmem:[%s1 + $0x50] sm:$0xf]
  %v43 = vld [vmem:[%s1 + $0x54] sm:$0xf]
  %v44 = vld [vmem:[%s1 + $0x58] sm:$0xf]
  %v45 = vld [vmem:[%s1 + $0x5c] sm:$0xf]
  %v46 = vld [vmem:[%s1 + $0x60] sm:$0xf]
  %v47 = vld [vmem:[%s1 + $0x64] sm:$0xf]
  %v48 = vld [vmem:[%s1 + $0x68] sm:$0xf]
  %v49 = vld [vmem:[%s1 + $0x6c] sm:$0xf]
  %v50 = vld [vmem:[%s1 + $0x70] sm:$0xf]
  %v51 = vld [vmem:[%s1 + $0x74] sm:$0xf]
  %v52 = vld [vmem:[%s1 + $0x78] sm:$0xf]
  %v53 = vld [vmem:[%s1 + $0x7c] sm:$0xf]
  %v54 = vld [vmem:[%s1 + $0x80] sm:$0xf]
  %v55 = vld [vmem:[%s1 + $0x84] sm:$0xf]
  %v56 = vld [vmem:[%s1 + $0x88] sm:$0xf]
  %v57 = vld [vmem:[%s1 + $0x8c] sm:$0xf]
  %v58 = vld [vmem:[%s1 + $0x90] sm:$0xf]
  %v59 = vld [vmem:[%s1 + $0x94] sm:$0xf]
  %v60 = vld [vmem:[%s1 + $0x98] sm:$0xf]
  %v61 = vld [vmem:[%s1 + $0x9c] sm:$0xf]
  %v62 = vld [vmem:[%s1 + $0xa0] sm:$0xf]
  %v63 = vld [vmem:[%s1 + $0xa4] sm:$0xf]
  %v64 = vld [vmem:[%s1 + $0xa8] sm:$0xf]
  %v65 = vld [vmem:[%s1 + $0xac] sm:$0xf]
  %v66 = vld [vmem:[%s1 + $0xb0] sm:$0xf]
  %v67 = vld [vmem:[%s1 + $0xb4] sm:$0xf]
  %v68 = vld [vmem:[%s1 + $0xb8] sm:$0xf]
  %v69 = vld [vmem:[%s1 + $0xbc] sm:$0xf]
  %v70 = vld [vmem:[%s1 + $0xc0] sm:$0xf]
  %v71 = vld [vmem:[%s1 + $0xc4] sm:$0xf]
  %v72 = vld [vmem:[%s1 + $0xc8] sm:$0xf]
  %v73 = vld [vmem:[%s1 + $0xcc] sm:$0xf]
  %v74 = vld [vmem:[%s1 + $0xd0] sm:$0xf]
  %v75 = vld [vmem:[%s1 + $0xd4] sm:$0xf]
  %v76 = vld [vmem:[%s1 + $0xd8] sm:$0xf]
  %v77 = vld [vmem:[%s1 + $0xdc] sm:$0xf]
  %v78 = vld [vmem:[%s1 + $0xe0] sm:$0xf]
  %v79 = vld [vmem:[%s1 + $0xe4] sm:$0xf]
  %v80 = vld [vmem:[%s1 + $0xe8] sm:$0xf]
  %v81 = vld [vmem:[%s1 + $0xec] sm:$0xf]
  %v82 = vld [vmem:[%s1 + $0xf0] sm:$0xf]
  %v83 = vld [vmem:[%s1 + $0xf4] sm:$0xf]
  %v84 = vld [vmem:[%s1 + $0xf8] sm:$0xf]
  %v85 = vld [vmem:[%s1 + $0xfc] sm:$0xf]
  %v86 = vld [vmem:[%s1 + $0x100] sm:$0xf]
  %v87 = vld [vmem:[%s1 + $0x104] sm:$0xf]
  %v88 = vld [vmem:[%s1 + $0x108] sm:$0xf]
  %v89 = vld [vmem:[%s1 + $0x10c] sm:$0xf]
  %v90 = vld [vmem:[%s1 + $0x110] sm:$0xf]
  %v91 = vld [vmem:[%s1 + $0x114] sm:$0xf]
  %v92 = vld [vmem:[%s1 + $0x118] sm:$0xf]
  %v93 = vld [vmem:[%s1 + $0x11c] sm:$0xf]
  %v94 = vld [vmem:[%s1 + $0x120] sm:$0xf]
  %v95 = vld [vmem:[%s1 + $0x124] sm:$0xf]
  %v96 = vld [vmem:[%s1 + $0x128] sm:$0xf]
  %v97 = vld [vmem:[%s1 + $0x12c] sm:$0xf]
  %v98 = vld [vmem:[%s1 + $0x130] sm:$0xf]
  %v99 = vld [vmem:[%s1 + $0x134] sm:$0xf]
  %v100 = vld [vmem:[%s1 + $0x138] sm:$0xf]
  %v101 = vld [vmem:[%s1 + $0x13c] sm:$0xf]
  %v102 = vld [vmem:[%s1 + $0x140] sm:$0xf]
  %v103 = vld [vmem:[%s1 + $0x144] sm:$0xf]
  %v104 = vld [vmem:[%s1 + $0x148] sm:$0xf]
  %v105 = vld [vmem:[%s1 + $0x14c] sm:$0xf]
  %v106 = vld [vmem:[%s1 + $0x150] sm:$0xf]
  %v107 = vld [vmem:[%s1 + $0x154] sm:$0xf]
  %v108 = vld [vmem:[%s1 + $0x158] sm:$0xf]
  %v109 = vld [vmem:[%s1 + $0x15c] sm:$0xf]
  %v110 = vld [vmem:[%s1 + $0x160] sm:$0xf]
  %v111 = vld [vmem:[%s1 + $0x164] sm:$0xf]
  %v112 = vld [vmem:[%s1 + $0x168] sm:$0xf]
  %v113 = vld [vmem:[%s1 + $0x16c] sm:$0xf]
  %v114 = vld [vmem:[%s1 + $0x170] sm:$0xf]
  %v115 = vld [vmem:[%s1 + $0x174] sm:$0xf]
  %v116 = vld [vmem:[%s1 + $0x178] sm:$0xf]
  %v117 = vld [vmem:[%s1 + $0x17c] sm:$0xf]
  %v118 = vld [vmem:[%s1 + $0x180] sm:$0xf]
  %v119 = vld [vmem:[%s1 + $0x184] sm:$0xf]
  %v120 = vld [vmem:[%s1 + $0x188] sm:$0xf]
  %v121 = vld [vmem:[%s1 + $0x18c] sm:$0xf]
  %v122 = vld [vmem:[%s1 + $0x190] sm:$0xf]
  %v123 = vld [vmem:[%s1 + $0x194] sm:$0xf]
  %v124 = vld [vmem:[%s1 + $0x198] sm:$0xf]
  %v125 = vld [vmem:[%s1 + $0x19c] sm:$0xf]
  %v126 = vld [vmem:[%s1 + $0x1a0] sm:$0xf]
  %v127 = vld [vmem:[%s1 + $0x1a4] sm:$0xf]
  %v128 = vld [vmem:[%s1 + $0x1a8] sm:$0xf]
  %v129 = vld [vmem:[%s1 + $0x1ac] sm:$0xf]
  %v130 = vld [vmem:[%s1 + $0x1b0] sm:$0xf]
  %v131 = vld [vmem:[%s1 + $0x1b4] sm:$0xf]
  %v132 = vld [vmem:[%s1 + $0x1b8] sm:$0xf]
  %v133 = vld [vmem:[%s1 + $0x1bc] sm:$0xf]
  %v134 = vld [vmem:[%s1 + $0x1c0] sm:$0xf]
  %v135 = vld [vmem:[%s1 + $0x1c4] sm:$0xf]
  %v136 = vld [vmem:[%s1 + $0x1c8] sm:$0xf]
  %v137 = vld [vmem:[%s1 + $0x1cc] sm:$0xf]
  %v138 = vld [vmem:[%s1 + $0x1d0] sm:$0xf]
  %v139 = vld [vmem:[%s1 + $0x1d4] sm:$0xf]
  %v140 = vld [vmem:[%s1 + $0x1d8] sm:$0xf]
  %v141 = vld [vmem:[%s1 + $0x1dc] sm:$0xf]
  %v142 = vld [vmem:[%s1 + $0x1e0] sm:$0xf]
  %v143 = vld [vmem:[%s1 + $0x1e4] sm:$0xf]
  %v144 = vld [vmem:[%s1 + $0x1e8] sm:$0xf]
  %v145 = vld [vmem:[%s1 + $0x1ec] sm:$0xf]
  %v146 = vld [vmem:[%s1 + $0x1f0] sm:$0xf]
  %v147 = vld [vmem:[%s1 + $0x1f4] sm:$0xf]
  %v148 = vld [vmem:[%s1 + $0x1f8] sm:$0xf]
  %v149 = vld [vmem:[%s1 + $0x1fc] sm:$0xf]
  %v150 = vld [vmem:[%s1 + $0x200] sm:$0xf]
  %v151 = vld [vmem:[%s1 + $0x204] sm:$0xf]
  %v152 = vld [vmem:[%s1 + $0x208] sm:$0xf]
  %v153 = vld [vmem:[%s1 + $0x20c] sm:$0xf]
  %v154 = vld [vmem:[%s1 + $0x210] sm:$0xf]
  %v155 = vld [vmem:[%s1 + $0x214] sm:$0xf]
  %v156 = vld [vmem:[%s1 + $0x218] sm:$0xf]
  %v157 = vld [vmem:[%s1 + $0x21c] sm:$0xf]
  %v158 = vld [vmem:[%s1 + $0x220] sm:$0xf]
  %v159 = vld [vmem:[%s1 + $0x224] sm:$0xf]
  %v160 = vld [vmem:[%s1 + $0x228] sm:$0xf]
  %v161 = vld [vmem:[%s1 + $0x22c] sm:$0xf]
  %v162 = vld [vmem:[%s1 + $0x230] sm:$0xf]
  %v163 = vld [vmem:[%s1 + $0x234] sm:$0xf]
  %v164 = vld [vmem:[%s1 + $0x238] sm:$0xf]
  %v165 = vld [vmem:[%s1 + $0x23c] sm:$0xf]
  %167 = vst [vmem:[#allocation1] ss:$9 sm:$0xff] %v20
  %v168 = vld [vmem:[#allocation1] sm:$0xff]
  %v169 = vld [vmem:[#allocation1 + $0x9] sm:$0xff]
  %v170 = vld [vmem:[#allocation1 + $0x12] sm:$0xff]
  %v171 = vld [vmem:[#allocation1 + $0x1b] sm:$0xff]
  %v172 = vld [vmem:[#allocation1 + $0x24] sm:$0xff]
  %v173 = vld [vmem:[#allocation1 + $0x2d] sm:$0xff]
  %v174 = vld [vmem:[#allocation1 + $0x36] sm:$0xff]
  %v175 = vld [vmem:[#allocation1 + $0x3f] sm:$0xff]
  %177 = vst [vmem:[#allocation1] ss:$9 sm:$0xff] %v21
  %v178 = vld [vmem:[#allocation1] sm:$0xff]
  %v332 = vunpack.c.l.b16 %v22
  %v333 = vunpack.c.l.b16 %v23
  %v334 = vunpack.c.l.b16 %v24
  %v335 = vunpack.c.l.b16 %v25
  %v336 = vunpack.c.l.b16 %v26
  %v337 = vunpack.c.l.b16 %v27
  %v338 = vunpack.c.l.b16 %v28
  %v339 = vunpack.c.l.b16 %v29
  %v340 = vunpack.c.l.b16 %v30
  %v341 = vunpack.c.l.b16 %v31
  %v342 = vunpack.c.l.b16 %v32
  %v343 = vunpack.c.l.b16 %v33
  %v344 = vunpack.c.l.b16 %v34
  %v345 = vunpack.c.l.b16 %v35
  %v346 = vunpack.c.l.b16 %v36
  %v347 = vunpack.c.l.b16 %v37
  %v348 = vunpack.c.l.b16 %v38
  %v349 = vunpack.c.l.b16 %v39
  %v350 = vunpack.c.l.b16 %v40
  %v351 = vunpack.c.l.b16 %v41
  %v352 = vunpack.c.l.b16 %v42
  %v353 = vunpack.c.l.b16 %v43
  %v354 = vunpack.c.l.b16 %v44
  %v355 = vunpack.c.l.b16 %v45
  %v356 = vunpack.c.l.b16 %v46
  %v357 = vunpack.c.l.b16 %v47
  %v358 = vunpack.c.l.b16 %v48
  %v359 = vunpack.c.l.b16 %v49
  %v360 = vunpack.c.l.b16 %v50
  %v361 = vunpack.c.l.b16 %v51
  %v362 = vunpack.c.l.b16 %v52
  %v363 = vunpack.c.l.b16 %v53
  %v364 = vunpack.c.l.b16 %v54
  %v365 = vunpack.c.l.b16 %v55
  %v366 = vunpack.c.l.b16 %v56
  %v367 = vunpack.c.l.b16 %v57
  %v368 = vunpack.c.l.b16 %v58
  %v369 = vunpack.c.l.b16 %v59
  %v370 = vunpack.c.l.b16 %v60
  %v371 = vunpack.c.l.b16 %v61
  %v372 = vunpack.c.l.b16 %v62
  %v373 = vunpack.c.l.b16 %v63
  %v374 = vunpack.c.l.b16 %v64
  %v375 = vunpack.c.l.b16 %v65
  %v376 = vunpack.c.l.b16 %v66
  %v377 = vunpack.c.l.b16 %v67
  %v378 = vunpack.c.l.b16 %v68
  %v379 = vunpack.c.l.b16 %v69
  %v380 = vunpack.c.l.b16 %v70
  %v381 = vunpack.c.l.b16 %v71
  %v382 = vunpack.c.l.b16 %v72
  %v383 = vunpack.c.l.b16 %v73
  %v384 = vunpack.c.l.b16 %v74
  %v385 = vunpack.c.l.b16 %v75
  %v386 = vunpack.c.l.b16 %v76
  %v387 = vunpack.c.l.b16 %v77
  %v388 = vunpack.c.l.b16 %v78
  %v389 = vunpack.c.l.b16 %v79
  %v390 = vunpack.c.l.b16 %v80
  %v391 = vunpack.c.l.b16 %v81
  %v392 = vunpack.c.l.b16 %v82
  %v393 = vunpack.c.l.b16 %v83
  %v394 = vunpack.c.l.b16 %v84
  %v395 = vunpack.c.l.b16 %v85
  %v396 = vunpack.c.l.b16 %v86
  %v397 = vunpack.c.l.b16 %v87
  %v398 = vunpack.c.l.b16 %v88
  %v399 = vunpack.c.l.b16 %v89
  %v400 = vunpack.c.l.b16 %v90
  %v401 = vunpack.c.l.b16 %v91
  %v402 = vunpack.c.l.b16 %v92
  %v403 = vunpack.c.l.b16 %v93
  %v404 = vunpack.c.l.b16 %v94
  %v405 = vunpack.c.l.b16 %v95
  %v406 = vunpack.c.l.b16 %v96
  %v407 = vunpack.c.l.b16 %v97
  %v408 = vunpack.c.l.b16 %v98
  %v409 = vunpack.c.l.b16 %v99
  %v410 = vunpack.c.l.b16 %v100
  %v411 = vunpack.c.l.b16 %v101
  %v412 = vunpack.c.l.b16 %v102
  %v413 = vunpack.c.l.b16 %v103
  %v414 = vunpack.c.l.b16 %v104
  %v415 = vunpack.c.l.b16 %v105
  %v416 = vunpack.c.l.b16 %v106
  %v417 = vunpack.c.l.b16 %v107
  %v418 = vunpack.c.l.b16 %v108
  %v419 = vunpack.c.l.b16 %v109
  %v420 = vunpack.c.l.b16 %v110
  %v421 = vunpack.c.l.b16 %v111
  %v422 = vunpack.c.l.b16 %v112
  %v423 = vunpack.c.l.b16 %v113
  %v424 = vunpack.c.l.b16 %v114
  %v425 = vunpack.c.l.b16 %v115
  %v426 = vunpack.c.l.b16 %v116
  %v427 = vunpack.c.l.b16 %v117
  %v428 = vunpack.c.l.b16 %v118
  %v429 = vunpack.c.l.b16 %v119
  %v430 = vunpack.c.l.b16 %v120
  %v431 = vunpack.c.l.b16 %v121
  %v432 = vunpack.c.l.b16 %v122
  %v433 = vunpack.c.l.b16 %v123
  %v434 = vunpack.c.l.b16 %v124
  %v435 = vunpack.c.l.b16 %v125
  %v436 = vunpack.c.l.b16 %v126
  %v437 = vunpack.c.l.b16 %v127
  %v438 = vunpack.c.l.b16 %v128
  %v439 = vunpack.c.l.b16 %v129
  %v440 = vunpack.c.l.b16 %v130
  %v441 = vunpack.c.l.b16 %v131
  %v442 = vunpack.c.l.b16 %v132
  %v443 = vunpack.c.l.b16 %v133
  %v444 = vunpack.c.l.b16 %v134
  %v445 = vunpack.c.l.b16 %v135
  %v446 = vunpack.c.l.b16 %v136
  %v447 = vunpack.c.l.b16 %v137
  %v448 = vunpack.c.l.b16 %v138
  %v449 = vunpack.c.l.b16 %v139
  %v450 = vunpack.c.l.b16 %v140
  %v451 = vunpack.c.l.b16 %v141
  %v452 = vunpack.c.l.b16 %v142
  %v453 = vunpack.c.l.b16 %v143
  %v454 = vunpack.c.l.b16 %v144
  %v455 = vunpack.c.l.b16 %v145
  %v456 = vunpack.c.l.b16 %v146
  %v457 = vunpack.c.l.b16 %v147
  %v458 = vunpack.c.l.b16 %v148
  %v459 = vunpack.c.l.b16 %v149
  %v460 = vunpack.c.l.b16 %v150
  %v461 = vunpack.c.l.b16 %v151
  %v462 = vunpack.c.l.b16 %v152
  %v463 = vunpack.c.l.b16 %v153
  %v464 = vunpack.c.l.b16 %v154
  %v465 = vunpack.c.l.b16 %v155
  %v466 = vunpack.c.l.b16 %v156
  %v467 = vunpack.c.l.b16 %v157
  %v468 = vunpack.c.l.b16 %v158
  %v469 = vunpack.c.l.b16 %v159
  %v470 = vunpack.c.l.b16 %v160
  %v471 = vunpack.c.l.b16 %v161
  %v472 = vunpack.c.l.b16 %v162
  %v473 = vunpack.c.l.b16 %v163
  %v474 = vunpack.c.l.b16 %v164
  %v475 = vunpack.c.l.b16 %v165
  %v476 = vpack.c.b16 %v333, %v332
  %v477 = vpack.c.b16 %v335, %v334
  %v478 = vpack.c.b16 %v337, %v336
  %v479 = vpack.c.b16 %v339, %v338
  %v480 = vpack.c.b16 %v341, %v340
  %v481 = vpack.c.b16 %v343, %v342
  %v482 = vpack.c.b16 %v345, %v344
  %v483 = vpack.c.b16 %v347, %v346
  %v484 = vpack.c.b16 %v349, %v348
  %v485 = vpack.c.b16 %v351, %v350
  %v486 = vpack.c.b16 %v353, %v352
  %v487 = vpack.c.b16 %v355, %v354
  %v488 = vpack.c.b16 %v357, %v356
  %v489 = vpack.c.b16 %v359, %v358
  %v490 = vpack.c.b16 %v361, %v360
  %v491 = vpack.c.b16 %v363, %v362
  %v492 = vpack.c.b16 %v365, %v364
  %v493 = vpack.c.b16 %v367, %v366
  %v494 = vpack.c.b16 %v369, %v368
  %v495 = vpack.c.b16 %v371, %v370
  %v496 = vpack.c.b16 %v373, %v372
  %v497 = vpack.c.b16 %v375, %v374
  %v498 = vpack.c.b16 %v377, %v376
  %v499 = vpack.c.b16 %v379, %v378
  %v500 = vpack.c.b16 %v381, %v380
  %v501 = vpack.c.b16 %v383, %v382
  %v502 = vpack.c.b16 %v385, %v384
  %v503 = vpack.c.b16 %v387, %v386
  %v504 = vpack.c.b16 %v389, %v388
  %v505 = vpack.c.b16 %v391, %v390
  %v506 = vpack.c.b16 %v393, %v392
  %v507 = vpack.c.b16 %v395, %v394
  %v508 = vpack.c.b16 %v397, %v396
  %v509 = vpack.c.b16 %v399, %v398
  %v510 = vpack.c.b16 %v401, %v400
  %v511 = vpack.c.b16 %v403, %v402
  %v512 = vpack.c.b16 %v405, %v404
  %v513 = vpack.c.b16 %v407, %v406
  %v514 = vpack.c.b16 %v409, %v408
  %v515 = vpack.c.b16 %v411, %v410
  %v516 = vpack.c.b16 %v413, %v412
  %v517 = vpack.c.b16 %v415, %v414
  %v518 = vpack.c.b16 %v417, %v416
  %v519 = vpack.c.b16 %v419, %v418
  %v520 = vpack.c.b16 %v421, %v420
  %v521 = vpack.c.b16 %v423, %v422
  %v522 = vpack.c.b16 %v425, %v424
  %v523 = vpack.c.b16 %v427, %v426
  %v524 = vpack.c.b16 %v429, %v428
  %v525 = vpack.c.b16 %v431, %v430
  %v526 = vpack.c.b16 %v433, %v432
  %v527 = vpack.c.b16 %v435, %v434
  %v528 = vpack.c.b16 %v437, %v436
  %v529 = vpack.c.b16 %v439, %v438
  %v530 = vpack.c.b16 %v441, %v440
  %v531 = vpack.c.b16 %v443, %v442
  %v532 = vpack.c.b16 %v445, %v444
  %v533 = vpack.c.b16 %v447, %v446
  %v534 = vpack.c.b16 %v449, %v448
  %v535 = vpack.c.b16 %v451, %v450
  %v536 = vpack.c.b16 %v453, %v452
  %v537 = vpack.c.b16 %v455, %v454
  %v538 = vpack.c.b16 %v457, %v456
  %v539 = vpack.c.b16 %v459, %v458
  %v540 = vpack.c.b16 %v461, %v460
  %v541 = vpack.c.b16 %v463, %v462
  %v542 = vpack.c.b16 %v465, %v464
  %v543 = vpack.c.b16 %v467, %v466
  %v544 = vpack.c.b16 %v469, %v468
  %v545 = vpack.c.b16 %v471, %v470
  %v546 = vpack.c.b16 %v473, %v472
  %v547 = vpack.c.b16 %v475, %v474
  %620 = vmatpush.bf16.msra.mxu0 %v483
  %621 = vmatpush.bf16.msra.mxu0 %v482
  %622 = vmatpush.bf16.msra.mxu0 %v481
  %623 = vmatpush.bf16.msra.mxu0 %v480
  %624 = vmatpush.bf16.msra.mxu0 %v479
  %625 = vmatpush.bf16.msra.mxu0 %v478
  %626 = vmatpush.bf16.msra.mxu0 %v477
  %627 = vmatpush.bf16.msra.mxu0 %v476
  %628 = vmatmul.bf16.gmra.mxu0 %v168
  %v629 = vpop.f32.mrf.mxu0
  %v630 = vadd.f32 0.0, %v629
  %v631 = vpop.f32.mrf.mxu0
  %632 = vdwg.mxu0
  %633 = vmatpush.bf16.msra.mxu0 %v491
  %634 = vmatpush.bf16.msra.mxu0 %v490
  %635 = vmatpush.bf16.msra.mxu0 %v489
  %636 = vmatpush.bf16.msra.mxu0 %v488
  %637 = vmatpush.bf16.msra.mxu0 %v487
  %638 = vmatpush.bf16.msra.mxu0 %v486
  %639 = vmatpush.bf16.msra.mxu0 %v485
  %640 = vmatpush.bf16.msra.mxu0 %v484
  %641 = vmatmul.bf16.gmra.mxu0 %v169
  %v642 = vpop.f32.mrf.mxu0
  %v643 = vadd.f32 %v630, %v642
  %v644 = vpop.f32.mrf.mxu0
  %645 = vdwg.mxu0
  %646 = vmatpush.bf16.msra.mxu0 %v499
  %647 = vmatpush.bf16.msra.mxu0 %v498
  %648 = vmatpush.bf16.msra.mxu0 %v497
  %649 = vmatpush.bf16.msra.mxu0 %v496
  %650 = vmatpush.bf16.msra.mxu0 %v495
  %651 = vmatpush.bf16.msra.mxu0 %v494
  %652 = vmatpush.bf16.msra.mxu0 %v493
  %653 = vmatpush.bf16.msra.mxu0 %v492
  %654 = vmatmul.bf16.gmra.mxu0 %v170
  %v655 = vpop.f32.mrf.mxu0
  %v656 = vadd.f32 %v643, %v655
  %v657 = vpop.f32.mrf.mxu0
  %658 = vdwg.mxu0
  %659 = vmatpush.bf16.msra.mxu0 %v507
  %660 = vmatpush.bf16.msra.mxu0 %v506
  %661 = vmatpush.bf16.msra.mxu0 %v505
  %662 = vmatpush.bf16.msra.mxu0 %v504
  %663 = vmatpush.bf16.msra.mxu0 %v503
  %664 = vmatpush.bf16.msra.mxu0 %v502
  %665 = vmatpush.bf16.msra.mxu0 %v501
  %666 = vmatpush.bf16.msra.mxu0 %v500
  %667 = vmatmul.bf16.gmra.mxu0 %v171
  %v668 = vpop.f32.mrf.mxu0
  %v669 = vadd.f32 %v656, %v668
  %v670 = vpop.f32.mrf.mxu0
  %671 = vdwg.mxu0
  %672 = vmatpush.bf16.msra.mxu0 %v515
  %673 = vmatpush.bf16.msra.mxu0 %v514
  %674 = vmatpush.bf16.msra.mxu0 %v513
  %675 = vmatpush.bf16.msra.mxu0 %v512
  %676 = vmatpush.bf16.msra.mxu0 %v511
  %677 = vmatpush.bf16.msra.mxu0 %v510
  %678 = vmatpush.bf16.msra.mxu0 %v509
  %679 = vmatpush.bf16.msra.mxu0 %v508
  %680 = vmatmul.bf16.gmra.mxu0 %v172
  %v681 = vpop.f32.mrf.mxu0
  %v682 = vadd.f32 %v669, %v681
  %v683 = vpop.f32.mrf.mxu0
  %684 = vdwg.mxu0
  %685 = vmatpush.bf16.msra.mxu0 %v523
  %686 = vmatpush.bf16.msra.mxu0 %v522
  %687 = vmatpush.bf16.msra.mxu0 %v521
  %688 = vmatpush.bf16.msra.mxu0 %v520
  %689 = vmatpush.bf16.msra.mxu0 %v519
  %690 = vmatpush.bf16.msra.mxu0 %v518
  %691 = vmatpush.bf16.msra.mxu0 %v517
  %692 = vmatpush.bf16.msra.mxu0 %v516
  %693 = vmatmul.bf16.gmra.mxu0 %v173
  %v694 = vpop.f32.mrf.mxu0
  %v695 = vadd.f32 %v682, %v694
  %v696 = vpop.f32.mrf.mxu0
  %697 = vdwg.mxu0
  %698 = vmatpush.bf16.msra.mxu0 %v531
  %699 = vmatpush.bf16.msra.mxu0 %v530
  %700 = vmatpush.bf16.msra.mxu0 %v529
  %701 = vmatpush.bf16.msra.mxu0 %v528
  %702 = vmatpush.bf16.msra.mxu0 %v527
  %703 = vmatpush.bf16.msra.mxu0 %v526
  %704 = vmatpush.bf16.msra.mxu0 %v525
  %705 = vmatpush.bf16.msra.mxu0 %v524
  %706 = vmatmul.bf16.gmra.mxu0 %v174
  %v707 = vpop.f32.mrf.mxu0
  %v708 = vadd.f32 %v695, %v707
  %v709 = vpop.f32.mrf.mxu0
  %710 = vdwg.mxu0
  %711 = vmatpush.bf16.msra.mxu0 %v539
  %712 = vmatpush.bf16.msra.mxu0 %v538
  %713 = vmatpush.bf16.msra.mxu0 %v537
  %714 = vmatpush.bf16.msra.mxu0 %v536
  %715 = vmatpush.bf16.msra.mxu0 %v535
  %716 = vmatpush.bf16.msra.mxu0 %v534
  %717 = vmatpush.bf16.msra.mxu0 %v533
  %718 = vmatpush.bf16.msra.mxu0 %v532
  %719 = vmatmul.bf16.gmra.mxu0 %v175
  %v720 = vpop.f32.mrf.mxu0
  %v721 = vadd.f32 %v708, %v720
  %v722 = vpop.f32.mrf.mxu0
  %723 = vdwg.mxu0
  %724 = vmatpush.bf16.msra.mxu0 %v547
  %725 = vmatpush.bf16.msra.mxu0 %v546
  %726 = vmatpush.bf16.msra.mxu0 %v545
  %727 = vmatpush.bf16.msra.mxu0 %v544
  %728 = vmatpush.bf16.msra.mxu0 %v543
  %729 = vmatpush.bf16.msra.mxu0 %v542
  %730 = vmatpush.bf16.msra.mxu0 %v541
  %731 = vmatpush.bf16.msra.mxu0 %v540
  %732 = vmatmul.bf16.gmra.mxu0 %v178
  %v733 = vpop.f32.mrf.mxu0
  %v734 = vadd.f32 %v721, %v733
  %v735 = vpop.f32.mrf.mxu0
  %736 = vdwg.mxu0
  %v737 = vadd.f32 %v19, %v734
  %738 = vst [vmem:[#allocation2] sm:$0x3] %v737
  // Predicated region
  $region18: #{_lambda_.27} parent=0 // pred_check
    %p739 = pneg %p14
  $region19: #{_lambda_.27} parent=0 // pred_check_branch
    %741 = sbr.rel (%p739) target = $region21
  $region20: #{_lambda_.27} parent=0 // pred_region
    %v742 = vld [vmem:[#allocation2] sm:$0x3]
    %v743 = vld [vmem:[%s2] sm:$0x1]
    %v745 = vperm.slane %v743, 0
    %v747 = vadd.f32 %v742, %v745
    %v748 = vmax.f32 %v747, 0.0
    %v749 = vpack.c.bf16 %v748, %v748
    %750 = vst [vmem:[%s3] sm:$0x1] %v749
  $region21: #{_lambda_.27} parent=0 // pred_fallthru
    _
  // Predicated region
  $region22: #{_lambda_.27} parent=0 // pred_check
    _
  $region23: #{_lambda_.27} parent=0 // pred_check_branch
    %752 = sbr.rel (0) target = $region25
  $region24: #{_lambda_.27} parent=0 // pred_region
    _
  $region25: #{_lambda_.27} parent=0 // pred_fallthru
    _
  // Predicated region
  $region26: #{_lambda_.27} parent=0 // pred_check
    _
  $region27: #{_lambda_.27} parent=0 // pred_check_branch
    %754 = sbr.rel (0) target = $region29
  $region28: #{_lambda_.27} parent=0 // pred_region
    _
  $region29: #{_lambda_.27} parent=0 // pred_fallthru
    _

// kernel: _lambda_.29
$region0: #{_lambda_.29}
  #allocation0 [shape = 'u32[]', space=smem, size = 0x4, offset = 0x4, fixed_abs, tag = 'smem constant byte address 0x4 - core index']
  #allocation1 [shape = 'u32[72,128]{1,0:T(1,128)}', space=vmem, size = 0x9000, scoped, tag = 'internal scratch']
  #allocation2 [shape = 'f32[2,100]{1,0:T(2,128)}', space=vmem, size = 0x400, scoped, tag = 'scratch operand']
  %s0 = inlined_call_operand.vmem [shape: bf16[2,512], index: 0, kind: input, shape index: {}]
  %s1 = inlined_call_operand.vmem [shape: bf16[512,100], index: 1, kind: input, shape index: {}]
  %s2 = inlined_call_operand.vmem [shape: f32[1,100], index: 2, kind: input, shape index: {}]
  %s3 = inlined_call_operand.hbm [shape: f32[2,100], index: 3, kind: output, shape index: {}]
  %s4 = sld [smem:[#allocation0]]
  $region30: #{_lambda_.29} parent=0
    _
  %s6 = ssub.s32 1, %s4
  %s7 = scalar_select 0, %s6, %s4
  $region1: #{_lambda_.29} parent=0
    #allocation3 [shape = 'u8[1024]{0}', space=vmem, size = 0x400, scoped, tag = 'output window, operand 0, single buffered']
    #allocation4 [shape = 's32[1]{0}', space=sflag, size = 0x4, scoped, tag = 'scoped memory for _lambda_.29']
    %8 = vsyncpa [#allocation4], 0
    // Predicated region
    $region2: #{_lambda_.29} parent=1 // pred_check
      _
    $region3: #{_lambda_.29} parent=1 // pred_check_branch
      %10 = sbr.rel (0) target = $region5
    $region4: #{_lambda_.29} parent=1 // pred_region
      _
    $region5: #{_lambda_.29} parent=1 // pred_fallthru
      _
    // Predicated region
    $region6: #{_lambda_.29} parent=1 // pred_check
      _
    $region7: #{_lambda_.29} parent=1 // pred_check_branch
      %12 = sbr.rel (0) target = $region9
    $region8: #{_lambda_.29} parent=1 // pred_region
      _
    $region9: #{_lambda_.29} parent=1 // pred_fallthru
      _
    // Predicated region
    $region10: #{_lambda_.29} parent=1 // pred_check
      _
    $region11: #{_lambda_.29} parent=1 // pred_check_branch
      %14 = sbr.rel (0) target = $region13
    $region12: #{_lambda_.29} parent=1 // pred_region
      _
    $region13: #{_lambda_.29} parent=1 // pred_fallthru
      _
    %p15 = scmp.eq.s32.totalorder 0, 0
    // Predicated region
    $region14: #{_lambda_.29} parent=1 // pred_check
      %p16 = pneg %p15
    $region15: #{_lambda_.29} parent=1 // pred_check_branch
      %18 = sbr.rel (%p16) target = $region17
    $region16: #{_lambda_.29} parent=1 // pred_region
      %vm19 = vcmask 812032
      %20 = vst.msk [vmem:[#allocation2] sm:$0x3] %vm19, 0.0
    $region17: #{_lambda_.29} parent=1 // pred_fallthru
      _
    %v21 = vld [vmem:[#allocation2] sm:$0x3]
    %v22 = vld [vmem:[%s0] sm:$0xf]
    %v23 = vld [vmem:[%s1] sm:$0xf]
    %v24 = vld [vmem:[%s1 + $0x4] sm:$0xf]
    %v25 = vld [vmem:[%s1 + $0x8] sm:$0xf]
    %v26 = vld [vmem:[%s1 + $0xc] sm:$0xf]
    %v27 = vld [vmem:[%s1 + $0x10] sm:$0xf]
    %v28 = vld [vmem:[%s1 + $0x14] sm:$0xf]
    %v29 = vld [vmem:[%s1 + $0x18] sm:$0xf]
    %v30 = vld [vmem:[%s1 + $0x1c] sm:$0xf]
    %v31 = vld [vmem:[%s1 + $0x20] sm:$0xf]
    %v32 = vld [vmem:[%s1 + $0x24] sm:$0xf]
    %v33 = vld [vmem:[%s1 + $0x28] sm:$0xf]
    %v34 = vld [vmem:[%s1 + $0x2c] sm:$0xf]
    %v35 = vld [vmem:[%s1 + $0x30] sm:$0xf]
    %v36 = vld [vmem:[%s1 + $0x34] sm:$0xf]
    %v37 = vld [vmem:[%s1 + $0x38] sm:$0xf]
    %v38 = vld [vmem:[%s1 + $0x3c] sm:$0xf]
    %v39 = vld [vmem:[%s1 + $0x40] sm:$0xf]
    %v40 = vld [vmem:[%s1 + $0x44] sm:$0xf]
    %v41 = vld [vmem:[%s1 + $0x48] sm:$0xf]
    %v42 = vld [vmem:[%s1 + $0x4c] sm:$0xf]
    %v43 = vld [vmem:[%s1 + $0x50] sm:$0xf]
    %v44 = vld [vmem:[%s1 + $0x54] sm:$0xf]
    %v45 = vld [vmem:[%s1 + $0x58] sm:$0xf]
    %v46 = vld [vmem:[%s1 + $0x5c] sm:$0xf]
    %v47 = vld [vmem:[%s1 + $0x60] sm:$0xf]
    %v48 = vld [vmem:[%s1 + $0x64] sm:$0xf]
    %v49 = vld [vmem:[%s1 + $0x68] sm:$0xf]
    %v50 = vld [vmem:[%s1 + $0x6c] sm:$0xf]
    %v51 = vld [vmem:[%s1 + $0x70] sm:$0xf]
    %v52 = vld [vmem:[%s1 + $0x74] sm:$0xf]
    %v53 = vld [vmem:[%s1 + $0x78] sm:$0xf]
    %v54 = vld [vmem:[%s1 + $0x7c] sm:$0xf]
    %v55 = vld [vmem:[%s1 + $0x80] sm:$0xf]
    %v56 = vld [vmem:[%s1 + $0x84] sm:$0xf]
    %v57 = vld [vmem:[%s1 + $0x88] sm:$0xf]
    %v58 = vld [vmem:[%s1 + $0x8c] sm:$0xf]
    %v59 = vld [vmem:[%s1 + $0x90] sm:$0xf]
    %v60 = vld [vmem:[%s1 + $0x94] sm:$0xf]
    %v61 = vld [vmem:[%s1 + $0x98] sm:$0xf]
    %v62 = vld [vmem:[%s1 + $0x9c] sm:$0xf]
    %v63 = vld [vmem:[%s1 + $0xa0] sm:$0xf]
    %v64 = vld [vmem:[%s1 + $0xa4] sm:$0xf]
    %v65 = vld [vmem:[%s1 + $0xa8] sm:$0xf]
    %v66 = vld [vmem:[%s1 + $0xac] sm:$0xf]
    %v67 = vld [vmem:[%s1 + $0xb0] sm:$0xf]
    %v68 = vld [vmem:[%s1 + $0xb4] sm:$0xf]
    %v69 = vld [vmem:[%s1 + $0xb8] sm:$0xf]
    %v70 = vld [vmem:[%s1 + $0xbc] sm:$0xf]
    %v71 = vld [vmem:[%s1 + $0xc0] sm:$0xf]
    %v72 = vld [vmem:[%s1 + $0xc4] sm:$0xf]
    %v73 = vld [vmem:[%s1 + $0xc8] sm:$0xf]
    %v74 = vld [vmem:[%s1 + $0xcc] sm:$0xf]
    %v75 = vld [vmem:[%s1 + $0xd0] sm:$0xf]
    %v76 = vld [vmem:[%s1 + $0xd4] sm:$0xf]
    %v77 = vld [vmem:[%s1 + $0xd8] sm:$0xf]
    %v78 = vld [vmem:[%s1 + $0xdc] sm:$0xf]
    %v79 = vld [vmem:[%s1 + $0xe0] sm:$0xf]
    %v80 = vld [vmem:[%s1 + $0xe4] sm:$0xf]
    %v81 = vld [vmem:[%s1 + $0xe8] sm:$0xf]
    %v82 = vld [vmem:[%s1 + $0xec] sm:$0xf]
    %v83 = vld [vmem:[%s1 + $0xf0] sm:$0xf]
    %v84 = vld [vmem:[%s1 + $0xf4] sm:$0xf]
    %v85 = vld [vmem:[%s1 + $0xf8] sm:$0xf]
    %v86 = vld [vmem:[%s1 + $0xfc] sm:$0xf]
    %88 = vst [vmem:[#allocation1] ss:$9 sm:$0xff] %v22
    %v89 = vld [vmem:[#allocation1] sm:$0xff]
    %v90 = vld [vmem:[#allocation1 + $0x9] sm:$0xff]
    %v91 = vld [vmem:[#allocation1 + $0x12] sm:$0xff]
    %v92 = vld [vmem:[#allocation1 + $0x1b] sm:$0xff]
    %v161 = vunpack.c.l.b16 %v23
    %v162 = vunpack.c.l.b16 %v24
    %v163 = vunpack.c.l.b16 %v25
    %v164 = vunpack.c.l.b16 %v26
    %v165 = vunpack.c.l.b16 %v27
    %v166 = vunpack.c.l.b16 %v28
    %v167 = vunpack.c.l.b16 %v29
    %v168 = vunpack.c.l.b16 %v30
    %v169 = vunpack.c.l.b16 %v31
    %v170 = vunpack.c.l.b16 %v32
    %v171 = vunpack.c.l.b16 %v33
    %v172 = vunpack.c.l.b16 %v34
    %v173 = vunpack.c.l.b16 %v35
    %v174 = vunpack.c.l.b16 %v36
    %v175 = vunpack.c.l.b16 %v37
    %v176 = vunpack.c.l.b16 %v38
    %v177 = vunpack.c.l.b16 %v39
    %v178 = vunpack.c.l.b16 %v40
    %v179 = vunpack.c.l.b16 %v41
    %v180 = vunpack.c.l.b16 %v42
    %v181 = vunpack.c.l.b16 %v43
    %v182 = vunpack.c.l.b16 %v44
    %v183 = vunpack.c.l.b16 %v45
    %v184 = vunpack.c.l.b16 %v46
    %v185 = vunpack.c.l.b16 %v47
    %v186 = vunpack.c.l.b16 %v48
    %v187 = vunpack.c.l.b16 %v49
    %v188 = vunpack.c.l.b16 %v50
    %v189 = vunpack.c.l.b16 %v51
    %v190 = vunpack.c.l.b16 %v52
    %v191 = vunpack.c.l.b16 %v53
    %v192 = vunpack.c.l.b16 %v54
    %v193 = vunpack.c.l.b16 %v55
    %v194 = vunpack.c.l.b16 %v56
    %v195 = vunpack.c.l.b16 %v57
    %v196 = vunpack.c.l.b16 %v58
    %v197 = vunpack.c.l.b16 %v59
    %v198 = vunpack.c.l.b16 %v60
    %v199 = vunpack.c.l.b16 %v61
    %v200 = vunpack.c.l.b16 %v62
    %v201 = vunpack.c.l.b16 %v63
    %v202 = vunpack.c.l.b16 %v64
    %v203 = vunpack.c.l.b16 %v65
    %v204 = vunpack.c.l.b16 %v66
    %v205 = vunpack.c.l.b16 %v67
    %v206 = vunpack.c.l.b16 %v68
    %v207 = vunpack.c.l.b16 %v69
    %v208 = vunpack.c.l.b16 %v70
    %v209 = vunpack.c.l.b16 %v71
    %v210 = vunpack.c.l.b16 %v72
    %v211 = vunpack.c.l.b16 %v73
    %v212 = vunpack.c.l.b16 %v74
    %v213 = vunpack.c.l.b16 %v75
    %v214 = vunpack.c.l.b16 %v76
    %v215 = vunpack.c.l.b16 %v77
    %v216 = vunpack.c.l.b16 %v78
    %v217 = vunpack.c.l.b16 %v79
    %v218 = vunpack.c.l.b16 %v80
    %v219 = vunpack.c.l.b16 %v81
    %v220 = vunpack.c.l.b16 %v82
    %v221 = vunpack.c.l.b16 %v83
    %v222 = vunpack.c.l.b16 %v84
    %v223 = vunpack.c.l.b16 %v85
    %v224 = vunpack.c.l.b16 %v86
    %v225 = vpack.c.b16 %v162, %v161
    %v226 = vpack.c.b16 %v164, %v163
    %v227 = vpack.c.b16 %v166, %v165
    %v228 = vpack.c.b16 %v168, %v167
    %v229 = vpack.c.b16 %v170, %v169
    %v230 = vpack.c.b16 %v172, %v171
    %v231 = vpack.c.b16 %v174, %v173
    %v232 = vpack.c.b16 %v176, %v175
    %v233 = vpack.c.b16 %v178, %v177
    %v234 = vpack.c.b16 %v180, %v179
    %v235 = vpack.c.b16 %v182, %v181
    %v236 = vpack.c.b16 %v184, %v183
    %v237 = vpack.c.b16 %v186, %v185
    %v238 = vpack.c.b16 %v188, %v187
    %v239 = vpack.c.b16 %v190, %v189
    %v240 = vpack.c.b16 %v192, %v191
    %v241 = vpack.c.b16 %v194, %v193
    %v242 = vpack.c.b16 %v196, %v195
    %v243 = vpack.c.b16 %v198, %v197
    %v244 = vpack.c.b16 %v200, %v199
    %v245 = vpack.c.b16 %v202, %v201
    %v246 = vpack.c.b16 %v204, %v203
    %v247 = vpack.c.b16 %v206, %v205
    %v248 = vpack.c.b16 %v208, %v207
    %v249 = vpack.c.b16 %v210, %v209
    %v250 = vpack.c.b16 %v212, %v211
    %v251 = vpack.c.b16 %v214, %v213
    %v252 = vpack.c.b16 %v216, %v215
    %v253 = vpack.c.b16 %v218, %v217
    %v254 = vpack.c.b16 %v220, %v219
    %v255 = vpack.c.b16 %v222, %v221
    %v256 = vpack.c.b16 %v224, %v223
    %289 = vmatpush.bf16.msra.mxu0 %v232
    %290 = vmatpush.bf16.msra.mxu0 %v231
    %291 = vmatpush.bf16.msra.mxu0 %v230
    %292 = vmatpush.bf16.msra.mxu0 %v229
    %293 = vmatpush.bf16.msra.mxu0 %v228
    %294 = vmatpush.bf16.msra.mxu0 %v227
    %295 = vmatpush.bf16.msra.mxu0 %v226
    %296 = vmatpush.bf16.msra.mxu0 %v225
    %297 = vmatmul.bf16.gmra.mxu0 %v89
    %v298 = vpop.f32.mrf.mxu0
    %v299 = vadd.f32 0.0, %v298
    %v300 = vpop.f32.mrf.mxu0
    %301 = vdwg.mxu0
    %302 = vmatpush.bf16.msra.mxu0 %v240
    %303 = vmatpush.bf16.msra.mxu0 %v239
    %304 = vmatpush.bf16.msra.mxu0 %v238
    %305 = vmatpush.bf16.msra.mxu0 %v237
    %306 = vmatpush.bf16.msra.mxu0 %v236
    %307 = vmatpush.bf16.msra.mxu0 %v235
    %308 = vmatpush.bf16.msra.mxu0 %v234
    %309 = vmatpush.bf16.msra.mxu0 %v233
    %310 = vmatmul.bf16.gmra.mxu0 %v90
    %v311 = vpop.f32.mrf.mxu0
    %v312 = vadd.f32 %v299, %v311
    %v313 = vpop.f32.mrf.mxu0
    %314 = vdwg.mxu0
    %315 = vmatpush.bf16.msra.mxu0 %v248
    %316 = vmatpush.bf16.msra.mxu0 %v247
    %317 = vmatpush.bf16.msra.mxu0 %v246
    %318 = vmatpush.bf16.msra.mxu0 %v245
    %319 = vmatpush.bf16.msra.mxu0 %v244
    %320 = vmatpush.bf16.msra.mxu0 %v243
    %321 = vmatpush.bf16.msra.mxu0 %v242
    %322 = vmatpush.bf16.msra.mxu0 %v241
    %323 = vmatmul.bf16.gmra.mxu0 %v91
    %v324 = vpop.f32.mrf.mxu0
    %v325 = vadd.f32 %v312, %v324
    %v326 = vpop.f32.mrf.mxu0
    %327 = vdwg.mxu0
    %328 = vmatpush.bf16.msra.mxu0 %v256
    %329 = vmatpush.bf16.msra.mxu0 %v255
    %330 = vmatpush.bf16.msra.mxu0 %v254
    %331 = vmatpush.bf16.msra.mxu0 %v253
    %332 = vmatpush.bf16.msra.mxu0 %v252
    %333 = vmatpush.bf16.msra.mxu0 %v251
    %334 = vmatpush.bf16.msra.mxu0 %v250
    %335 = vmatpush.bf16.msra.mxu0 %v249
    %336 = vmatmul.bf16.gmra.mxu0 %v92
    %v337 = vpop.f32.mrf.mxu0
    %v338 = vadd.f32 %v325, %v337
    %v339 = vpop.f32.mrf.mxu0
    %340 = vdwg.mxu0
    %v341 = vadd.f32 %v21, %v338
    %vm342 = vcmask 812032
    %343 = vst.msk [vmem:[#allocation2] sm:$0x3] %vm342, %v341
    // Predicated region
    $region18: #{_lambda_.29} parent=1 // pred_check
      %p344 = pneg %p15
    $region19: #{_lambda_.29} parent=1 // pred_check_branch
      %346 = sbr.rel (%p344) target = $region21
    $region20: #{_lambda_.29} parent=1 // pred_region
      %v347 = vld [vmem:[#allocation2] sm:$0x3]
      %v348 = vld [vmem:[%s2] sm:$0x1]
      %v350 = vperm.slane %v348, 0
      %v352 = vadd.f32 %v347, %v350
      %v353 = vxor.u32 %v352, 2147483648
      %v354 = vmul.f32 %v353, 1.442695
      %v355 = vpow.pop %v354
      %v356 = vadd.f32 %v355, 1.0
      %v357 = vrcp.pop %v356
      %v358 = vmul.f32 %v356, %v357
      %v359 = vsub.f32 1.0, %v358
      %v360 = vmul.f32 %v357, %v359
      %v361 = vadd.f32 %v357, %v360
      %vm362 = vweird.f32 %v356
      %vm363 = vweird.f32 %v357
      %vm364 = vmor %vm362, %vm363
      %v365 = vsel %vm364, %v357, %v361
      %v366 = vand.u32 2147483647, %v356
      %vm367 = vcmp.eq.f32.partialorder %v366, 8.507059e+37
      %v368 = vand.u32 %v356, 2147483648
      %v369 = vor.u32 1.1754944e-38, %v368
      %v370 = vsel %vm367, %v369, %v365
      %v371 = vmul.f32 1.0, %v370
      %372 = vst.msk [vmem:[#allocation3] sm:$0x3] %vm342, %v371
    $region21: #{_lambda_.29} parent=1 // pred_fallthru
      _
    // Predicated region
    $region22: #{_lambda_.29} parent=1 // pred_check
      _
    $region23: #{_lambda_.29} parent=1 // pred_check_branch
      %374 = sbr.rel (0) target = $region25
    $region24: #{_lambda_.29} parent=1 // pred_region
      %376 = vsyncadd [#allocation4], 0
      %s378 = sshll.u32 [#allocation3], 4
      %s379 = int_to_ptr.vmem [resolvable:$true] %s378
      %s380 = sshll.u32 %s3, 4
      %s381 = int_to_ptr.hbm [resolvable:$true] %s380
      %383 = dma.vmem_to_hbm [thread:$0]  %s379, 32, %s381, [#allocation4]
    $region25: #{_lambda_.29} parent=1 // pred_fallthru
      _
    // Predicated region
    $region26: #{_lambda_.29} parent=1 // pred_check
      _
    $region27: #{_lambda_.29} parent=1 // pred_check_branch
      %385 = sbr.rel (0) target = $region29
    $region28: #{_lambda_.29} parent=1 // pred_region
      %387 = dma.done [#allocation4], 32
    $region29: #{_lambda_.29} parent=1 // pred_fallthru
      _
    %388 = vsyncpa [#allocation4], 1

</llo_original>
